<compile_context>
chip_gen: v7x
topology: tpu7x:2x2x1
jax: 0.10.0
libtpu: 0.0.40
codegen_flags: <defaults>
</compile_context>

<pallas_src>
import jax
import jax.numpy as jnp
import numpy as np
from jax.experimental import pallas as pl
from jax.experimental.pallas import tpu as pltpu

# ----------------------------- static config --------------------------------
NB_VECT = 56          # channels C
VECT_DIM = 7          # sequence length L
EXP = 159             # expansion channels (version 74)
SQZ = 40              # _make_divisible(159 // 4, 8) == 40
ACTION_SIZE = 81      # synthetic game.getActionSize()
NUM_PLAYERS = 2       # synthetic game.num_players
LOWVALUE = -1.0e8     # self.lowvalue buffer
FLAT = NB_VECT * VECT_DIM   # 392

# Batch tile.  ~5 MiB of VMEM per step at TB=256 (f32), safe on v5e/v6e/v7x
# scoped-VMEM defaults.  On v6e one could push to 512-1024; on v7x (64 MiB
# physical VMEM, 2 TCs) keep <=512 and rely on grid steps >= 2 for megacore.
DEFAULT_BATCH_TILE = 256


def _round_up(x, m):
    return ((x + m - 1) // m) * m


# ----------------------------- activations ----------------------------------
def _relu(x):
    return jnp.maximum(x, 0.0)


def _hardswish(x):
    return x * jnp.clip(x + 3.0, 0.0, 6.0) * (1.0 / 6.0)


def _hardsigmoid(x):
    return jnp.clip(x + 3.0, 0.0, 6.0) * (1.0 / 6.0)


# ----------------------------- fused kernel ----------------------------------
def _build_kernel(treedef, n_w):
    """Builds the fused forward kernel; `treedef`/`n_w` describe the weight pytree."""
    L = VECT_DIM

    def ir_block(xs, p, wd_ref, wd_base, use_hs, se_max):
        """InvertedResidual1d on a list of L blocks of shape (TB, Cin)."""
        act = _hardswish if use_hs else _relu
        we = p["we"][...]; es = p["es"][...]; eb = p["eb"][...]
        ds = p["ds"][...]; db = p["db"][...]
        w1 = p["w1"][...]; b1 = p["b1"][...]
        w2 = p["w2"][...]; b2 = p["b2"][...]
        wp = p["wp"][...]; ps = p["ps"][...]; pb = p["pb"][...]

        # expand: Linear(Cin->E) over channels + BN + act   (M=TB matmuls)
        hs = [act(jnp.dot(x, we, preferred_element_type=jnp.float32) * es + eb)
              for x in xs]

        # depthwise: shared Linear(L->L) mixing sequence positions, BN(E), act.
        # 7x7 scalars live in SMEM -> 49 scalar-broadcast FMAs on the VPU.
        d = []
        for l in range(L):
            acc = wd_ref[wd_base + l * L] * hs[0]
            for k in range(1, L):
                acc = acc + wd_ref[wd_base + l * L + k] * hs[k]
            d.append(act(acc * ds + db))

        # squeeze-excitation: pool over L, batched fc1/fc2, hardsigmoid scale
        pooled = d[0]
        for k in range(1, L):
            pooled = jnp.maximum(pooled, d[k]) if se_max else pooled + d[k]
        if not se_max:
            pooled = pooled * (1.0 / L)
        s = jnp.maximum(
            jnp.dot(pooled, w1, preferred_element_type=jnp.float32) + b1, 0.0)
        s = _hardsigmoid(
            jnp.dot(s, w2, preferred_element_type=jnp.float32) + b2)

        # project: Linear(E->Cout) + BN, residual (Cin == Cout == 56 here)
        return [jnp.dot(d[l] * s, wp, preferred_element_type=jnp.float32) * ps + pb
                + xs[l]
                for l in range(L)]

    def kernel(*refs):
        x_ref, valid_ref, wd_ref = refs[0], refs[1], refs[2]
        w = jax.tree_util.tree_unflatten(treedef, refs[3:3 + n_w])
        pi_ref, v_ref = refs[3 + n_w], refs[4 + n_w]

        xblk = x_ref[...]                                    # (TB, 392) c-major
        fs = w["first_s"][...]
        fb = w["first_b"][...]
        # first layer: position-l gather + Linear(56,56) folded into one matmul
        xs = [jnp.dot(xblk, w["first_comb"][l],
                      preferred_element_type=jnp.float32) * fs + fb
              for l in range(L)]

        # trunk IR (ReLU, SE avg).  F.dropout(training=False) -> identity.
        xs = ir_block(xs, w["trunk"], wd_ref, 0 * L * L, use_hs=False, se_max=False)

        pis = ir_block(xs, w["pi_ir"], wd_ref, 1 * L * L, use_hs=True, se_max=True)
        vs = ir_block(xs, w["v_ir"], wd_ref, 2 * L * L, use_hs=True, se_max=True)

        # ---- PI head: Flatten(c-major) + Linear(392,A) decomposed per position
        acc = jnp.dot(pis[0], w["pi_w1l"][0], preferred_element_type=jnp.float32)
        for l in range(1, L):
            acc = acc + jnp.dot(pis[l], w["pi_w1l"][l],
                                preferred_element_type=jnp.float32)
        h = jnp.maximum(acc + w["pi_b1"][...], 0.0)
        logits = jnp.dot(h, w["pi_w2"][...],
                         preferred_element_type=jnp.float32) + w["pi_b2"][...]
        logits = jnp.where(valid_ref[...] != 0, logits, LOWVALUE)
        m = jnp.max(logits, axis=1, keepdims=True)
        z = logits - m
        lse = jnp.log(jnp.sum(jnp.exp(z), axis=1, keepdims=True))
        pi_ref[...] = z - lse

        # ---- V head
        accv = jnp.dot(vs[0], w["v_w1l"][0], preferred_element_type=jnp.float32)
        for l in range(1, L):
            accv = accv + jnp.dot(vs[l], w["v_w1l"][l],
                                  preferred_element_type=jnp.float32)
        hv = jnp.maximum(accv + w["v_b1"][...], 0.0)
        v_out = jnp.dot(hv, w["v_w2"][...],
                        preferred_element_type=jnp.float32) + w["v_b2"][...]
        v_ref[...] = jnp.tanh(v_out)

    return kernel


# ----------------------------- pallas_call wrapper ---------------------------
def splendor_forward(input_data, valid_actions, kernel_weights, wd_flat,
                     *, batch_tile=DEFAULT_BATCH_TILE):
    """Fused SplendorNNet forward (eval mode). Returns (log_pi, v)."""
    B = input_data.shape[0]
    # input.view(-1, 56, 7) flattened c-major -> (B, 392); no transposes needed.
    x = input_data.reshape(B, FLAT).astype(jnp.float32)
    valid = valid_actions.astype(jnp.int32)

    TB = min(batch_tile, _round_up(max(B, 1), 8))
    Bp = _round_up(B, TB)
    if Bp != B:
        # padded rows: all-invalid mask -> finite (uniform) log_softmax, sliced away
        x = jnp.pad(x, ((0, Bp - B), (0, 0)))
        valid = jnp.pad(valid, ((0, Bp - B), (0, 0)))

    flat_w, treedef = jax.tree_util.tree_flatten(kernel_weights)
    n_w = len(flat_w)
    kernel = _build_kernel(treedef, n_w)

    def const_spec(a):
        nd = a.ndim
        return pl.BlockSpec(a.shape, lambda i, nd=nd: (0,) * nd)

    in_specs = ([
        pl.BlockSpec((TB, FLAT), lambda i: (i, 0)),
        pl.BlockSpec((TB, ACTION_SIZE), lambda i: (i, 0)),
        pl.BlockSpec(memory_space=pltpu.MemorySpace.SMEM),   # depthwise 7x7 scalars
    ] + [const_spec(a) for a in flat_w])

    out_specs = (pl.BlockSpec((TB, ACTION_SIZE), lambda i: (i, 0)),
                 pl.BlockSpec((TB, NUM_PLAYERS), lambda i: (i, 0)))
    out_shape = (jax.ShapeDtypeStruct((Bp, ACTION_SIZE), jnp.float32),
                 jax.ShapeDtypeStruct((Bp, NUM_PLAYERS), jnp.float32))

    log_pi, v = pl.pallas_call(
        kernel,
        grid=(Bp // TB,),
        in_specs=in_specs,
        out_specs=out_specs,
        out_shape=out_shape,
        compiler_params=pltpu.CompilerParams(dimension_semantics=("parallel",)),
    )(x, valid, wd_flat, *flat_w)
    return log_pi[:B], v[:B]


# ----------------------------- parameters ------------------------------------
def _kaiming_uniform(key, out_f, in_f):
    # nn.init.kaiming_uniform_ default (a=0, fan_in): bound = sqrt(6/fan_in),
    # as used by the module's _init; biases are zero-initialized.
    bound = (6.0 / in_f) ** 0.5
    return jax.random.uniform(key, (out_f, in_f), jnp.float32, -bound, bound)


def _bn_vectors(n, eps=1e-5):
    # Freshly-initialized BatchNorm1d in eval mode folded to scale/shift.
    gamma = jnp.ones((n,), jnp.float32)
    beta = jnp.zeros((n,), jnp.float32)
    mean = jnp.zeros((n,), jnp.float32)
    var = jnp.ones((n,), jnp.float32)
    scale = gamma / jnp.sqrt(var + eps)
    shift = beta - mean * scale
    return scale, shift


def make_params(key):
    """Raw parameters in PyTorch layout (out_features, in_features)."""
    ks = jax.random.split(key, 8)

    def ir(k):
        kk = jax.random.split(k, 5)
        es, eb = _bn_vectors(EXP)
        ds, db = _bn_vectors(EXP)
        ps, pb = _bn_vectors(NB_VECT)
        return dict(
            we=_kaiming_uniform(kk[0], EXP, NB_VECT), e_scale=es, e_shift=eb,
            wd=_kaiming_uniform(kk[1], VECT_DIM, VECT_DIM), d_scale=ds, d_shift=db,
            se_w1=_kaiming_uniform(kk[2], SQZ, EXP), se_b1=jnp.zeros((SQZ,), jnp.float32),
            se_w2=_kaiming_uniform(kk[3], EXP, SQZ), se_b2=jnp.zeros((EXP,), jnp.float32),
            wp=_kaiming_uniform(kk[4], NB_VECT, EXP), p_scale=ps, p_shift=pb,
        )

    fs, fb = _bn_vectors(NB_VECT)
    return dict(
        first_w=_kaiming_uniform(ks[0], NB_VECT, NB_VECT), first_bn=(fs, fb),
        trunk=ir(ks[1]), pi_ir=ir(ks[2]), v_ir=ir(ks[3]),
        pi_w1=_kaiming_uniform(ks[4], ACTION_SIZE, FLAT),
        pi_b1=jnp.zeros((ACTION_SIZE,), jnp.float32),
        pi_w2=_kaiming_uniform(ks[5], ACTION_SIZE, ACTION_SIZE),
        pi_b2=jnp.zeros((ACTION_SIZE,), jnp.float32),
        v_w1=_kaiming_uniform(ks[6], NUM_PLAYERS, FLAT),
        v_b1=jnp.zeros((NUM_PLAYERS,), jnp.float32),
        v_w2=_kaiming_uniform(ks[7], NUM_PLAYERS, NUM_PLAYERS),
        v_b2=jnp.zeros((NUM_PLAYERS,), jnp.float32),
    )


def prepare_kernel_params(raw):
    """One-time host prep: (in,out)-layout weights, fold input gather + first
    Linear into (7,392,56), split head Linear(392,·) per sequence position,
    pack the three 7x7 depthwise weights for SMEM."""
    L = VECT_DIM

    def row(v):
        return jnp.asarray(v, jnp.float32).reshape(1, -1)

    # first layer: (x_flat @ first_comb[l]) == Linear(56,56) at position l
    w1t = np.asarray(raw["first_w"], np.float32).T          # (in=56, out=56)
    fc = np.zeros((L, FLAT, NB_VECT), np.float32)
    for l in range(L):
        fc[l, l::L, :] = w1t                                  # rows j = c*7 + l

    def ir(p):
        return dict(
            we=jnp.asarray(p["we"]).T, es=row(p["e_scale"]), eb=row(p["e_shift"]),
            ds=row(p["d_scale"]), db=row(p["d_shift"]),
            w1=jnp.asarray(p["se_w1"]).T, b1=row(p["se_b1"]),
            w2=jnp.asarray(p["se_w2"]).T, b2=row(p["se_b2"]),
            wp=jnp.asarray(p["wp"]).T, ps=row(p["p_scale"]), pb=row(p["p_shift"]),
        )

    def head_w1(w):                                           # (out, 392) -> (7, 56, out)
        w = np.asarray(w, np.float32)
        return jnp.asarray(np.stack([w[:, l::L].T for l in range(L)], axis=0))

    weights = dict(
        first_comb=jnp.asarray(fc),
        first_s=row(raw["first_bn"][0]), first_b=row(raw["first_bn"][1]),
        trunk=ir(raw["trunk"]), pi_ir=ir(raw["pi_ir"]), v_ir=ir(raw["v_ir"]),
        pi_w1l=head_w1(raw["pi_w1"]), pi_b1=row(raw["pi_b1"]),
        pi_w2=jnp.asarray(raw["pi_w2"]).T, pi_b2=row(raw["pi_b2"]),
        v_w1l=head_w1(raw["v_w1"]), v_b1=row(raw["v_b1"]),
        v_w2=jnp.asarray(raw["v_w2"]).T, v_b2=row(raw["v_b2"]),
    )
    wd_flat = jnp.concatenate([
        jnp.asarray(raw[k]["wd"], jnp.float32).reshape(-1)
        for k in ("trunk", "pi_ir", "v_ir")])                 # (3*49,) for SMEM
    return weights, wd_flat


# ----------------------------- plain-JAX reference ----------------------------
def reference_forward(input_data, valid_actions, raw):
    B = input_data.shape[0]
    x = input_data.reshape(B, NB_VECT, VECT_DIM).astype(jnp.float32)   # (B, C, L)

    def lna_channel(x, w, sc, sh, act):
        y = jnp.einsum('bcl,oc->bol', x, w)
        y = y * sc[None, :, None] + sh[None, :, None]
        return act(y) if act is not None else y

    def ir(x, p, use_hs, se_max):
        act = _hardswish if use_hs else _relu
        h = lna_channel(x, p["we"], p["e_scale"], p["e_shift"], act)
        d = jnp.einsum('bei,oi->beo', h, p["wd"])
        d = act(d * p["d_scale"][None, :, None] + p["d_shift"][None, :, None])
        pooled = jnp.max(d, axis=2) if se_max else jnp.mean(d, axis=2)
        s = jnp.maximum(pooled @ p["se_w1"].T + p["se_b1"], 0.0)
        s = _hardsigmoid(s @ p["se_w2"].T + p["se_b2"])
        d = d * s[:, :, None]
        y = lna_channel(d, p["wp"], p["p_scale"], p["p_shift"], None)
        return y + x

    y = lna_channel(x, raw["first_w"], raw["first_bn"][0], raw["first_bn"][1], None)
    y = ir(y, raw["trunk"], False, False)
    pi_f = ir(y, raw["pi_ir"], True, True).reshape(B, FLAT)
    v_f = ir(y, raw["v_ir"], True, True).reshape(B, FLAT)

    logits = (jnp.maximum(pi_f @ raw["pi_w1"].T + raw["pi_b1"], 0.0)
              @ raw["pi_w2"].T + raw["pi_b2"])
    logits = jnp.where(valid_actions, logits, LOWVALUE)
    log_pi = jax.nn.log_softmax(logits, axis=1)
    v = jnp.tanh(jnp.maximum(v_f @ raw["v_w1"].T + raw["v_b1"], 0.0)
                 @ raw["v_w2"].T + raw["v_b2"])
    return log_pi, v


# ----------------------------- main -------------------------------------------
if __name__ == "__main__":
    key = jax.random.PRNGKey(0)
    k_in, k_valid, k_par = jax.random.split(key, 3)

    B = 4
    input_data = jax.random.normal(k_in, (B, NB_VECT, VECT_DIM), jnp.float32)
    valid_actions = jax.random.bernoulli(k_valid, 0.5, (B, ACTION_SIZE))
    valid_actions = valid_actions.at[:, 0].set(True)   # >=1 valid action per row

    raw_params = make_params(k_par)
    kernel_weights, wd_flat = prepare_kernel_params(raw_params)

    log_pi, v = splendor_forward(input_data, valid_actions, kernel_weights, wd_flat)
    log_pi = jax.block_until_ready(log_pi)
    v = jax.block_until_ready(v)

    # shape / sanity checks
    assert log_pi.shape == (B, ACTION_SIZE) and v.shape == (B, NUM_PLAYERS)
    probs_sum = jnp.sum(jnp.exp(log_pi), axis=1)
    assert bool(jnp.all(jnp.abs(probs_sum - 1.0) < 1e-3))
    assert bool(jnp.all(jnp.abs(v) <= 1.0))

    # numerical check against a plain-JAX reference of the PyTorch module
    ref_pi, ref_v = reference_forward(input_data, valid_actions, raw_params)
    np.testing.assert_allclose(np.asarray(log_pi), np.asarray(ref_pi),
                               rtol=5e-3, atol=5e-3)
    np.testing.assert_allclose(np.asarray(v), np.asarray(ref_v),
                               rtol=5e-3, atol=5e-3)

    print("KERNEL_OK")
</pallas_src>

<mosaic_0001>
module attributes {stable_mosaic.version = 11 : i64} {
  func.func @kernel(%arg0: i32, %arg1: memref<8x392xf32, #tpu.memory_space<vmem>>, %arg2: memref<8x81xi32, #tpu.memory_space<vmem>>, %arg3: memref<147xf32, #tpu.memory_space<smem>>, %arg4: memref<1x56xf32, #tpu.memory_space<vmem>>, %arg5: memref<7x392x56xf32, #tpu.memory_space<vmem>>, %arg6: memref<1x56xf32, #tpu.memory_space<vmem>>, %arg7: memref<1x81xf32, #tpu.memory_space<vmem>>, %arg8: memref<1x81xf32, #tpu.memory_space<vmem>>, %arg9: memref<1x40xf32, #tpu.memory_space<vmem>>, %arg10: memref<1x159xf32, #tpu.memory_space<vmem>>, %arg11: memref<1x159xf32, #tpu.memory_space<vmem>>, %arg12: memref<1x159xf32, #tpu.memory_space<vmem>>, %arg13: memref<1x159xf32, #tpu.memory_space<vmem>>, %arg14: memref<1x159xf32, #tpu.memory_space<vmem>>, %arg15: memref<1x56xf32, #tpu.memory_space<vmem>>, %arg16: memref<1x56xf32, #tpu.memory_space<vmem>>, %arg17: memref<159x40xf32, #tpu.memory_space<vmem>>, %arg18: memref<40x159xf32, #tpu.memory_space<vmem>>, %arg19: memref<56x159xf32, #tpu.memory_space<vmem>>, %arg20: memref<159x56xf32, #tpu.memory_space<vmem>>, %arg21: memref<7x56x81xf32, #tpu.memory_space<vmem>>, %arg22: memref<81x81xf32, #tpu.memory_space<vmem>>, %arg23: memref<1x40xf32, #tpu.memory_space<vmem>>, %arg24: memref<1x159xf32, #tpu.memory_space<vmem>>, %arg25: memref<1x159xf32, #tpu.memory_space<vmem>>, %arg26: memref<1x159xf32, #tpu.memory_space<vmem>>, %arg27: memref<1x159xf32, #tpu.memory_space<vmem>>, %arg28: memref<1x159xf32, #tpu.memory_space<vmem>>, %arg29: memref<1x56xf32, #tpu.memory_space<vmem>>, %arg30: memref<1x56xf32, #tpu.memory_space<vmem>>, %arg31: memref<159x40xf32, #tpu.memory_space<vmem>>, %arg32: memref<40x159xf32, #tpu.memory_space<vmem>>, %arg33: memref<56x159xf32, #tpu.memory_space<vmem>>, %arg34: memref<159x56xf32, #tpu.memory_space<vmem>>, %arg35: memref<1x2xf32, #tpu.memory_space<vmem>>, %arg36: memref<1x2xf32, #tpu.memory_space<vmem>>, %arg37: memref<1x40xf32, #tpu.memory_space<vmem>>, %arg38: memref<1x159xf32, #tpu.memory_space<vmem>>, %arg39: memref<1x159xf32, #tpu.memory_space<vmem>>, %arg40: memref<1x159xf32, #tpu.memory_space<vmem>>, %arg41: memref<1x159xf32, #tpu.memory_space<vmem>>, %arg42: memref<1x159xf32, #tpu.memory_space<vmem>>, %arg43: memref<1x56xf32, #tpu.memory_space<vmem>>, %arg44: memref<1x56xf32, #tpu.memory_space<vmem>>, %arg45: memref<159x40xf32, #tpu.memory_space<vmem>>, %arg46: memref<40x159xf32, #tpu.memory_space<vmem>>, %arg47: memref<56x159xf32, #tpu.memory_space<vmem>>, %arg48: memref<159x56xf32, #tpu.memory_space<vmem>>, %arg49: memref<7x56x2xf32, #tpu.memory_space<vmem>>, %arg50: memref<2x2xf32, #tpu.memory_space<vmem>>, %arg51: memref<8x81xf32, #tpu.memory_space<vmem>>, %arg52: memref<8x2xf32, #tpu.memory_space<vmem>>) attributes {dimension_semantics = [#tpu.dimension_semantics<parallel>], iteration_bounds = array<i64: 1>, scalar_prefetch = 0 : i64, scratch_operands = 0 : i64, tpu.core_type = #tpu.core_type<tc>, window_params = [{transform_indices = @transform_0, window_bounds = array<i64: 8, 392>}, {transform_indices = @transform_1, window_bounds = array<i64: 8, 81>}, {transform_indices = @transform_2, window_bounds = array<i64: 147>}, {pipeline_mode = #tpu.pipeline_mode<synchronous>, transform_indices = @transform_3, window_bounds = array<i64: 1, 56>}, {pipeline_mode = #tpu.pipeline_mode<synchronous>, transform_indices = @transform_4, window_bounds = array<i64: 7, 392, 56>}, {pipeline_mode = #tpu.pipeline_mode<synchronous>, transform_indices = @transform_5, window_bounds = array<i64: 1, 56>}, {pipeline_mode = #tpu.pipeline_mode<synchronous>, transform_indices = @transform_6, window_bounds = array<i64: 1, 81>}, {pipeline_mode = #tpu.pipeline_mode<synchronous>, transform_indices = @transform_7, window_bounds = array<i64: 1, 81>}, {pipeline_mode = #tpu.pipeline_mode<synchronous>, transform_indices = @transform_8, window_bounds = array<i64: 1, 40>}, {pipeline_mode = #tpu.pipeline_mode<synchronous>, transform_indices = @transform_9, window_bounds = array<i64: 1, 159>}, {pipeline_mode = #tpu.pipeline_mode<synchronous>, transform_indices = @transform_10, window_bounds = array<i64: 1, 159>}, {pipeline_mode = #tpu.pipeline_mode<synchronous>, transform_indices = @transform_11, window_bounds = array<i64: 1, 159>}, {pipeline_mode = #tpu.pipeline_mode<synchronous>, transform_indices = @transform_12, window_bounds = array<i64: 1, 159>}, {pipeline_mode = #tpu.pipeline_mode<synchronous>, transform_indices = @transform_13, window_bounds = array<i64: 1, 159>}, {pipeline_mode = #tpu.pipeline_mode<synchronous>, transform_indices = @transform_14, window_bounds = array<i64: 1, 56>}, {pipeline_mode = #tpu.pipeline_mode<synchronous>, transform_indices = @transform_15, window_bounds = array<i64: 1, 56>}, {pipeline_mode = #tpu.pipeline_mode<synchronous>, transform_indices = @transform_16, window_bounds = array<i64: 159, 40>}, {pipeline_mode = #tpu.pipeline_mode<synchronous>, transform_indices = @transform_17, window_bounds = array<i64: 40, 159>}, {pipeline_mode = #tpu.pipeline_mode<synchronous>, transform_indices = @transform_18, window_bounds = array<i64: 56, 159>}, {pipeline_mode = #tpu.pipeline_mode<synchronous>, transform_indices = @transform_19, window_bounds = array<i64: 159, 56>}, {pipeline_mode = #tpu.pipeline_mode<synchronous>, transform_indices = @transform_20, window_bounds = array<i64: 7, 56, 81>}, {pipeline_mode = #tpu.pipeline_mode<synchronous>, transform_indices = @transform_21, window_bounds = array<i64: 81, 81>}, {pipeline_mode = #tpu.pipeline_mode<synchronous>, transform_indices = @transform_22, window_bounds = array<i64: 1, 40>}, {pipeline_mode = #tpu.pipeline_mode<synchronous>, transform_indices = @transform_23, window_bounds = array<i64: 1, 159>}, {pipeline_mode = #tpu.pipeline_mode<synchronous>, transform_indices = @transform_24, window_bounds = array<i64: 1, 159>}, {pipeline_mode = #tpu.pipeline_mode<synchronous>, transform_indices = @transform_25, window_bounds = array<i64: 1, 159>}, {pipeline_mode = #tpu.pipeline_mode<synchronous>, transform_indices = @transform_26, window_bounds = array<i64: 1, 159>}, {pipeline_mode = #tpu.pipeline_mode<synchronous>, transform_indices = @transform_27, window_bounds = array<i64: 1, 159>}, {pipeline_mode = #tpu.pipeline_mode<synchronous>, transform_indices = @transform_28, window_bounds = array<i64: 1, 56>}, {pipeline_mode = #tpu.pipeline_mode<synchronous>, transform_indices = @transform_29, window_bounds = array<i64: 1, 56>}, {pipeline_mode = #tpu.pipeline_mode<synchronous>, transform_indices = @transform_30, window_bounds = array<i64: 159, 40>}, {pipeline_mode = #tpu.pipeline_mode<synchronous>, transform_indices = @transform_31, window_bounds = array<i64: 40, 159>}, {pipeline_mode = #tpu.pipeline_mode<synchronous>, transform_indices = @transform_32, window_bounds = array<i64: 56, 159>}, {pipeline_mode = #tpu.pipeline_mode<synchronous>, transform_indices = @transform_33, window_bounds = array<i64: 159, 56>}, {pipeline_mode = #tpu.pipeline_mode<synchronous>, transform_indices = @transform_34, window_bounds = array<i64: 1, 2>}, {pipeline_mode = #tpu.pipeline_mode<synchronous>, transform_indices = @transform_35, window_bounds = array<i64: 1, 2>}, {pipeline_mode = #tpu.pipeline_mode<synchronous>, transform_indices = @transform_36, window_bounds = array<i64: 1, 40>}, {pipeline_mode = #tpu.pipeline_mode<synchronous>, transform_indices = @transform_37, window_bounds = array<i64: 1, 159>}, {pipeline_mode = #tpu.pipeline_mode<synchronous>, transform_indices = @transform_38, window_bounds = array<i64: 1, 159>}, {pipeline_mode = #tpu.pipeline_mode<synchronous>, transform_indices = @transform_39, window_bounds = array<i64: 1, 159>}, {pipeline_mode = #tpu.pipeline_mode<synchronous>, transform_indices = @transform_40, window_bounds = array<i64: 1, 159>}, {pipeline_mode = #tpu.pipeline_mode<synchronous>, transform_indices = @transform_41, window_bounds = array<i64: 1, 159>}, {pipeline_mode = #tpu.pipeline_mode<synchronous>, transform_indices = @transform_42, window_bounds = array<i64: 1, 56>}, {pipeline_mode = #tpu.pipeline_mode<synchronous>, transform_indices = @transform_43, window_bounds = array<i64: 1, 56>}, {pipeline_mode = #tpu.pipeline_mode<synchronous>, transform_indices = @transform_44, window_bounds = array<i64: 159, 40>}, {pipeline_mode = #tpu.pipeline_mode<synchronous>, transform_indices = @transform_45, window_bounds = array<i64: 40, 159>}, {pipeline_mode = #tpu.pipeline_mode<synchronous>, transform_indices = @transform_46, window_bounds = array<i64: 56, 159>}, {pipeline_mode = #tpu.pipeline_mode<synchronous>, transform_indices = @transform_47, window_bounds = array<i64: 159, 56>}, {pipeline_mode = #tpu.pipeline_mode<synchronous>, transform_indices = @transform_48, window_bounds = array<i64: 7, 56, 2>}, {pipeline_mode = #tpu.pipeline_mode<synchronous>, transform_indices = @transform_49, window_bounds = array<i64: 2, 2>}, {transform_indices = @transform_50, window_bounds = array<i64: 8, 81>}, {transform_indices = @transform_51, window_bounds = array<i64: 8, 2>}]} {
    %c0 = arith.constant 0 : index
    %c0_0 = arith.constant 0 : index
    %0 = vector.load %arg1[%c0, %c0_0] : memref<8x392xf32, #tpu.memory_space<vmem>>, vector<8x392xf32>
    %c0_1 = arith.constant 0 : index
    %c0_2 = arith.constant 0 : index
    %1 = vector.load %arg6[%c0_1, %c0_2] : memref<1x56xf32, #tpu.memory_space<vmem>>, vector<1x56xf32>
    %c0_3 = arith.constant 0 : index
    %c0_4 = arith.constant 0 : index
    %2 = vector.load %arg4[%c0_3, %c0_4] : memref<1x56xf32, #tpu.memory_space<vmem>>, vector<1x56xf32>
    %c0_5 = arith.constant 0 : index
    %c0_6 = arith.constant 0 : index
    %c0_7 = arith.constant 0 : index
    %3 = vector.load %arg5[%c0_5, %c0_6, %c0_7] : memref<7x392x56xf32, #tpu.memory_space<vmem>>, vector<1x392x56xf32>
    %4 = vector.shape_cast %3 : vector<1x392x56xf32> to vector<392x56xf32>
    %cst = arith.constant dense<0.000000e+00> : vector<8x56xf32>
    %5 = tpu.matmul %0, %4, %cst {dimension_numbers = #tpu.dot_dimension_numbers<[1], [0], [0], [1], [0, 0, 1, 1], [], []>} : vector<8x392xf32>, vector<392x56xf32>, vector<8x56xf32> -> vector<8x56xf32>
    %6 = vector.broadcast %1 : vector<1x56xf32> to vector<8x56xf32>
    %7 = arith.mulf %5, %6 : vector<8x56xf32>
    %8 = vector.broadcast %2 : vector<1x56xf32> to vector<8x56xf32>
    %9 = arith.addf %7, %8 : vector<8x56xf32>
    %c1 = arith.constant 1 : index
    %c0_8 = arith.constant 0 : index
    %c0_9 = arith.constant 0 : index
    %10 = vector.load %arg5[%c1, %c0_8, %c0_9] : memref<7x392x56xf32, #tpu.memory_space<vmem>>, vector<1x392x56xf32>
    %11 = vector.shape_cast %10 : vector<1x392x56xf32> to vector<392x56xf32>
    %cst_10 = arith.constant dense<0.000000e+00> : vector<8x56xf32>
    %12 = tpu.matmul %0, %11, %cst_10 {dimension_numbers = #tpu.dot_dimension_numbers<[1], [0], [0], [1], [0, 0, 1, 1], [], []>} : vector<8x392xf32>, vector<392x56xf32>, vector<8x56xf32> -> vector<8x56xf32>
    %13 = vector.broadcast %1 : vector<1x56xf32> to vector<8x56xf32>
    %14 = arith.mulf %12, %13 : vector<8x56xf32>
    %15 = vector.broadcast %2 : vector<1x56xf32> to vector<8x56xf32>
    %16 = arith.addf %14, %15 : vector<8x56xf32>
    %c2 = arith.constant 2 : index
    %c0_11 = arith.constant 0 : index
    %c0_12 = arith.constant 0 : index
    %17 = vector.load %arg5[%c2, %c0_11, %c0_12] : memref<7x392x56xf32, #tpu.memory_space<vmem>>, vector<1x392x56xf32>
    %18 = vector.shape_cast %17 : vector<1x392x56xf32> to vector<392x56xf32>
    %cst_13 = arith.constant dense<0.000000e+00> : vector<8x56xf32>
    %19 = tpu.matmul %0, %18, %cst_13 {dimension_numbers = #tpu.dot_dimension_numbers<[1], [0], [0], [1], [0, 0, 1, 1], [], []>} : vector<8x392xf32>, vector<392x56xf32>, vector<8x56xf32> -> vector<8x56xf32>
    %20 = vector.broadcast %1 : vector<1x56xf32> to vector<8x56xf32>
    %21 = arith.mulf %19, %20 : vector<8x56xf32>
    %22 = vector.broadcast %2 : vector<1x56xf32> to vector<8x56xf32>
    %23 = arith.addf %21, %22 : vector<8x56xf32>
    %c3 = arith.constant 3 : index
    %c0_14 = arith.constant 0 : index
    %c0_15 = arith.constant 0 : index
    %24 = vector.load %arg5[%c3, %c0_14, %c0_15] : memref<7x392x56xf32, #tpu.memory_space<vmem>>, vector<1x392x56xf32>
    %25 = vector.shape_cast %24 : vector<1x392x56xf32> to vector<392x56xf32>
    %cst_16 = arith.constant dense<0.000000e+00> : vector<8x56xf32>
    %26 = tpu.matmul %0, %25, %cst_16 {dimension_numbers = #tpu.dot_dimension_numbers<[1], [0], [0], [1], [0, 0, 1, 1], [], []>} : vector<8x392xf32>, vector<392x56xf32>, vector<8x56xf32> -> vector<8x56xf32>
    %27 = vector.broadcast %1 : vector<1x56xf32> to vector<8x56xf32>
    %28 = arith.mulf %26, %27 : vector<8x56xf32>
    %29 = vector.broadcast %2 : vector<1x56xf32> to vector<8x56xf32>
    %30 = arith.addf %28, %29 : vector<8x56xf32>
    %c4 = arith.constant 4 : index
    %c0_17 = arith.constant 0 : index
    %c0_18 = arith.constant 0 : index
    %31 = vector.load %arg5[%c4, %c0_17, %c0_18] : memref<7x392x56xf32, #tpu.memory_space<vmem>>, vector<1x392x56xf32>
    %32 = vector.shape_cast %31 : vector<1x392x56xf32> to vector<392x56xf32>
    %cst_19 = arith.constant dense<0.000000e+00> : vector<8x56xf32>
    %33 = tpu.matmul %0, %32, %cst_19 {dimension_numbers = #tpu.dot_dimension_numbers<[1], [0], [0], [1], [0, 0, 1, 1], [], []>} : vector<8x392xf32>, vector<392x56xf32>, vector<8x56xf32> -> vector<8x56xf32>
    %34 = vector.broadcast %1 : vector<1x56xf32> to vector<8x56xf32>
    %35 = arith.mulf %33, %34 : vector<8x56xf32>
    %36 = vector.broadcast %2 : vector<1x56xf32> to vector<8x56xf32>
    %37 = arith.addf %35, %36 : vector<8x56xf32>
    %c5 = arith.constant 5 : index
    %c0_20 = arith.constant 0 : index
    %c0_21 = arith.constant 0 : index
    %38 = vector.load %arg5[%c5, %c0_20, %c0_21] : memref<7x392x56xf32, #tpu.memory_space<vmem>>, vector<1x392x56xf32>
    %39 = vector.shape_cast %38 : vector<1x392x56xf32> to vector<392x56xf32>
    %cst_22 = arith.constant dense<0.000000e+00> : vector<8x56xf32>
    %40 = tpu.matmul %0, %39, %cst_22 {dimension_numbers = #tpu.dot_dimension_numbers<[1], [0], [0], [1], [0, 0, 1, 1], [], []>} : vector<8x392xf32>, vector<392x56xf32>, vector<8x56xf32> -> vector<8x56xf32>
    %41 = vector.broadcast %1 : vector<1x56xf32> to vector<8x56xf32>
    %42 = arith.mulf %40, %41 : vector<8x56xf32>
    %43 = vector.broadcast %2 : vector<1x56xf32> to vector<8x56xf32>
    %44 = arith.addf %42, %43 : vector<8x56xf32>
    %c6 = arith.constant 6 : index
    %c0_23 = arith.constant 0 : index
    %c0_24 = arith.constant 0 : index
    %45 = vector.load %arg5[%c6, %c0_23, %c0_24] : memref<7x392x56xf32, #tpu.memory_space<vmem>>, vector<1x392x56xf32>
    %46 = vector.shape_cast %45 : vector<1x392x56xf32> to vector<392x56xf32>
    %cst_25 = arith.constant dense<0.000000e+00> : vector<8x56xf32>
    %47 = tpu.matmul %0, %46, %cst_25 {dimension_numbers = #tpu.dot_dimension_numbers<[1], [0], [0], [1], [0, 0, 1, 1], [], []>} : vector<8x392xf32>, vector<392x56xf32>, vector<8x56xf32> -> vector<8x56xf32>
    %48 = vector.broadcast %1 : vector<1x56xf32> to vector<8x56xf32>
    %49 = arith.mulf %47, %48 : vector<8x56xf32>
    %50 = vector.broadcast %2 : vector<1x56xf32> to vector<8x56xf32>
    %51 = arith.addf %49, %50 : vector<8x56xf32>
    %c0_26 = arith.constant 0 : index
    %c0_27 = arith.constant 0 : index
    %52 = vector.load %arg33[%c0_26, %c0_27] : memref<56x159xf32, #tpu.memory_space<vmem>>, vector<56x159xf32>
    %c0_28 = arith.constant 0 : index
    %c0_29 = arith.constant 0 : index
    %53 = vector.load %arg28[%c0_28, %c0_29] : memref<1x159xf32, #tpu.memory_space<vmem>>, vector<1x159xf32>
    %c0_30 = arith.constant 0 : index
    %c0_31 = arith.constant 0 : index
    %54 = vector.load %arg27[%c0_30, %c0_31] : memref<1x159xf32, #tpu.memory_space<vmem>>, vector<1x159xf32>
    %c0_32 = arith.constant 0 : index
    %c0_33 = arith.constant 0 : index
    %55 = vector.load %arg26[%c0_32, %c0_33] : memref<1x159xf32, #tpu.memory_space<vmem>>, vector<1x159xf32>
    %c0_34 = arith.constant 0 : index
    %c0_35 = arith.constant 0 : index
    %56 = vector.load %arg25[%c0_34, %c0_35] : memref<1x159xf32, #tpu.memory_space<vmem>>, vector<1x159xf32>
    %c0_36 = arith.constant 0 : index
    %c0_37 = arith.constant 0 : index
    %57 = vector.load %arg31[%c0_36, %c0_37] : memref<159x40xf32, #tpu.memory_space<vmem>>, vector<159x40xf32>
    %c0_38 = arith.constant 0 : index
    %c0_39 = arith.constant 0 : index
    %58 = vector.load %arg23[%c0_38, %c0_39] : memref<1x40xf32, #tpu.memory_space<vmem>>, vector<1x40xf32>
    %c0_40 = arith.constant 0 : index
    %c0_41 = arith.constant 0 : index
    %59 = vector.load %arg32[%c0_40, %c0_41] : memref<40x159xf32, #tpu.memory_space<vmem>>, vector<40x159xf32>
    %c0_42 = arith.constant 0 : index
    %c0_43 = arith.constant 0 : index
    %60 = vector.load %arg24[%c0_42, %c0_43] : memref<1x159xf32, #tpu.memory_space<vmem>>, vector<1x159xf32>
    %c0_44 = arith.constant 0 : index
    %c0_45 = arith.constant 0 : index
    %61 = vector.load %arg34[%c0_44, %c0_45] : memref<159x56xf32, #tpu.memory_space<vmem>>, vector<159x56xf32>
    %c0_46 = arith.constant 0 : index
    %c0_47 = arith.constant 0 : index
    %62 = vector.load %arg30[%c0_46, %c0_47] : memref<1x56xf32, #tpu.memory_space<vmem>>, vector<1x56xf32>
    %c0_48 = arith.constant 0 : index
    %c0_49 = arith.constant 0 : index
    %63 = vector.load %arg29[%c0_48, %c0_49] : memref<1x56xf32, #tpu.memory_space<vmem>>, vector<1x56xf32>
    %cst_50 = arith.constant dense<0.000000e+00> : vector<8x159xf32>
    %64 = tpu.matmul %9, %52, %cst_50 {dimension_numbers = #tpu.dot_dimension_numbers<[1], [0], [0], [1], [0, 0, 1, 1], [], []>} : vector<8x56xf32>, vector<56x159xf32>, vector<8x159xf32> -> vector<8x159xf32>
    %65 = vector.broadcast %53 : vector<1x159xf32> to vector<8x159xf32>
    %66 = arith.mulf %64, %65 : vector<8x159xf32>
    %67 = vector.broadcast %54 : vector<1x159xf32> to vector<8x159xf32>
    %68 = arith.addf %66, %67 : vector<8x159xf32>
    %cst_51 = arith.constant 0.000000e+00 : f32
    %69 = vector.broadcast %cst_51 : f32 to vector<8x159xf32>
    %70 = arith.maximumf %68, %69 : vector<8x159xf32>
    %cst_52 = arith.constant dense<0.000000e+00> : vector<8x159xf32>
    %71 = tpu.matmul %16, %52, %cst_52 {dimension_numbers = #tpu.dot_dimension_numbers<[1], [0], [0], [1], [0, 0, 1, 1], [], []>} : vector<8x56xf32>, vector<56x159xf32>, vector<8x159xf32> -> vector<8x159xf32>
    %72 = vector.broadcast %53 : vector<1x159xf32> to vector<8x159xf32>
    %73 = arith.mulf %71, %72 : vector<8x159xf32>
    %74 = vector.broadcast %54 : vector<1x159xf32> to vector<8x159xf32>
    %75 = arith.addf %73, %74 : vector<8x159xf32>
    %cst_53 = arith.constant 0.000000e+00 : f32
    %76 = vector.broadcast %cst_53 : f32 to vector<8x159xf32>
    %77 = arith.maximumf %75, %76 : vector<8x159xf32>
    %cst_54 = arith.constant dense<0.000000e+00> : vector<8x159xf32>
    %78 = tpu.matmul %23, %52, %cst_54 {dimension_numbers = #tpu.dot_dimension_numbers<[1], [0], [0], [1], [0, 0, 1, 1], [], []>} : vector<8x56xf32>, vector<56x159xf32>, vector<8x159xf32> -> vector<8x159xf32>
    %79 = vector.broadcast %53 : vector<1x159xf32> to vector<8x159xf32>
    %80 = arith.mulf %78, %79 : vector<8x159xf32>
    %81 = vector.broadcast %54 : vector<1x159xf32> to vector<8x159xf32>
    %82 = arith.addf %80, %81 : vector<8x159xf32>
    %cst_55 = arith.constant 0.000000e+00 : f32
    %83 = vector.broadcast %cst_55 : f32 to vector<8x159xf32>
    %84 = arith.maximumf %82, %83 : vector<8x159xf32>
    %cst_56 = arith.constant dense<0.000000e+00> : vector<8x159xf32>
    %85 = tpu.matmul %30, %52, %cst_56 {dimension_numbers = #tpu.dot_dimension_numbers<[1], [0], [0], [1], [0, 0, 1, 1], [], []>} : vector<8x56xf32>, vector<56x159xf32>, vector<8x159xf32> -> vector<8x159xf32>
    %86 = vector.broadcast %53 : vector<1x159xf32> to vector<8x159xf32>
    %87 = arith.mulf %85, %86 : vector<8x159xf32>
    %88 = vector.broadcast %54 : vector<1x159xf32> to vector<8x159xf32>
    %89 = arith.addf %87, %88 : vector<8x159xf32>
    %cst_57 = arith.constant 0.000000e+00 : f32
    %90 = vector.broadcast %cst_57 : f32 to vector<8x159xf32>
    %91 = arith.maximumf %89, %90 : vector<8x159xf32>
    %cst_58 = arith.constant dense<0.000000e+00> : vector<8x159xf32>
    %92 = tpu.matmul %37, %52, %cst_58 {dimension_numbers = #tpu.dot_dimension_numbers<[1], [0], [0], [1], [0, 0, 1, 1], [], []>} : vector<8x56xf32>, vector<56x159xf32>, vector<8x159xf32> -> vector<8x159xf32>
    %93 = vector.broadcast %53 : vector<1x159xf32> to vector<8x159xf32>
    %94 = arith.mulf %92, %93 : vector<8x159xf32>
    %95 = vector.broadcast %54 : vector<1x159xf32> to vector<8x159xf32>
    %96 = arith.addf %94, %95 : vector<8x159xf32>
    %cst_59 = arith.constant 0.000000e+00 : f32
    %97 = vector.broadcast %cst_59 : f32 to vector<8x159xf32>
    %98 = arith.maximumf %96, %97 : vector<8x159xf32>
    %cst_60 = arith.constant dense<0.000000e+00> : vector<8x159xf32>
    %99 = tpu.matmul %44, %52, %cst_60 {dimension_numbers = #tpu.dot_dimension_numbers<[1], [0], [0], [1], [0, 0, 1, 1], [], []>} : vector<8x56xf32>, vector<56x159xf32>, vector<8x159xf32> -> vector<8x159xf32>
    %100 = vector.broadcast %53 : vector<1x159xf32> to vector<8x159xf32>
    %101 = arith.mulf %99, %100 : vector<8x159xf32>
    %102 = vector.broadcast %54 : vector<1x159xf32> to vector<8x159xf32>
    %103 = arith.addf %101, %102 : vector<8x159xf32>
    %cst_61 = arith.constant 0.000000e+00 : f32
    %104 = vector.broadcast %cst_61 : f32 to vector<8x159xf32>
    %105 = arith.maximumf %103, %104 : vector<8x159xf32>
    %cst_62 = arith.constant dense<0.000000e+00> : vector<8x159xf32>
    %106 = tpu.matmul %51, %52, %cst_62 {dimension_numbers = #tpu.dot_dimension_numbers<[1], [0], [0], [1], [0, 0, 1, 1], [], []>} : vector<8x56xf32>, vector<56x159xf32>, vector<8x159xf32> -> vector<8x159xf32>
    %107 = vector.broadcast %53 : vector<1x159xf32> to vector<8x159xf32>
    %108 = arith.mulf %106, %107 : vector<8x159xf32>
    %109 = vector.broadcast %54 : vector<1x159xf32> to vector<8x159xf32>
    %110 = arith.addf %108, %109 : vector<8x159xf32>
    %cst_63 = arith.constant 0.000000e+00 : f32
    %111 = vector.broadcast %cst_63 : f32 to vector<8x159xf32>
    %112 = arith.maximumf %110, %111 : vector<8x159xf32>
    %c0_64 = arith.constant 0 : index
    %113 = memref.load %arg3[%c0_64] : memref<147xf32, #tpu.memory_space<smem>>
    %114 = vector.broadcast %113 : f32 to vector<8x159xf32>
    %115 = arith.mulf %114, %70 : vector<8x159xf32>
    %c1_65 = arith.constant 1 : index
    %116 = memref.load %arg3[%c1_65] : memref<147xf32, #tpu.memory_space<smem>>
    %117 = vector.broadcast %116 : f32 to vector<8x159xf32>
    %118 = arith.mulf %117, %77 : vector<8x159xf32>
    %119 = arith.addf %115, %118 : vector<8x159xf32>
    %c2_66 = arith.constant 2 : index
    %120 = memref.load %arg3[%c2_66] : memref<147xf32, #tpu.memory_space<smem>>
    %121 = vector.broadcast %120 : f32 to vector<8x159xf32>
    %122 = arith.mulf %121, %84 : vector<8x159xf32>
    %123 = arith.addf %119, %122 : vector<8x159xf32>
    %c3_67 = arith.constant 3 : index
    %124 = memref.load %arg3[%c3_67] : memref<147xf32, #tpu.memory_space<smem>>
    %125 = vector.broadcast %124 : f32 to vector<8x159xf32>
    %126 = arith.mulf %125, %91 : vector<8x159xf32>
    %127 = arith.addf %123, %126 : vector<8x159xf32>
    %c4_68 = arith.constant 4 : index
    %128 = memref.load %arg3[%c4_68] : memref<147xf32, #tpu.memory_space<smem>>
    %129 = vector.broadcast %128 : f32 to vector<8x159xf32>
    %130 = arith.mulf %129, %98 : vector<8x159xf32>
    %131 = arith.addf %127, %130 : vector<8x159xf32>
    %c5_69 = arith.constant 5 : index
    %132 = memref.load %arg3[%c5_69] : memref<147xf32, #tpu.memory_space<smem>>
    %133 = vector.broadcast %132 : f32 to vector<8x159xf32>
    %134 = arith.mulf %133, %105 : vector<8x159xf32>
    %135 = arith.addf %131, %134 : vector<8x159xf32>
    %c6_70 = arith.constant 6 : index
    %136 = memref.load %arg3[%c6_70] : memref<147xf32, #tpu.memory_space<smem>>
    %137 = vector.broadcast %136 : f32 to vector<8x159xf32>
    %138 = arith.mulf %137, %112 : vector<8x159xf32>
    %139 = arith.addf %135, %138 : vector<8x159xf32>
    %140 = vector.broadcast %55 : vector<1x159xf32> to vector<8x159xf32>
    %141 = arith.mulf %139, %140 : vector<8x159xf32>
    %142 = vector.broadcast %56 : vector<1x159xf32> to vector<8x159xf32>
    %143 = arith.addf %141, %142 : vector<8x159xf32>
    %cst_71 = arith.constant 0.000000e+00 : f32
    %144 = vector.broadcast %cst_71 : f32 to vector<8x159xf32>
    %145 = arith.maximumf %143, %144 : vector<8x159xf32>
    %c7 = arith.constant 7 : index
    %146 = memref.load %arg3[%c7] : memref<147xf32, #tpu.memory_space<smem>>
    %147 = vector.broadcast %146 : f32 to vector<8x159xf32>
    %148 = arith.mulf %147, %70 : vector<8x159xf32>
    %c8 = arith.constant 8 : index
    %149 = memref.load %arg3[%c8] : memref<147xf32, #tpu.memory_space<smem>>
    %150 = vector.broadcast %149 : f32 to vector<8x159xf32>
    %151 = arith.mulf %150, %77 : vector<8x159xf32>
    %152 = arith.addf %148, %151 : vector<8x159xf32>
    %c9 = arith.constant 9 : index
    %153 = memref.load %arg3[%c9] : memref<147xf32, #tpu.memory_space<smem>>
    %154 = vector.broadcast %153 : f32 to vector<8x159xf32>
    %155 = arith.mulf %154, %84 : vector<8x159xf32>
    %156 = arith.addf %152, %155 : vector<8x159xf32>
    %c10 = arith.constant 10 : index
    %157 = memref.load %arg3[%c10] : memref<147xf32, #tpu.memory_space<smem>>
    %158 = vector.broadcast %157 : f32 to vector<8x159xf32>
    %159 = arith.mulf %158, %91 : vector<8x159xf32>
    %160 = arith.addf %156, %159 : vector<8x159xf32>
    %c11 = arith.constant 11 : index
    %161 = memref.load %arg3[%c11] : memref<147xf32, #tpu.memory_space<smem>>
    %162 = vector.broadcast %161 : f32 to vector<8x159xf32>
    %163 = arith.mulf %162, %98 : vector<8x159xf32>
    %164 = arith.addf %160, %163 : vector<8x159xf32>
    %c12 = arith.constant 12 : index
    %165 = memref.load %arg3[%c12] : memref<147xf32, #tpu.memory_space<smem>>
    %166 = vector.broadcast %165 : f32 to vector<8x159xf32>
    %167 = arith.mulf %166, %105 : vector<8x159xf32>
    %168 = arith.addf %164, %167 : vector<8x159xf32>
    %c13 = arith.constant 13 : index
    %169 = memref.load %arg3[%c13] : memref<147xf32, #tpu.memory_space<smem>>
    %170 = vector.broadcast %169 : f32 to vector<8x159xf32>
    %171 = arith.mulf %170, %112 : vector<8x159xf32>
    %172 = arith.addf %168, %171 : vector<8x159xf32>
    %173 = vector.broadcast %55 : vector<1x159xf32> to vector<8x159xf32>
    %174 = arith.mulf %172, %173 : vector<8x159xf32>
    %175 = vector.broadcast %56 : vector<1x159xf32> to vector<8x159xf32>
    %176 = arith.addf %174, %175 : vector<8x159xf32>
    %cst_72 = arith.constant 0.000000e+00 : f32
    %177 = vector.broadcast %cst_72 : f32 to vector<8x159xf32>
    %178 = arith.maximumf %176, %177 : vector<8x159xf32>
    %c14 = arith.constant 14 : index
    %179 = memref.load %arg3[%c14] : memref<147xf32, #tpu.memory_space<smem>>
    %180 = vector.broadcast %179 : f32 to vector<8x159xf32>
    %181 = arith.mulf %180, %70 : vector<8x159xf32>
    %c15 = arith.constant 15 : index
    %182 = memref.load %arg3[%c15] : memref<147xf32, #tpu.memory_space<smem>>
    %183 = vector.broadcast %182 : f32 to vector<8x159xf32>
    %184 = arith.mulf %183, %77 : vector<8x159xf32>
    %185 = arith.addf %181, %184 : vector<8x159xf32>
    %c16 = arith.constant 16 : index
    %186 = memref.load %arg3[%c16] : memref<147xf32, #tpu.memory_space<smem>>
    %187 = vector.broadcast %186 : f32 to vector<8x159xf32>
    %188 = arith.mulf %187, %84 : vector<8x159xf32>
    %189 = arith.addf %185, %188 : vector<8x159xf32>
    %c17 = arith.constant 17 : index
    %190 = memref.load %arg3[%c17] : memref<147xf32, #tpu.memory_space<smem>>
    %191 = vector.broadcast %190 : f32 to vector<8x159xf32>
    %192 = arith.mulf %191, %91 : vector<8x159xf32>
    %193 = arith.addf %189, %192 : vector<8x159xf32>
    %c18 = arith.constant 18 : index
    %194 = memref.load %arg3[%c18] : memref<147xf32, #tpu.memory_space<smem>>
    %195 = vector.broadcast %194 : f32 to vector<8x159xf32>
    %196 = arith.mulf %195, %98 : vector<8x159xf32>
    %197 = arith.addf %193, %196 : vector<8x159xf32>
    %c19 = arith.constant 19 : index
    %198 = memref.load %arg3[%c19] : memref<147xf32, #tpu.memory_space<smem>>
    %199 = vector.broadcast %198 : f32 to vector<8x159xf32>
    %200 = arith.mulf %199, %105 : vector<8x159xf32>
    %201 = arith.addf %197, %200 : vector<8x159xf32>
    %c20 = arith.constant 20 : index
    %202 = memref.load %arg3[%c20] : memref<147xf32, #tpu.memory_space<smem>>
    %203 = vector.broadcast %202 : f32 to vector<8x159xf32>
    %204 = arith.mulf %203, %112 : vector<8x159xf32>
    %205 = arith.addf %201, %204 : vector<8x159xf32>
    %206 = vector.broadcast %55 : vector<1x159xf32> to vector<8x159xf32>
    %207 = arith.mulf %205, %206 : vector<8x159xf32>
    %208 = vector.broadcast %56 : vector<1x159xf32> to vector<8x159xf32>
    %209 = arith.addf %207, %208 : vector<8x159xf32>
    %cst_73 = arith.constant 0.000000e+00 : f32
    %210 = vector.broadcast %cst_73 : f32 to vector<8x159xf32>
    %211 = arith.maximumf %209, %210 : vector<8x159xf32>
    %c21 = arith.constant 21 : index
    %212 = memref.load %arg3[%c21] : memref<147xf32, #tpu.memory_space<smem>>
    %213 = vector.broadcast %212 : f32 to vector<8x159xf32>
    %214 = arith.mulf %213, %70 : vector<8x159xf32>
    %c22 = arith.constant 22 : index
    %215 = memref.load %arg3[%c22] : memref<147xf32, #tpu.memory_space<smem>>
    %216 = vector.broadcast %215 : f32 to vector<8x159xf32>
    %217 = arith.mulf %216, %77 : vector<8x159xf32>
    %218 = arith.addf %214, %217 : vector<8x159xf32>
    %c23 = arith.constant 23 : index
    %219 = memref.load %arg3[%c23] : memref<147xf32, #tpu.memory_space<smem>>
    %220 = vector.broadcast %219 : f32 to vector<8x159xf32>
    %221 = arith.mulf %220, %84 : vector<8x159xf32>
    %222 = arith.addf %218, %221 : vector<8x159xf32>
    %c24 = arith.constant 24 : index
    %223 = memref.load %arg3[%c24] : memref<147xf32, #tpu.memory_space<smem>>
    %224 = vector.broadcast %223 : f32 to vector<8x159xf32>
    %225 = arith.mulf %224, %91 : vector<8x159xf32>
    %226 = arith.addf %222, %225 : vector<8x159xf32>
    %c25 = arith.constant 25 : index
    %227 = memref.load %arg3[%c25] : memref<147xf32, #tpu.memory_space<smem>>
    %228 = vector.broadcast %227 : f32 to vector<8x159xf32>
    %229 = arith.mulf %228, %98 : vector<8x159xf32>
    %230 = arith.addf %226, %229 : vector<8x159xf32>
    %c26 = arith.constant 26 : index
    %231 = memref.load %arg3[%c26] : memref<147xf32, #tpu.memory_space<smem>>
    %232 = vector.broadcast %231 : f32 to vector<8x159xf32>
    %233 = arith.mulf %232, %105 : vector<8x159xf32>
    %234 = arith.addf %230, %233 : vector<8x159xf32>
    %c27 = arith.constant 27 : index
    %235 = memref.load %arg3[%c27] : memref<147xf32, #tpu.memory_space<smem>>
    %236 = vector.broadcast %235 : f32 to vector<8x159xf32>
    %237 = arith.mulf %236, %112 : vector<8x159xf32>
    %238 = arith.addf %234, %237 : vector<8x159xf32>
    %239 = vector.broadcast %55 : vector<1x159xf32> to vector<8x159xf32>
    %240 = arith.mulf %238, %239 : vector<8x159xf32>
    %241 = vector.broadcast %56 : vector<1x159xf32> to vector<8x159xf32>
    %242 = arith.addf %240, %241 : vector<8x159xf32>
    %cst_74 = arith.constant 0.000000e+00 : f32
    %243 = vector.broadcast %cst_74 : f32 to vector<8x159xf32>
    %244 = arith.maximumf %242, %243 : vector<8x159xf32>
    %c28 = arith.constant 28 : index
    %245 = memref.load %arg3[%c28] : memref<147xf32, #tpu.memory_space<smem>>
    %246 = vector.broadcast %245 : f32 to vector<8x159xf32>
    %247 = arith.mulf %246, %70 : vector<8x159xf32>
    %c29 = arith.constant 29 : index
    %248 = memref.load %arg3[%c29] : memref<147xf32, #tpu.memory_space<smem>>
    %249 = vector.broadcast %248 : f32 to vector<8x159xf32>
    %250 = arith.mulf %249, %77 : vector<8x159xf32>
    %251 = arith.addf %247, %250 : vector<8x159xf32>
    %c30 = arith.constant 30 : index
    %252 = memref.load %arg3[%c30] : memref<147xf32, #tpu.memory_space<smem>>
    %253 = vector.broadcast %252 : f32 to vector<8x159xf32>
    %254 = arith.mulf %253, %84 : vector<8x159xf32>
    %255 = arith.addf %251, %254 : vector<8x159xf32>
    %c31 = arith.constant 31 : index
    %256 = memref.load %arg3[%c31] : memref<147xf32, #tpu.memory_space<smem>>
    %257 = vector.broadcast %256 : f32 to vector<8x159xf32>
    %258 = arith.mulf %257, %91 : vector<8x159xf32>
    %259 = arith.addf %255, %258 : vector<8x159xf32>
    %c32 = arith.constant 32 : index
    %260 = memref.load %arg3[%c32] : memref<147xf32, #tpu.memory_space<smem>>
    %261 = vector.broadcast %260 : f32 to vector<8x159xf32>
    %262 = arith.mulf %261, %98 : vector<8x159xf32>
    %263 = arith.addf %259, %262 : vector<8x159xf32>
    %c33 = arith.constant 33 : index
    %264 = memref.load %arg3[%c33] : memref<147xf32, #tpu.memory_space<smem>>
    %265 = vector.broadcast %264 : f32 to vector<8x159xf32>
    %266 = arith.mulf %265, %105 : vector<8x159xf32>
    %267 = arith.addf %263, %266 : vector<8x159xf32>
    %c34 = arith.constant 34 : index
    %268 = memref.load %arg3[%c34] : memref<147xf32, #tpu.memory_space<smem>>
    %269 = vector.broadcast %268 : f32 to vector<8x159xf32>
    %270 = arith.mulf %269, %112 : vector<8x159xf32>
    %271 = arith.addf %267, %270 : vector<8x159xf32>
    %272 = vector.broadcast %55 : vector<1x159xf32> to vector<8x159xf32>
    %273 = arith.mulf %271, %272 : vector<8x159xf32>
    %274 = vector.broadcast %56 : vector<1x159xf32> to vector<8x159xf32>
    %275 = arith.addf %273, %274 : vector<8x159xf32>
    %cst_75 = arith.constant 0.000000e+00 : f32
    %276 = vector.broadcast %cst_75 : f32 to vector<8x159xf32>
    %277 = arith.maximumf %275, %276 : vector<8x159xf32>
    %c35 = arith.constant 35 : index
    %278 = memref.load %arg3[%c35] : memref<147xf32, #tpu.memory_space<smem>>
    %279 = vector.broadcast %278 : f32 to vector<8x159xf32>
    %280 = arith.mulf %279, %70 : vector<8x159xf32>
    %c36 = arith.constant 36 : index
    %281 = memref.load %arg3[%c36] : memref<147xf32, #tpu.memory_space<smem>>
    %282 = vector.broadcast %281 : f32 to vector<8x159xf32>
    %283 = arith.mulf %282, %77 : vector<8x159xf32>
    %284 = arith.addf %280, %283 : vector<8x159xf32>
    %c37 = arith.constant 37 : index
    %285 = memref.load %arg3[%c37] : memref<147xf32, #tpu.memory_space<smem>>
    %286 = vector.broadcast %285 : f32 to vector<8x159xf32>
    %287 = arith.mulf %286, %84 : vector<8x159xf32>
    %288 = arith.addf %284, %287 : vector<8x159xf32>
    %c38 = arith.constant 38 : index
    %289 = memref.load %arg3[%c38] : memref<147xf32, #tpu.memory_space<smem>>
    %290 = vector.broadcast %289 : f32 to vector<8x159xf32>
    %291 = arith.mulf %290, %91 : vector<8x159xf32>
    %292 = arith.addf %288, %291 : vector<8x159xf32>
    %c39 = arith.constant 39 : index
    %293 = memref.load %arg3[%c39] : memref<147xf32, #tpu.memory_space<smem>>
    %294 = vector.broadcast %293 : f32 to vector<8x159xf32>
    %295 = arith.mulf %294, %98 : vector<8x159xf32>
    %296 = arith.addf %292, %295 : vector<8x159xf32>
    %c40 = arith.constant 40 : index
    %297 = memref.load %arg3[%c40] : memref<147xf32, #tpu.memory_space<smem>>
    %298 = vector.broadcast %297 : f32 to vector<8x159xf32>
    %299 = arith.mulf %298, %105 : vector<8x159xf32>
    %300 = arith.addf %296, %299 : vector<8x159xf32>
    %c41 = arith.constant 41 : index
    %301 = memref.load %arg3[%c41] : memref<147xf32, #tpu.memory_space<smem>>
    %302 = vector.broadcast %301 : f32 to vector<8x159xf32>
    %303 = arith.mulf %302, %112 : vector<8x159xf32>
    %304 = arith.addf %300, %303 : vector<8x159xf32>
    %305 = vector.broadcast %55 : vector<1x159xf32> to vector<8x159xf32>
    %306 = arith.mulf %304, %305 : vector<8x159xf32>
    %307 = vector.broadcast %56 : vector<1x159xf32> to vector<8x159xf32>
    %308 = arith.addf %306, %307 : vector<8x159xf32>
    %cst_76 = arith.constant 0.000000e+00 : f32
    %309 = vector.broadcast %cst_76 : f32 to vector<8x159xf32>
    %310 = arith.maximumf %308, %309 : vector<8x159xf32>
    %c42 = arith.constant 42 : index
    %311 = memref.load %arg3[%c42] : memref<147xf32, #tpu.memory_space<smem>>
    %312 = vector.broadcast %311 : f32 to vector<8x159xf32>
    %313 = arith.mulf %312, %70 : vector<8x159xf32>
    %c43 = arith.constant 43 : index
    %314 = memref.load %arg3[%c43] : memref<147xf32, #tpu.memory_space<smem>>
    %315 = vector.broadcast %314 : f32 to vector<8x159xf32>
    %316 = arith.mulf %315, %77 : vector<8x159xf32>
    %317 = arith.addf %313, %316 : vector<8x159xf32>
    %c44 = arith.constant 44 : index
    %318 = memref.load %arg3[%c44] : memref<147xf32, #tpu.memory_space<smem>>
    %319 = vector.broadcast %318 : f32 to vector<8x159xf32>
    %320 = arith.mulf %319, %84 : vector<8x159xf32>
    %321 = arith.addf %317, %320 : vector<8x159xf32>
    %c45 = arith.constant 45 : index
    %322 = memref.load %arg3[%c45] : memref<147xf32, #tpu.memory_space<smem>>
    %323 = vector.broadcast %322 : f32 to vector<8x159xf32>
    %324 = arith.mulf %323, %91 : vector<8x159xf32>
    %325 = arith.addf %321, %324 : vector<8x159xf32>
    %c46 = arith.constant 46 : index
    %326 = memref.load %arg3[%c46] : memref<147xf32, #tpu.memory_space<smem>>
    %327 = vector.broadcast %326 : f32 to vector<8x159xf32>
    %328 = arith.mulf %327, %98 : vector<8x159xf32>
    %329 = arith.addf %325, %328 : vector<8x159xf32>
    %c47 = arith.constant 47 : index
    %330 = memref.load %arg3[%c47] : memref<147xf32, #tpu.memory_space<smem>>
    %331 = vector.broadcast %330 : f32 to vector<8x159xf32>
    %332 = arith.mulf %331, %105 : vector<8x159xf32>
    %333 = arith.addf %329, %332 : vector<8x159xf32>
    %c48 = arith.constant 48 : index
    %334 = memref.load %arg3[%c48] : memref<147xf32, #tpu.memory_space<smem>>
    %335 = vector.broadcast %334 : f32 to vector<8x159xf32>
    %336 = arith.mulf %335, %112 : vector<8x159xf32>
    %337 = arith.addf %333, %336 : vector<8x159xf32>
    %338 = vector.broadcast %55 : vector<1x159xf32> to vector<8x159xf32>
    %339 = arith.mulf %337, %338 : vector<8x159xf32>
    %340 = vector.broadcast %56 : vector<1x159xf32> to vector<8x159xf32>
    %341 = arith.addf %339, %340 : vector<8x159xf32>
    %cst_77 = arith.constant 0.000000e+00 : f32
    %342 = vector.broadcast %cst_77 : f32 to vector<8x159xf32>
    %343 = arith.maximumf %341, %342 : vector<8x159xf32>
    %344 = arith.addf %145, %178 : vector<8x159xf32>
    %345 = arith.addf %344, %211 : vector<8x159xf32>
    %346 = arith.addf %345, %244 : vector<8x159xf32>
    %347 = arith.addf %346, %277 : vector<8x159xf32>
    %348 = arith.addf %347, %310 : vector<8x159xf32>
    %349 = arith.addf %348, %343 : vector<8x159xf32>
    %cst_78 = arith.constant 0.142857149 : f32
    %350 = vector.broadcast %cst_78 : f32 to vector<8x159xf32>
    %351 = arith.mulf %349, %350 : vector<8x159xf32>
    %cst_79 = arith.constant dense<0.000000e+00> : vector<8x40xf32>
    %352 = tpu.matmul %351, %57, %cst_79 {dimension_numbers = #tpu.dot_dimension_numbers<[1], [0], [0], [1], [0, 0, 1, 1], [], []>} : vector<8x159xf32>, vector<159x40xf32>, vector<8x40xf32> -> vector<8x40xf32>
    %353 = vector.broadcast %58 : vector<1x40xf32> to vector<8x40xf32>
    %354 = arith.addf %352, %353 : vector<8x40xf32>
    %cst_80 = arith.constant 0.000000e+00 : f32
    %355 = vector.broadcast %cst_80 : f32 to vector<8x40xf32>
    %356 = arith.maximumf %354, %355 : vector<8x40xf32>
    %cst_81 = arith.constant dense<0.000000e+00> : vector<8x159xf32>
    %357 = tpu.matmul %356, %59, %cst_81 {dimension_numbers = #tpu.dot_dimension_numbers<[1], [0], [0], [1], [0, 0, 1, 1], [], []>} : vector<8x40xf32>, vector<40x159xf32>, vector<8x159xf32> -> vector<8x159xf32>
    %358 = vector.broadcast %60 : vector<1x159xf32> to vector<8x159xf32>
    %359 = arith.addf %357, %358 : vector<8x159xf32>
    %cst_82 = arith.constant 3.000000e+00 : f32
    %360 = vector.broadcast %cst_82 : f32 to vector<8x159xf32>
    %361 = arith.addf %359, %360 : vector<8x159xf32>
    %cst_83 = arith.constant 0.000000e+00 : f32
    %cst_84 = arith.constant 6.000000e+00 : f32
    %362 = vector.broadcast %cst_83 : f32 to vector<8x159xf32>
    %363 = arith.maximumf %362, %361 : vector<8x159xf32>
    %364 = vector.broadcast %cst_84 : f32 to vector<8x159xf32>
    %365 = arith.minimumf %364, %363 : vector<8x159xf32>
    %cst_85 = arith.constant 0.166666672 : f32
    %366 = vector.broadcast %cst_85 : f32 to vector<8x159xf32>
    %367 = arith.mulf %365, %366 : vector<8x159xf32>
    %368 = arith.mulf %145, %367 : vector<8x159xf32>
    %cst_86 = arith.constant dense<0.000000e+00> : vector<8x56xf32>
    %369 = tpu.matmul %368, %61, %cst_86 {dimension_numbers = #tpu.dot_dimension_numbers<[1], [0], [0], [1], [0, 0, 1, 1], [], []>} : vector<8x159xf32>, vector<159x56xf32>, vector<8x56xf32> -> vector<8x56xf32>
    %370 = vector.broadcast %62 : vector<1x56xf32> to vector<8x56xf32>
    %371 = arith.mulf %369, %370 : vector<8x56xf32>
    %372 = vector.broadcast %63 : vector<1x56xf32> to vector<8x56xf32>
    %373 = arith.addf %371, %372 : vector<8x56xf32>
    %374 = arith.addf %373, %9 : vector<8x56xf32>
    %375 = arith.mulf %178, %367 : vector<8x159xf32>
    %cst_87 = arith.constant dense<0.000000e+00> : vector<8x56xf32>
    %376 = tpu.matmul %375, %61, %cst_87 {dimension_numbers = #tpu.dot_dimension_numbers<[1], [0], [0], [1], [0, 0, 1, 1], [], []>} : vector<8x159xf32>, vector<159x56xf32>, vector<8x56xf32> -> vector<8x56xf32>
    %377 = vector.broadcast %62 : vector<1x56xf32> to vector<8x56xf32>
    %378 = arith.mulf %376, %377 : vector<8x56xf32>
    %379 = vector.broadcast %63 : vector<1x56xf32> to vector<8x56xf32>
    %380 = arith.addf %378, %379 : vector<8x56xf32>
    %381 = arith.addf %380, %16 : vector<8x56xf32>
    %382 = arith.mulf %211, %367 : vector<8x159xf32>
    %cst_88 = arith.constant dense<0.000000e+00> : vector<8x56xf32>
    %383 = tpu.matmul %382, %61, %cst_88 {dimension_numbers = #tpu.dot_dimension_numbers<[1], [0], [0], [1], [0, 0, 1, 1], [], []>} : vector<8x159xf32>, vector<159x56xf32>, vector<8x56xf32> -> vector<8x56xf32>
    %384 = vector.broadcast %62 : vector<1x56xf32> to vector<8x56xf32>
    %385 = arith.mulf %383, %384 : vector<8x56xf32>
    %386 = vector.broadcast %63 : vector<1x56xf32> to vector<8x56xf32>
    %387 = arith.addf %385, %386 : vector<8x56xf32>
    %388 = arith.addf %387, %23 : vector<8x56xf32>
    %389 = arith.mulf %244, %367 : vector<8x159xf32>
    %cst_89 = arith.constant dense<0.000000e+00> : vector<8x56xf32>
    %390 = tpu.matmul %389, %61, %cst_89 {dimension_numbers = #tpu.dot_dimension_numbers<[1], [0], [0], [1], [0, 0, 1, 1], [], []>} : vector<8x159xf32>, vector<159x56xf32>, vector<8x56xf32> -> vector<8x56xf32>
    %391 = vector.broadcast %62 : vector<1x56xf32> to vector<8x56xf32>
    %392 = arith.mulf %390, %391 : vector<8x56xf32>
    %393 = vector.broadcast %63 : vector<1x56xf32> to vector<8x56xf32>
    %394 = arith.addf %392, %393 : vector<8x56xf32>
    %395 = arith.addf %394, %30 : vector<8x56xf32>
    %396 = arith.mulf %277, %367 : vector<8x159xf32>
    %cst_90 = arith.constant dense<0.000000e+00> : vector<8x56xf32>
    %397 = tpu.matmul %396, %61, %cst_90 {dimension_numbers = #tpu.dot_dimension_numbers<[1], [0], [0], [1], [0, 0, 1, 1], [], []>} : vector<8x159xf32>, vector<159x56xf32>, vector<8x56xf32> -> vector<8x56xf32>
    %398 = vector.broadcast %62 : vector<1x56xf32> to vector<8x56xf32>
    %399 = arith.mulf %397, %398 : vector<8x56xf32>
    %400 = vector.broadcast %63 : vector<1x56xf32> to vector<8x56xf32>
    %401 = arith.addf %399, %400 : vector<8x56xf32>
    %402 = arith.addf %401, %37 : vector<8x56xf32>
    %403 = arith.mulf %310, %367 : vector<8x159xf32>
    %cst_91 = arith.constant dense<0.000000e+00> : vector<8x56xf32>
    %404 = tpu.matmul %403, %61, %cst_91 {dimension_numbers = #tpu.dot_dimension_numbers<[1], [0], [0], [1], [0, 0, 1, 1], [], []>} : vector<8x159xf32>, vector<159x56xf32>, vector<8x56xf32> -> vector<8x56xf32>
    %405 = vector.broadcast %62 : vector<1x56xf32> to vector<8x56xf32>
    %406 = arith.mulf %404, %405 : vector<8x56xf32>
    %407 = vector.broadcast %63 : vector<1x56xf32> to vector<8x56xf32>
    %408 = arith.addf %406, %407 : vector<8x56xf32>
    %409 = arith.addf %408, %44 : vector<8x56xf32>
    %410 = arith.mulf %343, %367 : vector<8x159xf32>
    %cst_92 = arith.constant dense<0.000000e+00> : vector<8x56xf32>
    %411 = tpu.matmul %410, %61, %cst_92 {dimension_numbers = #tpu.dot_dimension_numbers<[1], [0], [0], [1], [0, 0, 1, 1], [], []>} : vector<8x159xf32>, vector<159x56xf32>, vector<8x56xf32> -> vector<8x56xf32>
    %412 = vector.broadcast %62 : vector<1x56xf32> to vector<8x56xf32>
    %413 = arith.mulf %411, %412 : vector<8x56xf32>
    %414 = vector.broadcast %63 : vector<1x56xf32> to vector<8x56xf32>
    %415 = arith.addf %413, %414 : vector<8x56xf32>
    %416 = arith.addf %415, %51 : vector<8x56xf32>
    %c0_93 = arith.constant 0 : index
    %c0_94 = arith.constant 0 : index
    %417 = vector.load %arg19[%c0_93, %c0_94] : memref<56x159xf32, #tpu.memory_space<vmem>>, vector<56x159xf32>
    %c0_95 = arith.constant 0 : index
    %c0_96 = arith.constant 0 : index
    %418 = vector.load %arg14[%c0_95, %c0_96] : memref<1x159xf32, #tpu.memory_space<vmem>>, vector<1x159xf32>
    %c0_97 = arith.constant 0 : index
    %c0_98 = arith.constant 0 : index
    %419 = vector.load %arg13[%c0_97, %c0_98] : memref<1x159xf32, #tpu.memory_space<vmem>>, vector<1x159xf32>
    %c0_99 = arith.constant 0 : index
    %c0_100 = arith.constant 0 : index
    %420 = vector.load %arg12[%c0_99, %c0_100] : memref<1x159xf32, #tpu.memory_space<vmem>>, vector<1x159xf32>
    %c0_101 = arith.constant 0 : index
    %c0_102 = arith.constant 0 : index
    %421 = vector.load %arg11[%c0_101, %c0_102] : memref<1x159xf32, #tpu.memory_space<vmem>>, vector<1x159xf32>
    %c0_103 = arith.constant 0 : index
    %c0_104 = arith.constant 0 : index
    %422 = vector.load %arg17[%c0_103, %c0_104] : memref<159x40xf32, #tpu.memory_space<vmem>>, vector<159x40xf32>
    %c0_105 = arith.constant 0 : index
    %c0_106 = arith.constant 0 : index
    %423 = vector.load %arg9[%c0_105, %c0_106] : memref<1x40xf32, #tpu.memory_space<vmem>>, vector<1x40xf32>
    %c0_107 = arith.constant 0 : index
    %c0_108 = arith.constant 0 : index
    %424 = vector.load %arg18[%c0_107, %c0_108] : memref<40x159xf32, #tpu.memory_space<vmem>>, vector<40x159xf32>
    %c0_109 = arith.constant 0 : index
    %c0_110 = arith.constant 0 : index
    %425 = vector.load %arg10[%c0_109, %c0_110] : memref<1x159xf32, #tpu.memory_space<vmem>>, vector<1x159xf32>
    %c0_111 = arith.constant 0 : index
    %c0_112 = arith.constant 0 : index
    %426 = vector.load %arg20[%c0_111, %c0_112] : memref<159x56xf32, #tpu.memory_space<vmem>>, vector<159x56xf32>
    %c0_113 = arith.constant 0 : index
    %c0_114 = arith.constant 0 : index
    %427 = vector.load %arg16[%c0_113, %c0_114] : memref<1x56xf32, #tpu.memory_space<vmem>>, vector<1x56xf32>
    %c0_115 = arith.constant 0 : index
    %c0_116 = arith.constant 0 : index
    %428 = vector.load %arg15[%c0_115, %c0_116] : memref<1x56xf32, #tpu.memory_space<vmem>>, vector<1x56xf32>
    %cst_117 = arith.constant dense<0.000000e+00> : vector<8x159xf32>
    %429 = tpu.matmul %374, %417, %cst_117 {dimension_numbers = #tpu.dot_dimension_numbers<[1], [0], [0], [1], [0, 0, 1, 1], [], []>} : vector<8x56xf32>, vector<56x159xf32>, vector<8x159xf32> -> vector<8x159xf32>
    %430 = vector.broadcast %418 : vector<1x159xf32> to vector<8x159xf32>
    %431 = arith.mulf %429, %430 : vector<8x159xf32>
    %432 = vector.broadcast %419 : vector<1x159xf32> to vector<8x159xf32>
    %433 = arith.addf %431, %432 : vector<8x159xf32>
    %cst_118 = arith.constant 3.000000e+00 : f32
    %434 = vector.broadcast %cst_118 : f32 to vector<8x159xf32>
    %435 = arith.addf %433, %434 : vector<8x159xf32>
    %cst_119 = arith.constant 0.000000e+00 : f32
    %cst_120 = arith.constant 6.000000e+00 : f32
    %436 = vector.broadcast %cst_119 : f32 to vector<8x159xf32>
    %437 = arith.maximumf %436, %435 : vector<8x159xf32>
    %438 = vector.broadcast %cst_120 : f32 to vector<8x159xf32>
    %439 = arith.minimumf %438, %437 : vector<8x159xf32>
    %440 = arith.mulf %433, %439 : vector<8x159xf32>
    %cst_121 = arith.constant 0.166666672 : f32
    %441 = vector.broadcast %cst_121 : f32 to vector<8x159xf32>
    %442 = arith.mulf %440, %441 : vector<8x159xf32>
    %cst_122 = arith.constant dense<0.000000e+00> : vector<8x159xf32>
    %443 = tpu.matmul %381, %417, %cst_122 {dimension_numbers = #tpu.dot_dimension_numbers<[1], [0], [0], [1], [0, 0, 1, 1], [], []>} : vector<8x56xf32>, vector<56x159xf32>, vector<8x159xf32> -> vector<8x159xf32>
    %444 = vector.broadcast %418 : vector<1x159xf32> to vector<8x159xf32>
    %445 = arith.mulf %443, %444 : vector<8x159xf32>
    %446 = vector.broadcast %419 : vector<1x159xf32> to vector<8x159xf32>
    %447 = arith.addf %445, %446 : vector<8x159xf32>
    %cst_123 = arith.constant 3.000000e+00 : f32
    %448 = vector.broadcast %cst_123 : f32 to vector<8x159xf32>
    %449 = arith.addf %447, %448 : vector<8x159xf32>
    %cst_124 = arith.constant 0.000000e+00 : f32
    %cst_125 = arith.constant 6.000000e+00 : f32
    %450 = vector.broadcast %cst_124 : f32 to vector<8x159xf32>
    %451 = arith.maximumf %450, %449 : vector<8x159xf32>
    %452 = vector.broadcast %cst_125 : f32 to vector<8x159xf32>
    %453 = arith.minimumf %452, %451 : vector<8x159xf32>
    %454 = arith.mulf %447, %453 : vector<8x159xf32>
    %cst_126 = arith.constant 0.166666672 : f32
    %455 = vector.broadcast %cst_126 : f32 to vector<8x159xf32>
    %456 = arith.mulf %454, %455 : vector<8x159xf32>
    %cst_127 = arith.constant dense<0.000000e+00> : vector<8x159xf32>
    %457 = tpu.matmul %388, %417, %cst_127 {dimension_numbers = #tpu.dot_dimension_numbers<[1], [0], [0], [1], [0, 0, 1, 1], [], []>} : vector<8x56xf32>, vector<56x159xf32>, vector<8x159xf32> -> vector<8x159xf32>
    %458 = vector.broadcast %418 : vector<1x159xf32> to vector<8x159xf32>
    %459 = arith.mulf %457, %458 : vector<8x159xf32>
    %460 = vector.broadcast %419 : vector<1x159xf32> to vector<8x159xf32>
    %461 = arith.addf %459, %460 : vector<8x159xf32>
    %cst_128 = arith.constant 3.000000e+00 : f32
    %462 = vector.broadcast %cst_128 : f32 to vector<8x159xf32>
    %463 = arith.addf %461, %462 : vector<8x159xf32>
    %cst_129 = arith.constant 0.000000e+00 : f32
    %cst_130 = arith.constant 6.000000e+00 : f32
    %464 = vector.broadcast %cst_129 : f32 to vector<8x159xf32>
    %465 = arith.maximumf %464, %463 : vector<8x159xf32>
    %466 = vector.broadcast %cst_130 : f32 to vector<8x159xf32>
    %467 = arith.minimumf %466, %465 : vector<8x159xf32>
    %468 = arith.mulf %461, %467 : vector<8x159xf32>
    %cst_131 = arith.constant 0.166666672 : f32
    %469 = vector.broadcast %cst_131 : f32 to vector<8x159xf32>
    %470 = arith.mulf %468, %469 : vector<8x159xf32>
    %cst_132 = arith.constant dense<0.000000e+00> : vector<8x159xf32>
    %471 = tpu.matmul %395, %417, %cst_132 {dimension_numbers = #tpu.dot_dimension_numbers<[1], [0], [0], [1], [0, 0, 1, 1], [], []>} : vector<8x56xf32>, vector<56x159xf32>, vector<8x159xf32> -> vector<8x159xf32>
    %472 = vector.broadcast %418 : vector<1x159xf32> to vector<8x159xf32>
    %473 = arith.mulf %471, %472 : vector<8x159xf32>
    %474 = vector.broadcast %419 : vector<1x159xf32> to vector<8x159xf32>
    %475 = arith.addf %473, %474 : vector<8x159xf32>
    %cst_133 = arith.constant 3.000000e+00 : f32
    %476 = vector.broadcast %cst_133 : f32 to vector<8x159xf32>
    %477 = arith.addf %475, %476 : vector<8x159xf32>
    %cst_134 = arith.constant 0.000000e+00 : f32
    %cst_135 = arith.constant 6.000000e+00 : f32
    %478 = vector.broadcast %cst_134 : f32 to vector<8x159xf32>
    %479 = arith.maximumf %478, %477 : vector<8x159xf32>
    %480 = vector.broadcast %cst_135 : f32 to vector<8x159xf32>
    %481 = arith.minimumf %480, %479 : vector<8x159xf32>
    %482 = arith.mulf %475, %481 : vector<8x159xf32>
    %cst_136 = arith.constant 0.166666672 : f32
    %483 = vector.broadcast %cst_136 : f32 to vector<8x159xf32>
    %484 = arith.mulf %482, %483 : vector<8x159xf32>
    %cst_137 = arith.constant dense<0.000000e+00> : vector<8x159xf32>
    %485 = tpu.matmul %402, %417, %cst_137 {dimension_numbers = #tpu.dot_dimension_numbers<[1], [0], [0], [1], [0, 0, 1, 1], [], []>} : vector<8x56xf32>, vector<56x159xf32>, vector<8x159xf32> -> vector<8x159xf32>
    %486 = vector.broadcast %418 : vector<1x159xf32> to vector<8x159xf32>
    %487 = arith.mulf %485, %486 : vector<8x159xf32>
    %488 = vector.broadcast %419 : vector<1x159xf32> to vector<8x159xf32>
    %489 = arith.addf %487, %488 : vector<8x159xf32>
    %cst_138 = arith.constant 3.000000e+00 : f32
    %490 = vector.broadcast %cst_138 : f32 to vector<8x159xf32>
    %491 = arith.addf %489, %490 : vector<8x159xf32>
    %cst_139 = arith.constant 0.000000e+00 : f32
    %cst_140 = arith.constant 6.000000e+00 : f32
    %492 = vector.broadcast %cst_139 : f32 to vector<8x159xf32>
    %493 = arith.maximumf %492, %491 : vector<8x159xf32>
    %494 = vector.broadcast %cst_140 : f32 to vector<8x159xf32>
    %495 = arith.minimumf %494, %493 : vector<8x159xf32>
    %496 = arith.mulf %489, %495 : vector<8x159xf32>
    %cst_141 = arith.constant 0.166666672 : f32
    %497 = vector.broadcast %cst_141 : f32 to vector<8x159xf32>
    %498 = arith.mulf %496, %497 : vector<8x159xf32>
    %cst_142 = arith.constant dense<0.000000e+00> : vector<8x159xf32>
    %499 = tpu.matmul %409, %417, %cst_142 {dimension_numbers = #tpu.dot_dimension_numbers<[1], [0], [0], [1], [0, 0, 1, 1], [], []>} : vector<8x56xf32>, vector<56x159xf32>, vector<8x159xf32> -> vector<8x159xf32>
    %500 = vector.broadcast %418 : vector<1x159xf32> to vector<8x159xf32>
    %501 = arith.mulf %499, %500 : vector<8x159xf32>
    %502 = vector.broadcast %419 : vector<1x159xf32> to vector<8x159xf32>
    %503 = arith.addf %501, %502 : vector<8x159xf32>
    %cst_143 = arith.constant 3.000000e+00 : f32
    %504 = vector.broadcast %cst_143 : f32 to vector<8x159xf32>
    %505 = arith.addf %503, %504 : vector<8x159xf32>
    %cst_144 = arith.constant 0.000000e+00 : f32
    %cst_145 = arith.constant 6.000000e+00 : f32
    %506 = vector.broadcast %cst_144 : f32 to vector<8x159xf32>
    %507 = arith.maximumf %506, %505 : vector<8x159xf32>
    %508 = vector.broadcast %cst_145 : f32 to vector<8x159xf32>
    %509 = arith.minimumf %508, %507 : vector<8x159xf32>
    %510 = arith.mulf %503, %509 : vector<8x159xf32>
    %cst_146 = arith.constant 0.166666672 : f32
    %511 = vector.broadcast %cst_146 : f32 to vector<8x159xf32>
    %512 = arith.mulf %510, %511 : vector<8x159xf32>
    %cst_147 = arith.constant dense<0.000000e+00> : vector<8x159xf32>
    %513 = tpu.matmul %416, %417, %cst_147 {dimension_numbers = #tpu.dot_dimension_numbers<[1], [0], [0], [1], [0, 0, 1, 1], [], []>} : vector<8x56xf32>, vector<56x159xf32>, vector<8x159xf32> -> vector<8x159xf32>
    %514 = vector.broadcast %418 : vector<1x159xf32> to vector<8x159xf32>
    %515 = arith.mulf %513, %514 : vector<8x159xf32>
    %516 = vector.broadcast %419 : vector<1x159xf32> to vector<8x159xf32>
    %517 = arith.addf %515, %516 : vector<8x159xf32>
    %cst_148 = arith.constant 3.000000e+00 : f32
    %518 = vector.broadcast %cst_148 : f32 to vector<8x159xf32>
    %519 = arith.addf %517, %518 : vector<8x159xf32>
    %cst_149 = arith.constant 0.000000e+00 : f32
    %cst_150 = arith.constant 6.000000e+00 : f32
    %520 = vector.broadcast %cst_149 : f32 to vector<8x159xf32>
    %521 = arith.maximumf %520, %519 : vector<8x159xf32>
    %522 = vector.broadcast %cst_150 : f32 to vector<8x159xf32>
    %523 = arith.minimumf %522, %521 : vector<8x159xf32>
    %524 = arith.mulf %517, %523 : vector<8x159xf32>
    %cst_151 = arith.constant 0.166666672 : f32
    %525 = vector.broadcast %cst_151 : f32 to vector<8x159xf32>
    %526 = arith.mulf %524, %525 : vector<8x159xf32>
    %c49 = arith.constant 49 : index
    %527 = memref.load %arg3[%c49] : memref<147xf32, #tpu.memory_space<smem>>
    %528 = vector.broadcast %527 : f32 to vector<8x159xf32>
    %529 = arith.mulf %528, %442 : vector<8x159xf32>
    %c50 = arith.constant 50 : index
    %530 = memref.load %arg3[%c50] : memref<147xf32, #tpu.memory_space<smem>>
    %531 = vector.broadcast %530 : f32 to vector<8x159xf32>
    %532 = arith.mulf %531, %456 : vector<8x159xf32>
    %533 = arith.addf %529, %532 : vector<8x159xf32>
    %c51 = arith.constant 51 : index
    %534 = memref.load %arg3[%c51] : memref<147xf32, #tpu.memory_space<smem>>
    %535 = vector.broadcast %534 : f32 to vector<8x159xf32>
    %536 = arith.mulf %535, %470 : vector<8x159xf32>
    %537 = arith.addf %533, %536 : vector<8x159xf32>
    %c52 = arith.constant 52 : index
    %538 = memref.load %arg3[%c52] : memref<147xf32, #tpu.memory_space<smem>>
    %539 = vector.broadcast %538 : f32 to vector<8x159xf32>
    %540 = arith.mulf %539, %484 : vector<8x159xf32>
    %541 = arith.addf %537, %540 : vector<8x159xf32>
    %c53 = arith.constant 53 : index
    %542 = memref.load %arg3[%c53] : memref<147xf32, #tpu.memory_space<smem>>
    %543 = vector.broadcast %542 : f32 to vector<8x159xf32>
    %544 = arith.mulf %543, %498 : vector<8x159xf32>
    %545 = arith.addf %541, %544 : vector<8x159xf32>
    %c54 = arith.constant 54 : index
    %546 = memref.load %arg3[%c54] : memref<147xf32, #tpu.memory_space<smem>>
    %547 = vector.broadcast %546 : f32 to vector<8x159xf32>
    %548 = arith.mulf %547, %512 : vector<8x159xf32>
    %549 = arith.addf %545, %548 : vector<8x159xf32>
    %c55 = arith.constant 55 : index
    %550 = memref.load %arg3[%c55] : memref<147xf32, #tpu.memory_space<smem>>
    %551 = vector.broadcast %550 : f32 to vector<8x159xf32>
    %552 = arith.mulf %551, %526 : vector<8x159xf32>
    %553 = arith.addf %549, %552 : vector<8x159xf32>
    %554 = vector.broadcast %420 : vector<1x159xf32> to vector<8x159xf32>
    %555 = arith.mulf %553, %554 : vector<8x159xf32>
    %556 = vector.broadcast %421 : vector<1x159xf32> to vector<8x159xf32>
    %557 = arith.addf %555, %556 : vector<8x159xf32>
    %cst_152 = arith.constant 3.000000e+00 : f32
    %558 = vector.broadcast %cst_152 : f32 to vector<8x159xf32>
    %559 = arith.addf %557, %558 : vector<8x159xf32>
    %cst_153 = arith.constant 0.000000e+00 : f32
    %cst_154 = arith.constant 6.000000e+00 : f32
    %560 = vector.broadcast %cst_153 : f32 to vector<8x159xf32>
    %561 = arith.maximumf %560, %559 : vector<8x159xf32>
    %562 = vector.broadcast %cst_154 : f32 to vector<8x159xf32>
    %563 = arith.minimumf %562, %561 : vector<8x159xf32>
    %564 = arith.mulf %557, %563 : vector<8x159xf32>
    %cst_155 = arith.constant 0.166666672 : f32
    %565 = vector.broadcast %cst_155 : f32 to vector<8x159xf32>
    %566 = arith.mulf %564, %565 : vector<8x159xf32>
    %c56 = arith.constant 56 : index
    %567 = memref.load %arg3[%c56] : memref<147xf32, #tpu.memory_space<smem>>
    %568 = vector.broadcast %567 : f32 to vector<8x159xf32>
    %569 = arith.mulf %568, %442 : vector<8x159xf32>
    %c57 = arith.constant 57 : index
    %570 = memref.load %arg3[%c57] : memref<147xf32, #tpu.memory_space<smem>>
    %571 = vector.broadcast %570 : f32 to vector<8x159xf32>
    %572 = arith.mulf %571, %456 : vector<8x159xf32>
    %573 = arith.addf %569, %572 : vector<8x159xf32>
    %c58 = arith.constant 58 : index
    %574 = memref.load %arg3[%c58] : memref<147xf32, #tpu.memory_space<smem>>
    %575 = vector.broadcast %574 : f32 to vector<8x159xf32>
    %576 = arith.mulf %575, %470 : vector<8x159xf32>
    %577 = arith.addf %573, %576 : vector<8x159xf32>
    %c59 = arith.constant 59 : index
    %578 = memref.load %arg3[%c59] : memref<147xf32, #tpu.memory_space<smem>>
    %579 = vector.broadcast %578 : f32 to vector<8x159xf32>
    %580 = arith.mulf %579, %484 : vector<8x159xf32>
    %581 = arith.addf %577, %580 : vector<8x159xf32>
    %c60 = arith.constant 60 : index
    %582 = memref.load %arg3[%c60] : memref<147xf32, #tpu.memory_space<smem>>
    %583 = vector.broadcast %582 : f32 to vector<8x159xf32>
    %584 = arith.mulf %583, %498 : vector<8x159xf32>
    %585 = arith.addf %581, %584 : vector<8x159xf32>
    %c61 = arith.constant 61 : index
    %586 = memref.load %arg3[%c61] : memref<147xf32, #tpu.memory_space<smem>>
    %587 = vector.broadcast %586 : f32 to vector<8x159xf32>
    %588 = arith.mulf %587, %512 : vector<8x159xf32>
    %589 = arith.addf %585, %588 : vector<8x159xf32>
    %c62 = arith.constant 62 : index
    %590 = memref.load %arg3[%c62] : memref<147xf32, #tpu.memory_space<smem>>
    %591 = vector.broadcast %590 : f32 to vector<8x159xf32>
    %592 = arith.mulf %591, %526 : vector<8x159xf32>
    %593 = arith.addf %589, %592 : vector<8x159xf32>
    %594 = vector.broadcast %420 : vector<1x159xf32> to vector<8x159xf32>
    %595 = arith.mulf %593, %594 : vector<8x159xf32>
    %596 = vector.broadcast %421 : vector<1x159xf32> to vector<8x159xf32>
    %597 = arith.addf %595, %596 : vector<8x159xf32>
    %cst_156 = arith.constant 3.000000e+00 : f32
    %598 = vector.broadcast %cst_156 : f32 to vector<8x159xf32>
    %599 = arith.addf %597, %598 : vector<8x159xf32>
    %cst_157 = arith.constant 0.000000e+00 : f32
    %cst_158 = arith.constant 6.000000e+00 : f32
    %600 = vector.broadcast %cst_157 : f32 to vector<8x159xf32>
    %601 = arith.maximumf %600, %599 : vector<8x159xf32>
    %602 = vector.broadcast %cst_158 : f32 to vector<8x159xf32>
    %603 = arith.minimumf %602, %601 : vector<8x159xf32>
    %604 = arith.mulf %597, %603 : vector<8x159xf32>
    %cst_159 = arith.constant 0.166666672 : f32
    %605 = vector.broadcast %cst_159 : f32 to vector<8x159xf32>
    %606 = arith.mulf %604, %605 : vector<8x159xf32>
    %c63 = arith.constant 63 : index
    %607 = memref.load %arg3[%c63] : memref<147xf32, #tpu.memory_space<smem>>
    %608 = vector.broadcast %607 : f32 to vector<8x159xf32>
    %609 = arith.mulf %608, %442 : vector<8x159xf32>
    %c64 = arith.constant 64 : index
    %610 = memref.load %arg3[%c64] : memref<147xf32, #tpu.memory_space<smem>>
    %611 = vector.broadcast %610 : f32 to vector<8x159xf32>
    %612 = arith.mulf %611, %456 : vector<8x159xf32>
    %613 = arith.addf %609, %612 : vector<8x159xf32>
    %c65 = arith.constant 65 : index
    %614 = memref.load %arg3[%c65] : memref<147xf32, #tpu.memory_space<smem>>
    %615 = vector.broadcast %614 : f32 to vector<8x159xf32>
    %616 = arith.mulf %615, %470 : vector<8x159xf32>
    %617 = arith.addf %613, %616 : vector<8x159xf32>
    %c66 = arith.constant 66 : index
    %618 = memref.load %arg3[%c66] : memref<147xf32, #tpu.memory_space<smem>>
    %619 = vector.broadcast %618 : f32 to vector<8x159xf32>
    %620 = arith.mulf %619, %484 : vector<8x159xf32>
    %621 = arith.addf %617, %620 : vector<8x159xf32>
    %c67 = arith.constant 67 : index
    %622 = memref.load %arg3[%c67] : memref<147xf32, #tpu.memory_space<smem>>
    %623 = vector.broadcast %622 : f32 to vector<8x159xf32>
    %624 = arith.mulf %623, %498 : vector<8x159xf32>
    %625 = arith.addf %621, %624 : vector<8x159xf32>
    %c68 = arith.constant 68 : index
    %626 = memref.load %arg3[%c68] : memref<147xf32, #tpu.memory_space<smem>>
    %627 = vector.broadcast %626 : f32 to vector<8x159xf32>
    %628 = arith.mulf %627, %512 : vector<8x159xf32>
    %629 = arith.addf %625, %628 : vector<8x159xf32>
    %c69 = arith.constant 69 : index
    %630 = memref.load %arg3[%c69] : memref<147xf32, #tpu.memory_space<smem>>
    %631 = vector.broadcast %630 : f32 to vector<8x159xf32>
    %632 = arith.mulf %631, %526 : vector<8x159xf32>
    %633 = arith.addf %629, %632 : vector<8x159xf32>
    %634 = vector.broadcast %420 : vector<1x159xf32> to vector<8x159xf32>
    %635 = arith.mulf %633, %634 : vector<8x159xf32>
    %636 = vector.broadcast %421 : vector<1x159xf32> to vector<8x159xf32>
    %637 = arith.addf %635, %636 : vector<8x159xf32>
    %cst_160 = arith.constant 3.000000e+00 : f32
    %638 = vector.broadcast %cst_160 : f32 to vector<8x159xf32>
    %639 = arith.addf %637, %638 : vector<8x159xf32>
    %cst_161 = arith.constant 0.000000e+00 : f32
    %cst_162 = arith.constant 6.000000e+00 : f32
    %640 = vector.broadcast %cst_161 : f32 to vector<8x159xf32>
    %641 = arith.maximumf %640, %639 : vector<8x159xf32>
    %642 = vector.broadcast %cst_162 : f32 to vector<8x159xf32>
    %643 = arith.minimumf %642, %641 : vector<8x159xf32>
    %644 = arith.mulf %637, %643 : vector<8x159xf32>
    %cst_163 = arith.constant 0.166666672 : f32
    %645 = vector.broadcast %cst_163 : f32 to vector<8x159xf32>
    %646 = arith.mulf %644, %645 : vector<8x159xf32>
    %c70 = arith.constant 70 : index
    %647 = memref.load %arg3[%c70] : memref<147xf32, #tpu.memory_space<smem>>
    %648 = vector.broadcast %647 : f32 to vector<8x159xf32>
    %649 = arith.mulf %648, %442 : vector<8x159xf32>
    %c71 = arith.constant 71 : index
    %650 = memref.load %arg3[%c71] : memref<147xf32, #tpu.memory_space<smem>>
    %651 = vector.broadcast %650 : f32 to vector<8x159xf32>
    %652 = arith.mulf %651, %456 : vector<8x159xf32>
    %653 = arith.addf %649, %652 : vector<8x159xf32>
    %c72 = arith.constant 72 : index
    %654 = memref.load %arg3[%c72] : memref<147xf32, #tpu.memory_space<smem>>
    %655 = vector.broadcast %654 : f32 to vector<8x159xf32>
    %656 = arith.mulf %655, %470 : vector<8x159xf32>
    %657 = arith.addf %653, %656 : vector<8x159xf32>
    %c73 = arith.constant 73 : index
    %658 = memref.load %arg3[%c73] : memref<147xf32, #tpu.memory_space<smem>>
    %659 = vector.broadcast %658 : f32 to vector<8x159xf32>
    %660 = arith.mulf %659, %484 : vector<8x159xf32>
    %661 = arith.addf %657, %660 : vector<8x159xf32>
    %c74 = arith.constant 74 : index
    %662 = memref.load %arg3[%c74] : memref<147xf32, #tpu.memory_space<smem>>
    %663 = vector.broadcast %662 : f32 to vector<8x159xf32>
    %664 = arith.mulf %663, %498 : vector<8x159xf32>
    %665 = arith.addf %661, %664 : vector<8x159xf32>
    %c75 = arith.constant 75 : index
    %666 = memref.load %arg3[%c75] : memref<147xf32, #tpu.memory_space<smem>>
    %667 = vector.broadcast %666 : f32 to vector<8x159xf32>
    %668 = arith.mulf %667, %512 : vector<8x159xf32>
    %669 = arith.addf %665, %668 : vector<8x159xf32>
    %c76 = arith.constant 76 : index
    %670 = memref.load %arg3[%c76] : memref<147xf32, #tpu.memory_space<smem>>
    %671 = vector.broadcast %670 : f32 to vector<8x159xf32>
    %672 = arith.mulf %671, %526 : vector<8x159xf32>
    %673 = arith.addf %669, %672 : vector<8x159xf32>
    %674 = vector.broadcast %420 : vector<1x159xf32> to vector<8x159xf32>
    %675 = arith.mulf %673, %674 : vector<8x159xf32>
    %676 = vector.broadcast %421 : vector<1x159xf32> to vector<8x159xf32>
    %677 = arith.addf %675, %676 : vector<8x159xf32>
    %cst_164 = arith.constant 3.000000e+00 : f32
    %678 = vector.broadcast %cst_164 : f32 to vector<8x159xf32>
    %679 = arith.addf %677, %678 : vector<8x159xf32>
    %cst_165 = arith.constant 0.000000e+00 : f32
    %cst_166 = arith.constant 6.000000e+00 : f32
    %680 = vector.broadcast %cst_165 : f32 to vector<8x159xf32>
    %681 = arith.maximumf %680, %679 : vector<8x159xf32>
    %682 = vector.broadcast %cst_166 : f32 to vector<8x159xf32>
    %683 = arith.minimumf %682, %681 : vector<8x159xf32>
    %684 = arith.mulf %677, %683 : vector<8x159xf32>
    %cst_167 = arith.constant 0.166666672 : f32
    %685 = vector.broadcast %cst_167 : f32 to vector<8x159xf32>
    %686 = arith.mulf %684, %685 : vector<8x159xf32>
    %c77 = arith.constant 77 : index
    %687 = memref.load %arg3[%c77] : memref<147xf32, #tpu.memory_space<smem>>
    %688 = vector.broadcast %687 : f32 to vector<8x159xf32>
    %689 = arith.mulf %688, %442 : vector<8x159xf32>
    %c78 = arith.constant 78 : index
    %690 = memref.load %arg3[%c78] : memref<147xf32, #tpu.memory_space<smem>>
    %691 = vector.broadcast %690 : f32 to vector<8x159xf32>
    %692 = arith.mulf %691, %456 : vector<8x159xf32>
    %693 = arith.addf %689, %692 : vector<8x159xf32>
    %c79 = arith.constant 79 : index
    %694 = memref.load %arg3[%c79] : memref<147xf32, #tpu.memory_space<smem>>
    %695 = vector.broadcast %694 : f32 to vector<8x159xf32>
    %696 = arith.mulf %695, %470 : vector<8x159xf32>
    %697 = arith.addf %693, %696 : vector<8x159xf32>
    %c80 = arith.constant 80 : index
    %698 = memref.load %arg3[%c80] : memref<147xf32, #tpu.memory_space<smem>>
    %699 = vector.broadcast %698 : f32 to vector<8x159xf32>
    %700 = arith.mulf %699, %484 : vector<8x159xf32>
    %701 = arith.addf %697, %700 : vector<8x159xf32>
    %c81 = arith.constant 81 : index
    %702 = memref.load %arg3[%c81] : memref<147xf32, #tpu.memory_space<smem>>
    %703 = vector.broadcast %702 : f32 to vector<8x159xf32>
    %704 = arith.mulf %703, %498 : vector<8x159xf32>
    %705 = arith.addf %701, %704 : vector<8x159xf32>
    %c82 = arith.constant 82 : index
    %706 = memref.load %arg3[%c82] : memref<147xf32, #tpu.memory_space<smem>>
    %707 = vector.broadcast %706 : f32 to vector<8x159xf32>
    %708 = arith.mulf %707, %512 : vector<8x159xf32>
    %709 = arith.addf %705, %708 : vector<8x159xf32>
    %c83 = arith.constant 83 : index
    %710 = memref.load %arg3[%c83] : memref<147xf32, #tpu.memory_space<smem>>
    %711 = vector.broadcast %710 : f32 to vector<8x159xf32>
    %712 = arith.mulf %711, %526 : vector<8x159xf32>
    %713 = arith.addf %709, %712 : vector<8x159xf32>
    %714 = vector.broadcast %420 : vector<1x159xf32> to vector<8x159xf32>
    %715 = arith.mulf %713, %714 : vector<8x159xf32>
    %716 = vector.broadcast %421 : vector<1x159xf32> to vector<8x159xf32>
    %717 = arith.addf %715, %716 : vector<8x159xf32>
    %cst_168 = arith.constant 3.000000e+00 : f32
    %718 = vector.broadcast %cst_168 : f32 to vector<8x159xf32>
    %719 = arith.addf %717, %718 : vector<8x159xf32>
    %cst_169 = arith.constant 0.000000e+00 : f32
    %cst_170 = arith.constant 6.000000e+00 : f32
    %720 = vector.broadcast %cst_169 : f32 to vector<8x159xf32>
    %721 = arith.maximumf %720, %719 : vector<8x159xf32>
    %722 = vector.broadcast %cst_170 : f32 to vector<8x159xf32>
    %723 = arith.minimumf %722, %721 : vector<8x159xf32>
    %724 = arith.mulf %717, %723 : vector<8x159xf32>
    %cst_171 = arith.constant 0.166666672 : f32
    %725 = vector.broadcast %cst_171 : f32 to vector<8x159xf32>
    %726 = arith.mulf %724, %725 : vector<8x159xf32>
    %c84 = arith.constant 84 : index
    %727 = memref.load %arg3[%c84] : memref<147xf32, #tpu.memory_space<smem>>
    %728 = vector.broadcast %727 : f32 to vector<8x159xf32>
    %729 = arith.mulf %728, %442 : vector<8x159xf32>
    %c85 = arith.constant 85 : index
    %730 = memref.load %arg3[%c85] : memref<147xf32, #tpu.memory_space<smem>>
    %731 = vector.broadcast %730 : f32 to vector<8x159xf32>
    %732 = arith.mulf %731, %456 : vector<8x159xf32>
    %733 = arith.addf %729, %732 : vector<8x159xf32>
    %c86 = arith.constant 86 : index
    %734 = memref.load %arg3[%c86] : memref<147xf32, #tpu.memory_space<smem>>
    %735 = vector.broadcast %734 : f32 to vector<8x159xf32>
    %736 = arith.mulf %735, %470 : vector<8x159xf32>
    %737 = arith.addf %733, %736 : vector<8x159xf32>
    %c87 = arith.constant 87 : index
    %738 = memref.load %arg3[%c87] : memref<147xf32, #tpu.memory_space<smem>>
    %739 = vector.broadcast %738 : f32 to vector<8x159xf32>
    %740 = arith.mulf %739, %484 : vector<8x159xf32>
    %741 = arith.addf %737, %740 : vector<8x159xf32>
    %c88 = arith.constant 88 : index
    %742 = memref.load %arg3[%c88] : memref<147xf32, #tpu.memory_space<smem>>
    %743 = vector.broadcast %742 : f32 to vector<8x159xf32>
    %744 = arith.mulf %743, %498 : vector<8x159xf32>
    %745 = arith.addf %741, %744 : vector<8x159xf32>
    %c89 = arith.constant 89 : index
    %746 = memref.load %arg3[%c89] : memref<147xf32, #tpu.memory_space<smem>>
    %747 = vector.broadcast %746 : f32 to vector<8x159xf32>
    %748 = arith.mulf %747, %512 : vector<8x159xf32>
    %749 = arith.addf %745, %748 : vector<8x159xf32>
    %c90 = arith.constant 90 : index
    %750 = memref.load %arg3[%c90] : memref<147xf32, #tpu.memory_space<smem>>
    %751 = vector.broadcast %750 : f32 to vector<8x159xf32>
    %752 = arith.mulf %751, %526 : vector<8x159xf32>
    %753 = arith.addf %749, %752 : vector<8x159xf32>
    %754 = vector.broadcast %420 : vector<1x159xf32> to vector<8x159xf32>
    %755 = arith.mulf %753, %754 : vector<8x159xf32>
    %756 = vector.broadcast %421 : vector<1x159xf32> to vector<8x159xf32>
    %757 = arith.addf %755, %756 : vector<8x159xf32>
    %cst_172 = arith.constant 3.000000e+00 : f32
    %758 = vector.broadcast %cst_172 : f32 to vector<8x159xf32>
    %759 = arith.addf %757, %758 : vector<8x159xf32>
    %cst_173 = arith.constant 0.000000e+00 : f32
    %cst_174 = arith.constant 6.000000e+00 : f32
    %760 = vector.broadcast %cst_173 : f32 to vector<8x159xf32>
    %761 = arith.maximumf %760, %759 : vector<8x159xf32>
    %762 = vector.broadcast %cst_174 : f32 to vector<8x159xf32>
    %763 = arith.minimumf %762, %761 : vector<8x159xf32>
    %764 = arith.mulf %757, %763 : vector<8x159xf32>
    %cst_175 = arith.constant 0.166666672 : f32
    %765 = vector.broadcast %cst_175 : f32 to vector<8x159xf32>
    %766 = arith.mulf %764, %765 : vector<8x159xf32>
    %c91 = arith.constant 91 : index
    %767 = memref.load %arg3[%c91] : memref<147xf32, #tpu.memory_space<smem>>
    %768 = vector.broadcast %767 : f32 to vector<8x159xf32>
    %769 = arith.mulf %768, %442 : vector<8x159xf32>
    %c92 = arith.constant 92 : index
    %770 = memref.load %arg3[%c92] : memref<147xf32, #tpu.memory_space<smem>>
    %771 = vector.broadcast %770 : f32 to vector<8x159xf32>
    %772 = arith.mulf %771, %456 : vector<8x159xf32>
    %773 = arith.addf %769, %772 : vector<8x159xf32>
    %c93 = arith.constant 93 : index
    %774 = memref.load %arg3[%c93] : memref<147xf32, #tpu.memory_space<smem>>
    %775 = vector.broadcast %774 : f32 to vector<8x159xf32>
    %776 = arith.mulf %775, %470 : vector<8x159xf32>
    %777 = arith.addf %773, %776 : vector<8x159xf32>
    %c94 = arith.constant 94 : index
    %778 = memref.load %arg3[%c94] : memref<147xf32, #tpu.memory_space<smem>>
    %779 = vector.broadcast %778 : f32 to vector<8x159xf32>
    %780 = arith.mulf %779, %484 : vector<8x159xf32>
    %781 = arith.addf %777, %780 : vector<8x159xf32>
    %c95 = arith.constant 95 : index
    %782 = memref.load %arg3[%c95] : memref<147xf32, #tpu.memory_space<smem>>
    %783 = vector.broadcast %782 : f32 to vector<8x159xf32>
    %784 = arith.mulf %783, %498 : vector<8x159xf32>
    %785 = arith.addf %781, %784 : vector<8x159xf32>
    %c96 = arith.constant 96 : index
    %786 = memref.load %arg3[%c96] : memref<147xf32, #tpu.memory_space<smem>>
    %787 = vector.broadcast %786 : f32 to vector<8x159xf32>
    %788 = arith.mulf %787, %512 : vector<8x159xf32>
    %789 = arith.addf %785, %788 : vector<8x159xf32>
    %c97 = arith.constant 97 : index
    %790 = memref.load %arg3[%c97] : memref<147xf32, #tpu.memory_space<smem>>
    %791 = vector.broadcast %790 : f32 to vector<8x159xf32>
    %792 = arith.mulf %791, %526 : vector<8x159xf32>
    %793 = arith.addf %789, %792 : vector<8x159xf32>
    %794 = vector.broadcast %420 : vector<1x159xf32> to vector<8x159xf32>
    %795 = arith.mulf %793, %794 : vector<8x159xf32>
    %796 = vector.broadcast %421 : vector<1x159xf32> to vector<8x159xf32>
    %797 = arith.addf %795, %796 : vector<8x159xf32>
    %cst_176 = arith.constant 3.000000e+00 : f32
    %798 = vector.broadcast %cst_176 : f32 to vector<8x159xf32>
    %799 = arith.addf %797, %798 : vector<8x159xf32>
    %cst_177 = arith.constant 0.000000e+00 : f32
    %cst_178 = arith.constant 6.000000e+00 : f32
    %800 = vector.broadcast %cst_177 : f32 to vector<8x159xf32>
    %801 = arith.maximumf %800, %799 : vector<8x159xf32>
    %802 = vector.broadcast %cst_178 : f32 to vector<8x159xf32>
    %803 = arith.minimumf %802, %801 : vector<8x159xf32>
    %804 = arith.mulf %797, %803 : vector<8x159xf32>
    %cst_179 = arith.constant 0.166666672 : f32
    %805 = vector.broadcast %cst_179 : f32 to vector<8x159xf32>
    %806 = arith.mulf %804, %805 : vector<8x159xf32>
    %807 = arith.maximumf %566, %606 : vector<8x159xf32>
    %808 = arith.maximumf %807, %646 : vector<8x159xf32>
    %809 = arith.maximumf %808, %686 : vector<8x159xf32>
    %810 = arith.maximumf %809, %726 : vector<8x159xf32>
    %811 = arith.maximumf %810, %766 : vector<8x159xf32>
    %812 = arith.maximumf %811, %806 : vector<8x159xf32>
    %cst_180 = arith.constant dense<0.000000e+00> : vector<8x40xf32>
    %813 = tpu.matmul %812, %422, %cst_180 {dimension_numbers = #tpu.dot_dimension_numbers<[1], [0], [0], [1], [0, 0, 1, 1], [], []>} : vector<8x159xf32>, vector<159x40xf32>, vector<8x40xf32> -> vector<8x40xf32>
    %814 = vector.broadcast %423 : vector<1x40xf32> to vector<8x40xf32>
    %815 = arith.addf %813, %814 : vector<8x40xf32>
    %cst_181 = arith.constant 0.000000e+00 : f32
    %816 = vector.broadcast %cst_181 : f32 to vector<8x40xf32>
    %817 = arith.maximumf %815, %816 : vector<8x40xf32>
    %cst_182 = arith.constant dense<0.000000e+00> : vector<8x159xf32>
    %818 = tpu.matmul %817, %424, %cst_182 {dimension_numbers = #tpu.dot_dimension_numbers<[1], [0], [0], [1], [0, 0, 1, 1], [], []>} : vector<8x40xf32>, vector<40x159xf32>, vector<8x159xf32> -> vector<8x159xf32>
    %819 = vector.broadcast %425 : vector<1x159xf32> to vector<8x159xf32>
    %820 = arith.addf %818, %819 : vector<8x159xf32>
    %cst_183 = arith.constant 3.000000e+00 : f32
    %821 = vector.broadcast %cst_183 : f32 to vector<8x159xf32>
    %822 = arith.addf %820, %821 : vector<8x159xf32>
    %cst_184 = arith.constant 0.000000e+00 : f32
    %cst_185 = arith.constant 6.000000e+00 : f32
    %823 = vector.broadcast %cst_184 : f32 to vector<8x159xf32>
    %824 = arith.maximumf %823, %822 : vector<8x159xf32>
    %825 = vector.broadcast %cst_185 : f32 to vector<8x159xf32>
    %826 = arith.minimumf %825, %824 : vector<8x159xf32>
    %cst_186 = arith.constant 0.166666672 : f32
    %827 = vector.broadcast %cst_186 : f32 to vector<8x159xf32>
    %828 = arith.mulf %826, %827 : vector<8x159xf32>
    %829 = arith.mulf %566, %828 : vector<8x159xf32>
    %cst_187 = arith.constant dense<0.000000e+00> : vector<8x56xf32>
    %830 = tpu.matmul %829, %426, %cst_187 {dimension_numbers = #tpu.dot_dimension_numbers<[1], [0], [0], [1], [0, 0, 1, 1], [], []>} : vector<8x159xf32>, vector<159x56xf32>, vector<8x56xf32> -> vector<8x56xf32>
    %831 = vector.broadcast %427 : vector<1x56xf32> to vector<8x56xf32>
    %832 = arith.mulf %830, %831 : vector<8x56xf32>
    %833 = vector.broadcast %428 : vector<1x56xf32> to vector<8x56xf32>
    %834 = arith.addf %832, %833 : vector<8x56xf32>
    %835 = arith.addf %834, %374 : vector<8x56xf32>
    %836 = arith.mulf %606, %828 : vector<8x159xf32>
    %cst_188 = arith.constant dense<0.000000e+00> : vector<8x56xf32>
    %837 = tpu.matmul %836, %426, %cst_188 {dimension_numbers = #tpu.dot_dimension_numbers<[1], [0], [0], [1], [0, 0, 1, 1], [], []>} : vector<8x159xf32>, vector<159x56xf32>, vector<8x56xf32> -> vector<8x56xf32>
    %838 = vector.broadcast %427 : vector<1x56xf32> to vector<8x56xf32>
    %839 = arith.mulf %837, %838 : vector<8x56xf32>
    %840 = vector.broadcast %428 : vector<1x56xf32> to vector<8x56xf32>
    %841 = arith.addf %839, %840 : vector<8x56xf32>
    %842 = arith.addf %841, %381 : vector<8x56xf32>
    %843 = arith.mulf %646, %828 : vector<8x159xf32>
    %cst_189 = arith.constant dense<0.000000e+00> : vector<8x56xf32>
    %844 = tpu.matmul %843, %426, %cst_189 {dimension_numbers = #tpu.dot_dimension_numbers<[1], [0], [0], [1], [0, 0, 1, 1], [], []>} : vector<8x159xf32>, vector<159x56xf32>, vector<8x56xf32> -> vector<8x56xf32>
    %845 = vector.broadcast %427 : vector<1x56xf32> to vector<8x56xf32>
    %846 = arith.mulf %844, %845 : vector<8x56xf32>
    %847 = vector.broadcast %428 : vector<1x56xf32> to vector<8x56xf32>
    %848 = arith.addf %846, %847 : vector<8x56xf32>
    %849 = arith.addf %848, %388 : vector<8x56xf32>
    %850 = arith.mulf %686, %828 : vector<8x159xf32>
    %cst_190 = arith.constant dense<0.000000e+00> : vector<8x56xf32>
    %851 = tpu.matmul %850, %426, %cst_190 {dimension_numbers = #tpu.dot_dimension_numbers<[1], [0], [0], [1], [0, 0, 1, 1], [], []>} : vector<8x159xf32>, vector<159x56xf32>, vector<8x56xf32> -> vector<8x56xf32>
    %852 = vector.broadcast %427 : vector<1x56xf32> to vector<8x56xf32>
    %853 = arith.mulf %851, %852 : vector<8x56xf32>
    %854 = vector.broadcast %428 : vector<1x56xf32> to vector<8x56xf32>
    %855 = arith.addf %853, %854 : vector<8x56xf32>
    %856 = arith.addf %855, %395 : vector<8x56xf32>
    %857 = arith.mulf %726, %828 : vector<8x159xf32>
    %cst_191 = arith.constant dense<0.000000e+00> : vector<8x56xf32>
    %858 = tpu.matmul %857, %426, %cst_191 {dimension_numbers = #tpu.dot_dimension_numbers<[1], [0], [0], [1], [0, 0, 1, 1], [], []>} : vector<8x159xf32>, vector<159x56xf32>, vector<8x56xf32> -> vector<8x56xf32>
    %859 = vector.broadcast %427 : vector<1x56xf32> to vector<8x56xf32>
    %860 = arith.mulf %858, %859 : vector<8x56xf32>
    %861 = vector.broadcast %428 : vector<1x56xf32> to vector<8x56xf32>
    %862 = arith.addf %860, %861 : vector<8x56xf32>
    %863 = arith.addf %862, %402 : vector<8x56xf32>
    %864 = arith.mulf %766, %828 : vector<8x159xf32>
    %cst_192 = arith.constant dense<0.000000e+00> : vector<8x56xf32>
    %865 = tpu.matmul %864, %426, %cst_192 {dimension_numbers = #tpu.dot_dimension_numbers<[1], [0], [0], [1], [0, 0, 1, 1], [], []>} : vector<8x159xf32>, vector<159x56xf32>, vector<8x56xf32> -> vector<8x56xf32>
    %866 = vector.broadcast %427 : vector<1x56xf32> to vector<8x56xf32>
    %867 = arith.mulf %865, %866 : vector<8x56xf32>
    %868 = vector.broadcast %428 : vector<1x56xf32> to vector<8x56xf32>
    %869 = arith.addf %867, %868 : vector<8x56xf32>
    %870 = arith.addf %869, %409 : vector<8x56xf32>
    %871 = arith.mulf %806, %828 : vector<8x159xf32>
    %cst_193 = arith.constant dense<0.000000e+00> : vector<8x56xf32>
    %872 = tpu.matmul %871, %426, %cst_193 {dimension_numbers = #tpu.dot_dimension_numbers<[1], [0], [0], [1], [0, 0, 1, 1], [], []>} : vector<8x159xf32>, vector<159x56xf32>, vector<8x56xf32> -> vector<8x56xf32>
    %873 = vector.broadcast %427 : vector<1x56xf32> to vector<8x56xf32>
    %874 = arith.mulf %872, %873 : vector<8x56xf32>
    %875 = vector.broadcast %428 : vector<1x56xf32> to vector<8x56xf32>
    %876 = arith.addf %874, %875 : vector<8x56xf32>
    %877 = arith.addf %876, %416 : vector<8x56xf32>
    %c0_194 = arith.constant 0 : index
    %c0_195 = arith.constant 0 : index
    %878 = vector.load %arg47[%c0_194, %c0_195] : memref<56x159xf32, #tpu.memory_space<vmem>>, vector<56x159xf32>
    %c0_196 = arith.constant 0 : index
    %c0_197 = arith.constant 0 : index
    %879 = vector.load %arg42[%c0_196, %c0_197] : memref<1x159xf32, #tpu.memory_space<vmem>>, vector<1x159xf32>
    %c0_198 = arith.constant 0 : index
    %c0_199 = arith.constant 0 : index
    %880 = vector.load %arg41[%c0_198, %c0_199] : memref<1x159xf32, #tpu.memory_space<vmem>>, vector<1x159xf32>
    %c0_200 = arith.constant 0 : index
    %c0_201 = arith.constant 0 : index
    %881 = vector.load %arg40[%c0_200, %c0_201] : memref<1x159xf32, #tpu.memory_space<vmem>>, vector<1x159xf32>
    %c0_202 = arith.constant 0 : index
    %c0_203 = arith.constant 0 : index
    %882 = vector.load %arg39[%c0_202, %c0_203] : memref<1x159xf32, #tpu.memory_space<vmem>>, vector<1x159xf32>
    %c0_204 = arith.constant 0 : index
    %c0_205 = arith.constant 0 : index
    %883 = vector.load %arg45[%c0_204, %c0_205] : memref<159x40xf32, #tpu.memory_space<vmem>>, vector<159x40xf32>
    %c0_206 = arith.constant 0 : index
    %c0_207 = arith.constant 0 : index
    %884 = vector.load %arg37[%c0_206, %c0_207] : memref<1x40xf32, #tpu.memory_space<vmem>>, vector<1x40xf32>
    %c0_208 = arith.constant 0 : index
    %c0_209 = arith.constant 0 : index
    %885 = vector.load %arg46[%c0_208, %c0_209] : memref<40x159xf32, #tpu.memory_space<vmem>>, vector<40x159xf32>
    %c0_210 = arith.constant 0 : index
    %c0_211 = arith.constant 0 : index
    %886 = vector.load %arg38[%c0_210, %c0_211] : memref<1x159xf32, #tpu.memory_space<vmem>>, vector<1x159xf32>
    %c0_212 = arith.constant 0 : index
    %c0_213 = arith.constant 0 : index
    %887 = vector.load %arg48[%c0_212, %c0_213] : memref<159x56xf32, #tpu.memory_space<vmem>>, vector<159x56xf32>
    %c0_214 = arith.constant 0 : index
    %c0_215 = arith.constant 0 : index
    %888 = vector.load %arg44[%c0_214, %c0_215] : memref<1x56xf32, #tpu.memory_space<vmem>>, vector<1x56xf32>
    %c0_216 = arith.constant 0 : index
    %c0_217 = arith.constant 0 : index
    %889 = vector.load %arg43[%c0_216, %c0_217] : memref<1x56xf32, #tpu.memory_space<vmem>>, vector<1x56xf32>
    %cst_218 = arith.constant dense<0.000000e+00> : vector<8x159xf32>
    %890 = tpu.matmul %374, %878, %cst_218 {dimension_numbers = #tpu.dot_dimension_numbers<[1], [0], [0], [1], [0, 0, 1, 1], [], []>} : vector<8x56xf32>, vector<56x159xf32>, vector<8x159xf32> -> vector<8x159xf32>
    %891 = vector.broadcast %879 : vector<1x159xf32> to vector<8x159xf32>
    %892 = arith.mulf %890, %891 : vector<8x159xf32>
    %893 = vector.broadcast %880 : vector<1x159xf32> to vector<8x159xf32>
    %894 = arith.addf %892, %893 : vector<8x159xf32>
    %cst_219 = arith.constant 3.000000e+00 : f32
    %895 = vector.broadcast %cst_219 : f32 to vector<8x159xf32>
    %896 = arith.addf %894, %895 : vector<8x159xf32>
    %cst_220 = arith.constant 0.000000e+00 : f32
    %cst_221 = arith.constant 6.000000e+00 : f32
    %897 = vector.broadcast %cst_220 : f32 to vector<8x159xf32>
    %898 = arith.maximumf %897, %896 : vector<8x159xf32>
    %899 = vector.broadcast %cst_221 : f32 to vector<8x159xf32>
    %900 = arith.minimumf %899, %898 : vector<8x159xf32>
    %901 = arith.mulf %894, %900 : vector<8x159xf32>
    %cst_222 = arith.constant 0.166666672 : f32
    %902 = vector.broadcast %cst_222 : f32 to vector<8x159xf32>
    %903 = arith.mulf %901, %902 : vector<8x159xf32>
    %cst_223 = arith.constant dense<0.000000e+00> : vector<8x159xf32>
    %904 = tpu.matmul %381, %878, %cst_223 {dimension_numbers = #tpu.dot_dimension_numbers<[1], [0], [0], [1], [0, 0, 1, 1], [], []>} : vector<8x56xf32>, vector<56x159xf32>, vector<8x159xf32> -> vector<8x159xf32>
    %905 = vector.broadcast %879 : vector<1x159xf32> to vector<8x159xf32>
    %906 = arith.mulf %904, %905 : vector<8x159xf32>
    %907 = vector.broadcast %880 : vector<1x159xf32> to vector<8x159xf32>
    %908 = arith.addf %906, %907 : vector<8x159xf32>
    %cst_224 = arith.constant 3.000000e+00 : f32
    %909 = vector.broadcast %cst_224 : f32 to vector<8x159xf32>
    %910 = arith.addf %908, %909 : vector<8x159xf32>
    %cst_225 = arith.constant 0.000000e+00 : f32
    %cst_226 = arith.constant 6.000000e+00 : f32
    %911 = vector.broadcast %cst_225 : f32 to vector<8x159xf32>
    %912 = arith.maximumf %911, %910 : vector<8x159xf32>
    %913 = vector.broadcast %cst_226 : f32 to vector<8x159xf32>
    %914 = arith.minimumf %913, %912 : vector<8x159xf32>
    %915 = arith.mulf %908, %914 : vector<8x159xf32>
    %cst_227 = arith.constant 0.166666672 : f32
    %916 = vector.broadcast %cst_227 : f32 to vector<8x159xf32>
    %917 = arith.mulf %915, %916 : vector<8x159xf32>
    %cst_228 = arith.constant dense<0.000000e+00> : vector<8x159xf32>
    %918 = tpu.matmul %388, %878, %cst_228 {dimension_numbers = #tpu.dot_dimension_numbers<[1], [0], [0], [1], [0, 0, 1, 1], [], []>} : vector<8x56xf32>, vector<56x159xf32>, vector<8x159xf32> -> vector<8x159xf32>
    %919 = vector.broadcast %879 : vector<1x159xf32> to vector<8x159xf32>
    %920 = arith.mulf %918, %919 : vector<8x159xf32>
    %921 = vector.broadcast %880 : vector<1x159xf32> to vector<8x159xf32>
    %922 = arith.addf %920, %921 : vector<8x159xf32>
    %cst_229 = arith.constant 3.000000e+00 : f32
    %923 = vector.broadcast %cst_229 : f32 to vector<8x159xf32>
    %924 = arith.addf %922, %923 : vector<8x159xf32>
    %cst_230 = arith.constant 0.000000e+00 : f32
    %cst_231 = arith.constant 6.000000e+00 : f32
    %925 = vector.broadcast %cst_230 : f32 to vector<8x159xf32>
    %926 = arith.maximumf %925, %924 : vector<8x159xf32>
    %927 = vector.broadcast %cst_231 : f32 to vector<8x159xf32>
    %928 = arith.minimumf %927, %926 : vector<8x159xf32>
    %929 = arith.mulf %922, %928 : vector<8x159xf32>
    %cst_232 = arith.constant 0.166666672 : f32
    %930 = vector.broadcast %cst_232 : f32 to vector<8x159xf32>
    %931 = arith.mulf %929, %930 : vector<8x159xf32>
    %cst_233 = arith.constant dense<0.000000e+00> : vector<8x159xf32>
    %932 = tpu.matmul %395, %878, %cst_233 {dimension_numbers = #tpu.dot_dimension_numbers<[1], [0], [0], [1], [0, 0, 1, 1], [], []>} : vector<8x56xf32>, vector<56x159xf32>, vector<8x159xf32> -> vector<8x159xf32>
    %933 = vector.broadcast %879 : vector<1x159xf32> to vector<8x159xf32>
    %934 = arith.mulf %932, %933 : vector<8x159xf32>
    %935 = vector.broadcast %880 : vector<1x159xf32> to vector<8x159xf32>
    %936 = arith.addf %934, %935 : vector<8x159xf32>
    %cst_234 = arith.constant 3.000000e+00 : f32
    %937 = vector.broadcast %cst_234 : f32 to vector<8x159xf32>
    %938 = arith.addf %936, %937 : vector<8x159xf32>
    %cst_235 = arith.constant 0.000000e+00 : f32
    %cst_236 = arith.constant 6.000000e+00 : f32
    %939 = vector.broadcast %cst_235 : f32 to vector<8x159xf32>
    %940 = arith.maximumf %939, %938 : vector<8x159xf32>
    %941 = vector.broadcast %cst_236 : f32 to vector<8x159xf32>
    %942 = arith.minimumf %941, %940 : vector<8x159xf32>
    %943 = arith.mulf %936, %942 : vector<8x159xf32>
    %cst_237 = arith.constant 0.166666672 : f32
    %944 = vector.broadcast %cst_237 : f32 to vector<8x159xf32>
    %945 = arith.mulf %943, %944 : vector<8x159xf32>
    %cst_238 = arith.constant dense<0.000000e+00> : vector<8x159xf32>
    %946 = tpu.matmul %402, %878, %cst_238 {dimension_numbers = #tpu.dot_dimension_numbers<[1], [0], [0], [1], [0, 0, 1, 1], [], []>} : vector<8x56xf32>, vector<56x159xf32>, vector<8x159xf32> -> vector<8x159xf32>
    %947 = vector.broadcast %879 : vector<1x159xf32> to vector<8x159xf32>
    %948 = arith.mulf %946, %947 : vector<8x159xf32>
    %949 = vector.broadcast %880 : vector<1x159xf32> to vector<8x159xf32>
    %950 = arith.addf %948, %949 : vector<8x159xf32>
    %cst_239 = arith.constant 3.000000e+00 : f32
    %951 = vector.broadcast %cst_239 : f32 to vector<8x159xf32>
    %952 = arith.addf %950, %951 : vector<8x159xf32>
    %cst_240 = arith.constant 0.000000e+00 : f32
    %cst_241 = arith.constant 6.000000e+00 : f32
    %953 = vector.broadcast %cst_240 : f32 to vector<8x159xf32>
    %954 = arith.maximumf %953, %952 : vector<8x159xf32>
    %955 = vector.broadcast %cst_241 : f32 to vector<8x159xf32>
    %956 = arith.minimumf %955, %954 : vector<8x159xf32>
    %957 = arith.mulf %950, %956 : vector<8x159xf32>
    %cst_242 = arith.constant 0.166666672 : f32
    %958 = vector.broadcast %cst_242 : f32 to vector<8x159xf32>
    %959 = arith.mulf %957, %958 : vector<8x159xf32>
    %cst_243 = arith.constant dense<0.000000e+00> : vector<8x159xf32>
    %960 = tpu.matmul %409, %878, %cst_243 {dimension_numbers = #tpu.dot_dimension_numbers<[1], [0], [0], [1], [0, 0, 1, 1], [], []>} : vector<8x56xf32>, vector<56x159xf32>, vector<8x159xf32> -> vector<8x159xf32>
    %961 = vector.broadcast %879 : vector<1x159xf32> to vector<8x159xf32>
    %962 = arith.mulf %960, %961 : vector<8x159xf32>
    %963 = vector.broadcast %880 : vector<1x159xf32> to vector<8x159xf32>
    %964 = arith.addf %962, %963 : vector<8x159xf32>
    %cst_244 = arith.constant 3.000000e+00 : f32
    %965 = vector.broadcast %cst_244 : f32 to vector<8x159xf32>
    %966 = arith.addf %964, %965 : vector<8x159xf32>
    %cst_245 = arith.constant 0.000000e+00 : f32
    %cst_246 = arith.constant 6.000000e+00 : f32
    %967 = vector.broadcast %cst_245 : f32 to vector<8x159xf32>
    %968 = arith.maximumf %967, %966 : vector<8x159xf32>
    %969 = vector.broadcast %cst_246 : f32 to vector<8x159xf32>
    %970 = arith.minimumf %969, %968 : vector<8x159xf32>
    %971 = arith.mulf %964, %970 : vector<8x159xf32>
    %cst_247 = arith.constant 0.166666672 : f32
    %972 = vector.broadcast %cst_247 : f32 to vector<8x159xf32>
    %973 = arith.mulf %971, %972 : vector<8x159xf32>
    %cst_248 = arith.constant dense<0.000000e+00> : vector<8x159xf32>
    %974 = tpu.matmul %416, %878, %cst_248 {dimension_numbers = #tpu.dot_dimension_numbers<[1], [0], [0], [1], [0, 0, 1, 1], [], []>} : vector<8x56xf32>, vector<56x159xf32>, vector<8x159xf32> -> vector<8x159xf32>
    %975 = vector.broadcast %879 : vector<1x159xf32> to vector<8x159xf32>
    %976 = arith.mulf %974, %975 : vector<8x159xf32>
    %977 = vector.broadcast %880 : vector<1x159xf32> to vector<8x159xf32>
    %978 = arith.addf %976, %977 : vector<8x159xf32>
    %cst_249 = arith.constant 3.000000e+00 : f32
    %979 = vector.broadcast %cst_249 : f32 to vector<8x159xf32>
    %980 = arith.addf %978, %979 : vector<8x159xf32>
    %cst_250 = arith.constant 0.000000e+00 : f32
    %cst_251 = arith.constant 6.000000e+00 : f32
    %981 = vector.broadcast %cst_250 : f32 to vector<8x159xf32>
    %982 = arith.maximumf %981, %980 : vector<8x159xf32>
    %983 = vector.broadcast %cst_251 : f32 to vector<8x159xf32>
    %984 = arith.minimumf %983, %982 : vector<8x159xf32>
    %985 = arith.mulf %978, %984 : vector<8x159xf32>
    %cst_252 = arith.constant 0.166666672 : f32
    %986 = vector.broadcast %cst_252 : f32 to vector<8x159xf32>
    %987 = arith.mulf %985, %986 : vector<8x159xf32>
    %c98 = arith.constant 98 : index
    %988 = memref.load %arg3[%c98] : memref<147xf32, #tpu.memory_space<smem>>
    %989 = vector.broadcast %988 : f32 to vector<8x159xf32>
    %990 = arith.mulf %989, %903 : vector<8x159xf32>
    %c99 = arith.constant 99 : index
    %991 = memref.load %arg3[%c99] : memref<147xf32, #tpu.memory_space<smem>>
    %992 = vector.broadcast %991 : f32 to vector<8x159xf32>
    %993 = arith.mulf %992, %917 : vector<8x159xf32>
    %994 = arith.addf %990, %993 : vector<8x159xf32>
    %c100 = arith.constant 100 : index
    %995 = memref.load %arg3[%c100] : memref<147xf32, #tpu.memory_space<smem>>
    %996 = vector.broadcast %995 : f32 to vector<8x159xf32>
    %997 = arith.mulf %996, %931 : vector<8x159xf32>
    %998 = arith.addf %994, %997 : vector<8x159xf32>
    %c101 = arith.constant 101 : index
    %999 = memref.load %arg3[%c101] : memref<147xf32, #tpu.memory_space<smem>>
    %1000 = vector.broadcast %999 : f32 to vector<8x159xf32>
    %1001 = arith.mulf %1000, %945 : vector<8x159xf32>
    %1002 = arith.addf %998, %1001 : vector<8x159xf32>
    %c102 = arith.constant 102 : index
    %1003 = memref.load %arg3[%c102] : memref<147xf32, #tpu.memory_space<smem>>
    %1004 = vector.broadcast %1003 : f32 to vector<8x159xf32>
    %1005 = arith.mulf %1004, %959 : vector<8x159xf32>
    %1006 = arith.addf %1002, %1005 : vector<8x159xf32>
    %c103 = arith.constant 103 : index
    %1007 = memref.load %arg3[%c103] : memref<147xf32, #tpu.memory_space<smem>>
    %1008 = vector.broadcast %1007 : f32 to vector<8x159xf32>
    %1009 = arith.mulf %1008, %973 : vector<8x159xf32>
    %1010 = arith.addf %1006, %1009 : vector<8x159xf32>
    %c104 = arith.constant 104 : index
    %1011 = memref.load %arg3[%c104] : memref<147xf32, #tpu.memory_space<smem>>
    %1012 = vector.broadcast %1011 : f32 to vector<8x159xf32>
    %1013 = arith.mulf %1012, %987 : vector<8x159xf32>
    %1014 = arith.addf %1010, %1013 : vector<8x159xf32>
    %1015 = vector.broadcast %881 : vector<1x159xf32> to vector<8x159xf32>
    %1016 = arith.mulf %1014, %1015 : vector<8x159xf32>
    %1017 = vector.broadcast %882 : vector<1x159xf32> to vector<8x159xf32>
    %1018 = arith.addf %1016, %1017 : vector<8x159xf32>
    %cst_253 = arith.constant 3.000000e+00 : f32
    %1019 = vector.broadcast %cst_253 : f32 to vector<8x159xf32>
    %1020 = arith.addf %1018, %1019 : vector<8x159xf32>
    %cst_254 = arith.constant 0.000000e+00 : f32
    %cst_255 = arith.constant 6.000000e+00 : f32
    %1021 = vector.broadcast %cst_254 : f32 to vector<8x159xf32>
    %1022 = arith.maximumf %1021, %1020 : vector<8x159xf32>
    %1023 = vector.broadcast %cst_255 : f32 to vector<8x159xf32>
    %1024 = arith.minimumf %1023, %1022 : vector<8x159xf32>
    %1025 = arith.mulf %1018, %1024 : vector<8x159xf32>
    %cst_256 = arith.constant 0.166666672 : f32
    %1026 = vector.broadcast %cst_256 : f32 to vector<8x159xf32>
    %1027 = arith.mulf %1025, %1026 : vector<8x159xf32>
    %c105 = arith.constant 105 : index
    %1028 = memref.load %arg3[%c105] : memref<147xf32, #tpu.memory_space<smem>>
    %1029 = vector.broadcast %1028 : f32 to vector<8x159xf32>
    %1030 = arith.mulf %1029, %903 : vector<8x159xf32>
    %c106 = arith.constant 106 : index
    %1031 = memref.load %arg3[%c106] : memref<147xf32, #tpu.memory_space<smem>>
    %1032 = vector.broadcast %1031 : f32 to vector<8x159xf32>
    %1033 = arith.mulf %1032, %917 : vector<8x159xf32>
    %1034 = arith.addf %1030, %1033 : vector<8x159xf32>
    %c107 = arith.constant 107 : index
    %1035 = memref.load %arg3[%c107] : memref<147xf32, #tpu.memory_space<smem>>
    %1036 = vector.broadcast %1035 : f32 to vector<8x159xf32>
    %1037 = arith.mulf %1036, %931 : vector<8x159xf32>
    %1038 = arith.addf %1034, %1037 : vector<8x159xf32>
    %c108 = arith.constant 108 : index
    %1039 = memref.load %arg3[%c108] : memref<147xf32, #tpu.memory_space<smem>>
    %1040 = vector.broadcast %1039 : f32 to vector<8x159xf32>
    %1041 = arith.mulf %1040, %945 : vector<8x159xf32>
    %1042 = arith.addf %1038, %1041 : vector<8x159xf32>
    %c109 = arith.constant 109 : index
    %1043 = memref.load %arg3[%c109] : memref<147xf32, #tpu.memory_space<smem>>
    %1044 = vector.broadcast %1043 : f32 to vector<8x159xf32>
    %1045 = arith.mulf %1044, %959 : vector<8x159xf32>
    %1046 = arith.addf %1042, %1045 : vector<8x159xf32>
    %c110 = arith.constant 110 : index
    %1047 = memref.load %arg3[%c110] : memref<147xf32, #tpu.memory_space<smem>>
    %1048 = vector.broadcast %1047 : f32 to vector<8x159xf32>
    %1049 = arith.mulf %1048, %973 : vector<8x159xf32>
    %1050 = arith.addf %1046, %1049 : vector<8x159xf32>
    %c111 = arith.constant 111 : index
    %1051 = memref.load %arg3[%c111] : memref<147xf32, #tpu.memory_space<smem>>
    %1052 = vector.broadcast %1051 : f32 to vector<8x159xf32>
    %1053 = arith.mulf %1052, %987 : vector<8x159xf32>
    %1054 = arith.addf %1050, %1053 : vector<8x159xf32>
    %1055 = vector.broadcast %881 : vector<1x159xf32> to vector<8x159xf32>
    %1056 = arith.mulf %1054, %1055 : vector<8x159xf32>
    %1057 = vector.broadcast %882 : vector<1x159xf32> to vector<8x159xf32>
    %1058 = arith.addf %1056, %1057 : vector<8x159xf32>
    %cst_257 = arith.constant 3.000000e+00 : f32
    %1059 = vector.broadcast %cst_257 : f32 to vector<8x159xf32>
    %1060 = arith.addf %1058, %1059 : vector<8x159xf32>
    %cst_258 = arith.constant 0.000000e+00 : f32
    %cst_259 = arith.constant 6.000000e+00 : f32
    %1061 = vector.broadcast %cst_258 : f32 to vector<8x159xf32>
    %1062 = arith.maximumf %1061, %1060 : vector<8x159xf32>
    %1063 = vector.broadcast %cst_259 : f32 to vector<8x159xf32>
    %1064 = arith.minimumf %1063, %1062 : vector<8x159xf32>
    %1065 = arith.mulf %1058, %1064 : vector<8x159xf32>
    %cst_260 = arith.constant 0.166666672 : f32
    %1066 = vector.broadcast %cst_260 : f32 to vector<8x159xf32>
    %1067 = arith.mulf %1065, %1066 : vector<8x159xf32>
    %c112 = arith.constant 112 : index
    %1068 = memref.load %arg3[%c112] : memref<147xf32, #tpu.memory_space<smem>>
    %1069 = vector.broadcast %1068 : f32 to vector<8x159xf32>
    %1070 = arith.mulf %1069, %903 : vector<8x159xf32>
    %c113 = arith.constant 113 : index
    %1071 = memref.load %arg3[%c113] : memref<147xf32, #tpu.memory_space<smem>>
    %1072 = vector.broadcast %1071 : f32 to vector<8x159xf32>
    %1073 = arith.mulf %1072, %917 : vector<8x159xf32>
    %1074 = arith.addf %1070, %1073 : vector<8x159xf32>
    %c114 = arith.constant 114 : index
    %1075 = memref.load %arg3[%c114] : memref<147xf32, #tpu.memory_space<smem>>
    %1076 = vector.broadcast %1075 : f32 to vector<8x159xf32>
    %1077 = arith.mulf %1076, %931 : vector<8x159xf32>
    %1078 = arith.addf %1074, %1077 : vector<8x159xf32>
    %c115 = arith.constant 115 : index
    %1079 = memref.load %arg3[%c115] : memref<147xf32, #tpu.memory_space<smem>>
    %1080 = vector.broadcast %1079 : f32 to vector<8x159xf32>
    %1081 = arith.mulf %1080, %945 : vector<8x159xf32>
    %1082 = arith.addf %1078, %1081 : vector<8x159xf32>
    %c116 = arith.constant 116 : index
    %1083 = memref.load %arg3[%c116] : memref<147xf32, #tpu.memory_space<smem>>
    %1084 = vector.broadcast %1083 : f32 to vector<8x159xf32>
    %1085 = arith.mulf %1084, %959 : vector<8x159xf32>
    %1086 = arith.addf %1082, %1085 : vector<8x159xf32>
    %c117 = arith.constant 117 : index
    %1087 = memref.load %arg3[%c117] : memref<147xf32, #tpu.memory_space<smem>>
    %1088 = vector.broadcast %1087 : f32 to vector<8x159xf32>
    %1089 = arith.mulf %1088, %973 : vector<8x159xf32>
    %1090 = arith.addf %1086, %1089 : vector<8x159xf32>
    %c118 = arith.constant 118 : index
    %1091 = memref.load %arg3[%c118] : memref<147xf32, #tpu.memory_space<smem>>
    %1092 = vector.broadcast %1091 : f32 to vector<8x159xf32>
    %1093 = arith.mulf %1092, %987 : vector<8x159xf32>
    %1094 = arith.addf %1090, %1093 : vector<8x159xf32>
    %1095 = vector.broadcast %881 : vector<1x159xf32> to vector<8x159xf32>
    %1096 = arith.mulf %1094, %1095 : vector<8x159xf32>
    %1097 = vector.broadcast %882 : vector<1x159xf32> to vector<8x159xf32>
    %1098 = arith.addf %1096, %1097 : vector<8x159xf32>
    %cst_261 = arith.constant 3.000000e+00 : f32
    %1099 = vector.broadcast %cst_261 : f32 to vector<8x159xf32>
    %1100 = arith.addf %1098, %1099 : vector<8x159xf32>
    %cst_262 = arith.constant 0.000000e+00 : f32
    %cst_263 = arith.constant 6.000000e+00 : f32
    %1101 = vector.broadcast %cst_262 : f32 to vector<8x159xf32>
    %1102 = arith.maximumf %1101, %1100 : vector<8x159xf32>
    %1103 = vector.broadcast %cst_263 : f32 to vector<8x159xf32>
    %1104 = arith.minimumf %1103, %1102 : vector<8x159xf32>
    %1105 = arith.mulf %1098, %1104 : vector<8x159xf32>
    %cst_264 = arith.constant 0.166666672 : f32
    %1106 = vector.broadcast %cst_264 : f32 to vector<8x159xf32>
    %1107 = arith.mulf %1105, %1106 : vector<8x159xf32>
    %c119 = arith.constant 119 : index
    %1108 = memref.load %arg3[%c119] : memref<147xf32, #tpu.memory_space<smem>>
    %1109 = vector.broadcast %1108 : f32 to vector<8x159xf32>
    %1110 = arith.mulf %1109, %903 : vector<8x159xf32>
    %c120 = arith.constant 120 : index
    %1111 = memref.load %arg3[%c120] : memref<147xf32, #tpu.memory_space<smem>>
    %1112 = vector.broadcast %1111 : f32 to vector<8x159xf32>
    %1113 = arith.mulf %1112, %917 : vector<8x159xf32>
    %1114 = arith.addf %1110, %1113 : vector<8x159xf32>
    %c121 = arith.constant 121 : index
    %1115 = memref.load %arg3[%c121] : memref<147xf32, #tpu.memory_space<smem>>
    %1116 = vector.broadcast %1115 : f32 to vector<8x159xf32>
    %1117 = arith.mulf %1116, %931 : vector<8x159xf32>
    %1118 = arith.addf %1114, %1117 : vector<8x159xf32>
    %c122 = arith.constant 122 : index
    %1119 = memref.load %arg3[%c122] : memref<147xf32, #tpu.memory_space<smem>>
    %1120 = vector.broadcast %1119 : f32 to vector<8x159xf32>
    %1121 = arith.mulf %1120, %945 : vector<8x159xf32>
    %1122 = arith.addf %1118, %1121 : vector<8x159xf32>
    %c123 = arith.constant 123 : index
    %1123 = memref.load %arg3[%c123] : memref<147xf32, #tpu.memory_space<smem>>
    %1124 = vector.broadcast %1123 : f32 to vector<8x159xf32>
    %1125 = arith.mulf %1124, %959 : vector<8x159xf32>
    %1126 = arith.addf %1122, %1125 : vector<8x159xf32>
    %c124 = arith.constant 124 : index
    %1127 = memref.load %arg3[%c124] : memref<147xf32, #tpu.memory_space<smem>>
    %1128 = vector.broadcast %1127 : f32 to vector<8x159xf32>
    %1129 = arith.mulf %1128, %973 : vector<8x159xf32>
    %1130 = arith.addf %1126, %1129 : vector<8x159xf32>
    %c125 = arith.constant 125 : index
    %1131 = memref.load %arg3[%c125] : memref<147xf32, #tpu.memory_space<smem>>
    %1132 = vector.broadcast %1131 : f32 to vector<8x159xf32>
    %1133 = arith.mulf %1132, %987 : vector<8x159xf32>
    %1134 = arith.addf %1130, %1133 : vector<8x159xf32>
    %1135 = vector.broadcast %881 : vector<1x159xf32> to vector<8x159xf32>
    %1136 = arith.mulf %1134, %1135 : vector<8x159xf32>
    %1137 = vector.broadcast %882 : vector<1x159xf32> to vector<8x159xf32>
    %1138 = arith.addf %1136, %1137 : vector<8x159xf32>
    %cst_265 = arith.constant 3.000000e+00 : f32
    %1139 = vector.broadcast %cst_265 : f32 to vector<8x159xf32>
    %1140 = arith.addf %1138, %1139 : vector<8x159xf32>
    %cst_266 = arith.constant 0.000000e+00 : f32
    %cst_267 = arith.constant 6.000000e+00 : f32
    %1141 = vector.broadcast %cst_266 : f32 to vector<8x159xf32>
    %1142 = arith.maximumf %1141, %1140 : vector<8x159xf32>
    %1143 = vector.broadcast %cst_267 : f32 to vector<8x159xf32>
    %1144 = arith.minimumf %1143, %1142 : vector<8x159xf32>
    %1145 = arith.mulf %1138, %1144 : vector<8x159xf32>
    %cst_268 = arith.constant 0.166666672 : f32
    %1146 = vector.broadcast %cst_268 : f32 to vector<8x159xf32>
    %1147 = arith.mulf %1145, %1146 : vector<8x159xf32>
    %c126 = arith.constant 126 : index
    %1148 = memref.load %arg3[%c126] : memref<147xf32, #tpu.memory_space<smem>>
    %1149 = vector.broadcast %1148 : f32 to vector<8x159xf32>
    %1150 = arith.mulf %1149, %903 : vector<8x159xf32>
    %c127 = arith.constant 127 : index
    %1151 = memref.load %arg3[%c127] : memref<147xf32, #tpu.memory_space<smem>>
    %1152 = vector.broadcast %1151 : f32 to vector<8x159xf32>
    %1153 = arith.mulf %1152, %917 : vector<8x159xf32>
    %1154 = arith.addf %1150, %1153 : vector<8x159xf32>
    %c128 = arith.constant 128 : index
    %1155 = memref.load %arg3[%c128] : memref<147xf32, #tpu.memory_space<smem>>
    %1156 = vector.broadcast %1155 : f32 to vector<8x159xf32>
    %1157 = arith.mulf %1156, %931 : vector<8x159xf32>
    %1158 = arith.addf %1154, %1157 : vector<8x159xf32>
    %c129 = arith.constant 129 : index
    %1159 = memref.load %arg3[%c129] : memref<147xf32, #tpu.memory_space<smem>>
    %1160 = vector.broadcast %1159 : f32 to vector<8x159xf32>
    %1161 = arith.mulf %1160, %945 : vector<8x159xf32>
    %1162 = arith.addf %1158, %1161 : vector<8x159xf32>
    %c130 = arith.constant 130 : index
    %1163 = memref.load %arg3[%c130] : memref<147xf32, #tpu.memory_space<smem>>
    %1164 = vector.broadcast %1163 : f32 to vector<8x159xf32>
    %1165 = arith.mulf %1164, %959 : vector<8x159xf32>
    %1166 = arith.addf %1162, %1165 : vector<8x159xf32>
    %c131 = arith.constant 131 : index
    %1167 = memref.load %arg3[%c131] : memref<147xf32, #tpu.memory_space<smem>>
    %1168 = vector.broadcast %1167 : f32 to vector<8x159xf32>
    %1169 = arith.mulf %1168, %973 : vector<8x159xf32>
    %1170 = arith.addf %1166, %1169 : vector<8x159xf32>
    %c132 = arith.constant 132 : index
    %1171 = memref.load %arg3[%c132] : memref<147xf32, #tpu.memory_space<smem>>
    %1172 = vector.broadcast %1171 : f32 to vector<8x159xf32>
    %1173 = arith.mulf %1172, %987 : vector<8x159xf32>
    %1174 = arith.addf %1170, %1173 : vector<8x159xf32>
    %1175 = vector.broadcast %881 : vector<1x159xf32> to vector<8x159xf32>
    %1176 = arith.mulf %1174, %1175 : vector<8x159xf32>
    %1177 = vector.broadcast %882 : vector<1x159xf32> to vector<8x159xf32>
    %1178 = arith.addf %1176, %1177 : vector<8x159xf32>
    %cst_269 = arith.constant 3.000000e+00 : f32
    %1179 = vector.broadcast %cst_269 : f32 to vector<8x159xf32>
    %1180 = arith.addf %1178, %1179 : vector<8x159xf32>
    %cst_270 = arith.constant 0.000000e+00 : f32
    %cst_271 = arith.constant 6.000000e+00 : f32
    %1181 = vector.broadcast %cst_270 : f32 to vector<8x159xf32>
    %1182 = arith.maximumf %1181, %1180 : vector<8x159xf32>
    %1183 = vector.broadcast %cst_271 : f32 to vector<8x159xf32>
    %1184 = arith.minimumf %1183, %1182 : vector<8x159xf32>
    %1185 = arith.mulf %1178, %1184 : vector<8x159xf32>
    %cst_272 = arith.constant 0.166666672 : f32
    %1186 = vector.broadcast %cst_272 : f32 to vector<8x159xf32>
    %1187 = arith.mulf %1185, %1186 : vector<8x159xf32>
    %c133 = arith.constant 133 : index
    %1188 = memref.load %arg3[%c133] : memref<147xf32, #tpu.memory_space<smem>>
    %1189 = vector.broadcast %1188 : f32 to vector<8x159xf32>
    %1190 = arith.mulf %1189, %903 : vector<8x159xf32>
    %c134 = arith.constant 134 : index
    %1191 = memref.load %arg3[%c134] : memref<147xf32, #tpu.memory_space<smem>>
    %1192 = vector.broadcast %1191 : f32 to vector<8x159xf32>
    %1193 = arith.mulf %1192, %917 : vector<8x159xf32>
    %1194 = arith.addf %1190, %1193 : vector<8x159xf32>
    %c135 = arith.constant 135 : index
    %1195 = memref.load %arg3[%c135] : memref<147xf32, #tpu.memory_space<smem>>
    %1196 = vector.broadcast %1195 : f32 to vector<8x159xf32>
    %1197 = arith.mulf %1196, %931 : vector<8x159xf32>
    %1198 = arith.addf %1194, %1197 : vector<8x159xf32>
    %c136 = arith.constant 136 : index
    %1199 = memref.load %arg3[%c136] : memref<147xf32, #tpu.memory_space<smem>>
    %1200 = vector.broadcast %1199 : f32 to vector<8x159xf32>
    %1201 = arith.mulf %1200, %945 : vector<8x159xf32>
    %1202 = arith.addf %1198, %1201 : vector<8x159xf32>
    %c137 = arith.constant 137 : index
    %1203 = memref.load %arg3[%c137] : memref<147xf32, #tpu.memory_space<smem>>
    %1204 = vector.broadcast %1203 : f32 to vector<8x159xf32>
    %1205 = arith.mulf %1204, %959 : vector<8x159xf32>
    %1206 = arith.addf %1202, %1205 : vector<8x159xf32>
    %c138 = arith.constant 138 : index
    %1207 = memref.load %arg3[%c138] : memref<147xf32, #tpu.memory_space<smem>>
    %1208 = vector.broadcast %1207 : f32 to vector<8x159xf32>
    %1209 = arith.mulf %1208, %973 : vector<8x159xf32>
    %1210 = arith.addf %1206, %1209 : vector<8x159xf32>
    %c139 = arith.constant 139 : index
    %1211 = memref.load %arg3[%c139] : memref<147xf32, #tpu.memory_space<smem>>
    %1212 = vector.broadcast %1211 : f32 to vector<8x159xf32>
    %1213 = arith.mulf %1212, %987 : vector<8x159xf32>
    %1214 = arith.addf %1210, %1213 : vector<8x159xf32>
    %1215 = vector.broadcast %881 : vector<1x159xf32> to vector<8x159xf32>
    %1216 = arith.mulf %1214, %1215 : vector<8x159xf32>
    %1217 = vector.broadcast %882 : vector<1x159xf32> to vector<8x159xf32>
    %1218 = arith.addf %1216, %1217 : vector<8x159xf32>
    %cst_273 = arith.constant 3.000000e+00 : f32
    %1219 = vector.broadcast %cst_273 : f32 to vector<8x159xf32>
    %1220 = arith.addf %1218, %1219 : vector<8x159xf32>
    %cst_274 = arith.constant 0.000000e+00 : f32
    %cst_275 = arith.constant 6.000000e+00 : f32
    %1221 = vector.broadcast %cst_274 : f32 to vector<8x159xf32>
    %1222 = arith.maximumf %1221, %1220 : vector<8x159xf32>
    %1223 = vector.broadcast %cst_275 : f32 to vector<8x159xf32>
    %1224 = arith.minimumf %1223, %1222 : vector<8x159xf32>
    %1225 = arith.mulf %1218, %1224 : vector<8x159xf32>
    %cst_276 = arith.constant 0.166666672 : f32
    %1226 = vector.broadcast %cst_276 : f32 to vector<8x159xf32>
    %1227 = arith.mulf %1225, %1226 : vector<8x159xf32>
    %c140 = arith.constant 140 : index
    %1228 = memref.load %arg3[%c140] : memref<147xf32, #tpu.memory_space<smem>>
    %1229 = vector.broadcast %1228 : f32 to vector<8x159xf32>
    %1230 = arith.mulf %1229, %903 : vector<8x159xf32>
    %c141 = arith.constant 141 : index
    %1231 = memref.load %arg3[%c141] : memref<147xf32, #tpu.memory_space<smem>>
    %1232 = vector.broadcast %1231 : f32 to vector<8x159xf32>
    %1233 = arith.mulf %1232, %917 : vector<8x159xf32>
    %1234 = arith.addf %1230, %1233 : vector<8x159xf32>
    %c142 = arith.constant 142 : index
    %1235 = memref.load %arg3[%c142] : memref<147xf32, #tpu.memory_space<smem>>
    %1236 = vector.broadcast %1235 : f32 to vector<8x159xf32>
    %1237 = arith.mulf %1236, %931 : vector<8x159xf32>
    %1238 = arith.addf %1234, %1237 : vector<8x159xf32>
    %c143 = arith.constant 143 : index
    %1239 = memref.load %arg3[%c143] : memref<147xf32, #tpu.memory_space<smem>>
    %1240 = vector.broadcast %1239 : f32 to vector<8x159xf32>
    %1241 = arith.mulf %1240, %945 : vector<8x159xf32>
    %1242 = arith.addf %1238, %1241 : vector<8x159xf32>
    %c144 = arith.constant 144 : index
    %1243 = memref.load %arg3[%c144] : memref<147xf32, #tpu.memory_space<smem>>
    %1244 = vector.broadcast %1243 : f32 to vector<8x159xf32>
    %1245 = arith.mulf %1244, %959 : vector<8x159xf32>
    %1246 = arith.addf %1242, %1245 : vector<8x159xf32>
    %c145 = arith.constant 145 : index
    %1247 = memref.load %arg3[%c145] : memref<147xf32, #tpu.memory_space<smem>>
    %1248 = vector.broadcast %1247 : f32 to vector<8x159xf32>
    %1249 = arith.mulf %1248, %973 : vector<8x159xf32>
    %1250 = arith.addf %1246, %1249 : vector<8x159xf32>
    %c146 = arith.constant 146 : index
    %1251 = memref.load %arg3[%c146] : memref<147xf32, #tpu.memory_space<smem>>
    %1252 = vector.broadcast %1251 : f32 to vector<8x159xf32>
    %1253 = arith.mulf %1252, %987 : vector<8x159xf32>
    %1254 = arith.addf %1250, %1253 : vector<8x159xf32>
    %1255 = vector.broadcast %881 : vector<1x159xf32> to vector<8x159xf32>
    %1256 = arith.mulf %1254, %1255 : vector<8x159xf32>
    %1257 = vector.broadcast %882 : vector<1x159xf32> to vector<8x159xf32>
    %1258 = arith.addf %1256, %1257 : vector<8x159xf32>
    %cst_277 = arith.constant 3.000000e+00 : f32
    %1259 = vector.broadcast %cst_277 : f32 to vector<8x159xf32>
    %1260 = arith.addf %1258, %1259 : vector<8x159xf32>
    %cst_278 = arith.constant 0.000000e+00 : f32
    %cst_279 = arith.constant 6.000000e+00 : f32
    %1261 = vector.broadcast %cst_278 : f32 to vector<8x159xf32>
    %1262 = arith.maximumf %1261, %1260 : vector<8x159xf32>
    %1263 = vector.broadcast %cst_279 : f32 to vector<8x159xf32>
    %1264 = arith.minimumf %1263, %1262 : vector<8x159xf32>
    %1265 = arith.mulf %1258, %1264 : vector<8x159xf32>
    %cst_280 = arith.constant 0.166666672 : f32
    %1266 = vector.broadcast %cst_280 : f32 to vector<8x159xf32>
    %1267 = arith.mulf %1265, %1266 : vector<8x159xf32>
    %1268 = arith.maximumf %1027, %1067 : vector<8x159xf32>
    %1269 = arith.maximumf %1268, %1107 : vector<8x159xf32>
    %1270 = arith.maximumf %1269, %1147 : vector<8x159xf32>
    %1271 = arith.maximumf %1270, %1187 : vector<8x159xf32>
    %1272 = arith.maximumf %1271, %1227 : vector<8x159xf32>
    %1273 = arith.maximumf %1272, %1267 : vector<8x159xf32>
    %cst_281 = arith.constant dense<0.000000e+00> : vector<8x40xf32>
    %1274 = tpu.matmul %1273, %883, %cst_281 {dimension_numbers = #tpu.dot_dimension_numbers<[1], [0], [0], [1], [0, 0, 1, 1], [], []>} : vector<8x159xf32>, vector<159x40xf32>, vector<8x40xf32> -> vector<8x40xf32>
    %1275 = vector.broadcast %884 : vector<1x40xf32> to vector<8x40xf32>
    %1276 = arith.addf %1274, %1275 : vector<8x40xf32>
    %cst_282 = arith.constant 0.000000e+00 : f32
    %1277 = vector.broadcast %cst_282 : f32 to vector<8x40xf32>
    %1278 = arith.maximumf %1276, %1277 : vector<8x40xf32>
    %cst_283 = arith.constant dense<0.000000e+00> : vector<8x159xf32>
    %1279 = tpu.matmul %1278, %885, %cst_283 {dimension_numbers = #tpu.dot_dimension_numbers<[1], [0], [0], [1], [0, 0, 1, 1], [], []>} : vector<8x40xf32>, vector<40x159xf32>, vector<8x159xf32> -> vector<8x159xf32>
    %1280 = vector.broadcast %886 : vector<1x159xf32> to vector<8x159xf32>
    %1281 = arith.addf %1279, %1280 : vector<8x159xf32>
    %cst_284 = arith.constant 3.000000e+00 : f32
    %1282 = vector.broadcast %cst_284 : f32 to vector<8x159xf32>
    %1283 = arith.addf %1281, %1282 : vector<8x159xf32>
    %cst_285 = arith.constant 0.000000e+00 : f32
    %cst_286 = arith.constant 6.000000e+00 : f32
    %1284 = vector.broadcast %cst_285 : f32 to vector<8x159xf32>
    %1285 = arith.maximumf %1284, %1283 : vector<8x159xf32>
    %1286 = vector.broadcast %cst_286 : f32 to vector<8x159xf32>
    %1287 = arith.minimumf %1286, %1285 : vector<8x159xf32>
    %cst_287 = arith.constant 0.166666672 : f32
    %1288 = vector.broadcast %cst_287 : f32 to vector<8x159xf32>
    %1289 = arith.mulf %1287, %1288 : vector<8x159xf32>
    %1290 = arith.mulf %1027, %1289 : vector<8x159xf32>
    %cst_288 = arith.constant dense<0.000000e+00> : vector<8x56xf32>
    %1291 = tpu.matmul %1290, %887, %cst_288 {dimension_numbers = #tpu.dot_dimension_numbers<[1], [0], [0], [1], [0, 0, 1, 1], [], []>} : vector<8x159xf32>, vector<159x56xf32>, vector<8x56xf32> -> vector<8x56xf32>
    %1292 = vector.broadcast %888 : vector<1x56xf32> to vector<8x56xf32>
    %1293 = arith.mulf %1291, %1292 : vector<8x56xf32>
    %1294 = vector.broadcast %889 : vector<1x56xf32> to vector<8x56xf32>
    %1295 = arith.addf %1293, %1294 : vector<8x56xf32>
    %1296 = arith.addf %1295, %374 : vector<8x56xf32>
    %1297 = arith.mulf %1067, %1289 : vector<8x159xf32>
    %cst_289 = arith.constant dense<0.000000e+00> : vector<8x56xf32>
    %1298 = tpu.matmul %1297, %887, %cst_289 {dimension_numbers = #tpu.dot_dimension_numbers<[1], [0], [0], [1], [0, 0, 1, 1], [], []>} : vector<8x159xf32>, vector<159x56xf32>, vector<8x56xf32> -> vector<8x56xf32>
    %1299 = vector.broadcast %888 : vector<1x56xf32> to vector<8x56xf32>
    %1300 = arith.mulf %1298, %1299 : vector<8x56xf32>
    %1301 = vector.broadcast %889 : vector<1x56xf32> to vector<8x56xf32>
    %1302 = arith.addf %1300, %1301 : vector<8x56xf32>
    %1303 = arith.addf %1302, %381 : vector<8x56xf32>
    %1304 = arith.mulf %1107, %1289 : vector<8x159xf32>
    %cst_290 = arith.constant dense<0.000000e+00> : vector<8x56xf32>
    %1305 = tpu.matmul %1304, %887, %cst_290 {dimension_numbers = #tpu.dot_dimension_numbers<[1], [0], [0], [1], [0, 0, 1, 1], [], []>} : vector<8x159xf32>, vector<159x56xf32>, vector<8x56xf32> -> vector<8x56xf32>
    %1306 = vector.broadcast %888 : vector<1x56xf32> to vector<8x56xf32>
    %1307 = arith.mulf %1305, %1306 : vector<8x56xf32>
    %1308 = vector.broadcast %889 : vector<1x56xf32> to vector<8x56xf32>
    %1309 = arith.addf %1307, %1308 : vector<8x56xf32>
    %1310 = arith.addf %1309, %388 : vector<8x56xf32>
    %1311 = arith.mulf %1147, %1289 : vector<8x159xf32>
    %cst_291 = arith.constant dense<0.000000e+00> : vector<8x56xf32>
    %1312 = tpu.matmul %1311, %887, %cst_291 {dimension_numbers = #tpu.dot_dimension_numbers<[1], [0], [0], [1], [0, 0, 1, 1], [], []>} : vector<8x159xf32>, vector<159x56xf32>, vector<8x56xf32> -> vector<8x56xf32>
    %1313 = vector.broadcast %888 : vector<1x56xf32> to vector<8x56xf32>
    %1314 = arith.mulf %1312, %1313 : vector<8x56xf32>
    %1315 = vector.broadcast %889 : vector<1x56xf32> to vector<8x56xf32>
    %1316 = arith.addf %1314, %1315 : vector<8x56xf32>
    %1317 = arith.addf %1316, %395 : vector<8x56xf32>
    %1318 = arith.mulf %1187, %1289 : vector<8x159xf32>
    %cst_292 = arith.constant dense<0.000000e+00> : vector<8x56xf32>
    %1319 = tpu.matmul %1318, %887, %cst_292 {dimension_numbers = #tpu.dot_dimension_numbers<[1], [0], [0], [1], [0, 0, 1, 1], [], []>} : vector<8x159xf32>, vector<159x56xf32>, vector<8x56xf32> -> vector<8x56xf32>
    %1320 = vector.broadcast %888 : vector<1x56xf32> to vector<8x56xf32>
    %1321 = arith.mulf %1319, %1320 : vector<8x56xf32>
    %1322 = vector.broadcast %889 : vector<1x56xf32> to vector<8x56xf32>
    %1323 = arith.addf %1321, %1322 : vector<8x56xf32>
    %1324 = arith.addf %1323, %402 : vector<8x56xf32>
    %1325 = arith.mulf %1227, %1289 : vector<8x159xf32>
    %cst_293 = arith.constant dense<0.000000e+00> : vector<8x56xf32>
    %1326 = tpu.matmul %1325, %887, %cst_293 {dimension_numbers = #tpu.dot_dimension_numbers<[1], [0], [0], [1], [0, 0, 1, 1], [], []>} : vector<8x159xf32>, vector<159x56xf32>, vector<8x56xf32> -> vector<8x56xf32>
    %1327 = vector.broadcast %888 : vector<1x56xf32> to vector<8x56xf32>
    %1328 = arith.mulf %1326, %1327 : vector<8x56xf32>
    %1329 = vector.broadcast %889 : vector<1x56xf32> to vector<8x56xf32>
    %1330 = arith.addf %1328, %1329 : vector<8x56xf32>
    %1331 = arith.addf %1330, %409 : vector<8x56xf32>
    %1332 = arith.mulf %1267, %1289 : vector<8x159xf32>
    %cst_294 = arith.constant dense<0.000000e+00> : vector<8x56xf32>
    %1333 = tpu.matmul %1332, %887, %cst_294 {dimension_numbers = #tpu.dot_dimension_numbers<[1], [0], [0], [1], [0, 0, 1, 1], [], []>} : vector<8x159xf32>, vector<159x56xf32>, vector<8x56xf32> -> vector<8x56xf32>
    %1334 = vector.broadcast %888 : vector<1x56xf32> to vector<8x56xf32>
    %1335 = arith.mulf %1333, %1334 : vector<8x56xf32>
    %1336 = vector.broadcast %889 : vector<1x56xf32> to vector<8x56xf32>
    %1337 = arith.addf %1335, %1336 : vector<8x56xf32>
    %1338 = arith.addf %1337, %416 : vector<8x56xf32>
    %c0_295 = arith.constant 0 : index
    %c0_296 = arith.constant 0 : index
    %c0_297 = arith.constant 0 : index
    %1339 = vector.load %arg21[%c0_295, %c0_296, %c0_297] : memref<7x56x81xf32, #tpu.memory_space<vmem>>, vector<1x56x81xf32>
    %1340 = vector.shape_cast %1339 : vector<1x56x81xf32> to vector<56x81xf32>
    %cst_298 = arith.constant dense<0.000000e+00> : vector<8x81xf32>
    %1341 = tpu.matmul %835, %1340, %cst_298 {dimension_numbers = #tpu.dot_dimension_numbers<[1], [0], [0], [1], [0, 0, 1, 1], [], []>} : vector<8x56xf32>, vector<56x81xf32>, vector<8x81xf32> -> vector<8x81xf32>
    %c1_299 = arith.constant 1 : index
    %c0_300 = arith.constant 0 : index
    %c0_301 = arith.constant 0 : index
    %1342 = vector.load %arg21[%c1_299, %c0_300, %c0_301] : memref<7x56x81xf32, #tpu.memory_space<vmem>>, vector<1x56x81xf32>
    %1343 = vector.shape_cast %1342 : vector<1x56x81xf32> to vector<56x81xf32>
    %cst_302 = arith.constant dense<0.000000e+00> : vector<8x81xf32>
    %1344 = tpu.matmul %842, %1343, %cst_302 {dimension_numbers = #tpu.dot_dimension_numbers<[1], [0], [0], [1], [0, 0, 1, 1], [], []>} : vector<8x56xf32>, vector<56x81xf32>, vector<8x81xf32> -> vector<8x81xf32>
    %1345 = arith.addf %1341, %1344 : vector<8x81xf32>
    %c2_303 = arith.constant 2 : index
    %c0_304 = arith.constant 0 : index
    %c0_305 = arith.constant 0 : index
    %1346 = vector.load %arg21[%c2_303, %c0_304, %c0_305] : memref<7x56x81xf32, #tpu.memory_space<vmem>>, vector<1x56x81xf32>
    %1347 = vector.shape_cast %1346 : vector<1x56x81xf32> to vector<56x81xf32>
    %cst_306 = arith.constant dense<0.000000e+00> : vector<8x81xf32>
    %1348 = tpu.matmul %849, %1347, %cst_306 {dimension_numbers = #tpu.dot_dimension_numbers<[1], [0], [0], [1], [0, 0, 1, 1], [], []>} : vector<8x56xf32>, vector<56x81xf32>, vector<8x81xf32> -> vector<8x81xf32>
    %1349 = arith.addf %1345, %1348 : vector<8x81xf32>
    %c3_307 = arith.constant 3 : index
    %c0_308 = arith.constant 0 : index
    %c0_309 = arith.constant 0 : index
    %1350 = vector.load %arg21[%c3_307, %c0_308, %c0_309] : memref<7x56x81xf32, #tpu.memory_space<vmem>>, vector<1x56x81xf32>
    %1351 = vector.shape_cast %1350 : vector<1x56x81xf32> to vector<56x81xf32>
    %cst_310 = arith.constant dense<0.000000e+00> : vector<8x81xf32>
    %1352 = tpu.matmul %856, %1351, %cst_310 {dimension_numbers = #tpu.dot_dimension_numbers<[1], [0], [0], [1], [0, 0, 1, 1], [], []>} : vector<8x56xf32>, vector<56x81xf32>, vector<8x81xf32> -> vector<8x81xf32>
    %1353 = arith.addf %1349, %1352 : vector<8x81xf32>
    %c4_311 = arith.constant 4 : index
    %c0_312 = arith.constant 0 : index
    %c0_313 = arith.constant 0 : index
    %1354 = vector.load %arg21[%c4_311, %c0_312, %c0_313] : memref<7x56x81xf32, #tpu.memory_space<vmem>>, vector<1x56x81xf32>
    %1355 = vector.shape_cast %1354 : vector<1x56x81xf32> to vector<56x81xf32>
    %cst_314 = arith.constant dense<0.000000e+00> : vector<8x81xf32>
    %1356 = tpu.matmul %863, %1355, %cst_314 {dimension_numbers = #tpu.dot_dimension_numbers<[1], [0], [0], [1], [0, 0, 1, 1], [], []>} : vector<8x56xf32>, vector<56x81xf32>, vector<8x81xf32> -> vector<8x81xf32>
    %1357 = arith.addf %1353, %1356 : vector<8x81xf32>
    %c5_315 = arith.constant 5 : index
    %c0_316 = arith.constant 0 : index
    %c0_317 = arith.constant 0 : index
    %1358 = vector.load %arg21[%c5_315, %c0_316, %c0_317] : memref<7x56x81xf32, #tpu.memory_space<vmem>>, vector<1x56x81xf32>
    %1359 = vector.shape_cast %1358 : vector<1x56x81xf32> to vector<56x81xf32>
    %cst_318 = arith.constant dense<0.000000e+00> : vector<8x81xf32>
    %1360 = tpu.matmul %870, %1359, %cst_318 {dimension_numbers = #tpu.dot_dimension_numbers<[1], [0], [0], [1], [0, 0, 1, 1], [], []>} : vector<8x56xf32>, vector<56x81xf32>, vector<8x81xf32> -> vector<8x81xf32>
    %1361 = arith.addf %1357, %1360 : vector<8x81xf32>
    %c6_319 = arith.constant 6 : index
    %c0_320 = arith.constant 0 : index
    %c0_321 = arith.constant 0 : index
    %1362 = vector.load %arg21[%c6_319, %c0_320, %c0_321] : memref<7x56x81xf32, #tpu.memory_space<vmem>>, vector<1x56x81xf32>
    %1363 = vector.shape_cast %1362 : vector<1x56x81xf32> to vector<56x81xf32>
    %cst_322 = arith.constant dense<0.000000e+00> : vector<8x81xf32>
    %1364 = tpu.matmul %877, %1363, %cst_322 {dimension_numbers = #tpu.dot_dimension_numbers<[1], [0], [0], [1], [0, 0, 1, 1], [], []>} : vector<8x56xf32>, vector<56x81xf32>, vector<8x81xf32> -> vector<8x81xf32>
    %1365 = arith.addf %1361, %1364 : vector<8x81xf32>
    %c0_323 = arith.constant 0 : index
    %c0_324 = arith.constant 0 : index
    %1366 = vector.load %arg7[%c0_323, %c0_324] : memref<1x81xf32, #tpu.memory_space<vmem>>, vector<1x81xf32>
    %1367 = vector.broadcast %1366 : vector<1x81xf32> to vector<8x81xf32>
    %1368 = arith.addf %1365, %1367 : vector<8x81xf32>
    %cst_325 = arith.constant 0.000000e+00 : f32
    %1369 = vector.broadcast %cst_325 : f32 to vector<8x81xf32>
    %1370 = arith.maximumf %1368, %1369 : vector<8x81xf32>
    %c0_326 = arith.constant 0 : index
    %c0_327 = arith.constant 0 : index
    %1371 = vector.load %arg22[%c0_326, %c0_327] : memref<81x81xf32, #tpu.memory_space<vmem>>, vector<81x81xf32>
    %cst_328 = arith.constant dense<0.000000e+00> : vector<8x81xf32>
    %1372 = tpu.matmul %1370, %1371, %cst_328 {dimension_numbers = #tpu.dot_dimension_numbers<[1], [0], [0], [1], [0, 0, 1, 1], [], []>} : vector<8x81xf32>, vector<81x81xf32>, vector<8x81xf32> -> vector<8x81xf32>
    %c0_329 = arith.constant 0 : index
    %c0_330 = arith.constant 0 : index
    %1373 = vector.load %arg8[%c0_329, %c0_330] : memref<1x81xf32, #tpu.memory_space<vmem>>, vector<1x81xf32>
    %1374 = vector.broadcast %1373 : vector<1x81xf32> to vector<8x81xf32>
    %1375 = arith.addf %1372, %1374 : vector<8x81xf32>
    %c0_331 = arith.constant 0 : index
    %c0_332 = arith.constant 0 : index
    %1376 = vector.load %arg2[%c0_331, %c0_332] : memref<8x81xi32, #tpu.memory_space<vmem>>, vector<8x81xi32>
    %c0_i32 = arith.constant 0 : i32
    %1377 = vector.broadcast %c0_i32 : i32 to vector<8x81xi32>
    %1378 = arith.cmpi ne, %1376, %1377 : vector<8x81xi32>
    %cst_333 = arith.constant -1.000000e+08 : f32
    %1379 = vector.broadcast %cst_333 : f32 to vector<8x81xf32>
    %1380 = arith.select %1378, %1375, %1379 : vector<8x81xi1>, vector<8x81xf32>
    %cst_334 = arith.constant dense<0xFF800000> : vector<8xf32>
    %1381 = vector.multi_reduction <maximumf>, %1380, %cst_334 [1] : vector<8x81xf32> to vector<8xf32>
    %1382 = vector.shape_cast %1381 : vector<8xf32> to vector<8x1xf32>
    %1383 = vector.broadcast %1382 : vector<8x1xf32> to vector<8x81xf32>
    %1384 = arith.subf %1380, %1383 : vector<8x81xf32>
    %1385 = math.exp %1384 : vector<8x81xf32>
    %cst_335 = arith.constant dense<0.000000e+00> : vector<8xf32>
    %1386 = vector.multi_reduction <add>, %1385, %cst_335 [1] : vector<8x81xf32> to vector<8xf32>
    %1387 = vector.shape_cast %1386 : vector<8xf32> to vector<8x1xf32>
    %1388 = math.log %1387 : vector<8x1xf32>
    %1389 = vector.broadcast %1388 : vector<8x1xf32> to vector<8x81xf32>
    %1390 = arith.subf %1384, %1389 : vector<8x81xf32>
    %c0_336 = arith.constant 0 : index
    %c0_337 = arith.constant 0 : index
    %1391 = vector.load %arg51[%c0_336, %c0_337] : memref<8x81xf32, #tpu.memory_space<vmem>>, vector<8x81xf32>
    tpu.vector_store %arg51[%c0_336, %c0_337], %1390 {strides = array<i32>} : memref<8x81xf32, #tpu.memory_space<vmem>>, vector<8x81xf32>,
    %c0_338 = arith.constant 0 : index
    %c0_339 = arith.constant 0 : index
    %c0_340 = arith.constant 0 : index
    %1392 = vector.load %arg49[%c0_338, %c0_339, %c0_340] : memref<7x56x2xf32, #tpu.memory_space<vmem>>, vector<1x56x2xf32>
    %1393 = vector.shape_cast %1392 : vector<1x56x2xf32> to vector<56x2xf32>
    %cst_341 = arith.constant dense<0.000000e+00> : vector<8x2xf32>
    %1394 = tpu.matmul %1296, %1393, %cst_341 {dimension_numbers = #tpu.dot_dimension_numbers<[1], [0], [0], [1], [0, 0, 1, 1], [], []>} : vector<8x56xf32>, vector<56x2xf32>, vector<8x2xf32> -> vector<8x2xf32>
    %c1_342 = arith.constant 1 : index
    %c0_343 = arith.constant 0 : index
    %c0_344 = arith.constant 0 : index
    %1395 = vector.load %arg49[%c1_342, %c0_343, %c0_344] : memref<7x56x2xf32, #tpu.memory_space<vmem>>, vector<1x56x2xf32>
    %1396 = vector.shape_cast %1395 : vector<1x56x2xf32> to vector<56x2xf32>
    %cst_345 = arith.constant dense<0.000000e+00> : vector<8x2xf32>
    %1397 = tpu.matmul %1303, %1396, %cst_345 {dimension_numbers = #tpu.dot_dimension_numbers<[1], [0], [0], [1], [0, 0, 1, 1], [], []>} : vector<8x56xf32>, vector<56x2xf32>, vector<8x2xf32> -> vector<8x2xf32>
    %1398 = arith.addf %1394, %1397 : vector<8x2xf32>
    %c2_346 = arith.constant 2 : index
    %c0_347 = arith.constant 0 : index
    %c0_348 = arith.constant 0 : index
    %1399 = vector.load %arg49[%c2_346, %c0_347, %c0_348] : memref<7x56x2xf32, #tpu.memory_space<vmem>>, vector<1x56x2xf32>
    %1400 = vector.shape_cast %1399 : vector<1x56x2xf32> to vector<56x2xf32>
    %cst_349 = arith.constant dense<0.000000e+00> : vector<8x2xf32>
    %1401 = tpu.matmul %1310, %1400, %cst_349 {dimension_numbers = #tpu.dot_dimension_numbers<[1], [0], [0], [1], [0, 0, 1, 1], [], []>} : vector<8x56xf32>, vector<56x2xf32>, vector<8x2xf32> -> vector<8x2xf32>
    %1402 = arith.addf %1398, %1401 : vector<8x2xf32>
    %c3_350 = arith.constant 3 : index
    %c0_351 = arith.constant 0 : index
    %c0_352 = arith.constant 0 : index
    %1403 = vector.load %arg49[%c3_350, %c0_351, %c0_352] : memref<7x56x2xf32, #tpu.memory_space<vmem>>, vector<1x56x2xf32>
    %1404 = vector.shape_cast %1403 : vector<1x56x2xf32> to vector<56x2xf32>
    %cst_353 = arith.constant dense<0.000000e+00> : vector<8x2xf32>
    %1405 = tpu.matmul %1317, %1404, %cst_353 {dimension_numbers = #tpu.dot_dimension_numbers<[1], [0], [0], [1], [0, 0, 1, 1], [], []>} : vector<8x56xf32>, vector<56x2xf32>, vector<8x2xf32> -> vector<8x2xf32>
    %1406 = arith.addf %1402, %1405 : vector<8x2xf32>
    %c4_354 = arith.constant 4 : index
    %c0_355 = arith.constant 0 : index
    %c0_356 = arith.constant 0 : index
    %1407 = vector.load %arg49[%c4_354, %c0_355, %c0_356] : memref<7x56x2xf32, #tpu.memory_space<vmem>>, vector<1x56x2xf32>
    %1408 = vector.shape_cast %1407 : vector<1x56x2xf32> to vector<56x2xf32>
    %cst_357 = arith.constant dense<0.000000e+00> : vector<8x2xf32>
    %1409 = tpu.matmul %1324, %1408, %cst_357 {dimension_numbers = #tpu.dot_dimension_numbers<[1], [0], [0], [1], [0, 0, 1, 1], [], []>} : vector<8x56xf32>, vector<56x2xf32>, vector<8x2xf32> -> vector<8x2xf32>
    %1410 = arith.addf %1406, %1409 : vector<8x2xf32>
    %c5_358 = arith.constant 5 : index
    %c0_359 = arith.constant 0 : index
    %c0_360 = arith.constant 0 : index
    %1411 = vector.load %arg49[%c5_358, %c0_359, %c0_360] : memref<7x56x2xf32, #tpu.memory_space<vmem>>, vector<1x56x2xf32>
    %1412 = vector.shape_cast %1411 : vector<1x56x2xf32> to vector<56x2xf32>
    %cst_361 = arith.constant dense<0.000000e+00> : vector<8x2xf32>
    %1413 = tpu.matmul %1331, %1412, %cst_361 {dimension_numbers = #tpu.dot_dimension_numbers<[1], [0], [0], [1], [0, 0, 1, 1], [], []>} : vector<8x56xf32>, vector<56x2xf32>, vector<8x2xf32> -> vector<8x2xf32>
    %1414 = arith.addf %1410, %1413 : vector<8x2xf32>
    %c6_362 = arith.constant 6 : index
    %c0_363 = arith.constant 0 : index
    %c0_364 = arith.constant 0 : index
    %1415 = vector.load %arg49[%c6_362, %c0_363, %c0_364] : memref<7x56x2xf32, #tpu.memory_space<vmem>>, vector<1x56x2xf32>
    %1416 = vector.shape_cast %1415 : vector<1x56x2xf32> to vector<56x2xf32>
    %cst_365 = arith.constant dense<0.000000e+00> : vector<8x2xf32>
    %1417 = tpu.matmul %1338, %1416, %cst_365 {dimension_numbers = #tpu.dot_dimension_numbers<[1], [0], [0], [1], [0, 0, 1, 1], [], []>} : vector<8x56xf32>, vector<56x2xf32>, vector<8x2xf32> -> vector<8x2xf32>
    %1418 = arith.addf %1414, %1417 : vector<8x2xf32>
    %c0_366 = arith.constant 0 : index
    %c0_367 = arith.constant 0 : index
    %1419 = vector.load %arg35[%c0_366, %c0_367] : memref<1x2xf32, #tpu.memory_space<vmem>>, vector<1x2xf32>
    %1420 = vector.broadcast %1419 : vector<1x2xf32> to vector<8x2xf32>
    %1421 = arith.addf %1418, %1420 : vector<8x2xf32>
    %cst_368 = arith.constant 0.000000e+00 : f32
    %1422 = vector.broadcast %cst_368 : f32 to vector<8x2xf32>
    %1423 = arith.maximumf %1421, %1422 : vector<8x2xf32>
    %c0_369 = arith.constant 0 : index
    %c0_370 = arith.constant 0 : index
    %1424 = vector.load %arg50[%c0_369, %c0_370] : memref<2x2xf32, #tpu.memory_space<vmem>>, vector<2x2xf32>
    %cst_371 = arith.constant dense<0.000000e+00> : vector<8x2xf32>
    %1425 = tpu.matmul %1423, %1424, %cst_371 {dimension_numbers = #tpu.dot_dimension_numbers<[1], [0], [0], [1], [0, 0, 1, 1], [], []>} : vector<8x2xf32>, vector<2x2xf32>, vector<8x2xf32> -> vector<8x2xf32>
    %c0_372 = arith.constant 0 : index
    %c0_373 = arith.constant 0 : index
    %1426 = vector.load %arg36[%c0_372, %c0_373] : memref<1x2xf32, #tpu.memory_space<vmem>>, vector<1x2xf32>
    %1427 = vector.broadcast %1426 : vector<1x2xf32> to vector<8x2xf32>
    %1428 = arith.addf %1425, %1427 : vector<8x2xf32>
    %1429 = math.tanh %1428 : vector<8x2xf32>
    %c0_374 = arith.constant 0 : index
    %c0_375 = arith.constant 0 : index
    %1430 = vector.load %arg52[%c0_374, %c0_375] : memref<8x2xf32, #tpu.memory_space<vmem>>, vector<8x2xf32>
    tpu.vector_store %arg52[%c0_374, %c0_375], %1429 {strides = array<i32>} : memref<8x2xf32, #tpu.memory_space<vmem>>, vector<8x2xf32>,
    return
  }
  func.func @transform_0(%arg0: i32) -> (i32, i32) {
    %c0_i32 = arith.constant 0 : i32
    %c0_i32_0 = arith.constant 0 : i32
    return %arg0, %c0_i32 : i32, i32
  }
  func.func @transform_1(%arg0: i32) -> (i32, i32) {
    %c0_i32 = arith.constant 0 : i32
    %c0_i32_0 = arith.constant 0 : i32
    return %arg0, %c0_i32 : i32, i32
  }
  func.func @transform_2(%arg0: i32) -> i32 {
    %c0_i32 = arith.constant 0 : i32
    %c0_i32_0 = arith.constant 0 : i32
    return %c0_i32 : i32
  }
  func.func @transform_3(%arg0: i32) -> (i32, i32) {
    %c0_i32 = arith.constant 0 : i32
    %c0_i32_0 = arith.constant 0 : i32
    %c0_i32_1 = arith.constant 0 : i32
    return %c0_i32, %c0_i32_0 : i32, i32
  }
  func.func @transform_4(%arg0: i32) -> (i32, i32, i32) {
    %c0_i32 = arith.constant 0 : i32
    %c0_i32_0 = arith.constant 0 : i32
    %c0_i32_1 = arith.constant 0 : i32
    %c0_i32_2 = arith.constant 0 : i32
    return %c0_i32, %c0_i32_0, %c0_i32_1 : i32, i32, i32
  }
  func.func @transform_5(%arg0: i32) -> (i32, i32) {
    %c0_i32 = arith.constant 0 : i32
    %c0_i32_0 = arith.constant 0 : i32
    %c0_i32_1 = arith.constant 0 : i32
    return %c0_i32, %c0_i32_0 : i32, i32
  }
  func.func @transform_6(%arg0: i32) -> (i32, i32) {
    %c0_i32 = arith.constant 0 : i32
    %c0_i32_0 = arith.constant 0 : i32
    %c0_i32_1 = arith.constant 0 : i32
    return %c0_i32, %c0_i32_0 : i32, i32
  }
  func.func @transform_7(%arg0: i32) -> (i32, i32) {
    %c0_i32 = arith.constant 0 : i32
    %c0_i32_0 = arith.constant 0 : i32
    %c0_i32_1 = arith.constant 0 : i32
    return %c0_i32, %c0_i32_0 : i32, i32
  }
  func.func @transform_8(%arg0: i32) -> (i32, i32) {
    %c0_i32 = arith.constant 0 : i32
    %c0_i32_0 = arith.constant 0 : i32
    %c0_i32_1 = arith.constant 0 : i32
    return %c0_i32, %c0_i32_0 : i32, i32
  }
  func.func @transform_9(%arg0: i32) -> (i32, i32) {
    %c0_i32 = arith.constant 0 : i32
    %c0_i32_0 = arith.constant 0 : i32
    %c0_i32_1 = arith.constant 0 : i32
    return %c0_i32, %c0_i32_0 : i32, i32
  }
  func.func @transform_10(%arg0: i32) -> (i32, i32) {
    %c0_i32 = arith.constant 0 : i32
    %c0_i32_0 = arith.constant 0 : i32
    %c0_i32_1 = arith.constant 0 : i32
    return %c0_i32, %c0_i32_0 : i32, i32
  }
  func.func @transform_11(%arg0: i32) -> (i32, i32) {
    %c0_i32 = arith.constant 0 : i32
    %c0_i32_0 = arith.constant 0 : i32
    %c0_i32_1 = arith.constant 0 : i32
    return %c0_i32, %c0_i32_0 : i32, i32
  }
  func.func @transform_12(%arg0: i32) -> (i32, i32) {
    %c0_i32 = arith.constant 0 : i32
    %c0_i32_0 = arith.constant 0 : i32
    %c0_i32_1 = arith.constant 0 : i32
    return %c0_i32, %c0_i32_0 : i32, i32
  }
  func.func @transform_13(%arg0: i32) -> (i32, i32) {
    %c0_i32 = arith.constant 0 : i32
    %c0_i32_0 = arith.constant 0 : i32
    %c0_i32_1 = arith.constant 0 : i32
    return %c0_i32, %c0_i32_0 : i32, i32
  }
  func.func @transform_14(%arg0: i32) -> (i32, i32) {
    %c0_i32 = arith.constant 0 : i32
    %c0_i32_0 = arith.constant 0 : i32
    %c0_i32_1 = arith.constant 0 : i32
    return %c0_i32, %c0_i32_0 : i32, i32
  }
  func.func @transform_15(%arg0: i32) -> (i32, i32) {
    %c0_i32 = arith.constant 0 : i32
    %c0_i32_0 = arith.constant 0 : i32
    %c0_i32_1 = arith.constant 0 : i32
    return %c0_i32, %c0_i32_0 : i32, i32
  }
  func.func @transform_16(%arg0: i32) -> (i32, i32) {
    %c0_i32 = arith.constant 0 : i32
    %c0_i32_0 = arith.constant 0 : i32
    %c0_i32_1 = arith.constant 0 : i32
    return %c0_i32, %c0_i32_0 : i32, i32
  }
  func.func @transform_17(%arg0: i32) -> (i32, i32) {
    %c0_i32 = arith.constant 0 : i32
    %c0_i32_0 = arith.constant 0 : i32
    %c0_i32_1 = arith.constant 0 : i32
    return %c0_i32, %c0_i32_0 : i32, i32
  }
  func.func @transform_18(%arg0: i32) -> (i32, i32) {
    %c0_i32 = arith.constant 0 : i32
    %c0_i32_0 = arith.constant 0 : i32
    %c0_i32_1 = arith.constant 0 : i32
    return %c0_i32, %c0_i32_0 : i32, i32
  }
  func.func @transform_19(%arg0: i32) -> (i32, i32) {
    %c0_i32 = arith.constant 0 : i32
    %c0_i32_0 = arith.constant 0 : i32
    %c0_i32_1 = arith.constant 0 : i32
    return %c0_i32, %c0_i32_0 : i32, i32
  }
  func.func @transform_20(%arg0: i32) -> (i32, i32, i32) {
    %c0_i32 = arith.constant 0 : i32
    %c0_i32_0 = arith.constant 0 : i32
    %c0_i32_1 = arith.constant 0 : i32
    %c0_i32_2 = arith.constant 0 : i32
    return %c0_i32, %c0_i32_0, %c0_i32_1 : i32, i32, i32
  }
  func.func @transform_21(%arg0: i32) -> (i32, i32) {
    %c0_i32 = arith.constant 0 : i32
    %c0_i32_0 = arith.constant 0 : i32
    %c0_i32_1 = arith.constant 0 : i32
    return %c0_i32, %c0_i32_0 : i32, i32
  }
  func.func @transform_22(%arg0: i32) -> (i32, i32) {
    %c0_i32 = arith.constant 0 : i32
    %c0_i32_0 = arith.constant 0 : i32
    %c0_i32_1 = arith.constant 0 : i32
    return %c0_i32, %c0_i32_0 : i32, i32
  }
  func.func @transform_23(%arg0: i32) -> (i32, i32) {
    %c0_i32 = arith.constant 0 : i32
    %c0_i32_0 = arith.constant 0 : i32
    %c0_i32_1 = arith.constant 0 : i32
    return %c0_i32, %c0_i32_0 : i32, i32
  }
  func.func @transform_24(%arg0: i32) -> (i32, i32) {
    %c0_i32 = arith.constant 0 : i32
    %c0_i32_0 = arith.constant 0 : i32
    %c0_i32_1 = arith.constant 0 : i32
    return %c0_i32, %c0_i32_0 : i32, i32
  }
  func.func @transform_25(%arg0: i32) -> (i32, i32) {
    %c0_i32 = arith.constant 0 : i32
    %c0_i32_0 = arith.constant 0 : i32
    %c0_i32_1 = arith.constant 0 : i32
    return %c0_i32, %c0_i32_0 : i32, i32
  }
  func.func @transform_26(%arg0: i32) -> (i32, i32) {
    %c0_i32 = arith.constant 0 : i32
    %c0_i32_0 = arith.constant 0 : i32
    %c0_i32_1 = arith.constant 0 : i32
    return %c0_i32, %c0_i32_0 : i32, i32
  }
  func.func @transform_27(%arg0: i32) -> (i32, i32) {
    %c0_i32 = arith.constant 0 : i32
    %c0_i32_0 = arith.constant 0 : i32
    %c0_i32_1 = arith.constant 0 : i32
    return %c0_i32, %c0_i32_0 : i32, i32
  }
  func.func @transform_28(%arg0: i32) -> (i32, i32) {
    %c0_i32 = arith.constant 0 : i32
    %c0_i32_0 = arith.constant 0 : i32
    %c0_i32_1 = arith.constant 0 : i32
    return %c0_i32, %c0_i32_0 : i32, i32
  }
  func.func @transform_29(%arg0: i32) -> (i32, i32) {
    %c0_i32 = arith.constant 0 : i32
    %c0_i32_0 = arith.constant 0 : i32
    %c0_i32_1 = arith.constant 0 : i32
    return %c0_i32, %c0_i32_0 : i32, i32
  }
  func.func @transform_30(%arg0: i32) -> (i32, i32) {
    %c0_i32 = arith.constant 0 : i32
    %c0_i32_0 = arith.constant 0 : i32
    %c0_i32_1 = arith.constant 0 : i32
    return %c0_i32, %c0_i32_0 : i32, i32
  }
  func.func @transform_31(%arg0: i32) -> (i32, i32) {
    %c0_i32 = arith.constant 0 : i32
    %c0_i32_0 = arith.constant 0 : i32
    %c0_i32_1 = arith.constant 0 : i32
    return %c0_i32, %c0_i32_0 : i32, i32
  }
  func.func @transform_32(%arg0: i32) -> (i32, i32) {
    %c0_i32 = arith.constant 0 : i32
    %c0_i32_0 = arith.constant 0 : i32
    %c0_i32_1 = arith.constant 0 : i32
    return %c0_i32, %c0_i32_0 : i32, i32
  }
  func.func @transform_33(%arg0: i32) -> (i32, i32) {
    %c0_i32 = arith.constant 0 : i32
    %c0_i32_0 = arith.constant 0 : i32
    %c0_i32_1 = arith.constant 0 : i32
    return %c0_i32, %c0_i32_0 : i32, i32
  }
  func.func @transform_34(%arg0: i32) -> (i32, i32) {
    %c0_i32 = arith.constant 0 : i32
    %c0_i32_0 = arith.constant 0 : i32
    %c0_i32_1 = arith.constant 0 : i32
    return %c0_i32, %c0_i32_0 : i32, i32
  }
  func.func @transform_35(%arg0: i32) -> (i32, i32) {
    %c0_i32 = arith.constant 0 : i32
    %c0_i32_0 = arith.constant 0 : i32
    %c0_i32_1 = arith.constant 0 : i32
    return %c0_i32, %c0_i32_0 : i32, i32
  }
  func.func @transform_36(%arg0: i32) -> (i32, i32) {
    %c0_i32 = arith.constant 0 : i32
    %c0_i32_0 = arith.constant 0 : i32
    %c0_i32_1 = arith.constant 0 : i32
    return %c0_i32, %c0_i32_0 : i32, i32
  }
  func.func @transform_37(%arg0: i32) -> (i32, i32) {
    %c0_i32 = arith.constant 0 : i32
    %c0_i32_0 = arith.constant 0 : i32
    %c0_i32_1 = arith.constant 0 : i32
    return %c0_i32, %c0_i32_0 : i32, i32
  }
  func.func @transform_38(%arg0: i32) -> (i32, i32) {
    %c0_i32 = arith.constant 0 : i32
    %c0_i32_0 = arith.constant 0 : i32
    %c0_i32_1 = arith.constant 0 : i32
    return %c0_i32, %c0_i32_0 : i32, i32
  }
  func.func @transform_39(%arg0: i32) -> (i32, i32) {
    %c0_i32 = arith.constant 0 : i32
    %c0_i32_0 = arith.constant 0 : i32
    %c0_i32_1 = arith.constant 0 : i32
    return %c0_i32, %c0_i32_0 : i32, i32
  }
  func.func @transform_40(%arg0: i32) -> (i32, i32) {
    %c0_i32 = arith.constant 0 : i32
    %c0_i32_0 = arith.constant 0 : i32
    %c0_i32_1 = arith.constant 0 : i32
    return %c0_i32, %c0_i32_0 : i32, i32
  }
  func.func @transform_41(%arg0: i32) -> (i32, i32) {
    %c0_i32 = arith.constant 0 : i32
    %c0_i32_0 = arith.constant 0 : i32
    %c0_i32_1 = arith.constant 0 : i32
    return %c0_i32, %c0_i32_0 : i32, i32
  }
  func.func @transform_42(%arg0: i32) -> (i32, i32) {
    %c0_i32 = arith.constant 0 : i32
    %c0_i32_0 = arith.constant 0 : i32
    %c0_i32_1 = arith.constant 0 : i32
    return %c0_i32, %c0_i32_0 : i32, i32
  }
  func.func @transform_43(%arg0: i32) -> (i32, i32) {
    %c0_i32 = arith.constant 0 : i32
    %c0_i32_0 = arith.constant 0 : i32
    %c0_i32_1 = arith.constant 0 : i32
    return %c0_i32, %c0_i32_0 : i32, i32
  }
  func.func @transform_44(%arg0: i32) -> (i32, i32) {
    %c0_i32 = arith.constant 0 : i32
    %c0_i32_0 = arith.constant 0 : i32
    %c0_i32_1 = arith.constant 0 : i32
    return %c0_i32, %c0_i32_0 : i32, i32
  }
  func.func @transform_45(%arg0: i32) -> (i32, i32) {
    %c0_i32 = arith.constant 0 : i32
    %c0_i32_0 = arith.constant 0 : i32
    %c0_i32_1 = arith.constant 0 : i32
    return %c0_i32, %c0_i32_0 : i32, i32
  }
  func.func @transform_46(%arg0: i32) -> (i32, i32) {
    %c0_i32 = arith.constant 0 : i32
    %c0_i32_0 = arith.constant 0 : i32
    %c0_i32_1 = arith.constant 0 : i32
    return %c0_i32, %c0_i32_0 : i32, i32
  }
  func.func @transform_47(%arg0: i32) -> (i32, i32) {
    %c0_i32 = arith.constant 0 : i32
    %c0_i32_0 = arith.constant 0 : i32
    %c0_i32_1 = arith.constant 0 : i32
    return %c0_i32, %c0_i32_0 : i32, i32
  }
  func.func @transform_48(%arg0: i32) -> (i32, i32, i32) {
    %c0_i32 = arith.constant 0 : i32
    %c0_i32_0 = arith.constant 0 : i32
    %c0_i32_1 = arith.constant 0 : i32
    %c0_i32_2 = arith.constant 0 : i32
    return %c0_i32, %c0_i32_0, %c0_i32_1 : i32, i32, i32
  }
  func.func @transform_49(%arg0: i32) -> (i32, i32) {
    %c0_i32 = arith.constant 0 : i32
    %c0_i32_0 = arith.constant 0 : i32
    %c0_i32_1 = arith.constant 0 : i32
    return %c0_i32, %c0_i32_0 : i32, i32
  }
  func.func @transform_50(%arg0: i32) -> (i32, i32) {
    %c0_i32 = arith.constant 0 : i32
    %c0_i32_0 = arith.constant 0 : i32
    return %arg0, %c0_i32 : i32, i32
  }
  func.func @transform_51(%arg0: i32) -> (i32, i32) {
    %c0_i32 = arith.constant 0 : i32
    %c0_i32_0 = arith.constant 0 : i32
    return %arg0, %c0_i32 : i32, i32
  }
}

</mosaic_0001>

<llo_original>
// kernel: tpu_custom_call.1
$region0: #{tpu_custom_call.1}
  #allocation0 [shape = 'u32[]', space=smem, size = 0x4, offset = 0x4, fixed_abs, tag = 'smem constant byte address 0x4 - core index']
  #allocation1 [shape = 'u32[144,128]{1,0:T(1,128)}', space=vmem, size = 0x12000, scoped, tag = 'internal scratch']
  %s0 = inlined_call_operand.smem [shape: u32[52], index: -1, kind: input, shape index: {}]
  %s1 = sld [smem:[%s0]]
  %s2 = scalar_lea.smem %s0, 1
  %s3 = sld [smem:[%s2]]
  %s4 = scalar_lea.smem %s0, 2
  %s5 = sld [smem:[%s4]]
  %s6 = scalar_lea.smem %s0, 3
  %s7 = sld [smem:[%s6]]
  %s8 = scalar_lea.smem %s0, 4
  %s9 = sld [smem:[%s8]]
  %s10 = scalar_lea.smem %s0, 5
  %s11 = sld [smem:[%s10]]
  %s12 = scalar_lea.smem %s0, 6
  %s13 = sld [smem:[%s12]]
  %s14 = scalar_lea.smem %s0, 7
  %s15 = sld [smem:[%s14]]
  %s16 = scalar_lea.smem %s0, 8
  %s17 = sld [smem:[%s16]]
  %s18 = scalar_lea.smem %s0, 9
  %s19 = sld [smem:[%s18]]
  %s20 = scalar_lea.smem %s0, 10
  %s21 = sld [smem:[%s20]]
  %s22 = scalar_lea.smem %s0, 11
  %s23 = sld [smem:[%s22]]
  %s24 = scalar_lea.smem %s0, 12
  %s25 = sld [smem:[%s24]]
  %s26 = scalar_lea.smem %s0, 13
  %s27 = sld [smem:[%s26]]
  %s28 = scalar_lea.smem %s0, 14
  %s29 = sld [smem:[%s28]]
  %s30 = scalar_lea.smem %s0, 15
  %s31 = sld [smem:[%s30]]
  %s32 = scalar_lea.smem %s0, 16
  %s33 = sld [smem:[%s32]]
  %s34 = scalar_lea.smem %s0, 17
  %s35 = sld [smem:[%s34]]
  %s36 = scalar_lea.smem %s0, 18
  %s37 = sld [smem:[%s36]]
  %s38 = scalar_lea.smem %s0, 19
  %s39 = sld [smem:[%s38]]
  %s40 = scalar_lea.smem %s0, 20
  %s41 = sld [smem:[%s40]]
  %s42 = scalar_lea.smem %s0, 21
  %s43 = sld [smem:[%s42]]
  %s44 = scalar_lea.smem %s0, 22
  %s45 = sld [smem:[%s44]]
  %s46 = scalar_lea.smem %s0, 23
  %s47 = sld [smem:[%s46]]
  %s48 = scalar_lea.smem %s0, 24
  %s49 = sld [smem:[%s48]]
  %s50 = scalar_lea.smem %s0, 25
  %s51 = sld [smem:[%s50]]
  %s52 = scalar_lea.smem %s0, 26
  %s53 = sld [smem:[%s52]]
  %s54 = scalar_lea.smem %s0, 27
  %s55 = sld [smem:[%s54]]
  %s56 = scalar_lea.smem %s0, 28
  %s57 = sld [smem:[%s56]]
  %s58 = scalar_lea.smem %s0, 29
  %s59 = sld [smem:[%s58]]
  %s60 = scalar_lea.smem %s0, 30
  %s61 = sld [smem:[%s60]]
  %s62 = scalar_lea.smem %s0, 31
  %s63 = sld [smem:[%s62]]
  %s64 = scalar_lea.smem %s0, 32
  %s65 = sld [smem:[%s64]]
  %s66 = scalar_lea.smem %s0, 33
  %s67 = sld [smem:[%s66]]
  %s68 = scalar_lea.smem %s0, 34
  %s69 = sld [smem:[%s68]]
  %s70 = scalar_lea.smem %s0, 35
  %s71 = sld [smem:[%s70]]
  %s72 = scalar_lea.smem %s0, 36
  %s73 = sld [smem:[%s72]]
  %s74 = scalar_lea.smem %s0, 37
  %s75 = sld [smem:[%s74]]
  %s76 = scalar_lea.smem %s0, 38
  %s77 = sld [smem:[%s76]]
  %s78 = scalar_lea.smem %s0, 39
  %s79 = sld [smem:[%s78]]
  %s80 = scalar_lea.smem %s0, 40
  %s81 = sld [smem:[%s80]]
  %s82 = scalar_lea.smem %s0, 41
  %s83 = sld [smem:[%s82]]
  %s84 = scalar_lea.smem %s0, 42
  %s85 = sld [smem:[%s84]]
  %s86 = scalar_lea.smem %s0, 43
  %s87 = sld [smem:[%s86]]
  %s88 = scalar_lea.smem %s0, 44
  %s89 = sld [smem:[%s88]]
  %s90 = scalar_lea.smem %s0, 45
  %s91 = sld [smem:[%s90]]
  %s92 = scalar_lea.smem %s0, 46
  %s93 = sld [smem:[%s92]]
  %s94 = scalar_lea.smem %s0, 47
  %s95 = sld [smem:[%s94]]
  %s96 = scalar_lea.smem %s0, 48
  %s97 = sld [smem:[%s96]]
  %s98 = scalar_lea.smem %s0, 49
  %s99 = sld [smem:[%s98]]
  %s100 = scalar_lea.smem %s0, 50
  %s101 = sld [smem:[%s100]]
  %s102 = scalar_lea.smem %s0, 51
  %s103 = sld [smem:[%s102]]
  %104 = xla_tuple %s101, %s103
  %s105 = sld [smem:[#allocation0]]
  $region234: #{tpu_custom_call.1} parent=0
    _
  %s107 = ssub.s32 1, %s105
  %s108 = scalar_select 0, %s107, %s105
  $region1: #{tpu_custom_call.1} parent=0
    #allocation2 [shape = 'u8[1024]{0}', space=smem, size = 0x400, scoped, tag = 'input window, operand 2, single buffered']
    #allocation3 [shape = 's32[1]{0}', space=sflag, size = 0x4, scoped, tag = 'scoped memory for tpu_custom_call.1']
    #allocation4 [shape = 's32[1]{0}', space=sflag, size = 0x4, scoped, tag = 'scoped memory for tpu_custom_call.1']
    #allocation5 [shape = 's32[1]{0}', space=sflag, size = 0x4, scoped, tag = 'scoped memory for tpu_custom_call.1']
    #allocation6 [shape = 'u8[512]{0}', space=vmem, size = 0x400, scoped, tag = 'input window, operand 36, single buffered']
    #allocation7 [shape = 'u8[512]{0}', space=vmem, size = 0x400, scoped, tag = 'input window, operand 42, single buffered']
    #allocation8 [shape = 's32[1]{0}', space=sflag, size = 0x4, scoped, tag = 'scoped memory for tpu_custom_call.1']
    #allocation9 [shape = 'u8[512]{0}', space=vmem, size = 0x400, scoped, tag = 'input window, operand 43, single buffered']
    #allocation10 [shape = 'u8[4096]{0}', space=vmem, size = 0x1000, scoped, tag = 'output window, operand 0, single buffered']
    %109 = vsyncpa [#allocation5], 0
    %110 = vsyncpa [#allocation3], 0
    %111 = vsyncpa [#allocation8], 0
    %112 = vsyncpa [#allocation4], 0
    // Predicated region
    $region2: #{tpu_custom_call.1} parent=1 // pred_check
      _
    $region3: #{tpu_custom_call.1} parent=1 // pred_check_branch
      %114 = sbr.rel (0) target = $region5
    $region4: #{tpu_custom_call.1} parent=1 // pred_region
      _
    $region5: #{tpu_custom_call.1} parent=1 // pred_fallthru
      _
    // Predicated region
    $region6: #{tpu_custom_call.1} parent=1 // pred_check
      _
    $region7: #{tpu_custom_call.1} parent=1 // pred_check_branch
      %116 = sbr.rel (0) target = $region9
    $region8: #{tpu_custom_call.1} parent=1 // pred_region
      _
    $region9: #{tpu_custom_call.1} parent=1 // pred_fallthru
      _
    // Predicated region
    $region10: #{tpu_custom_call.1} parent=1 // pred_check
      _
    $region11: #{tpu_custom_call.1} parent=1 // pred_check_branch
      %118 = sbr.rel (0) target = $region13
    $region12: #{tpu_custom_call.1} parent=1 // pred_region
      %s120 = ssub.s32 32, 32
      %121 = vsyncadd [#allocation5], %s120
      %s123 = sshll.u32 %s5, 4
      %s124 = int_to_ptr.vmem [resolvable:$true] %s123
      %126 = dma.vmem_to_smem %s124, 32, [#allocation2], [#allocation5]
    $region13: #{tpu_custom_call.1} parent=1 // pred_fallthru
      _
    // Predicated region
    $region14: #{tpu_custom_call.1} parent=1 // pred_check
      _
    $region15: #{tpu_custom_call.1} parent=1 // pred_check_branch
      %128 = sbr.rel (0) target = $region17
    $region16: #{tpu_custom_call.1} parent=1 // pred_region
      _
    $region17: #{tpu_custom_call.1} parent=1 // pred_fallthru
      _
    // Predicated region
    $region18: #{tpu_custom_call.1} parent=1 // pred_check
      _
    $region19: #{tpu_custom_call.1} parent=1 // pred_check_branch
      %130 = sbr.rel (0) target = $region21
    $region20: #{tpu_custom_call.1} parent=1 // pred_region
      _
    $region21: #{tpu_custom_call.1} parent=1 // pred_fallthru
      _
    // Predicated region
    $region22: #{tpu_custom_call.1} parent=1 // pred_check
      _
    $region23: #{tpu_custom_call.1} parent=1 // pred_check_branch
      %132 = sbr.rel (0) target = $region25
    $region24: #{tpu_custom_call.1} parent=1 // pred_region
      _
    $region25: #{tpu_custom_call.1} parent=1 // pred_fallthru
      _
    // Predicated region
    $region26: #{tpu_custom_call.1} parent=1 // pred_check
      _
    $region27: #{tpu_custom_call.1} parent=1 // pred_check_branch
      %134 = sbr.rel (0) target = $region29
    $region28: #{tpu_custom_call.1} parent=1 // pred_region
      _
    $region29: #{tpu_custom_call.1} parent=1 // pred_fallthru
      _
    // Predicated region
    $region30: #{tpu_custom_call.1} parent=1 // pred_check
      _
    $region31: #{tpu_custom_call.1} parent=1 // pred_check_branch
      %136 = sbr.rel (0) target = $region33
    $region32: #{tpu_custom_call.1} parent=1 // pred_region
      _
    $region33: #{tpu_custom_call.1} parent=1 // pred_fallthru
      _
    // Predicated region
    $region34: #{tpu_custom_call.1} parent=1 // pred_check
      _
    $region35: #{tpu_custom_call.1} parent=1 // pred_check_branch
      %138 = sbr.rel (0) target = $region37
    $region36: #{tpu_custom_call.1} parent=1 // pred_region
      _
    $region37: #{tpu_custom_call.1} parent=1 // pred_fallthru
      _
    // Predicated region
    $region38: #{tpu_custom_call.1} parent=1 // pred_check
      _
    $region39: #{tpu_custom_call.1} parent=1 // pred_check_branch
      %140 = sbr.rel (0) target = $region41
    $region40: #{tpu_custom_call.1} parent=1 // pred_region
      _
    $region41: #{tpu_custom_call.1} parent=1 // pred_fallthru
      _
    // Predicated region
    $region42: #{tpu_custom_call.1} parent=1 // pred_check
      _
    $region43: #{tpu_custom_call.1} parent=1 // pred_check_branch
      %142 = sbr.rel (0) target = $region45
    $region44: #{tpu_custom_call.1} parent=1 // pred_region
      _
    $region45: #{tpu_custom_call.1} parent=1 // pred_fallthru
      _
    // Predicated region
    $region46: #{tpu_custom_call.1} parent=1 // pred_check
      _
    $region47: #{tpu_custom_call.1} parent=1 // pred_check_branch
      %144 = sbr.rel (0) target = $region49
    $region48: #{tpu_custom_call.1} parent=1 // pred_region
      _
    $region49: #{tpu_custom_call.1} parent=1 // pred_fallthru
      _
    // Predicated region
    $region50: #{tpu_custom_call.1} parent=1 // pred_check
      _
    $region51: #{tpu_custom_call.1} parent=1 // pred_check_branch
      %146 = sbr.rel (0) target = $region53
    $region52: #{tpu_custom_call.1} parent=1 // pred_region
      _
    $region53: #{tpu_custom_call.1} parent=1 // pred_fallthru
      _
    // Predicated region
    $region54: #{tpu_custom_call.1} parent=1 // pred_check
      _
    $region55: #{tpu_custom_call.1} parent=1 // pred_check_branch
      %148 = sbr.rel (0) target = $region57
    $region56: #{tpu_custom_call.1} parent=1 // pred_region
      _
    $region57: #{tpu_custom_call.1} parent=1 // pred_fallthru
      _
    // Predicated region
    $region58: #{tpu_custom_call.1} parent=1 // pred_check
      _
    $region59: #{tpu_custom_call.1} parent=1 // pred_check_branch
      %150 = sbr.rel (0) target = $region61
    $region60: #{tpu_custom_call.1} parent=1 // pred_region
      _
    $region61: #{tpu_custom_call.1} parent=1 // pred_fallthru
      _
    // Predicated region
    $region62: #{tpu_custom_call.1} parent=1 // pred_check
      _
    $region63: #{tpu_custom_call.1} parent=1 // pred_check_branch
      %152 = sbr.rel (0) target = $region65
    $region64: #{tpu_custom_call.1} parent=1 // pred_region
      _
    $region65: #{tpu_custom_call.1} parent=1 // pred_fallthru
      _
    // Predicated region
    $region66: #{tpu_custom_call.1} parent=1 // pred_check
      _
    $region67: #{tpu_custom_call.1} parent=1 // pred_check_branch
      %154 = sbr.rel (0) target = $region69
    $region68: #{tpu_custom_call.1} parent=1 // pred_region
      _
    $region69: #{tpu_custom_call.1} parent=1 // pred_fallthru
      _
    // Predicated region
    $region70: #{tpu_custom_call.1} parent=1 // pred_check
      _
    $region71: #{tpu_custom_call.1} parent=1 // pred_check_branch
      %156 = sbr.rel (0) target = $region73
    $region72: #{tpu_custom_call.1} parent=1 // pred_region
      _
    $region73: #{tpu_custom_call.1} parent=1 // pred_fallthru
      _
    // Predicated region
    $region74: #{tpu_custom_call.1} parent=1 // pred_check
      _
    $region75: #{tpu_custom_call.1} parent=1 // pred_check_branch
      %158 = sbr.rel (0) target = $region77
    $region76: #{tpu_custom_call.1} parent=1 // pred_region
      _
    $region77: #{tpu_custom_call.1} parent=1 // pred_fallthru
      _
    // Predicated region
    $region78: #{tpu_custom_call.1} parent=1 // pred_check
      _
    $region79: #{tpu_custom_call.1} parent=1 // pred_check_branch
      %160 = sbr.rel (0) target = $region81
    $region80: #{tpu_custom_call.1} parent=1 // pred_region
      _
    $region81: #{tpu_custom_call.1} parent=1 // pred_fallthru
      _
    // Predicated region
    $region82: #{tpu_custom_call.1} parent=1 // pred_check
      _
    $region83: #{tpu_custom_call.1} parent=1 // pred_check_branch
      %162 = sbr.rel (0) target = $region85
    $region84: #{tpu_custom_call.1} parent=1 // pred_region
      _
    $region85: #{tpu_custom_call.1} parent=1 // pred_fallthru
      _
    // Predicated region
    $region86: #{tpu_custom_call.1} parent=1 // pred_check
      _
    $region87: #{tpu_custom_call.1} parent=1 // pred_check_branch
      %164 = sbr.rel (0) target = $region89
    $region88: #{tpu_custom_call.1} parent=1 // pred_region
      _
    $region89: #{tpu_custom_call.1} parent=1 // pred_fallthru
      _
    // Predicated region
    $region90: #{tpu_custom_call.1} parent=1 // pred_check
      _
    $region91: #{tpu_custom_call.1} parent=1 // pred_check_branch
      %166 = sbr.rel (0) target = $region93
    $region92: #{tpu_custom_call.1} parent=1 // pred_region
      _
    $region93: #{tpu_custom_call.1} parent=1 // pred_fallthru
      _
    // Predicated region
    $region94: #{tpu_custom_call.1} parent=1 // pred_check
      _
    $region95: #{tpu_custom_call.1} parent=1 // pred_check_branch
      %168 = sbr.rel (0) target = $region97
    $region96: #{tpu_custom_call.1} parent=1 // pred_region
      _
    $region97: #{tpu_custom_call.1} parent=1 // pred_fallthru
      _
    // Predicated region
    $region98: #{tpu_custom_call.1} parent=1 // pred_check
      _
    $region99: #{tpu_custom_call.1} parent=1 // pred_check_branch
      %170 = sbr.rel (0) target = $region101
    $region100: #{tpu_custom_call.1} parent=1 // pred_region
      _
    $region101: #{tpu_custom_call.1} parent=1 // pred_fallthru
      _
    // Predicated region
    $region102: #{tpu_custom_call.1} parent=1 // pred_check
      _
    $region103: #{tpu_custom_call.1} parent=1 // pred_check_branch
      %172 = sbr.rel (0) target = $region105
    $region104: #{tpu_custom_call.1} parent=1 // pred_region
      _
    $region105: #{tpu_custom_call.1} parent=1 // pred_fallthru
      _
    // Predicated region
    $region106: #{tpu_custom_call.1} parent=1 // pred_check
      _
    $region107: #{tpu_custom_call.1} parent=1 // pred_check_branch
      %174 = sbr.rel (0) target = $region109
    $region108: #{tpu_custom_call.1} parent=1 // pred_region
      _
    $region109: #{tpu_custom_call.1} parent=1 // pred_fallthru
      _
    // Predicated region
    $region110: #{tpu_custom_call.1} parent=1 // pred_check
      _
    $region111: #{tpu_custom_call.1} parent=1 // pred_check_branch
      %176 = sbr.rel (0) target = $region113
    $region112: #{tpu_custom_call.1} parent=1 // pred_region
      _
    $region113: #{tpu_custom_call.1} parent=1 // pred_fallthru
      _
    // Predicated region
    $region114: #{tpu_custom_call.1} parent=1 // pred_check
      _
    $region115: #{tpu_custom_call.1} parent=1 // pred_check_branch
      %178 = sbr.rel (0) target = $region117
    $region116: #{tpu_custom_call.1} parent=1 // pred_region
      _
    $region117: #{tpu_custom_call.1} parent=1 // pred_fallthru
      _
    // Predicated region
    $region118: #{tpu_custom_call.1} parent=1 // pred_check
      _
    $region119: #{tpu_custom_call.1} parent=1 // pred_check_branch
      %180 = sbr.rel (0) target = $region121
    $region120: #{tpu_custom_call.1} parent=1 // pred_region
      _
    $region121: #{tpu_custom_call.1} parent=1 // pred_fallthru
      _
    // Predicated region
    $region122: #{tpu_custom_call.1} parent=1 // pred_check
      _
    $region123: #{tpu_custom_call.1} parent=1 // pred_check_branch
      %182 = sbr.rel (0) target = $region125
    $region124: #{tpu_custom_call.1} parent=1 // pred_region
      _
    $region125: #{tpu_custom_call.1} parent=1 // pred_fallthru
      _
    // Predicated region
    $region126: #{tpu_custom_call.1} parent=1 // pred_check
      _
    $region127: #{tpu_custom_call.1} parent=1 // pred_check_branch
      %184 = sbr.rel (0) target = $region129
    $region128: #{tpu_custom_call.1} parent=1 // pred_region
      _
    $region129: #{tpu_custom_call.1} parent=1 // pred_fallthru
      _
    // Predicated region
    $region130: #{tpu_custom_call.1} parent=1 // pred_check
      _
    $region131: #{tpu_custom_call.1} parent=1 // pred_check_branch
      %186 = sbr.rel (0) target = $region133
    $region132: #{tpu_custom_call.1} parent=1 // pred_region
      _
    $region133: #{tpu_custom_call.1} parent=1 // pred_fallthru
      _
    // Predicated region
    $region134: #{tpu_custom_call.1} parent=1 // pred_check
      _
    $region135: #{tpu_custom_call.1} parent=1 // pred_check_branch
      %188 = sbr.rel (0) target = $region137
    $region136: #{tpu_custom_call.1} parent=1 // pred_region
      _
    $region137: #{tpu_custom_call.1} parent=1 // pred_fallthru
      _
    // Predicated region
    $region138: #{tpu_custom_call.1} parent=1 // pred_check
      _
    $region139: #{tpu_custom_call.1} parent=1 // pred_check_branch
      %190 = sbr.rel (0) target = $region141
    $region140: #{tpu_custom_call.1} parent=1 // pred_region
      _
    $region141: #{tpu_custom_call.1} parent=1 // pred_fallthru
      _
    // Predicated region
    $region142: #{tpu_custom_call.1} parent=1 // pred_check
      _
    $region143: #{tpu_custom_call.1} parent=1 // pred_check_branch
      %192 = sbr.rel (0) target = $region145
    $region144: #{tpu_custom_call.1} parent=1 // pred_region
      _
    $region145: #{tpu_custom_call.1} parent=1 // pred_fallthru
      _
    // Predicated region
    $region146: #{tpu_custom_call.1} parent=1 // pred_check
      _
    $region147: #{tpu_custom_call.1} parent=1 // pred_check_branch
      %194 = sbr.rel (0) target = $region149
    $region148: #{tpu_custom_call.1} parent=1 // pred_region
      %s196 = ssub.s32 16, 16
      %197 = vsyncadd [#allocation3], %s196
      %s199 = sshll.u32 [#allocation6], 4
      %s200 = int_to_ptr.vmem [resolvable:$true] %s199
      %202 = dma.hbm_to_vmem [thread:$0]  %s73, 16, %s200, [#allocation3]
    $region149: #{tpu_custom_call.1} parent=1 // pred_fallthru
      _
    // Predicated region
    $region150: #{tpu_custom_call.1} parent=1 // pred_check
      _
    $region151: #{tpu_custom_call.1} parent=1 // pred_check_branch
      %204 = sbr.rel (0) target = $region153
    $region152: #{tpu_custom_call.1} parent=1 // pred_region
      _
    $region153: #{tpu_custom_call.1} parent=1 // pred_fallthru
      _
    // Predicated region
    $region154: #{tpu_custom_call.1} parent=1 // pred_check
      _
    $region155: #{tpu_custom_call.1} parent=1 // pred_check_branch
      %206 = sbr.rel (0) target = $region157
    $region156: #{tpu_custom_call.1} parent=1 // pred_region
      _
    $region157: #{tpu_custom_call.1} parent=1 // pred_fallthru
      _
    // Predicated region
    $region158: #{tpu_custom_call.1} parent=1 // pred_check
      _
    $region159: #{tpu_custom_call.1} parent=1 // pred_check_branch
      %208 = sbr.rel (0) target = $region161
    $region160: #{tpu_custom_call.1} parent=1 // pred_region
      _
    $region161: #{tpu_custom_call.1} parent=1 // pred_fallthru
      _
    // Predicated region
    $region162: #{tpu_custom_call.1} parent=1 // pred_check
      _
    $region163: #{tpu_custom_call.1} parent=1 // pred_check_branch
      %210 = sbr.rel (0) target = $region165
    $region164: #{tpu_custom_call.1} parent=1 // pred_region
      _
    $region165: #{tpu_custom_call.1} parent=1 // pred_fallthru
      _
    // Predicated region
    $region166: #{tpu_custom_call.1} parent=1 // pred_check
      _
    $region167: #{tpu_custom_call.1} parent=1 // pred_check_branch
      %212 = sbr.rel (0) target = $region169
    $region168: #{tpu_custom_call.1} parent=1 // pred_region
      _
    $region169: #{tpu_custom_call.1} parent=1 // pred_fallthru
      _
    // Predicated region
    $region170: #{tpu_custom_call.1} parent=1 // pred_check
      _
    $region171: #{tpu_custom_call.1} parent=1 // pred_check_branch
      %214 = sbr.rel (0) target = $region173
    $region172: #{tpu_custom_call.1} parent=1 // pred_region
      %s216 = ssub.s32 16, 16
      %217 = vsyncadd [#allocation8], %s216
      %s219 = sshll.u32 [#allocation7], 4
      %s220 = int_to_ptr.vmem [resolvable:$true] %s219
      %222 = dma.hbm_to_vmem [thread:$0]  %s85, 16, %s220, [#allocation8]
    $region173: #{tpu_custom_call.1} parent=1 // pred_fallthru
      _
    // Predicated region
    $region174: #{tpu_custom_call.1} parent=1 // pred_check
      _
    $region175: #{tpu_custom_call.1} parent=1 // pred_check_branch
      %224 = sbr.rel (0) target = $region177
    $region176: #{tpu_custom_call.1} parent=1 // pred_region
      %s226 = ssub.s32 16, 16
      %227 = vsyncadd [#allocation8], %s226
      %s229 = sshll.u32 [#allocation9], 4
      %s230 = int_to_ptr.vmem [resolvable:$true] %s229
      %232 = dma.hbm_to_vmem [thread:$0]  %s87, 16, %s230, [#allocation8]
    $region177: #{tpu_custom_call.1} parent=1 // pred_fallthru
      _
    // Predicated region
    $region178: #{tpu_custom_call.1} parent=1 // pred_check
      _
    $region179: #{tpu_custom_call.1} parent=1 // pred_check_branch
      %234 = sbr.rel (0) target = $region181
    $region180: #{tpu_custom_call.1} parent=1 // pred_region
      _
    $region181: #{tpu_custom_call.1} parent=1 // pred_fallthru
      _
    // Predicated region
    $region182: #{tpu_custom_call.1} parent=1 // pred_check
      _
    $region183: #{tpu_custom_call.1} parent=1 // pred_check_branch
      %236 = sbr.rel (0) target = $region185
    $region184: #{tpu_custom_call.1} parent=1 // pred_region
      _
    $region185: #{tpu_custom_call.1} parent=1 // pred_fallthru
      _
    // Predicated region
    $region186: #{tpu_custom_call.1} parent=1 // pred_check
      _
    $region187: #{tpu_custom_call.1} parent=1 // pred_check_branch
      %238 = sbr.rel (0) target = $region189
    $region188: #{tpu_custom_call.1} parent=1 // pred_region
      _
    $region189: #{tpu_custom_call.1} parent=1 // pred_fallthru
      _
    // Predicated region
    $region190: #{tpu_custom_call.1} parent=1 // pred_check
      _
    $region191: #{tpu_custom_call.1} parent=1 // pred_check_branch
      %240 = sbr.rel (0) target = $region193
    $region192: #{tpu_custom_call.1} parent=1 // pred_region
      _
    $region193: #{tpu_custom_call.1} parent=1 // pred_fallthru
      _
    // Predicated region
    $region194: #{tpu_custom_call.1} parent=1 // pred_check
      _
    $region195: #{tpu_custom_call.1} parent=1 // pred_check_branch
      %242 = sbr.rel (0) target = $region197
    $region196: #{tpu_custom_call.1} parent=1 // pred_region
      _
    $region197: #{tpu_custom_call.1} parent=1 // pred_fallthru
      _
    // Predicated region
    $region198: #{tpu_custom_call.1} parent=1 // pred_check
      _
    $region199: #{tpu_custom_call.1} parent=1 // pred_check_branch
      %244 = sbr.rel (0) target = $region201
    $region200: #{tpu_custom_call.1} parent=1 // pred_region
      _
    $region201: #{tpu_custom_call.1} parent=1 // pred_fallthru
      _
    // Predicated region
    $region202: #{tpu_custom_call.1} parent=1 // pred_check
      _
    $region203: #{tpu_custom_call.1} parent=1 // pred_check_branch
      %246 = sbr.rel (0) target = $region205
    $region204: #{tpu_custom_call.1} parent=1 // pred_region
      %247 = dma.done [#allocation5], 32
    $region205: #{tpu_custom_call.1} parent=1 // pred_fallthru
      _
    // Predicated region
    $region206: #{tpu_custom_call.1} parent=1 // pred_check
      _
    $region207: #{tpu_custom_call.1} parent=1 // pred_check_branch
      %249 = sbr.rel (0) target = $region209
    $region208: #{tpu_custom_call.1} parent=1 // pred_region
      %250 = dma.done [#allocation3], 16
    $region209: #{tpu_custom_call.1} parent=1 // pred_fallthru
      _
    // Predicated region
    $region210: #{tpu_custom_call.1} parent=1 // pred_check
      _
    $region211: #{tpu_custom_call.1} parent=1 // pred_check_branch
      %252 = sbr.rel (0) target = $region213
    $region212: #{tpu_custom_call.1} parent=1 // pred_region
      %253 = dma.done [#allocation8], 16
    $region213: #{tpu_custom_call.1} parent=1 // pred_fallthru
      _
    // Predicated region
    $region214: #{tpu_custom_call.1} parent=1 // pred_check
      _
    $region215: #{tpu_custom_call.1} parent=1 // pred_check_branch
      %255 = sbr.rel (0) target = $region217
    $region216: #{tpu_custom_call.1} parent=1 // pred_region
      %256 = dma.done [#allocation8], 16
    $region217: #{tpu_custom_call.1} parent=1 // pred_fallthru
      _
    %257 = sfence
    %v258 = vld [vmem:[%s1] sm:$0xff]
    %v259 = vld [vmem:[%s1 + $0x8] sm:$0xff]
    %v260 = vld [vmem:[%s1 + $0x10] sm:$0xff]
    %v261 = vld [vmem:[%s1 + $0x18] sm:$0xff]
    %v262 = vld [vmem:[%s11] sm:$0x1]
    %v263 = vld [vmem:[%s7] sm:$0x1]
    %v264 = vld [vmem:[%s9] sm:$0xff]
    %v265 = vld [vmem:[%s9 + $0x8] sm:$0xff]
    %v266 = vld [vmem:[%s9 + $0x10] sm:$0xff]
    %v267 = vld [vmem:[%s9 + $0x18] sm:$0xff]
    %v268 = vld [vmem:[%s9 + $0x20] sm:$0xff]
    %v269 = vld [vmem:[%s9 + $0x28] sm:$0xff]
    %v270 = vld [vmem:[%s9 + $0x30] sm:$0xff]
    %v271 = vld [vmem:[%s9 + $0x38] sm:$0xff]
    %v272 = vld [vmem:[%s9 + $0x40] sm:$0xff]
    %v273 = vld [vmem:[%s9 + $0x48] sm:$0xff]
    %v274 = vld [vmem:[%s9 + $0x50] sm:$0xff]
    %v275 = vld [vmem:[%s9 + $0x58] sm:$0xff]
    %v276 = vld [vmem:[%s9 + $0x60] sm:$0xff]
    %v277 = vld [vmem:[%s9 + $0x68] sm:$0xff]
    %v278 = vld [vmem:[%s9 + $0x70] sm:$0xff]
    %v279 = vld [vmem:[%s9 + $0x78] sm:$0xff]
    %v280 = vld [vmem:[%s9 + $0x80] sm:$0xff]
    %v281 = vld [vmem:[%s9 + $0x88] sm:$0xff]
    %v282 = vld [vmem:[%s9 + $0x90] sm:$0xff]
    %v283 = vld [vmem:[%s9 + $0x98] sm:$0xff]
    %v284 = vld [vmem:[%s9 + $0xa0] sm:$0xff]
    %v285 = vld [vmem:[%s9 + $0xa8] sm:$0xff]
    %v286 = vld [vmem:[%s9 + $0xb0] sm:$0xff]
    %v287 = vld [vmem:[%s9 + $0xb8] sm:$0xff]
    %v288 = vld [vmem:[%s9 + $0xc0] sm:$0xff]
    %v289 = vld [vmem:[%s9 + $0xc8] sm:$0xff]
    %v290 = vld [vmem:[%s9 + $0xd0] sm:$0xff]
    %v291 = vld [vmem:[%s9 + $0xd8] sm:$0xff]
    %v292 = vld [vmem:[%s9 + $0xe0] sm:$0xff]
    %v293 = vld [vmem:[%s9 + $0xe8] sm:$0xff]
    %v294 = vld [vmem:[%s9 + $0xf0] sm:$0xff]
    %v295 = vld [vmem:[%s9 + $0xf8] sm:$0xff]
    %v296 = vld [vmem:[%s9 + $0x100] sm:$0xff]
    %v297 = vld [vmem:[%s9 + $0x108] sm:$0xff]
    %v298 = vld [vmem:[%s9 + $0x110] sm:$0xff]
    %v299 = vld [vmem:[%s9 + $0x118] sm:$0xff]
    %v300 = vld [vmem:[%s9 + $0x120] sm:$0xff]
    %v301 = vld [vmem:[%s9 + $0x128] sm:$0xff]
    %v302 = vld [vmem:[%s9 + $0x130] sm:$0xff]
    %v303 = vld [vmem:[%s9 + $0x138] sm:$0xff]
    %v304 = vld [vmem:[%s9 + $0x140] sm:$0xff]
    %v305 = vld [vmem:[%s9 + $0x148] sm:$0xff]
    %v306 = vld [vmem:[%s9 + $0x150] sm:$0xff]
    %v307 = vld [vmem:[%s9 + $0x158] sm:$0xff]
    %v308 = vld [vmem:[%s9 + $0x160] sm:$0xff]
    %v309 = vld [vmem:[%s9 + $0x168] sm:$0xff]
    %v310 = vld [vmem:[%s9 + $0x170] sm:$0xff]
    %v311 = vld [vmem:[%s9 + $0x178] sm:$0xff]
    %v312 = vld [vmem:[%s9 + $0x180] sm:$0xff]
    %vm313 = vcmask 64512
    %v315 = vsel %vm313, %v261, 0
    %317 = vmatprep.subr.mxu0 0.0
    %318 = vmatpush1.msra.mxu0 %v264
    %319 = vmatprep.subr.mxu0 0.0
    %320 = vmatpush1.msra.mxu0 %v265
    %321 = vmatprep.subr.mxu0 0.0
    %322 = vmatpush1.msra.mxu0 %v266
    %323 = vmatprep.subr.mxu0 0.0
    %324 = vmatpush1.msra.mxu0 %v267
    %325 = vmatprep.subr.mxu0 0.0
    %326 = vmatpush1.msra.mxu0 %v268
    %327 = vmatprep.subr.mxu0 0.0
    %328 = vmatpush1.msra.mxu0 %v269
    %329 = vmatprep.subr.mxu0 0.0
    %330 = vmatpush1.msra.mxu0 %v270
    %331 = vmatprep.subr.mxu0 0.0
    %332 = vmatpush1.msra.mxu0 %v271
    %333 = vmatprep.subr.mxu0 0.0
    %334 = vmatpush1.msra.mxu0 %v272
    %335 = vmatprep.subr.mxu0 0.0
    %336 = vmatpush1.msra.mxu0 %v273
    %337 = vmatprep.subr.mxu0 0.0
    %338 = vmatpush1.msra.mxu0 %v274
    %339 = vmatprep.subr.mxu0 0.0
    %340 = vmatpush1.msra.mxu0 %v275
    %341 = vmatprep.subr.mxu0 0.0
    %342 = vmatpush1.msra.mxu0 %v276
    %343 = vmatprep.subr.mxu0 0.0
    %344 = vmatpush1.msra.mxu0 %v277
    %345 = vmatprep.subr.mxu0 0.0
    %346 = vmatpush1.msra.mxu0 %v278
    %347 = vmatprep.subr.mxu0 0.0
    %348 = vmatpush1.msra.mxu0 %v279
    %349 = vmatprep.subr.mxu0 0.0
    %350 = vmatpush1.msra.mxu0 %v280
    %351 = vmatprep.subr.mxu0 0.0
    %352 = vmatpush1.msra.mxu0 %v281
    %353 = vmatprep.subr.mxu0 0.0
    %354 = vmatpush1.msra.mxu0 %v282
    %355 = vmatprep.subr.mxu0 0.0
    %356 = vmatpush1.msra.mxu0 %v283
    %357 = vmatprep.subr.mxu0 0.0
    %358 = vmatpush1.msra.mxu0 %v284
    %359 = vmatprep.subr.mxu0 0.0
    %360 = vmatpush1.msra.mxu0 %v285
    %361 = vmatprep.subr.mxu0 0.0
    %362 = vmatpush1.msra.mxu0 %v286
    %363 = vmatprep.subr.mxu0 0.0
    %364 = vmatpush1.msra.mxu0 %v287
    %365 = vmatprep.subr.mxu0 0.0
    %366 = vmatpush1.msra.mxu0 %v288
    %367 = vmatprep.subr.mxu0 0.0
    %368 = vmatpush1.msra.mxu0 %v289
    %369 = vmatprep.subr.mxu0 0.0
    %370 = vmatpush1.msra.mxu0 %v290
    %371 = vmatprep.subr.mxu0 0.0
    %372 = vmatpush1.msra.mxu0 %v291
    %373 = vmatprep.subr.mxu0 0.0
    %374 = vmatpush1.msra.mxu0 %v292
    %375 = vmatprep.subr.mxu0 0.0
    %376 = vmatpush1.msra.mxu0 %v293
    %377 = vmatprep.subr.mxu0 0.0
    %378 = vmatpush1.msra.mxu0 %v294
    %379 = vmatprep.subr.mxu0 0.0
    %380 = vmatpush1.msra.mxu0 %v295
    %381 = vmatprep.mubr.f32.mxu0 %v259
    %382 = vmatmul.mubr.f32.gmra.mrb[0].mxu0 %v258
    %v383 = vpop.f32.mrb[0].mxu0
    %v384 = vadd.f32 0.0, %v383
    %v385 = vpop.f32.mrb[0].mxu0
    %386 = vdwg.mxu0
    %387 = vmatprep.subr.mxu0 0.0
    %388 = vmatpush1.msra.mxu0 %v296
    %389 = vmatprep.subr.mxu0 0.0
    %390 = vmatpush1.msra.mxu0 %v297
    %391 = vmatprep.subr.mxu0 0.0
    %392 = vmatpush1.msra.mxu0 %v298
    %393 = vmatprep.subr.mxu0 0.0
    %394 = vmatpush1.msra.mxu0 %v299
    %395 = vmatprep.subr.mxu0 0.0
    %396 = vmatpush1.msra.mxu0 %v300
    %397 = vmatprep.subr.mxu0 0.0
    %398 = vmatpush1.msra.mxu0 %v301
    %399 = vmatprep.subr.mxu0 0.0
    %400 = vmatpush1.msra.mxu0 %v302
    %401 = vmatprep.subr.mxu0 0.0
    %402 = vmatpush1.msra.mxu0 %v303
    %403 = vmatprep.subr.mxu0 0.0
    %404 = vmatpush1.msra.mxu0 %v304
    %405 = vmatprep.subr.mxu0 0.0
    %406 = vmatpush1.msra.mxu0 %v305
    %407 = vmatprep.subr.mxu0 0.0
    %408 = vmatpush1.msra.mxu0 %v306
    %409 = vmatprep.subr.mxu0 0.0
    %410 = vmatpush1.msra.mxu0 %v307
    %411 = vmatprep.subr.mxu0 0.0
    %412 = vmatpush1.msra.mxu0 %v308
    %413 = vmatprep.subr.mxu0 0.0
    %414 = vmatpush1.msra.mxu0 %v309
    %415 = vmatprep.subr.mxu0 0.0
    %416 = vmatpush1.msra.mxu0 %v310
    %417 = vmatprep.subr.mxu0 0.0
    %418 = vmatpush1.msra.mxu0 %v311
    %419 = vmatprep.subr.mxu0 0.0
    %420 = vmatpush1.msra.mxu0 %v312
    %421 = vmatprep.subr.mxu0 0.0
    %422 = vmatpush1.msra.mxu0 0.0
    %423 = vmatprep.subr.mxu0 0.0
    %424 = vmatpush1.msra.mxu0 0.0
    %425 = vmatprep.subr.mxu0 0.0
    %426 = vmatpush1.msra.mxu0 0.0
    %427 = vmatprep.subr.mxu0 0.0
    %428 = vmatpush1.msra.mxu0 0.0
    %429 = vmatprep.subr.mxu0 0.0
    %430 = vmatpush1.msra.mxu0 0.0
    %431 = vmatprep.subr.mxu0 0.0
    %432 = vmatpush1.msra.mxu0 0.0
    %433 = vmatprep.subr.mxu0 0.0
    %434 = vmatpush1.msra.mxu0 0.0
    %435 = vmatprep.subr.mxu0 0.0
    %436 = vmatpush1.msra.mxu0 0.0
    %437 = vmatprep.subr.mxu0 0.0
    %438 = vmatpush1.msra.mxu0 0.0
    %439 = vmatprep.subr.mxu0 0.0
    %440 = vmatpush1.msra.mxu0 0.0
    %441 = vmatprep.subr.mxu0 0.0
    %442 = vmatpush1.msra.mxu0 0.0
    %443 = vmatprep.subr.mxu0 0.0
    %444 = vmatpush1.msra.mxu0 0.0
    %445 = vmatprep.subr.mxu0 0.0
    %446 = vmatpush1.msra.mxu0 0.0
    %447 = vmatprep.subr.mxu0 0.0
    %448 = vmatpush1.msra.mxu0 0.0
    %449 = vmatprep.subr.mxu0 0.0
    %450 = vmatpush1.msra.mxu0 0.0
    %451 = vmatprep.mubr.f32.mxu0 %v315
    %452 = vmatmul.mubr.f32.gmra.mrb[0].mxu0 %v260
    %v453 = vpop.f32.mrb[0].mxu0
    %v454 = vadd.f32 %v384, %v453
    %v455 = vpop.f32.mrb[0].mxu0
    %456 = vdwg.mxu0
    %v458 = vlaneseq
    %v459 = vshrl.u32 %v458, 7
    %v460 = vsub.s32 0, %v459
    %v461 = vrot.slane %v262, %v460
    %v463 = vmul.f32 %v454, %v461
    %v465 = vlaneseq
    %v466 = vshrl.u32 %v465, 7
    %v467 = vsub.s32 0, %v466
    %v468 = vrot.slane %v263, %v467
    %v470 = vadd.f32 %v463, %v468
    %s471 = scalar_lea.vmem %s9, 392
    %v472 = vld [vmem:[%s471] sm:$0xff]
    %v473 = vld [vmem:[%s471 + $0x8] sm:$0xff]
    %v474 = vld [vmem:[%s471 + $0x10] sm:$0xff]
    %v475 = vld [vmem:[%s471 + $0x18] sm:$0xff]
    %v476 = vld [vmem:[%s471 + $0x20] sm:$0xff]
    %v477 = vld [vmem:[%s471 + $0x28] sm:$0xff]
    %v478 = vld [vmem:[%s471 + $0x30] sm:$0xff]
    %v479 = vld [vmem:[%s471 + $0x38] sm:$0xff]
    %v480 = vld [vmem:[%s471 + $0x40] sm:$0xff]
    %v481 = vld [vmem:[%s471 + $0x48] sm:$0xff]
    %v482 = vld [vmem:[%s471 + $0x50] sm:$0xff]
    %v483 = vld [vmem:[%s471 + $0x58] sm:$0xff]
    %v484 = vld [vmem:[%s471 + $0x60] sm:$0xff]
    %v485 = vld [vmem:[%s471 + $0x68] sm:$0xff]
    %v486 = vld [vmem:[%s471 + $0x70] sm:$0xff]
    %v487 = vld [vmem:[%s471 + $0x78] sm:$0xff]
    %v488 = vld [vmem:[%s471 + $0x80] sm:$0xff]
    %v489 = vld [vmem:[%s471 + $0x88] sm:$0xff]
    %v490 = vld [vmem:[%s471 + $0x90] sm:$0xff]
    %v491 = vld [vmem:[%s471 + $0x98] sm:$0xff]
    %v492 = vld [vmem:[%s471 + $0xa0] sm:$0xff]
    %v493 = vld [vmem:[%s471 + $0xa8] sm:$0xff]
    %v494 = vld [vmem:[%s471 + $0xb0] sm:$0xff]
    %v495 = vld [vmem:[%s471 + $0xb8] sm:$0xff]
    %v496 = vld [vmem:[%s471 + $0xc0] sm:$0xff]
    %v497 = vld [vmem:[%s471 + $0xc8] sm:$0xff]
    %v498 = vld [vmem:[%s471 + $0xd0] sm:$0xff]
    %v499 = vld [vmem:[%s471 + $0xd8] sm:$0xff]
    %v500 = vld [vmem:[%s471 + $0xe0] sm:$0xff]
    %v501 = vld [vmem:[%s471 + $0xe8] sm:$0xff]
    %v502 = vld [vmem:[%s471 + $0xf0] sm:$0xff]
    %v503 = vld [vmem:[%s471 + $0xf8] sm:$0xff]
    %v504 = vld [vmem:[%s471 + $0x100] sm:$0xff]
    %v505 = vld [vmem:[%s471 + $0x108] sm:$0xff]
    %v506 = vld [vmem:[%s471 + $0x110] sm:$0xff]
    %v507 = vld [vmem:[%s471 + $0x118] sm:$0xff]
    %v508 = vld [vmem:[%s471 + $0x120] sm:$0xff]
    %v509 = vld [vmem:[%s471 + $0x128] sm:$0xff]
    %v510 = vld [vmem:[%s471 + $0x130] sm:$0xff]
    %v511 = vld [vmem:[%s471 + $0x138] sm:$0xff]
    %v512 = vld [vmem:[%s471 + $0x140] sm:$0xff]
    %v513 = vld [vmem:[%s471 + $0x148] sm:$0xff]
    %v514 = vld [vmem:[%s471 + $0x150] sm:$0xff]
    %v515 = vld [vmem:[%s471 + $0x158] sm:$0xff]
    %v516 = vld [vmem:[%s471 + $0x160] sm:$0xff]
    %v517 = vld [vmem:[%s471 + $0x168] sm:$0xff]
    %v518 = vld [vmem:[%s471 + $0x170] sm:$0xff]
    %v519 = vld [vmem:[%s471 + $0x178] sm:$0xff]
    %v520 = vld [vmem:[%s471 + $0x180] sm:$0xff]
    %521 = vmatprep.subr.mxu0 0.0
    %522 = vmatpush1.msra.mxu0 %v472
    %523 = vmatprep.subr.mxu0 0.0
    %524 = vmatpush1.msra.mxu0 %v473
    %525 = vmatprep.subr.mxu0 0.0
    %526 = vmatpush1.msra.mxu0 %v474
    %527 = vmatprep.subr.mxu0 0.0
    %528 = vmatpush1.msra.mxu0 %v475
    %529 = vmatprep.subr.mxu0 0.0
    %530 = vmatpush1.msra.mxu0 %v476
    %531 = vmatprep.subr.mxu0 0.0
    %532 = vmatpush1.msra.mxu0 %v477
    %533 = vmatprep.subr.mxu0 0.0
    %534 = vmatpush1.msra.mxu0 %v478
    %535 = vmatprep.subr.mxu0 0.0
    %536 = vmatpush1.msra.mxu0 %v479
    %537 = vmatprep.subr.mxu0 0.0
    %538 = vmatpush1.msra.mxu0 %v480
    %539 = vmatprep.subr.mxu0 0.0
    %540 = vmatpush1.msra.mxu0 %v481
    %541 = vmatprep.subr.mxu0 0.0
    %542 = vmatpush1.msra.mxu0 %v482
    %543 = vmatprep.subr.mxu0 0.0
    %544 = vmatpush1.msra.mxu0 %v483
    %545 = vmatprep.subr.mxu0 0.0
    %546 = vmatpush1.msra.mxu0 %v484
    %547 = vmatprep.subr.mxu0 0.0
    %548 = vmatpush1.msra.mxu0 %v485
    %549 = vmatprep.subr.mxu0 0.0
    %550 = vmatpush1.msra.mxu0 %v486
    %551 = vmatprep.subr.mxu0 0.0
    %552 = vmatpush1.msra.mxu0 %v487
    %553 = vmatprep.subr.mxu0 0.0
    %554 = vmatpush1.msra.mxu0 %v488
    %555 = vmatprep.subr.mxu0 0.0
    %556 = vmatpush1.msra.mxu0 %v489
    %557 = vmatprep.subr.mxu0 0.0
    %558 = vmatpush1.msra.mxu0 %v490
    %559 = vmatprep.subr.mxu0 0.0
    %560 = vmatpush1.msra.mxu0 %v491
    %561 = vmatprep.subr.mxu0 0.0
    %562 = vmatpush1.msra.mxu0 %v492
    %563 = vmatprep.subr.mxu0 0.0
    %564 = vmatpush1.msra.mxu0 %v493
    %565 = vmatprep.subr.mxu0 0.0
    %566 = vmatpush1.msra.mxu0 %v494
    %567 = vmatprep.subr.mxu0 0.0
    %568 = vmatpush1.msra.mxu0 %v495
    %569 = vmatprep.subr.mxu0 0.0
    %570 = vmatpush1.msra.mxu0 %v496
    %571 = vmatprep.subr.mxu0 0.0
    %572 = vmatpush1.msra.mxu0 %v497
    %573 = vmatprep.subr.mxu0 0.0
    %574 = vmatpush1.msra.mxu0 %v498
    %575 = vmatprep.subr.mxu0 0.0
    %576 = vmatpush1.msra.mxu0 %v499
    %577 = vmatprep.subr.mxu0 0.0
    %578 = vmatpush1.msra.mxu0 %v500
    %579 = vmatprep.subr.mxu0 0.0
    %580 = vmatpush1.msra.mxu0 %v501
    %581 = vmatprep.subr.mxu0 0.0
    %582 = vmatpush1.msra.mxu0 %v502
    %583 = vmatprep.subr.mxu0 0.0
    %584 = vmatpush1.msra.mxu0 %v503
    %585 = vmatprep.mubr.f32.mxu0 %v259
    %586 = vmatmul.mubr.f32.gmra.mrb[0].mxu0 %v258
    %v587 = vpop.f32.mrb[0].mxu0
    %v588 = vadd.f32 0.0, %v587
    %v589 = vpop.f32.mrb[0].mxu0
    %590 = vdwg.mxu0
    %591 = vmatprep.subr.mxu0 0.0
    %592 = vmatpush1.msra.mxu0 %v504
    %593 = vmatprep.subr.mxu0 0.0
    %594 = vmatpush1.msra.mxu0 %v505
    %595 = vmatprep.subr.mxu0 0.0
    %596 = vmatpush1.msra.mxu0 %v506
    %597 = vmatprep.subr.mxu0 0.0
    %598 = vmatpush1.msra.mxu0 %v507
    %599 = vmatprep.subr.mxu0 0.0
    %600 = vmatpush1.msra.mxu0 %v508
    %601 = vmatprep.subr.mxu0 0.0
    %602 = vmatpush1.msra.mxu0 %v509
    %603 = vmatprep.subr.mxu0 0.0
    %604 = vmatpush1.msra.mxu0 %v510
    %605 = vmatprep.subr.mxu0 0.0
    %606 = vmatpush1.msra.mxu0 %v511
    %607 = vmatprep.subr.mxu0 0.0
    %608 = vmatpush1.msra.mxu0 %v512
    %609 = vmatprep.subr.mxu0 0.0
    %610 = vmatpush1.msra.mxu0 %v513
    %611 = vmatprep.subr.mxu0 0.0
    %612 = vmatpush1.msra.mxu0 %v514
    %613 = vmatprep.subr.mxu0 0.0
    %614 = vmatpush1.msra.mxu0 %v515
    %615 = vmatprep.subr.mxu0 0.0
    %616 = vmatpush1.msra.mxu0 %v516
    %617 = vmatprep.subr.mxu0 0.0
    %618 = vmatpush1.msra.mxu0 %v517
    %619 = vmatprep.subr.mxu0 0.0
    %620 = vmatpush1.msra.mxu0 %v518
    %621 = vmatprep.subr.mxu0 0.0
    %622 = vmatpush1.msra.mxu0 %v519
    %623 = vmatprep.subr.mxu0 0.0
    %624 = vmatpush1.msra.mxu0 %v520
    %625 = vmatprep.subr.mxu0 0.0
    %626 = vmatpush1.msra.mxu0 0.0
    %627 = vmatprep.subr.mxu0 0.0
    %628 = vmatpush1.msra.mxu0 0.0
    %629 = vmatprep.subr.mxu0 0.0
    %630 = vmatpush1.msra.mxu0 0.0
    %631 = vmatprep.subr.mxu0 0.0
    %632 = vmatpush1.msra.mxu0 0.0
    %633 = vmatprep.subr.mxu0 0.0
    %634 = vmatpush1.msra.mxu0 0.0
    %635 = vmatprep.subr.mxu0 0.0
    %636 = vmatpush1.msra.mxu0 0.0
    %637 = vmatprep.subr.mxu0 0.0
    %638 = vmatpush1.msra.mxu0 0.0
    %639 = vmatprep.subr.mxu0 0.0
    %640 = vmatpush1.msra.mxu0 0.0
    %641 = vmatprep.subr.mxu0 0.0
    %642 = vmatpush1.msra.mxu0 0.0
    %643 = vmatprep.subr.mxu0 0.0
    %644 = vmatpush1.msra.mxu0 0.0
    %645 = vmatprep.subr.mxu0 0.0
    %646 = vmatpush1.msra.mxu0 0.0
    %647 = vmatprep.subr.mxu0 0.0
    %648 = vmatpush1.msra.mxu0 0.0
    %649 = vmatprep.subr.mxu0 0.0
    %650 = vmatpush1.msra.mxu0 0.0
    %651 = vmatprep.subr.mxu0 0.0
    %652 = vmatpush1.msra.mxu0 0.0
    %653 = vmatprep.subr.mxu0 0.0
    %654 = vmatpush1.msra.mxu0 0.0
    %655 = vmatprep.mubr.f32.mxu0 %v315
    %656 = vmatmul.mubr.f32.gmra.mrb[0].mxu0 %v260
    %v657 = vpop.f32.mrb[0].mxu0
    %v658 = vadd.f32 %v588, %v657
    %v659 = vpop.f32.mrb[0].mxu0
    %660 = vdwg.mxu0
    %v661 = vmul.f32 %v658, %v461
    %v662 = vadd.f32 %v661, %v468
    %s663 = scalar_lea.vmem %s9, 784
    %v664 = vld [vmem:[%s663] sm:$0xff]
    %v665 = vld [vmem:[%s663 + $0x8] sm:$0xff]
    %v666 = vld [vmem:[%s663 + $0x10] sm:$0xff]
    %v667 = vld [vmem:[%s663 + $0x18] sm:$0xff]
    %v668 = vld [vmem:[%s663 + $0x20] sm:$0xff]
    %v669 = vld [vmem:[%s663 + $0x28] sm:$0xff]
    %v670 = vld [vmem:[%s663 + $0x30] sm:$0xff]
    %v671 = vld [vmem:[%s663 + $0x38] sm:$0xff]
    %v672 = vld [vmem:[%s663 + $0x40] sm:$0xff]
    %v673 = vld [vmem:[%s663 + $0x48] sm:$0xff]
    %v674 = vld [vmem:[%s663 + $0x50] sm:$0xff]
    %v675 = vld [vmem:[%s663 + $0x58] sm:$0xff]
    %v676 = vld [vmem:[%s663 + $0x60] sm:$0xff]
    %v677 = vld [vmem:[%s663 + $0x68] sm:$0xff]
    %v678 = vld [vmem:[%s663 + $0x70] sm:$0xff]
    %v679 = vld [vmem:[%s663 + $0x78] sm:$0xff]
    %v680 = vld [vmem:[%s663 + $0x80] sm:$0xff]
    %v681 = vld [vmem:[%s663 + $0x88] sm:$0xff]
    %v682 = vld [vmem:[%s663 + $0x90] sm:$0xff]
    %v683 = vld [vmem:[%s663 + $0x98] sm:$0xff]
    %v684 = vld [vmem:[%s663 + $0xa0] sm:$0xff]
    %v685 = vld [vmem:[%s663 + $0xa8] sm:$0xff]
    %v686 = vld [vmem:[%s663 + $0xb0] sm:$0xff]
    %v687 = vld [vmem:[%s663 + $0xb8] sm:$0xff]
    %v688 = vld [vmem:[%s663 + $0xc0] sm:$0xff]
    %v689 = vld [vmem:[%s663 + $0xc8] sm:$0xff]
    %v690 = vld [vmem:[%s663 + $0xd0] sm:$0xff]
    %v691 = vld [vmem:[%s663 + $0xd8] sm:$0xff]
    %v692 = vld [vmem:[%s663 + $0xe0] sm:$0xff]
    %v693 = vld [vmem:[%s663 + $0xe8] sm:$0xff]
    %v694 = vld [vmem:[%s663 + $0xf0] sm:$0xff]
    %v695 = vld [vmem:[%s663 + $0xf8] sm:$0xff]
    %v696 = vld [vmem:[%s663 + $0x100] sm:$0xff]
    %v697 = vld [vmem:[%s663 + $0x108] sm:$0xff]
    %v698 = vld [vmem:[%s663 + $0x110] sm:$0xff]
    %v699 = vld [vmem:[%s663 + $0x118] sm:$0xff]
    %v700 = vld [vmem:[%s663 + $0x120] sm:$0xff]
    %v701 = vld [vmem:[%s663 + $0x128] sm:$0xff]
    %v702 = vld [vmem:[%s663 + $0x130] sm:$0xff]
    %v703 = vld [vmem:[%s663 + $0x138] sm:$0xff]
    %v704 = vld [vmem:[%s663 + $0x140] sm:$0xff]
    %v705 = vld [vmem:[%s663 + $0x148] sm:$0xff]
    %v706 = vld [vmem:[%s663 + $0x150] sm:$0xff]
    %v707 = vld [vmem:[%s663 + $0x158] sm:$0xff]
    %v708 = vld [vmem:[%s663 + $0x160] sm:$0xff]
    %v709 = vld [vmem:[%s663 + $0x168] sm:$0xff]
    %v710 = vld [vmem:[%s663 + $0x170] sm:$0xff]
    %v711 = vld [vmem:[%s663 + $0x178] sm:$0xff]
    %v712 = vld [vmem:[%s663 + $0x180] sm:$0xff]
    %713 = vmatprep.subr.mxu0 0.0
    %714 = vmatpush1.msra.mxu0 %v664
    %715 = vmatprep.subr.mxu0 0.0
    %716 = vmatpush1.msra.mxu0 %v665
    %717 = vmatprep.subr.mxu0 0.0
    %718 = vmatpush1.msra.mxu0 %v666
    %719 = vmatprep.subr.mxu0 0.0
    %720 = vmatpush1.msra.mxu0 %v667
    %721 = vmatprep.subr.mxu0 0.0
    %722 = vmatpush1.msra.mxu0 %v668
    %723 = vmatprep.subr.mxu0 0.0
    %724 = vmatpush1.msra.mxu0 %v669
    %725 = vmatprep.subr.mxu0 0.0
    %726 = vmatpush1.msra.mxu0 %v670
    %727 = vmatprep.subr.mxu0 0.0
    %728 = vmatpush1.msra.mxu0 %v671
    %729 = vmatprep.subr.mxu0 0.0
    %730 = vmatpush1.msra.mxu0 %v672
    %731 = vmatprep.subr.mxu0 0.0
    %732 = vmatpush1.msra.mxu0 %v673
    %733 = vmatprep.subr.mxu0 0.0
    %734 = vmatpush1.msra.mxu0 %v674
    %735 = vmatprep.subr.mxu0 0.0
    %736 = vmatpush1.msra.mxu0 %v675
    %737 = vmatprep.subr.mxu0 0.0
    %738 = vmatpush1.msra.mxu0 %v676
    %739 = vmatprep.subr.mxu0 0.0
    %740 = vmatpush1.msra.mxu0 %v677
    %741 = vmatprep.subr.mxu0 0.0
    %742 = vmatpush1.msra.mxu0 %v678
    %743 = vmatprep.subr.mxu0 0.0
    %744 = vmatpush1.msra.mxu0 %v679
    %745 = vmatprep.subr.mxu0 0.0
    %746 = vmatpush1.msra.mxu0 %v680
    %747 = vmatprep.subr.mxu0 0.0
    %748 = vmatpush1.msra.mxu0 %v681
    %749 = vmatprep.subr.mxu0 0.0
    %750 = vmatpush1.msra.mxu0 %v682
    %751 = vmatprep.subr.mxu0 0.0
    %752 = vmatpush1.msra.mxu0 %v683
    %753 = vmatprep.subr.mxu0 0.0
    %754 = vmatpush1.msra.mxu0 %v684
    %755 = vmatprep.subr.mxu0 0.0
    %756 = vmatpush1.msra.mxu0 %v685
    %757 = vmatprep.subr.mxu0 0.0
    %758 = vmatpush1.msra.mxu0 %v686
    %759 = vmatprep.subr.mxu0 0.0
    %760 = vmatpush1.msra.mxu0 %v687
    %761 = vmatprep.subr.mxu0 0.0
    %762 = vmatpush1.msra.mxu0 %v688
    %763 = vmatprep.subr.mxu0 0.0
    %764 = vmatpush1.msra.mxu0 %v689
    %765 = vmatprep.subr.mxu0 0.0
    %766 = vmatpush1.msra.mxu0 %v690
    %767 = vmatprep.subr.mxu0 0.0
    %768 = vmatpush1.msra.mxu0 %v691
    %769 = vmatprep.subr.mxu0 0.0
    %770 = vmatpush1.msra.mxu0 %v692
    %771 = vmatprep.subr.mxu0 0.0
    %772 = vmatpush1.msra.mxu0 %v693
    %773 = vmatprep.subr.mxu0 0.0
    %774 = vmatpush1.msra.mxu0 %v694
    %775 = vmatprep.subr.mxu0 0.0
    %776 = vmatpush1.msra.mxu0 %v695
    %777 = vmatprep.mubr.f32.mxu0 %v259
    %778 = vmatmul.mubr.f32.gmra.mrb[0].mxu0 %v258
    %v779 = vpop.f32.mrb[0].mxu0
    %v780 = vadd.f32 0.0, %v779
    %v781 = vpop.f32.mrb[0].mxu0
    %782 = vdwg.mxu0
    %783 = vmatprep.subr.mxu0 0.0
    %784 = vmatpush1.msra.mxu0 %v696
    %785 = vmatprep.subr.mxu0 0.0
    %786 = vmatpush1.msra.mxu0 %v697
    %787 = vmatprep.subr.mxu0 0.0
    %788 = vmatpush1.msra.mxu0 %v698
    %789 = vmatprep.subr.mxu0 0.0
    %790 = vmatpush1.msra.mxu0 %v699
    %791 = vmatprep.subr.mxu0 0.0
    %792 = vmatpush1.msra.mxu0 %v700
    %793 = vmatprep.subr.mxu0 0.0
    %794 = vmatpush1.msra.mxu0 %v701
    %795 = vmatprep.subr.mxu0 0.0
    %796 = vmatpush1.msra.mxu0 %v702
    %797 = vmatprep.subr.mxu0 0.0
    %798 = vmatpush1.msra.mxu0 %v703
    %799 = vmatprep.subr.mxu0 0.0
    %800 = vmatpush1.msra.mxu0 %v704
    %801 = vmatprep.subr.mxu0 0.0
    %802 = vmatpush1.msra.mxu0 %v705
    %803 = vmatprep.subr.mxu0 0.0
    %804 = vmatpush1.msra.mxu0 %v706
    %805 = vmatprep.subr.mxu0 0.0
    %806 = vmatpush1.msra.mxu0 %v707
    %807 = vmatprep.subr.mxu0 0.0
    %808 = vmatpush1.msra.mxu0 %v708
    %809 = vmatprep.subr.mxu0 0.0
    %810 = vmatpush1.msra.mxu0 %v709
    %811 = vmatprep.subr.mxu0 0.0
    %812 = vmatpush1.msra.mxu0 %v710
    %813 = vmatprep.subr.mxu0 0.0
    %814 = vmatpush1.msra.mxu0 %v711
    %815 = vmatprep.subr.mxu0 0.0
    %816 = vmatpush1.msra.mxu0 %v712
    %817 = vmatprep.subr.mxu0 0.0
    %818 = vmatpush1.msra.mxu0 0.0
    %819 = vmatprep.subr.mxu0 0.0
    %820 = vmatpush1.msra.mxu0 0.0
    %821 = vmatprep.subr.mxu0 0.0
    %822 = vmatpush1.msra.mxu0 0.0
    %823 = vmatprep.subr.mxu0 0.0
    %824 = vmatpush1.msra.mxu0 0.0
    %825 = vmatprep.subr.mxu0 0.0
    %826 = vmatpush1.msra.mxu0 0.0
    %827 = vmatprep.subr.mxu0 0.0
    %828 = vmatpush1.msra.mxu0 0.0
    %829 = vmatprep.subr.mxu0 0.0
    %830 = vmatpush1.msra.mxu0 0.0
    %831 = vmatprep.subr.mxu0 0.0
    %832 = vmatpush1.msra.mxu0 0.0
    %833 = vmatprep.subr.mxu0 0.0
    %834 = vmatpush1.msra.mxu0 0.0
    %835 = vmatprep.subr.mxu0 0.0
    %836 = vmatpush1.msra.mxu0 0.0
    %837 = vmatprep.subr.mxu0 0.0
    %838 = vmatpush1.msra.mxu0 0.0
    %839 = vmatprep.subr.mxu0 0.0
    %840 = vmatpush1.msra.mxu0 0.0
    %841 = vmatprep.subr.mxu0 0.0
    %842 = vmatpush1.msra.mxu0 0.0
    %843 = vmatprep.subr.mxu0 0.0
    %844 = vmatpush1.msra.mxu0 0.0
    %845 = vmatprep.subr.mxu0 0.0
    %846 = vmatpush1.msra.mxu0 0.0
    %847 = vmatprep.mubr.f32.mxu0 %v315
    %848 = vmatmul.mubr.f32.gmra.mrb[0].mxu0 %v260
    %v849 = vpop.f32.mrb[0].mxu0
    %v850 = vadd.f32 %v780, %v849
    %v851 = vpop.f32.mrb[0].mxu0
    %852 = vdwg.mxu0
    %v853 = vmul.f32 %v850, %v461
    %v854 = vadd.f32 %v853, %v468
    %s855 = scalar_lea.vmem %s9, 1176
    %v856 = vld [vmem:[%s855] sm:$0xff]
    %v857 = vld [vmem:[%s855 + $0x8] sm:$0xff]
    %v858 = vld [vmem:[%s855 + $0x10] sm:$0xff]
    %v859 = vld [vmem:[%s855 + $0x18] sm:$0xff]
    %v860 = vld [vmem:[%s855 + $0x20] sm:$0xff]
    %v861 = vld [vmem:[%s855 + $0x28] sm:$0xff]
    %v862 = vld [vmem:[%s855 + $0x30] sm:$0xff]
    %v863 = vld [vmem:[%s855 + $0x38] sm:$0xff]
    %v864 = vld [vmem:[%s855 + $0x40] sm:$0xff]
    %v865 = vld [vmem:[%s855 + $0x48] sm:$0xff]
    %v866 = vld [vmem:[%s855 + $0x50] sm:$0xff]
    %v867 = vld [vmem:[%s855 + $0x58] sm:$0xff]
    %v868 = vld [vmem:[%s855 + $0x60] sm:$0xff]
    %v869 = vld [vmem:[%s855 + $0x68] sm:$0xff]
    %v870 = vld [vmem:[%s855 + $0x70] sm:$0xff]
    %v871 = vld [vmem:[%s855 + $0x78] sm:$0xff]
    %v872 = vld [vmem:[%s855 + $0x80] sm:$0xff]
    %v873 = vld [vmem:[%s855 + $0x88] sm:$0xff]
    %v874 = vld [vmem:[%s855 + $0x90] sm:$0xff]
    %v875 = vld [vmem:[%s855 + $0x98] sm:$0xff]
    %v876 = vld [vmem:[%s855 + $0xa0] sm:$0xff]
    %v877 = vld [vmem:[%s855 + $0xa8] sm:$0xff]
    %v878 = vld [vmem:[%s855 + $0xb0] sm:$0xff]
    %v879 = vld [vmem:[%s855 + $0xb8] sm:$0xff]
    %v880 = vld [vmem:[%s855 + $0xc0] sm:$0xff]
    %v881 = vld [vmem:[%s855 + $0xc8] sm:$0xff]
    %v882 = vld [vmem:[%s855 + $0xd0] sm:$0xff]
    %v883 = vld [vmem:[%s855 + $0xd8] sm:$0xff]
    %v884 = vld [vmem:[%s855 + $0xe0] sm:$0xff]
    %v885 = vld [vmem:[%s855 + $0xe8] sm:$0xff]
    %v886 = vld [vmem:[%s855 + $0xf0] sm:$0xff]
    %v887 = vld [vmem:[%s855 + $0xf8] sm:$0xff]
    %v888 = vld [vmem:[%s855 + $0x100] sm:$0xff]
    %v889 = vld [vmem:[%s855 + $0x108] sm:$0xff]
    %v890 = vld [vmem:[%s855 + $0x110] sm:$0xff]
    %v891 = vld [vmem:[%s855 + $0x118] sm:$0xff]
    %v892 = vld [vmem:[%s855 + $0x120] sm:$0xff]
    %v893 = vld [vmem:[%s855 + $0x128] sm:$0xff]
    %v894 = vld [vmem:[%s855 + $0x130] sm:$0xff]
    %v895 = vld [vmem:[%s855 + $0x138] sm:$0xff]
    %v896 = vld [vmem:[%s855 + $0x140] sm:$0xff]
    %v897 = vld [vmem:[%s855 + $0x148] sm:$0xff]
    %v898 = vld [vmem:[%s855 + $0x150] sm:$0xff]
    %v899 = vld [vmem:[%s855 + $0x158] sm:$0xff]
    %v900 = vld [vmem:[%s855 + $0x160] sm:$0xff]
    %v901 = vld [vmem:[%s855 + $0x168] sm:$0xff]
    %v902 = vld [vmem:[%s855 + $0x170] sm:$0xff]
    %v903 = vld [vmem:[%s855 + $0x178] sm:$0xff]
    %v904 = vld [vmem:[%s855 + $0x180] sm:$0xff]
    %905 = vmatprep.subr.mxu0 0.0
    %906 = vmatpush1.msra.mxu0 %v856
    %907 = vmatprep.subr.mxu0 0.0
    %908 = vmatpush1.msra.mxu0 %v857
    %909 = vmatprep.subr.mxu0 0.0
    %910 = vmatpush1.msra.mxu0 %v858
    %911 = vmatprep.subr.mxu0 0.0
    %912 = vmatpush1.msra.mxu0 %v859
    %913 = vmatprep.subr.mxu0 0.0
    %914 = vmatpush1.msra.mxu0 %v860
    %915 = vmatprep.subr.mxu0 0.0
    %916 = vmatpush1.msra.mxu0 %v861
    %917 = vmatprep.subr.mxu0 0.0
    %918 = vmatpush1.msra.mxu0 %v862
    %919 = vmatprep.subr.mxu0 0.0
    %920 = vmatpush1.msra.mxu0 %v863
    %921 = vmatprep.subr.mxu0 0.0
    %922 = vmatpush1.msra.mxu0 %v864
    %923 = vmatprep.subr.mxu0 0.0
    %924 = vmatpush1.msra.mxu0 %v865
    %925 = vmatprep.subr.mxu0 0.0
    %926 = vmatpush1.msra.mxu0 %v866
    %927 = vmatprep.subr.mxu0 0.0
    %928 = vmatpush1.msra.mxu0 %v867
    %929 = vmatprep.subr.mxu0 0.0
    %930 = vmatpush1.msra.mxu0 %v868
    %931 = vmatprep.subr.mxu0 0.0
    %932 = vmatpush1.msra.mxu0 %v869
    %933 = vmatprep.subr.mxu0 0.0
    %934 = vmatpush1.msra.mxu0 %v870
    %935 = vmatprep.subr.mxu0 0.0
    %936 = vmatpush1.msra.mxu0 %v871
    %937 = vmatprep.subr.mxu0 0.0
    %938 = vmatpush1.msra.mxu0 %v872
    %939 = vmatprep.subr.mxu0 0.0
    %940 = vmatpush1.msra.mxu0 %v873
    %941 = vmatprep.subr.mxu0 0.0
    %942 = vmatpush1.msra.mxu0 %v874
    %943 = vmatprep.subr.mxu0 0.0
    %944 = vmatpush1.msra.mxu0 %v875
    %945 = vmatprep.subr.mxu0 0.0
    %946 = vmatpush1.msra.mxu0 %v876
    %947 = vmatprep.subr.mxu0 0.0
    %948 = vmatpush1.msra.mxu0 %v877
    %949 = vmatprep.subr.mxu0 0.0
    %950 = vmatpush1.msra.mxu0 %v878
    %951 = vmatprep.subr.mxu0 0.0
    %952 = vmatpush1.msra.mxu0 %v879
    %953 = vmatprep.subr.mxu0 0.0
    %954 = vmatpush1.msra.mxu0 %v880
    %955 = vmatprep.subr.mxu0 0.0
    %956 = vmatpush1.msra.mxu0 %v881
    %957 = vmatprep.subr.mxu0 0.0
    %958 = vmatpush1.msra.mxu0 %v882
    %959 = vmatprep.subr.mxu0 0.0
    %960 = vmatpush1.msra.mxu0 %v883
    %961 = vmatprep.subr.mxu0 0.0
    %962 = vmatpush1.msra.mxu0 %v884
    %963 = vmatprep.subr.mxu0 0.0
    %964 = vmatpush1.msra.mxu0 %v885
    %965 = vmatprep.subr.mxu0 0.0
    %966 = vmatpush1.msra.mxu0 %v886
    %967 = vmatprep.subr.mxu0 0.0
    %968 = vmatpush1.msra.mxu0 %v887
    %969 = vmatprep.mubr.f32.mxu0 %v259
    %970 = vmatmul.mubr.f32.gmra.mrb[0].mxu0 %v258
    %v971 = vpop.f32.mrb[0].mxu0
    %v972 = vadd.f32 0.0, %v971
    %v973 = vpop.f32.mrb[0].mxu0
    %974 = vdwg.mxu0
    %975 = vmatprep.subr.mxu0 0.0
    %976 = vmatpush1.msra.mxu0 %v888
    %977 = vmatprep.subr.mxu0 0.0
    %978 = vmatpush1.msra.mxu0 %v889
    %979 = vmatprep.subr.mxu0 0.0
    %980 = vmatpush1.msra.mxu0 %v890
    %981 = vmatprep.subr.mxu0 0.0
    %982 = vmatpush1.msra.mxu0 %v891
    %983 = vmatprep.subr.mxu0 0.0
    %984 = vmatpush1.msra.mxu0 %v892
    %985 = vmatprep.subr.mxu0 0.0
    %986 = vmatpush1.msra.mxu0 %v893
    %987 = vmatprep.subr.mxu0 0.0
    %988 = vmatpush1.msra.mxu0 %v894
    %989 = vmatprep.subr.mxu0 0.0
    %990 = vmatpush1.msra.mxu0 %v895
    %991 = vmatprep.subr.mxu0 0.0
    %992 = vmatpush1.msra.mxu0 %v896
    %993 = vmatprep.subr.mxu0 0.0
    %994 = vmatpush1.msra.mxu0 %v897
    %995 = vmatprep.subr.mxu0 0.0
    %996 = vmatpush1.msra.mxu0 %v898
    %997 = vmatprep.subr.mxu0 0.0
    %998 = vmatpush1.msra.mxu0 %v899
    %999 = vmatprep.subr.mxu0 0.0
    %1000 = vmatpush1.msra.mxu0 %v900
    %1001 = vmatprep.subr.mxu0 0.0
    %1002 = vmatpush1.msra.mxu0 %v901
    %1003 = vmatprep.subr.mxu0 0.0
    %1004 = vmatpush1.msra.mxu0 %v902
    %1005 = vmatprep.subr.mxu0 0.0
    %1006 = vmatpush1.msra.mxu0 %v903
    %1007 = vmatprep.subr.mxu0 0.0
    %1008 = vmatpush1.msra.mxu0 %v904
    %1009 = vmatprep.subr.mxu0 0.0
    %1010 = vmatpush1.msra.mxu0 0.0
    %1011 = vmatprep.subr.mxu0 0.0
    %1012 = vmatpush1.msra.mxu0 0.0
    %1013 = vmatprep.subr.mxu0 0.0
    %1014 = vmatpush1.msra.mxu0 0.0
    %1015 = vmatprep.subr.mxu0 0.0
    %1016 = vmatpush1.msra.mxu0 0.0
    %1017 = vmatprep.subr.mxu0 0.0
    %1018 = vmatpush1.msra.mxu0 0.0
    %1019 = vmatprep.subr.mxu0 0.0
    %1020 = vmatpush1.msra.mxu0 0.0
    %1021 = vmatprep.subr.mxu0 0.0
    %1022 = vmatpush1.msra.mxu0 0.0
    %1023 = vmatprep.subr.mxu0 0.0
    %1024 = vmatpush1.msra.mxu0 0.0
    %1025 = vmatprep.subr.mxu0 0.0
    %1026 = vmatpush1.msra.mxu0 0.0
    %1027 = vmatprep.subr.mxu0 0.0
    %1028 = vmatpush1.msra.mxu0 0.0
    %1029 = vmatprep.subr.mxu0 0.0
    %1030 = vmatpush1.msra.mxu0 0.0
    %1031 = vmatprep.subr.mxu0 0.0
    %1032 = vmatpush1.msra.mxu0 0.0
    %1033 = vmatprep.subr.mxu0 0.0
    %1034 = vmatpush1.msra.mxu0 0.0
    %1035 = vmatprep.subr.mxu0 0.0
    %1036 = vmatpush1.msra.mxu0 0.0
    %1037 = vmatprep.subr.mxu0 0.0
    %1038 = vmatpush1.msra.mxu0 0.0
    %1039 = vmatprep.mubr.f32.mxu0 %v315
    %1040 = vmatmul.mubr.f32.gmra.mrb[0].mxu0 %v260
    %v1041 = vpop.f32.mrb[0].mxu0
    %v1042 = vadd.f32 %v972, %v1041
    %v1043 = vpop.f32.mrb[0].mxu0
    %1044 = vdwg.mxu0
    %v1045 = vmul.f32 %v1042, %v461
    %v1046 = vadd.f32 %v1045, %v468
    %s1047 = scalar_lea.vmem %s9, 1568
    %v1048 = vld [vmem:[%s1047] sm:$0xff]
    %v1049 = vld [vmem:[%s1047 + $0x8] sm:$0xff]
    %v1050 = vld [vmem:[%s1047 + $0x10] sm:$0xff]
    %v1051 = vld [vmem:[%s1047 + $0x18] sm:$0xff]
    %v1052 = vld [vmem:[%s1047 + $0x20] sm:$0xff]
    %v1053 = vld [vmem:[%s1047 + $0x28] sm:$0xff]
    %v1054 = vld [vmem:[%s1047 + $0x30] sm:$0xff]
    %v1055 = vld [vmem:[%s1047 + $0x38] sm:$0xff]
    %v1056 = vld [vmem:[%s1047 + $0x40] sm:$0xff]
    %v1057 = vld [vmem:[%s1047 + $0x48] sm:$0xff]
    %v1058 = vld [vmem:[%s1047 + $0x50] sm:$0xff]
    %v1059 = vld [vmem:[%s1047 + $0x58] sm:$0xff]
    %v1060 = vld [vmem:[%s1047 + $0x60] sm:$0xff]
    %v1061 = vld [vmem:[%s1047 + $0x68] sm:$0xff]
    %v1062 = vld [vmem:[%s1047 + $0x70] sm:$0xff]
    %v1063 = vld [vmem:[%s1047 + $0x78] sm:$0xff]
    %v1064 = vld [vmem:[%s1047 + $0x80] sm:$0xff]
    %v1065 = vld [vmem:[%s1047 + $0x88] sm:$0xff]
    %v1066 = vld [vmem:[%s1047 + $0x90] sm:$0xff]
    %v1067 = vld [vmem:[%s1047 + $0x98] sm:$0xff]
    %v1068 = vld [vmem:[%s1047 + $0xa0] sm:$0xff]
    %v1069 = vld [vmem:[%s1047 + $0xa8] sm:$0xff]
    %v1070 = vld [vmem:[%s1047 + $0xb0] sm:$0xff]
    %v1071 = vld [vmem:[%s1047 + $0xb8] sm:$0xff]
    %v1072 = vld [vmem:[%s1047 + $0xc0] sm:$0xff]
    %v1073 = vld [vmem:[%s1047 + $0xc8] sm:$0xff]
    %v1074 = vld [vmem:[%s1047 + $0xd0] sm:$0xff]
    %v1075 = vld [vmem:[%s1047 + $0xd8] sm:$0xff]
    %v1076 = vld [vmem:[%s1047 + $0xe0] sm:$0xff]
    %v1077 = vld [vmem:[%s1047 + $0xe8] sm:$0xff]
    %v1078 = vld [vmem:[%s1047 + $0xf0] sm:$0xff]
    %v1079 = vld [vmem:[%s1047 + $0xf8] sm:$0xff]
    %v1080 = vld [vmem:[%s1047 + $0x100] sm:$0xff]
    %v1081 = vld [vmem:[%s1047 + $0x108] sm:$0xff]
    %v1082 = vld [vmem:[%s1047 + $0x110] sm:$0xff]
    %v1083 = vld [vmem:[%s1047 + $0x118] sm:$0xff]
    %v1084 = vld [vmem:[%s1047 + $0x120] sm:$0xff]
    %v1085 = vld [vmem:[%s1047 + $0x128] sm:$0xff]
    %v1086 = vld [vmem:[%s1047 + $0x130] sm:$0xff]
    %v1087 = vld [vmem:[%s1047 + $0x138] sm:$0xff]
    %v1088 = vld [vmem:[%s1047 + $0x140] sm:$0xff]
    %v1089 = vld [vmem:[%s1047 + $0x148] sm:$0xff]
    %v1090 = vld [vmem:[%s1047 + $0x150] sm:$0xff]
    %v1091 = vld [vmem:[%s1047 + $0x158] sm:$0xff]
    %v1092 = vld [vmem:[%s1047 + $0x160] sm:$0xff]
    %v1093 = vld [vmem:[%s1047 + $0x168] sm:$0xff]
    %v1094 = vld [vmem:[%s1047 + $0x170] sm:$0xff]
    %v1095 = vld [vmem:[%s1047 + $0x178] sm:$0xff]
    %v1096 = vld [vmem:[%s1047 + $0x180] sm:$0xff]
    %1097 = vmatprep.subr.mxu0 0.0
    %1098 = vmatpush1.msra.mxu0 %v1048
    %1099 = vmatprep.subr.mxu0 0.0
    %1100 = vmatpush1.msra.mxu0 %v1049
    %1101 = vmatprep.subr.mxu0 0.0
    %1102 = vmatpush1.msra.mxu0 %v1050
    %1103 = vmatprep.subr.mxu0 0.0
    %1104 = vmatpush1.msra.mxu0 %v1051
    %1105 = vmatprep.subr.mxu0 0.0
    %1106 = vmatpush1.msra.mxu0 %v1052
    %1107 = vmatprep.subr.mxu0 0.0
    %1108 = vmatpush1.msra.mxu0 %v1053
    %1109 = vmatprep.subr.mxu0 0.0
    %1110 = vmatpush1.msra.mxu0 %v1054
    %1111 = vmatprep.subr.mxu0 0.0
    %1112 = vmatpush1.msra.mxu0 %v1055
    %1113 = vmatprep.subr.mxu0 0.0
    %1114 = vmatpush1.msra.mxu0 %v1056
    %1115 = vmatprep.subr.mxu0 0.0
    %1116 = vmatpush1.msra.mxu0 %v1057
    %1117 = vmatprep.subr.mxu0 0.0
    %1118 = vmatpush1.msra.mxu0 %v1058
    %1119 = vmatprep.subr.mxu0 0.0
    %1120 = vmatpush1.msra.mxu0 %v1059
    %1121 = vmatprep.subr.mxu0 0.0
    %1122 = vmatpush1.msra.mxu0 %v1060
    %1123 = vmatprep.subr.mxu0 0.0
    %1124 = vmatpush1.msra.mxu0 %v1061
    %1125 = vmatprep.subr.mxu0 0.0
    %1126 = vmatpush1.msra.mxu0 %v1062
    %1127 = vmatprep.subr.mxu0 0.0
    %1128 = vmatpush1.msra.mxu0 %v1063
    %1129 = vmatprep.subr.mxu0 0.0
    %1130 = vmatpush1.msra.mxu0 %v1064
    %1131 = vmatprep.subr.mxu0 0.0
    %1132 = vmatpush1.msra.mxu0 %v1065
    %1133 = vmatprep.subr.mxu0 0.0
    %1134 = vmatpush1.msra.mxu0 %v1066
    %1135 = vmatprep.subr.mxu0 0.0
    %1136 = vmatpush1.msra.mxu0 %v1067
    %1137 = vmatprep.subr.mxu0 0.0
    %1138 = vmatpush1.msra.mxu0 %v1068
    %1139 = vmatprep.subr.mxu0 0.0
    %1140 = vmatpush1.msra.mxu0 %v1069
    %1141 = vmatprep.subr.mxu0 0.0
    %1142 = vmatpush1.msra.mxu0 %v1070
    %1143 = vmatprep.subr.mxu0 0.0
    %1144 = vmatpush1.msra.mxu0 %v1071
    %1145 = vmatprep.subr.mxu0 0.0
    %1146 = vmatpush1.msra.mxu0 %v1072
    %1147 = vmatprep.subr.mxu0 0.0
    %1148 = vmatpush1.msra.mxu0 %v1073
    %1149 = vmatprep.subr.mxu0 0.0
    %1150 = vmatpush1.msra.mxu0 %v1074
    %1151 = vmatprep.subr.mxu0 0.0
    %1152 = vmatpush1.msra.mxu0 %v1075
    %1153 = vmatprep.subr.mxu0 0.0
    %1154 = vmatpush1.msra.mxu0 %v1076
    %1155 = vmatprep.subr.mxu0 0.0
    %1156 = vmatpush1.msra.mxu0 %v1077
    %1157 = vmatprep.subr.mxu0 0.0
    %1158 = vmatpush1.msra.mxu0 %v1078
    %1159 = vmatprep.subr.mxu0 0.0
    %1160 = vmatpush1.msra.mxu0 %v1079
    %1161 = vmatprep.mubr.f32.mxu0 %v259
    %1162 = vmatmul.mubr.f32.gmra.mrb[0].mxu0 %v258
    %v1163 = vpop.f32.mrb[0].mxu0
    %v1164 = vadd.f32 0.0, %v1163
    %v1165 = vpop.f32.mrb[0].mxu0
    %1166 = vdwg.mxu0
    %1167 = vmatprep.subr.mxu0 0.0
    %1168 = vmatpush1.msra.mxu0 %v1080
    %1169 = vmatprep.subr.mxu0 0.0
    %1170 = vmatpush1.msra.mxu0 %v1081
    %1171 = vmatprep.subr.mxu0 0.0
    %1172 = vmatpush1.msra.mxu0 %v1082
    %1173 = vmatprep.subr.mxu0 0.0
    %1174 = vmatpush1.msra.mxu0 %v1083
    %1175 = vmatprep.subr.mxu0 0.0
    %1176 = vmatpush1.msra.mxu0 %v1084
    %1177 = vmatprep.subr.mxu0 0.0
    %1178 = vmatpush1.msra.mxu0 %v1085
    %1179 = vmatprep.subr.mxu0 0.0
    %1180 = vmatpush1.msra.mxu0 %v1086
    %1181 = vmatprep.subr.mxu0 0.0
    %1182 = vmatpush1.msra.mxu0 %v1087
    %1183 = vmatprep.subr.mxu0 0.0
    %1184 = vmatpush1.msra.mxu0 %v1088
    %1185 = vmatprep.subr.mxu0 0.0
    %1186 = vmatpush1.msra.mxu0 %v1089
    %1187 = vmatprep.subr.mxu0 0.0
    %1188 = vmatpush1.msra.mxu0 %v1090
    %1189 = vmatprep.subr.mxu0 0.0
    %1190 = vmatpush1.msra.mxu0 %v1091
    %1191 = vmatprep.subr.mxu0 0.0
    %1192 = vmatpush1.msra.mxu0 %v1092
    %1193 = vmatprep.subr.mxu0 0.0
    %1194 = vmatpush1.msra.mxu0 %v1093
    %1195 = vmatprep.subr.mxu0 0.0
    %1196 = vmatpush1.msra.mxu0 %v1094
    %1197 = vmatprep.subr.mxu0 0.0
    %1198 = vmatpush1.msra.mxu0 %v1095
    %1199 = vmatprep.subr.mxu0 0.0
    %1200 = vmatpush1.msra.mxu0 %v1096
    %1201 = vmatprep.subr.mxu0 0.0
    %1202 = vmatpush1.msra.mxu0 0.0
    %1203 = vmatprep.subr.mxu0 0.0
    %1204 = vmatpush1.msra.mxu0 0.0
    %1205 = vmatprep.subr.mxu0 0.0
    %1206 = vmatpush1.msra.mxu0 0.0
    %1207 = vmatprep.subr.mxu0 0.0
    %1208 = vmatpush1.msra.mxu0 0.0
    %1209 = vmatprep.subr.mxu0 0.0
    %1210 = vmatpush1.msra.mxu0 0.0
    %1211 = vmatprep.subr.mxu0 0.0
    %1212 = vmatpush1.msra.mxu0 0.0
    %1213 = vmatprep.subr.mxu0 0.0
    %1214 = vmatpush1.msra.mxu0 0.0
    %1215 = vmatprep.subr.mxu0 0.0
    %1216 = vmatpush1.msra.mxu0 0.0
    %1217 = vmatprep.subr.mxu0 0.0
    %1218 = vmatpush1.msra.mxu0 0.0
    %1219 = vmatprep.subr.mxu0 0.0
    %1220 = vmatpush1.msra.mxu0 0.0
    %1221 = vmatprep.subr.mxu0 0.0
    %1222 = vmatpush1.msra.mxu0 0.0
    %1223 = vmatprep.subr.mxu0 0.0
    %1224 = vmatpush1.msra.mxu0 0.0
    %1225 = vmatprep.subr.mxu0 0.0
    %1226 = vmatpush1.msra.mxu0 0.0
    %1227 = vmatprep.subr.mxu0 0.0
    %1228 = vmatpush1.msra.mxu0 0.0
    %1229 = vmatprep.subr.mxu0 0.0
    %1230 = vmatpush1.msra.mxu0 0.0
    %1231 = vmatprep.mubr.f32.mxu0 %v315
    %1232 = vmatmul.mubr.f32.gmra.mrb[0].mxu0 %v260
    %v1233 = vpop.f32.mrb[0].mxu0
    %v1234 = vadd.f32 %v1164, %v1233
    %v1235 = vpop.f32.mrb[0].mxu0
    %1236 = vdwg.mxu0
    %v1237 = vmul.f32 %v1234, %v461
    %v1238 = vadd.f32 %v1237, %v468
    %s1239 = scalar_lea.vmem %s9, 1960
    %v1240 = vld [vmem:[%s1239] sm:$0xff]
    %v1241 = vld [vmem:[%s1239 + $0x8] sm:$0xff]
    %v1242 = vld [vmem:[%s1239 + $0x10] sm:$0xff]
    %v1243 = vld [vmem:[%s1239 + $0x18] sm:$0xff]
    %v1244 = vld [vmem:[%s1239 + $0x20] sm:$0xff]
    %v1245 = vld [vmem:[%s1239 + $0x28] sm:$0xff]
    %v1246 = vld [vmem:[%s1239 + $0x30] sm:$0xff]
    %v1247 = vld [vmem:[%s1239 + $0x38] sm:$0xff]
    %v1248 = vld [vmem:[%s1239 + $0x40] sm:$0xff]
    %v1249 = vld [vmem:[%s1239 + $0x48] sm:$0xff]
    %v1250 = vld [vmem:[%s1239 + $0x50] sm:$0xff]
    %v1251 = vld [vmem:[%s1239 + $0x58] sm:$0xff]
    %v1252 = vld [vmem:[%s1239 + $0x60] sm:$0xff]
    %v1253 = vld [vmem:[%s1239 + $0x68] sm:$0xff]
    %v1254 = vld [vmem:[%s1239 + $0x70] sm:$0xff]
    %v1255 = vld [vmem:[%s1239 + $0x78] sm:$0xff]
    %v1256 = vld [vmem:[%s1239 + $0x80] sm:$0xff]
    %v1257 = vld [vmem:[%s1239 + $0x88] sm:$0xff]
    %v1258 = vld [vmem:[%s1239 + $0x90] sm:$0xff]
    %v1259 = vld [vmem:[%s1239 + $0x98] sm:$0xff]
    %v1260 = vld [vmem:[%s1239 + $0xa0] sm:$0xff]
    %v1261 = vld [vmem:[%s1239 + $0xa8] sm:$0xff]
    %v1262 = vld [vmem:[%s1239 + $0xb0] sm:$0xff]
    %v1263 = vld [vmem:[%s1239 + $0xb8] sm:$0xff]
    %v1264 = vld [vmem:[%s1239 + $0xc0] sm:$0xff]
    %v1265 = vld [vmem:[%s1239 + $0xc8] sm:$0xff]
    %v1266 = vld [vmem:[%s1239 + $0xd0] sm:$0xff]
    %v1267 = vld [vmem:[%s1239 + $0xd8] sm:$0xff]
    %v1268 = vld [vmem:[%s1239 + $0xe0] sm:$0xff]
    %v1269 = vld [vmem:[%s1239 + $0xe8] sm:$0xff]
    %v1270 = vld [vmem:[%s1239 + $0xf0] sm:$0xff]
    %v1271 = vld [vmem:[%s1239 + $0xf8] sm:$0xff]
    %v1272 = vld [vmem:[%s1239 + $0x100] sm:$0xff]
    %v1273 = vld [vmem:[%s1239 + $0x108] sm:$0xff]
    %v1274 = vld [vmem:[%s1239 + $0x110] sm:$0xff]
    %v1275 = vld [vmem:[%s1239 + $0x118] sm:$0xff]
    %v1276 = vld [vmem:[%s1239 + $0x120] sm:$0xff]
    %v1277 = vld [vmem:[%s1239 + $0x128] sm:$0xff]
    %v1278 = vld [vmem:[%s1239 + $0x130] sm:$0xff]
    %v1279 = vld [vmem:[%s1239 + $0x138] sm:$0xff]
    %v1280 = vld [vmem:[%s1239 + $0x140] sm:$0xff]
    %v1281 = vld [vmem:[%s1239 + $0x148] sm:$0xff]
    %v1282 = vld [vmem:[%s1239 + $0x150] sm:$0xff]
    %v1283 = vld [vmem:[%s1239 + $0x158] sm:$0xff]
    %v1284 = vld [vmem:[%s1239 + $0x160] sm:$0xff]
    %v1285 = vld [vmem:[%s1239 + $0x168] sm:$0xff]
    %v1286 = vld [vmem:[%s1239 + $0x170] sm:$0xff]
    %v1287 = vld [vmem:[%s1239 + $0x178] sm:$0xff]
    %v1288 = vld [vmem:[%s1239 + $0x180] sm:$0xff]
    %1289 = vmatprep.subr.mxu0 0.0
    %1290 = vmatpush1.msra.mxu0 %v1240
    %1291 = vmatprep.subr.mxu0 0.0
    %1292 = vmatpush1.msra.mxu0 %v1241
    %1293 = vmatprep.subr.mxu0 0.0
    %1294 = vmatpush1.msra.mxu0 %v1242
    %1295 = vmatprep.subr.mxu0 0.0
    %1296 = vmatpush1.msra.mxu0 %v1243
    %1297 = vmatprep.subr.mxu0 0.0
    %1298 = vmatpush1.msra.mxu0 %v1244
    %1299 = vmatprep.subr.mxu0 0.0
    %1300 = vmatpush1.msra.mxu0 %v1245
    %1301 = vmatprep.subr.mxu0 0.0
    %1302 = vmatpush1.msra.mxu0 %v1246
    %1303 = vmatprep.subr.mxu0 0.0
    %1304 = vmatpush1.msra.mxu0 %v1247
    %1305 = vmatprep.subr.mxu0 0.0
    %1306 = vmatpush1.msra.mxu0 %v1248
    %1307 = vmatprep.subr.mxu0 0.0
    %1308 = vmatpush1.msra.mxu0 %v1249
    %1309 = vmatprep.subr.mxu0 0.0
    %1310 = vmatpush1.msra.mxu0 %v1250
    %1311 = vmatprep.subr.mxu0 0.0
    %1312 = vmatpush1.msra.mxu0 %v1251
    %1313 = vmatprep.subr.mxu0 0.0
    %1314 = vmatpush1.msra.mxu0 %v1252
    %1315 = vmatprep.subr.mxu0 0.0
    %1316 = vmatpush1.msra.mxu0 %v1253
    %1317 = vmatprep.subr.mxu0 0.0
    %1318 = vmatpush1.msra.mxu0 %v1254
    %1319 = vmatprep.subr.mxu0 0.0
    %1320 = vmatpush1.msra.mxu0 %v1255
    %1321 = vmatprep.subr.mxu0 0.0
    %1322 = vmatpush1.msra.mxu0 %v1256
    %1323 = vmatprep.subr.mxu0 0.0
    %1324 = vmatpush1.msra.mxu0 %v1257
    %1325 = vmatprep.subr.mxu0 0.0
    %1326 = vmatpush1.msra.mxu0 %v1258
    %1327 = vmatprep.subr.mxu0 0.0
    %1328 = vmatpush1.msra.mxu0 %v1259
    %1329 = vmatprep.subr.mxu0 0.0
    %1330 = vmatpush1.msra.mxu0 %v1260
    %1331 = vmatprep.subr.mxu0 0.0
    %1332 = vmatpush1.msra.mxu0 %v1261
    %1333 = vmatprep.subr.mxu0 0.0
    %1334 = vmatpush1.msra.mxu0 %v1262
    %1335 = vmatprep.subr.mxu0 0.0
    %1336 = vmatpush1.msra.mxu0 %v1263
    %1337 = vmatprep.subr.mxu0 0.0
    %1338 = vmatpush1.msra.mxu0 %v1264
    %1339 = vmatprep.subr.mxu0 0.0
    %1340 = vmatpush1.msra.mxu0 %v1265
    %1341 = vmatprep.subr.mxu0 0.0
    %1342 = vmatpush1.msra.mxu0 %v1266
    %1343 = vmatprep.subr.mxu0 0.0
    %1344 = vmatpush1.msra.mxu0 %v1267
    %1345 = vmatprep.subr.mxu0 0.0
    %1346 = vmatpush1.msra.mxu0 %v1268
    %1347 = vmatprep.subr.mxu0 0.0
    %1348 = vmatpush1.msra.mxu0 %v1269
    %1349 = vmatprep.subr.mxu0 0.0
    %1350 = vmatpush1.msra.mxu0 %v1270
    %1351 = vmatprep.subr.mxu0 0.0
    %1352 = vmatpush1.msra.mxu0 %v1271
    %1353 = vmatprep.mubr.f32.mxu0 %v259
    %1354 = vmatmul.mubr.f32.gmra.mrb[0].mxu0 %v258
    %v1355 = vpop.f32.mrb[0].mxu0
    %v1356 = vadd.f32 0.0, %v1355
    %v1357 = vpop.f32.mrb[0].mxu0
    %1358 = vdwg.mxu0
    %1359 = vmatprep.subr.mxu0 0.0
    %1360 = vmatpush1.msra.mxu0 %v1272
    %1361 = vmatprep.subr.mxu0 0.0
    %1362 = vmatpush1.msra.mxu0 %v1273
    %1363 = vmatprep.subr.mxu0 0.0
    %1364 = vmatpush1.msra.mxu0 %v1274
    %1365 = vmatprep.subr.mxu0 0.0
    %1366 = vmatpush1.msra.mxu0 %v1275
    %1367 = vmatprep.subr.mxu0 0.0
    %1368 = vmatpush1.msra.mxu0 %v1276
    %1369 = vmatprep.subr.mxu0 0.0
    %1370 = vmatpush1.msra.mxu0 %v1277
    %1371 = vmatprep.subr.mxu0 0.0
    %1372 = vmatpush1.msra.mxu0 %v1278
    %1373 = vmatprep.subr.mxu0 0.0
    %1374 = vmatpush1.msra.mxu0 %v1279
    %1375 = vmatprep.subr.mxu0 0.0
    %1376 = vmatpush1.msra.mxu0 %v1280
    %1377 = vmatprep.subr.mxu0 0.0
    %1378 = vmatpush1.msra.mxu0 %v1281
    %1379 = vmatprep.subr.mxu0 0.0
    %1380 = vmatpush1.msra.mxu0 %v1282
    %1381 = vmatprep.subr.mxu0 0.0
    %1382 = vmatpush1.msra.mxu0 %v1283
    %1383 = vmatprep.subr.mxu0 0.0
    %1384 = vmatpush1.msra.mxu0 %v1284
    %1385 = vmatprep.subr.mxu0 0.0
    %1386 = vmatpush1.msra.mxu0 %v1285
    %1387 = vmatprep.subr.mxu0 0.0
    %1388 = vmatpush1.msra.mxu0 %v1286
    %1389 = vmatprep.subr.mxu0 0.0
    %1390 = vmatpush1.msra.mxu0 %v1287
    %1391 = vmatprep.subr.mxu0 0.0
    %1392 = vmatpush1.msra.mxu0 %v1288
    %1393 = vmatprep.subr.mxu0 0.0
    %1394 = vmatpush1.msra.mxu0 0.0
    %1395 = vmatprep.subr.mxu0 0.0
    %1396 = vmatpush1.msra.mxu0 0.0
    %1397 = vmatprep.subr.mxu0 0.0
    %1398 = vmatpush1.msra.mxu0 0.0
    %1399 = vmatprep.subr.mxu0 0.0
    %1400 = vmatpush1.msra.mxu0 0.0
    %1401 = vmatprep.subr.mxu0 0.0
    %1402 = vmatpush1.msra.mxu0 0.0
    %1403 = vmatprep.subr.mxu0 0.0
    %1404 = vmatpush1.msra.mxu0 0.0
    %1405 = vmatprep.subr.mxu0 0.0
    %1406 = vmatpush1.msra.mxu0 0.0
    %1407 = vmatprep.subr.mxu0 0.0
    %1408 = vmatpush1.msra.mxu0 0.0
    %1409 = vmatprep.subr.mxu0 0.0
    %1410 = vmatpush1.msra.mxu0 0.0
    %1411 = vmatprep.subr.mxu0 0.0
    %1412 = vmatpush1.msra.mxu0 0.0
    %1413 = vmatprep.subr.mxu0 0.0
    %1414 = vmatpush1.msra.mxu0 0.0
    %1415 = vmatprep.subr.mxu0 0.0
    %1416 = vmatpush1.msra.mxu0 0.0
    %1417 = vmatprep.subr.mxu0 0.0
    %1418 = vmatpush1.msra.mxu0 0.0
    %1419 = vmatprep.subr.mxu0 0.0
    %1420 = vmatpush1.msra.mxu0 0.0
    %1421 = vmatprep.subr.mxu0 0.0
    %1422 = vmatpush1.msra.mxu0 0.0
    %1423 = vmatprep.mubr.f32.mxu0 %v315
    %1424 = vmatmul.mubr.f32.gmra.mrb[0].mxu0 %v260
    %v1425 = vpop.f32.mrb[0].mxu0
    %v1426 = vadd.f32 %v1356, %v1425
    %v1427 = vpop.f32.mrb[0].mxu0
    %1428 = vdwg.mxu0
    %v1429 = vmul.f32 %v1426, %v461
    %v1430 = vadd.f32 %v1429, %v468
    %s1431 = scalar_lea.vmem %s9, 2352
    %v1432 = vld [vmem:[%s1431] sm:$0xff]
    %v1433 = vld [vmem:[%s1431 + $0x8] sm:$0xff]
    %v1434 = vld [vmem:[%s1431 + $0x10] sm:$0xff]
    %v1435 = vld [vmem:[%s1431 + $0x18] sm:$0xff]
    %v1436 = vld [vmem:[%s1431 + $0x20] sm:$0xff]
    %v1437 = vld [vmem:[%s1431 + $0x28] sm:$0xff]
    %v1438 = vld [vmem:[%s1431 + $0x30] sm:$0xff]
    %v1439 = vld [vmem:[%s1431 + $0x38] sm:$0xff]
    %v1440 = vld [vmem:[%s1431 + $0x40] sm:$0xff]
    %v1441 = vld [vmem:[%s1431 + $0x48] sm:$0xff]
    %v1442 = vld [vmem:[%s1431 + $0x50] sm:$0xff]
    %v1443 = vld [vmem:[%s1431 + $0x58] sm:$0xff]
    %v1444 = vld [vmem:[%s1431 + $0x60] sm:$0xff]
    %v1445 = vld [vmem:[%s1431 + $0x68] sm:$0xff]
    %v1446 = vld [vmem:[%s1431 + $0x70] sm:$0xff]
    %v1447 = vld [vmem:[%s1431 + $0x78] sm:$0xff]
    %v1448 = vld [vmem:[%s1431 + $0x80] sm:$0xff]
    %v1449 = vld [vmem:[%s1431 + $0x88] sm:$0xff]
    %v1450 = vld [vmem:[%s1431 + $0x90] sm:$0xff]
    %v1451 = vld [vmem:[%s1431 + $0x98] sm:$0xff]
    %v1452 = vld [vmem:[%s1431 + $0xa0] sm:$0xff]
    %v1453 = vld [vmem:[%s1431 + $0xa8] sm:$0xff]
    %v1454 = vld [vmem:[%s1431 + $0xb0] sm:$0xff]
    %v1455 = vld [vmem:[%s1431 + $0xb8] sm:$0xff]
    %v1456 = vld [vmem:[%s1431 + $0xc0] sm:$0xff]
    %v1457 = vld [vmem:[%s1431 + $0xc8] sm:$0xff]
    %v1458 = vld [vmem:[%s1431 + $0xd0] sm:$0xff]
    %v1459 = vld [vmem:[%s1431 + $0xd8] sm:$0xff]
    %v1460 = vld [vmem:[%s1431 + $0xe0] sm:$0xff]
    %v1461 = vld [vmem:[%s1431 + $0xe8] sm:$0xff]
    %v1462 = vld [vmem:[%s1431 + $0xf0] sm:$0xff]
    %v1463 = vld [vmem:[%s1431 + $0xf8] sm:$0xff]
    %v1464 = vld [vmem:[%s1431 + $0x100] sm:$0xff]
    %v1465 = vld [vmem:[%s1431 + $0x108] sm:$0xff]
    %v1466 = vld [vmem:[%s1431 + $0x110] sm:$0xff]
    %v1467 = vld [vmem:[%s1431 + $0x118] sm:$0xff]
    %v1468 = vld [vmem:[%s1431 + $0x120] sm:$0xff]
    %v1469 = vld [vmem:[%s1431 + $0x128] sm:$0xff]
    %v1470 = vld [vmem:[%s1431 + $0x130] sm:$0xff]
    %v1471 = vld [vmem:[%s1431 + $0x138] sm:$0xff]
    %v1472 = vld [vmem:[%s1431 + $0x140] sm:$0xff]
    %v1473 = vld [vmem:[%s1431 + $0x148] sm:$0xff]
    %v1474 = vld [vmem:[%s1431 + $0x150] sm:$0xff]
    %v1475 = vld [vmem:[%s1431 + $0x158] sm:$0xff]
    %v1476 = vld [vmem:[%s1431 + $0x160] sm:$0xff]
    %v1477 = vld [vmem:[%s1431 + $0x168] sm:$0xff]
    %v1478 = vld [vmem:[%s1431 + $0x170] sm:$0xff]
    %v1479 = vld [vmem:[%s1431 + $0x178] sm:$0xff]
    %v1480 = vld [vmem:[%s1431 + $0x180] sm:$0xff]
    %1481 = vmatprep.subr.mxu0 0.0
    %1482 = vmatpush1.msra.mxu0 %v1432
    %1483 = vmatprep.subr.mxu0 0.0
    %1484 = vmatpush1.msra.mxu0 %v1433
    %1485 = vmatprep.subr.mxu0 0.0
    %1486 = vmatpush1.msra.mxu0 %v1434
    %1487 = vmatprep.subr.mxu0 0.0
    %1488 = vmatpush1.msra.mxu0 %v1435
    %1489 = vmatprep.subr.mxu0 0.0
    %1490 = vmatpush1.msra.mxu0 %v1436
    %1491 = vmatprep.subr.mxu0 0.0
    %1492 = vmatpush1.msra.mxu0 %v1437
    %1493 = vmatprep.subr.mxu0 0.0
    %1494 = vmatpush1.msra.mxu0 %v1438
    %1495 = vmatprep.subr.mxu0 0.0
    %1496 = vmatpush1.msra.mxu0 %v1439
    %1497 = vmatprep.subr.mxu0 0.0
    %1498 = vmatpush1.msra.mxu0 %v1440
    %1499 = vmatprep.subr.mxu0 0.0
    %1500 = vmatpush1.msra.mxu0 %v1441
    %1501 = vmatprep.subr.mxu0 0.0
    %1502 = vmatpush1.msra.mxu0 %v1442
    %1503 = vmatprep.subr.mxu0 0.0
    %1504 = vmatpush1.msra.mxu0 %v1443
    %1505 = vmatprep.subr.mxu0 0.0
    %1506 = vmatpush1.msra.mxu0 %v1444
    %1507 = vmatprep.subr.mxu0 0.0
    %1508 = vmatpush1.msra.mxu0 %v1445
    %1509 = vmatprep.subr.mxu0 0.0
    %1510 = vmatpush1.msra.mxu0 %v1446
    %1511 = vmatprep.subr.mxu0 0.0
    %1512 = vmatpush1.msra.mxu0 %v1447
    %1513 = vmatprep.subr.mxu0 0.0
    %1514 = vmatpush1.msra.mxu0 %v1448
    %1515 = vmatprep.subr.mxu0 0.0
    %1516 = vmatpush1.msra.mxu0 %v1449
    %1517 = vmatprep.subr.mxu0 0.0
    %1518 = vmatpush1.msra.mxu0 %v1450
    %1519 = vmatprep.subr.mxu0 0.0
    %1520 = vmatpush1.msra.mxu0 %v1451
    %1521 = vmatprep.subr.mxu0 0.0
    %1522 = vmatpush1.msra.mxu0 %v1452
    %1523 = vmatprep.subr.mxu0 0.0
    %1524 = vmatpush1.msra.mxu0 %v1453
    %1525 = vmatprep.subr.mxu0 0.0
    %1526 = vmatpush1.msra.mxu0 %v1454
    %1527 = vmatprep.subr.mxu0 0.0
    %1528 = vmatpush1.msra.mxu0 %v1455
    %1529 = vmatprep.subr.mxu0 0.0
    %1530 = vmatpush1.msra.mxu0 %v1456
    %1531 = vmatprep.subr.mxu0 0.0
    %1532 = vmatpush1.msra.mxu0 %v1457
    %1533 = vmatprep.subr.mxu0 0.0
    %1534 = vmatpush1.msra.mxu0 %v1458
    %1535 = vmatprep.subr.mxu0 0.0
    %1536 = vmatpush1.msra.mxu0 %v1459
    %1537 = vmatprep.subr.mxu0 0.0
    %1538 = vmatpush1.msra.mxu0 %v1460
    %1539 = vmatprep.subr.mxu0 0.0
    %1540 = vmatpush1.msra.mxu0 %v1461
    %1541 = vmatprep.subr.mxu0 0.0
    %1542 = vmatpush1.msra.mxu0 %v1462
    %1543 = vmatprep.subr.mxu0 0.0
    %1544 = vmatpush1.msra.mxu0 %v1463
    %1545 = vmatprep.mubr.f32.mxu0 %v259
    %1546 = vmatmul.mubr.f32.gmra.mrb[0].mxu0 %v258
    %v1547 = vpop.f32.mrb[0].mxu0
    %v1548 = vadd.f32 0.0, %v1547
    %v1549 = vpop.f32.mrb[0].mxu0
    %1550 = vdwg.mxu0
    %1551 = vmatprep.subr.mxu0 0.0
    %1552 = vmatpush1.msra.mxu0 %v1464
    %1553 = vmatprep.subr.mxu0 0.0
    %1554 = vmatpush1.msra.mxu0 %v1465
    %1555 = vmatprep.subr.mxu0 0.0
    %1556 = vmatpush1.msra.mxu0 %v1466
    %1557 = vmatprep.subr.mxu0 0.0
    %1558 = vmatpush1.msra.mxu0 %v1467
    %1559 = vmatprep.subr.mxu0 0.0
    %1560 = vmatpush1.msra.mxu0 %v1468
    %1561 = vmatprep.subr.mxu0 0.0
    %1562 = vmatpush1.msra.mxu0 %v1469
    %1563 = vmatprep.subr.mxu0 0.0
    %1564 = vmatpush1.msra.mxu0 %v1470
    %1565 = vmatprep.subr.mxu0 0.0
    %1566 = vmatpush1.msra.mxu0 %v1471
    %1567 = vmatprep.subr.mxu0 0.0
    %1568 = vmatpush1.msra.mxu0 %v1472
    %1569 = vmatprep.subr.mxu0 0.0
    %1570 = vmatpush1.msra.mxu0 %v1473
    %1571 = vmatprep.subr.mxu0 0.0
    %1572 = vmatpush1.msra.mxu0 %v1474
    %1573 = vmatprep.subr.mxu0 0.0
    %1574 = vmatpush1.msra.mxu0 %v1475
    %1575 = vmatprep.subr.mxu0 0.0
    %1576 = vmatpush1.msra.mxu0 %v1476
    %1577 = vmatprep.subr.mxu0 0.0
    %1578 = vmatpush1.msra.mxu0 %v1477
    %1579 = vmatprep.subr.mxu0 0.0
    %1580 = vmatpush1.msra.mxu0 %v1478
    %1581 = vmatprep.subr.mxu0 0.0
    %1582 = vmatpush1.msra.mxu0 %v1479
    %1583 = vmatprep.subr.mxu0 0.0
    %1584 = vmatpush1.msra.mxu0 %v1480
    %1585 = vmatprep.subr.mxu0 0.0
    %1586 = vmatpush1.msra.mxu0 0.0
    %1587 = vmatprep.subr.mxu0 0.0
    %1588 = vmatpush1.msra.mxu0 0.0
    %1589 = vmatprep.subr.mxu0 0.0
    %1590 = vmatpush1.msra.mxu0 0.0
    %1591 = vmatprep.subr.mxu0 0.0
    %1592 = vmatpush1.msra.mxu0 0.0
    %1593 = vmatprep.subr.mxu0 0.0
    %1594 = vmatpush1.msra.mxu0 0.0
    %1595 = vmatprep.subr.mxu0 0.0
    %1596 = vmatpush1.msra.mxu0 0.0
    %1597 = vmatprep.subr.mxu0 0.0
    %1598 = vmatpush1.msra.mxu0 0.0
    %1599 = vmatprep.subr.mxu0 0.0
    %1600 = vmatpush1.msra.mxu0 0.0
    %1601 = vmatprep.subr.mxu0 0.0
    %1602 = vmatpush1.msra.mxu0 0.0
    %1603 = vmatprep.subr.mxu0 0.0
    %1604 = vmatpush1.msra.mxu0 0.0
    %1605 = vmatprep.subr.mxu0 0.0
    %1606 = vmatpush1.msra.mxu0 0.0
    %1607 = vmatprep.subr.mxu0 0.0
    %1608 = vmatpush1.msra.mxu0 0.0
    %1609 = vmatprep.subr.mxu0 0.0
    %1610 = vmatpush1.msra.mxu0 0.0
    %1611 = vmatprep.subr.mxu0 0.0
    %1612 = vmatpush1.msra.mxu0 0.0
    %1613 = vmatprep.subr.mxu0 0.0
    %1614 = vmatpush1.msra.mxu0 0.0
    %1615 = vmatprep.mubr.f32.mxu0 %v315
    %1616 = vmatmul.mubr.f32.gmra.mrb[0].mxu0 %v260
    %v1617 = vpop.f32.mrb[0].mxu0
    %v1618 = vadd.f32 %v1548, %v1617
    %v1619 = vpop.f32.mrb[0].mxu0
    %1620 = vdwg.mxu0
    %v1621 = vmul.f32 %v1618, %v461
    %v1622 = vadd.f32 %v1621, %v468
    %v1623 = vld [vmem:[%s65] sm:$0xff]
    %v1624 = vld [vmem:[%s65 + $0x8] sm:$0xff]
    %v1625 = vld [vmem:[%s65 + $0x10] sm:$0xff]
    %v1626 = vld [vmem:[%s65 + $0x18] sm:$0xff]
    %v1627 = vld [vmem:[%s65 + $0x20] sm:$0xff]
    %v1628 = vld [vmem:[%s65 + $0x28] sm:$0xff]
    %v1629 = vld [vmem:[%s65 + $0x30] sm:$0xff]
    %v1630 = vld [vmem:[%s65 + $0x38] sm:$0xff]
    %v1631 = vld [vmem:[%s65 + $0x40] sm:$0xff]
    %v1632 = vld [vmem:[%s65 + $0x48] sm:$0xff]
    %v1633 = vld [vmem:[%s65 + $0x50] sm:$0xff]
    %v1634 = vld [vmem:[%s65 + $0x58] sm:$0xff]
    %v1635 = vld [vmem:[%s65 + $0x60] sm:$0xff]
    %v1636 = vld [vmem:[%s65 + $0x68] sm:$0xff]
    %v1637 = vld [vmem:[%s55] sm:$0x3]
    %v1638 = vld [vmem:[%s53] sm:$0x3]
    %v1639 = vld [vmem:[%s51] sm:$0x3]
    %v1640 = vld [vmem:[%s49] sm:$0x3]
    %v1641 = vld [vmem:[%s61] sm:$0xff]
    %v1642 = vld [vmem:[%s61 + $0x8] sm:$0xff]
    %v1643 = vld [vmem:[%s61 + $0x10] sm:$0xff]
    %v1644 = vld [vmem:[%s61 + $0x18] sm:$0xff]
    %v1645 = vld [vmem:[%s61 + $0x20] sm:$0xff]
    %v1646 = vld [vmem:[%s61 + $0x28] sm:$0xff]
    %v1647 = vld [vmem:[%s61 + $0x30] sm:$0xff]
    %v1648 = vld [vmem:[%s61 + $0x38] sm:$0xff]
    %v1649 = vld [vmem:[%s61 + $0x40] sm:$0xff]
    %v1650 = vld [vmem:[%s61 + $0x48] sm:$0xff]
    %v1651 = vld [vmem:[%s61 + $0x50] sm:$0xff]
    %v1652 = vld [vmem:[%s61 + $0x58] sm:$0xff]
    %v1653 = vld [vmem:[%s61 + $0x60] sm:$0xff]
    %v1654 = vld [vmem:[%s61 + $0x68] sm:$0xff]
    %v1655 = vld [vmem:[%s61 + $0x70] sm:$0xff]
    %v1656 = vld [vmem:[%s61 + $0x78] sm:$0xff]
    %v1657 = vld [vmem:[%s61 + $0x80] sm:$0xff]
    %v1658 = vld [vmem:[%s61 + $0x88] sm:$0xff]
    %v1659 = vld [vmem:[%s61 + $0x90] sm:$0xff]
    %v1660 = vld [vmem:[%s61 + $0x98] sm:$0x7f]
    %v1661 = vld [vmem:[%s45] sm:$0x1]
    %v1662 = vld [vmem:[%s63] sm:$0xff]
    %v1663 = vld [vmem:[%s63 + $0x8] sm:$0xff]
    %v1664 = vld [vmem:[%s63 + $0x10] sm:$0xff]
    %v1665 = vld [vmem:[%s63 + $0x18] sm:$0xff]
    %v1666 = vld [vmem:[%s63 + $0x20] sm:$0xff]
    %v1667 = vld [vmem:[%s63 + $0x28] sm:$0xff]
    %v1668 = vld [vmem:[%s63 + $0x30] sm:$0xff]
    %v1669 = vld [vmem:[%s63 + $0x38] sm:$0xff]
    %v1670 = vld [vmem:[%s63 + $0x40] sm:$0xff]
    %v1671 = vld [vmem:[%s63 + $0x48] sm:$0xff]
    %v1672 = vld [vmem:[%s47] sm:$0x3]
    %v1673 = vld [vmem:[%s67] sm:$0xff]
    %v1674 = vld [vmem:[%s67 + $0x8] sm:$0xff]
    %v1675 = vld [vmem:[%s67 + $0x10] sm:$0xff]
    %v1676 = vld [vmem:[%s67 + $0x18] sm:$0xff]
    %v1677 = vld [vmem:[%s67 + $0x20] sm:$0xff]
    %v1678 = vld [vmem:[%s67 + $0x28] sm:$0xff]
    %v1679 = vld [vmem:[%s67 + $0x30] sm:$0xff]
    %v1680 = vld [vmem:[%s67 + $0x38] sm:$0xff]
    %v1681 = vld [vmem:[%s67 + $0x40] sm:$0xff]
    %v1682 = vld [vmem:[%s67 + $0x48] sm:$0xff]
    %v1683 = vld [vmem:[%s67 + $0x50] sm:$0xff]
    %v1684 = vld [vmem:[%s67 + $0x58] sm:$0xff]
    %v1685 = vld [vmem:[%s67 + $0x60] sm:$0xff]
    %v1686 = vld [vmem:[%s67 + $0x68] sm:$0xff]
    %v1687 = vld [vmem:[%s67 + $0x70] sm:$0xff]
    %v1688 = vld [vmem:[%s67 + $0x78] sm:$0xff]
    %v1689 = vld [vmem:[%s67 + $0x80] sm:$0xff]
    %v1690 = vld [vmem:[%s67 + $0x88] sm:$0xff]
    %v1691 = vld [vmem:[%s67 + $0x90] sm:$0xff]
    %v1692 = vld [vmem:[%s67 + $0x98] sm:$0x7f]
    %v1693 = vld [vmem:[%s59] sm:$0x1]
    %v1694 = vld [vmem:[%s57] sm:$0x1]
    %vm1695 = vcmask 457728
    %v1697 = vsel %vm1695, %v470, 0
    %1699 = vmatprep.subr.mxu0 %v1624
    %1700 = vmatpush1.msra.mxu0 %v1623
    %1701 = vmatprep.subr.mxu0 %v1626
    %1702 = vmatpush1.msra.mxu0 %v1625
    %1703 = vmatprep.subr.mxu0 %v1628
    %1704 = vmatpush1.msra.mxu0 %v1627
    %1705 = vmatprep.subr.mxu0 %v1630
    %1706 = vmatpush1.msra.mxu0 %v1629
    %1707 = vmatprep.subr.mxu0 %v1632
    %1708 = vmatpush1.msra.mxu0 %v1631
    %1709 = vmatprep.subr.mxu0 %v1634
    %1710 = vmatpush1.msra.mxu0 %v1633
    %1711 = vmatprep.subr.mxu0 %v1636
    %1712 = vmatpush1.msra.mxu0 %v1635
    %1713 = vmatprep.subr.mxu0 0.0
    %1714 = vmatpush1.msra.mxu0 0.0
    %1715 = vmatprep.subr.mxu0 0.0
    %1716 = vmatpush1.msra.mxu0 0.0
    %1717 = vmatprep.subr.mxu0 0.0
    %1718 = vmatpush1.msra.mxu0 0.0
    %1719 = vmatprep.subr.mxu0 0.0
    %1720 = vmatpush1.msra.mxu0 0.0
    %1721 = vmatprep.subr.mxu0 0.0
    %1722 = vmatpush1.msra.mxu0 0.0
    %1723 = vmatprep.subr.mxu0 0.0
    %1724 = vmatpush1.msra.mxu0 0.0
    %1725 = vmatprep.subr.mxu0 0.0
    %1726 = vmatpush1.msra.mxu0 0.0
    %1727 = vmatprep.subr.mxu0 0.0
    %1728 = vmatpush1.msra.mxu0 0.0
    %1729 = vmatprep.subr.mxu0 0.0
    %1730 = vmatpush1.msra.mxu0 0.0
    %1731 = vmatprep.subr.mxu0 0.0
    %1732 = vmatpush1.msra.mxu0 0.0
    %1733 = vmatprep.subr.mxu0 0.0
    %1734 = vmatpush1.msra.mxu0 0.0
    %1735 = vmatprep.subr.mxu0 0.0
    %1736 = vmatpush1.msra.mxu0 0.0
    %1737 = vmatprep.subr.mxu0 0.0
    %1738 = vmatpush1.msra.mxu0 0.0
    %1739 = vmatprep.subr.mxu0 0.0
    %1740 = vmatpush1.msra.mxu0 0.0
    %1741 = vmatprep.subr.mxu0 0.0
    %1742 = vmatpush1.msra.mxu0 0.0
    %1743 = vmatprep.subr.mxu0 0.0
    %1744 = vmatpush1.msra.mxu0 0.0
    %1745 = vmatprep.subr.mxu0 0.0
    %1746 = vmatpush1.msra.mxu0 0.0
    %1747 = vmatprep.subr.mxu0 0.0
    %1748 = vmatpush1.msra.mxu0 0.0
    %1749 = vmatprep.subr.mxu0 0.0
    %1750 = vmatpush1.msra.mxu0 0.0
    %1751 = vmatprep.subr.mxu0 0.0
    %1752 = vmatpush1.msra.mxu0 0.0
    %1753 = vmatprep.subr.mxu0 0.0
    %1754 = vmatpush1.msra.mxu0 0.0
    %1755 = vmatprep.subr.mxu0 0.0
    %1756 = vmatpush1.msra.mxu0 0.0
    %1757 = vmatprep.subr.mxu0 0.0
    %1758 = vmatpush1.msra.mxu0 0.0
    %1759 = vmatprep.subr.mxu0 0.0
    %1760 = vmatpush1.msra.mxu0 0.0
    %1761 = vmatprep.subr.mxu0 0.0
    %1762 = vmatpush1.msra.mxu0 0.0
    %1763 = vmatprep.mubr.f32.mxu0 0.0
    %1764 = vmatmul.mubr.f32.gmra.mrb[0].mxu0 %v1697
    %v1765 = vpop.f32.mrb[0].mxu0
    %v1766 = vadd.f32 0.0, %v1765
    %v1767 = vpop.f32.mrb[0].mxu0
    %v1768 = vadd.f32 0.0, %v1767
    %1769 = vdwg.mxu0
    %v1771 = vlaneseq
    %v1772 = vshrl.u32 %v1771, 7
    %v1773 = vsub.s32 0, %v1772
    %v1774 = vrot.slane %v1637, %v1773
    %v1775 = vlaneseq
    %v1776 = vshrl.u32 %v1775, 7
    %v1777 = vsub.s32 1, %v1776
    %v1778 = vrot.slane %v1637, %v1777
    %v1781 = vmul.f32 %v1766, %v1774
    %v1782 = vmul.f32 %v1768, %v1778
    %v1784 = vlaneseq
    %v1785 = vshrl.u32 %v1784, 7
    %v1786 = vsub.s32 0, %v1785
    %v1787 = vrot.slane %v1638, %v1786
    %v1788 = vlaneseq
    %v1789 = vshrl.u32 %v1788, 7
    %v1790 = vsub.s32 1, %v1789
    %v1791 = vrot.slane %v1638, %v1790
    %v1794 = vadd.f32 %v1781, %v1787
    %v1795 = vadd.f32 %v1782, %v1791
    %v1796 = vmax.f32 %v1794, 0.0
    %v1797 = vmax.f32 %v1795, 0.0
    %v1799 = vsel %vm1695, %v662, 0
    %1801 = vmatprep.subr.mxu0 %v1624
    %1802 = vmatpush1.msra.mxu0 %v1623
    %1803 = vmatprep.subr.mxu0 %v1626
    %1804 = vmatpush1.msra.mxu0 %v1625
    %1805 = vmatprep.subr.mxu0 %v1628
    %1806 = vmatpush1.msra.mxu0 %v1627
    %1807 = vmatprep.subr.mxu0 %v1630
    %1808 = vmatpush1.msra.mxu0 %v1629
    %1809 = vmatprep.subr.mxu0 %v1632
    %1810 = vmatpush1.msra.mxu0 %v1631
    %1811 = vmatprep.subr.mxu0 %v1634
    %1812 = vmatpush1.msra.mxu0 %v1633
    %1813 = vmatprep.subr.mxu0 %v1636
    %1814 = vmatpush1.msra.mxu0 %v1635
    %1815 = vmatprep.subr.mxu0 0.0
    %1816 = vmatpush1.msra.mxu0 0.0
    %1817 = vmatprep.subr.mxu0 0.0
    %1818 = vmatpush1.msra.mxu0 0.0
    %1819 = vmatprep.subr.mxu0 0.0
    %1820 = vmatpush1.msra.mxu0 0.0
    %1821 = vmatprep.subr.mxu0 0.0
    %1822 = vmatpush1.msra.mxu0 0.0
    %1823 = vmatprep.subr.mxu0 0.0
    %1824 = vmatpush1.msra.mxu0 0.0
    %1825 = vmatprep.subr.mxu0 0.0
    %1826 = vmatpush1.msra.mxu0 0.0
    %1827 = vmatprep.subr.mxu0 0.0
    %1828 = vmatpush1.msra.mxu0 0.0
    %1829 = vmatprep.subr.mxu0 0.0
    %1830 = vmatpush1.msra.mxu0 0.0
    %1831 = vmatprep.subr.mxu0 0.0
    %1832 = vmatpush1.msra.mxu0 0.0
    %1833 = vmatprep.subr.mxu0 0.0
    %1834 = vmatpush1.msra.mxu0 0.0
    %1835 = vmatprep.subr.mxu0 0.0
    %1836 = vmatpush1.msra.mxu0 0.0
    %1837 = vmatprep.subr.mxu0 0.0
    %1838 = vmatpush1.msra.mxu0 0.0
    %1839 = vmatprep.subr.mxu0 0.0
    %1840 = vmatpush1.msra.mxu0 0.0
    %1841 = vmatprep.subr.mxu0 0.0
    %1842 = vmatpush1.msra.mxu0 0.0
    %1843 = vmatprep.subr.mxu0 0.0
    %1844 = vmatpush1.msra.mxu0 0.0
    %1845 = vmatprep.subr.mxu0 0.0
    %1846 = vmatpush1.msra.mxu0 0.0
    %1847 = vmatprep.subr.mxu0 0.0
    %1848 = vmatpush1.msra.mxu0 0.0
    %1849 = vmatprep.subr.mxu0 0.0
    %1850 = vmatpush1.msra.mxu0 0.0
    %1851 = vmatprep.subr.mxu0 0.0
    %1852 = vmatpush1.msra.mxu0 0.0
    %1853 = vmatprep.subr.mxu0 0.0
    %1854 = vmatpush1.msra.mxu0 0.0
    %1855 = vmatprep.subr.mxu0 0.0
    %1856 = vmatpush1.msra.mxu0 0.0
    %1857 = vmatprep.subr.mxu0 0.0
    %1858 = vmatpush1.msra.mxu0 0.0
    %1859 = vmatprep.subr.mxu0 0.0
    %1860 = vmatpush1.msra.mxu0 0.0
    %1861 = vmatprep.subr.mxu0 0.0
    %1862 = vmatpush1.msra.mxu0 0.0
    %1863 = vmatprep.subr.mxu0 0.0
    %1864 = vmatpush1.msra.mxu0 0.0
    %1865 = vmatprep.mubr.f32.mxu0 0.0
    %1866 = vmatmul.mubr.f32.gmra.mrb[0].mxu0 %v1799
    %v1867 = vpop.f32.mrb[0].mxu0
    %v1868 = vadd.f32 0.0, %v1867
    %v1869 = vpop.f32.mrb[0].mxu0
    %v1870 = vadd.f32 0.0, %v1869
    %1871 = vdwg.mxu0
    %v1872 = vmul.f32 %v1868, %v1774
    %v1873 = vmul.f32 %v1870, %v1778
    %v1874 = vadd.f32 %v1872, %v1787
    %v1875 = vadd.f32 %v1873, %v1791
    %v1876 = vmax.f32 %v1874, 0.0
    %v1877 = vmax.f32 %v1875, 0.0
    %v1879 = vsel %vm1695, %v854, 0
    %1881 = vmatprep.subr.mxu0 %v1624
    %1882 = vmatpush1.msra.mxu0 %v1623
    %1883 = vmatprep.subr.mxu0 %v1626
    %1884 = vmatpush1.msra.mxu0 %v1625
    %1885 = vmatprep.subr.mxu0 %v1628
    %1886 = vmatpush1.msra.mxu0 %v1627
    %1887 = vmatprep.subr.mxu0 %v1630
    %1888 = vmatpush1.msra.mxu0 %v1629
    %1889 = vmatprep.subr.mxu0 %v1632
    %1890 = vmatpush1.msra.mxu0 %v1631
    %1891 = vmatprep.subr.mxu0 %v1634
    %1892 = vmatpush1.msra.mxu0 %v1633
    %1893 = vmatprep.subr.mxu0 %v1636
    %1894 = vmatpush1.msra.mxu0 %v1635
    %1895 = vmatprep.subr.mxu0 0.0
    %1896 = vmatpush1.msra.mxu0 0.0
    %1897 = vmatprep.subr.mxu0 0.0
    %1898 = vmatpush1.msra.mxu0 0.0
    %1899 = vmatprep.subr.mxu0 0.0
    %1900 = vmatpush1.msra.mxu0 0.0
    %1901 = vmatprep.subr.mxu0 0.0
    %1902 = vmatpush1.msra.mxu0 0.0
    %1903 = vmatprep.subr.mxu0 0.0
    %1904 = vmatpush1.msra.mxu0 0.0
    %1905 = vmatprep.subr.mxu0 0.0
    %1906 = vmatpush1.msra.mxu0 0.0
    %1907 = vmatprep.subr.mxu0 0.0
    %1908 = vmatpush1.msra.mxu0 0.0
    %1909 = vmatprep.subr.mxu0 0.0
    %1910 = vmatpush1.msra.mxu0 0.0
    %1911 = vmatprep.subr.mxu0 0.0
    %1912 = vmatpush1.msra.mxu0 0.0
    %1913 = vmatprep.subr.mxu0 0.0
    %1914 = vmatpush1.msra.mxu0 0.0
    %1915 = vmatprep.subr.mxu0 0.0
    %1916 = vmatpush1.msra.mxu0 0.0
    %1917 = vmatprep.subr.mxu0 0.0
    %1918 = vmatpush1.msra.mxu0 0.0
    %1919 = vmatprep.subr.mxu0 0.0
    %1920 = vmatpush1.msra.mxu0 0.0
    %1921 = vmatprep.subr.mxu0 0.0
    %1922 = vmatpush1.msra.mxu0 0.0
    %1923 = vmatprep.subr.mxu0 0.0
    %1924 = vmatpush1.msra.mxu0 0.0
    %1925 = vmatprep.subr.mxu0 0.0
    %1926 = vmatpush1.msra.mxu0 0.0
    %1927 = vmatprep.subr.mxu0 0.0
    %1928 = vmatpush1.msra.mxu0 0.0
    %1929 = vmatprep.subr.mxu0 0.0
    %1930 = vmatpush1.msra.mxu0 0.0
    %1931 = vmatprep.subr.mxu0 0.0
    %1932 = vmatpush1.msra.mxu0 0.0
    %1933 = vmatprep.subr.mxu0 0.0
    %1934 = vmatpush1.msra.mxu0 0.0
    %1935 = vmatprep.subr.mxu0 0.0
    %1936 = vmatpush1.msra.mxu0 0.0
    %1937 = vmatprep.subr.mxu0 0.0
    %1938 = vmatpush1.msra.mxu0 0.0
    %1939 = vmatprep.subr.mxu0 0.0
    %1940 = vmatpush1.msra.mxu0 0.0
    %1941 = vmatprep.subr.mxu0 0.0
    %1942 = vmatpush1.msra.mxu0 0.0
    %1943 = vmatprep.subr.mxu0 0.0
    %1944 = vmatpush1.msra.mxu0 0.0
    %1945 = vmatprep.mubr.f32.mxu0 0.0
    %1946 = vmatmul.mubr.f32.gmra.mrb[0].mxu0 %v1879
    %v1947 = vpop.f32.mrb[0].mxu0
    %v1948 = vadd.f32 0.0, %v1947
    %v1949 = vpop.f32.mrb[0].mxu0
    %v1950 = vadd.f32 0.0, %v1949
    %1951 = vdwg.mxu0
    %v1952 = vmul.f32 %v1948, %v1774
    %v1953 = vmul.f32 %v1950, %v1778
    %v1954 = vadd.f32 %v1952, %v1787
    %v1955 = vadd.f32 %v1953, %v1791
    %v1956 = vmax.f32 %v1954, 0.0
    %v1957 = vmax.f32 %v1955, 0.0
    %v1959 = vsel %vm1695, %v1046, 0
    %1961 = vmatprep.subr.mxu0 %v1624
    %1962 = vmatpush1.msra.mxu0 %v1623
    %1963 = vmatprep.subr.mxu0 %v1626
    %1964 = vmatpush1.msra.mxu0 %v1625
    %1965 = vmatprep.subr.mxu0 %v1628
    %1966 = vmatpush1.msra.mxu0 %v1627
    %1967 = vmatprep.subr.mxu0 %v1630
    %1968 = vmatpush1.msra.mxu0 %v1629
    %1969 = vmatprep.subr.mxu0 %v1632
    %1970 = vmatpush1.msra.mxu0 %v1631
    %1971 = vmatprep.subr.mxu0 %v1634
    %1972 = vmatpush1.msra.mxu0 %v1633
    %1973 = vmatprep.subr.mxu0 %v1636
    %1974 = vmatpush1.msra.mxu0 %v1635
    %1975 = vmatprep.subr.mxu0 0.0
    %1976 = vmatpush1.msra.mxu0 0.0
    %1977 = vmatprep.subr.mxu0 0.0
    %1978 = vmatpush1.msra.mxu0 0.0
    %1979 = vmatprep.subr.mxu0 0.0
    %1980 = vmatpush1.msra.mxu0 0.0
    %1981 = vmatprep.subr.mxu0 0.0
    %1982 = vmatpush1.msra.mxu0 0.0
    %1983 = vmatprep.subr.mxu0 0.0
    %1984 = vmatpush1.msra.mxu0 0.0
    %1985 = vmatprep.subr.mxu0 0.0
    %1986 = vmatpush1.msra.mxu0 0.0
    %1987 = vmatprep.subr.mxu0 0.0
    %1988 = vmatpush1.msra.mxu0 0.0
    %1989 = vmatprep.subr.mxu0 0.0
    %1990 = vmatpush1.msra.mxu0 0.0
    %1991 = vmatprep.subr.mxu0 0.0
    %1992 = vmatpush1.msra.mxu0 0.0
    %1993 = vmatprep.subr.mxu0 0.0
    %1994 = vmatpush1.msra.mxu0 0.0
    %1995 = vmatprep.subr.mxu0 0.0
    %1996 = vmatpush1.msra.mxu0 0.0
    %1997 = vmatprep.subr.mxu0 0.0
    %1998 = vmatpush1.msra.mxu0 0.0
    %1999 = vmatprep.subr.mxu0 0.0
    %2000 = vmatpush1.msra.mxu0 0.0
    %2001 = vmatprep.subr.mxu0 0.0
    %2002 = vmatpush1.msra.mxu0 0.0
    %2003 = vmatprep.subr.mxu0 0.0
    %2004 = vmatpush1.msra.mxu0 0.0
    %2005 = vmatprep.subr.mxu0 0.0
    %2006 = vmatpush1.msra.mxu0 0.0
    %2007 = vmatprep.subr.mxu0 0.0
    %2008 = vmatpush1.msra.mxu0 0.0
    %2009 = vmatprep.subr.mxu0 0.0
    %2010 = vmatpush1.msra.mxu0 0.0
    %2011 = vmatprep.subr.mxu0 0.0
    %2012 = vmatpush1.msra.mxu0 0.0
    %2013 = vmatprep.subr.mxu0 0.0
    %2014 = vmatpush1.msra.mxu0 0.0
    %2015 = vmatprep.subr.mxu0 0.0
    %2016 = vmatpush1.msra.mxu0 0.0
    %2017 = vmatprep.subr.mxu0 0.0
    %2018 = vmatpush1.msra.mxu0 0.0
    %2019 = vmatprep.subr.mxu0 0.0
    %2020 = vmatpush1.msra.mxu0 0.0
    %2021 = vmatprep.subr.mxu0 0.0
    %2022 = vmatpush1.msra.mxu0 0.0
    %2023 = vmatprep.subr.mxu0 0.0
    %2024 = vmatpush1.msra.mxu0 0.0
    %2025 = vmatprep.mubr.f32.mxu0 0.0
    %2026 = vmatmul.mubr.f32.gmra.mrb[0].mxu0 %v1959
    %v2027 = vpop.f32.mrb[0].mxu0
    %v2028 = vadd.f32 0.0, %v2027
    %v2029 = vpop.f32.mrb[0].mxu0
    %v2030 = vadd.f32 0.0, %v2029
    %2031 = vdwg.mxu0
    %v2032 = vmul.f32 %v2028, %v1774
    %v2033 = vmul.f32 %v2030, %v1778
    %v2034 = vadd.f32 %v2032, %v1787
    %v2035 = vadd.f32 %v2033, %v1791
    %v2036 = vmax.f32 %v2034, 0.0
    %v2037 = vmax.f32 %v2035, 0.0
    %v2039 = vsel %vm1695, %v1238, 0
    %2041 = vmatprep.subr.mxu0 %v1624
    %2042 = vmatpush1.msra.mxu0 %v1623
    %2043 = vmatprep.subr.mxu0 %v1626
    %2044 = vmatpush1.msra.mxu0 %v1625
    %2045 = vmatprep.subr.mxu0 %v1628
    %2046 = vmatpush1.msra.mxu0 %v1627
    %2047 = vmatprep.subr.mxu0 %v1630
    %2048 = vmatpush1.msra.mxu0 %v1629
    %2049 = vmatprep.subr.mxu0 %v1632
    %2050 = vmatpush1.msra.mxu0 %v1631
    %2051 = vmatprep.subr.mxu0 %v1634
    %2052 = vmatpush1.msra.mxu0 %v1633
    %2053 = vmatprep.subr.mxu0 %v1636
    %2054 = vmatpush1.msra.mxu0 %v1635
    %2055 = vmatprep.subr.mxu0 0.0
    %2056 = vmatpush1.msra.mxu0 0.0
    %2057 = vmatprep.subr.mxu0 0.0
    %2058 = vmatpush1.msra.mxu0 0.0
    %2059 = vmatprep.subr.mxu0 0.0
    %2060 = vmatpush1.msra.mxu0 0.0
    %2061 = vmatprep.subr.mxu0 0.0
    %2062 = vmatpush1.msra.mxu0 0.0
    %2063 = vmatprep.subr.mxu0 0.0
    %2064 = vmatpush1.msra.mxu0 0.0
    %2065 = vmatprep.subr.mxu0 0.0
    %2066 = vmatpush1.msra.mxu0 0.0
    %2067 = vmatprep.subr.mxu0 0.0
    %2068 = vmatpush1.msra.mxu0 0.0
    %2069 = vmatprep.subr.mxu0 0.0
    %2070 = vmatpush1.msra.mxu0 0.0
    %2071 = vmatprep.subr.mxu0 0.0
    %2072 = vmatpush1.msra.mxu0 0.0
    %2073 = vmatprep.subr.mxu0 0.0
    %2074 = vmatpush1.msra.mxu0 0.0
    %2075 = vmatprep.subr.mxu0 0.0
    %2076 = vmatpush1.msra.mxu0 0.0
    %2077 = vmatprep.subr.mxu0 0.0
    %2078 = vmatpush1.msra.mxu0 0.0
    %2079 = vmatprep.subr.mxu0 0.0
    %2080 = vmatpush1.msra.mxu0 0.0
    %2081 = vmatprep.subr.mxu0 0.0
    %2082 = vmatpush1.msra.mxu0 0.0
    %2083 = vmatprep.subr.mxu0 0.0
    %2084 = vmatpush1.msra.mxu0 0.0
    %2085 = vmatprep.subr.mxu0 0.0
    %2086 = vmatpush1.msra.mxu0 0.0
    %2087 = vmatprep.subr.mxu0 0.0
    %2088 = vmatpush1.msra.mxu0 0.0
    %2089 = vmatprep.subr.mxu0 0.0
    %2090 = vmatpush1.msra.mxu0 0.0
    %2091 = vmatprep.subr.mxu0 0.0
    %2092 = vmatpush1.msra.mxu0 0.0
    %2093 = vmatprep.subr.mxu0 0.0
    %2094 = vmatpush1.msra.mxu0 0.0
    %2095 = vmatprep.subr.mxu0 0.0
    %2096 = vmatpush1.msra.mxu0 0.0
    %2097 = vmatprep.subr.mxu0 0.0
    %2098 = vmatpush1.msra.mxu0 0.0
    %2099 = vmatprep.subr.mxu0 0.0
    %2100 = vmatpush1.msra.mxu0 0.0
    %2101 = vmatprep.subr.mxu0 0.0
    %2102 = vmatpush1.msra.mxu0 0.0
    %2103 = vmatprep.subr.mxu0 0.0
    %2104 = vmatpush1.msra.mxu0 0.0
    %2105 = vmatprep.mubr.f32.mxu0 0.0
    %2106 = vmatmul.mubr.f32.gmra.mrb[0].mxu0 %v2039
    %v2107 = vpop.f32.mrb[0].mxu0
    %v2108 = vadd.f32 0.0, %v2107
    %v2109 = vpop.f32.mrb[0].mxu0
    %v2110 = vadd.f32 0.0, %v2109
    %2111 = vdwg.mxu0
    %v2112 = vmul.f32 %v2108, %v1774
    %v2113 = vmul.f32 %v2110, %v1778
    %v2114 = vadd.f32 %v2112, %v1787
    %v2115 = vadd.f32 %v2113, %v1791
    %v2116 = vmax.f32 %v2114, 0.0
    %v2117 = vmax.f32 %v2115, 0.0
    %v2119 = vsel %vm1695, %v1430, 0
    %2121 = vmatprep.subr.mxu0 %v1624
    %2122 = vmatpush1.msra.mxu0 %v1623
    %2123 = vmatprep.subr.mxu0 %v1626
    %2124 = vmatpush1.msra.mxu0 %v1625
    %2125 = vmatprep.subr.mxu0 %v1628
    %2126 = vmatpush1.msra.mxu0 %v1627
    %2127 = vmatprep.subr.mxu0 %v1630
    %2128 = vmatpush1.msra.mxu0 %v1629
    %2129 = vmatprep.subr.mxu0 %v1632
    %2130 = vmatpush1.msra.mxu0 %v1631
    %2131 = vmatprep.subr.mxu0 %v1634
    %2132 = vmatpush1.msra.mxu0 %v1633
    %2133 = vmatprep.subr.mxu0 %v1636
    %2134 = vmatpush1.msra.mxu0 %v1635
    %2135 = vmatprep.subr.mxu0 0.0
    %2136 = vmatpush1.msra.mxu0 0.0
    %2137 = vmatprep.subr.mxu0 0.0
    %2138 = vmatpush1.msra.mxu0 0.0
    %2139 = vmatprep.subr.mxu0 0.0
    %2140 = vmatpush1.msra.mxu0 0.0
    %2141 = vmatprep.subr.mxu0 0.0
    %2142 = vmatpush1.msra.mxu0 0.0
    %2143 = vmatprep.subr.mxu0 0.0
    %2144 = vmatpush1.msra.mxu0 0.0
    %2145 = vmatprep.subr.mxu0 0.0
    %2146 = vmatpush1.msra.mxu0 0.0
    %2147 = vmatprep.subr.mxu0 0.0
    %2148 = vmatpush1.msra.mxu0 0.0
    %2149 = vmatprep.subr.mxu0 0.0
    %2150 = vmatpush1.msra.mxu0 0.0
    %2151 = vmatprep.subr.mxu0 0.0
    %2152 = vmatpush1.msra.mxu0 0.0
    %2153 = vmatprep.subr.mxu0 0.0
    %2154 = vmatpush1.msra.mxu0 0.0
    %2155 = vmatprep.subr.mxu0 0.0
    %2156 = vmatpush1.msra.mxu0 0.0
    %2157 = vmatprep.subr.mxu0 0.0
    %2158 = vmatpush1.msra.mxu0 0.0
    %2159 = vmatprep.subr.mxu0 0.0
    %2160 = vmatpush1.msra.mxu0 0.0
    %2161 = vmatprep.subr.mxu0 0.0
    %2162 = vmatpush1.msra.mxu0 0.0
    %2163 = vmatprep.subr.mxu0 0.0
    %2164 = vmatpush1.msra.mxu0 0.0
    %2165 = vmatprep.subr.mxu0 0.0
    %2166 = vmatpush1.msra.mxu0 0.0
    %2167 = vmatprep.subr.mxu0 0.0
    %2168 = vmatpush1.msra.mxu0 0.0
    %2169 = vmatprep.subr.mxu0 0.0
    %2170 = vmatpush1.msra.mxu0 0.0
    %2171 = vmatprep.subr.mxu0 0.0
    %2172 = vmatpush1.msra.mxu0 0.0
    %2173 = vmatprep.subr.mxu0 0.0
    %2174 = vmatpush1.msra.mxu0 0.0
    %2175 = vmatprep.subr.mxu0 0.0
    %2176 = vmatpush1.msra.mxu0 0.0
    %2177 = vmatprep.subr.mxu0 0.0
    %2178 = vmatpush1.msra.mxu0 0.0
    %2179 = vmatprep.subr.mxu0 0.0
    %2180 = vmatpush1.msra.mxu0 0.0
    %2181 = vmatprep.subr.mxu0 0.0
    %2182 = vmatpush1.msra.mxu0 0.0
    %2183 = vmatprep.subr.mxu0 0.0
    %2184 = vmatpush1.msra.mxu0 0.0
    %2185 = vmatprep.mubr.f32.mxu0 0.0
    %2186 = vmatmul.mubr.f32.gmra.mrb[0].mxu0 %v2119
    %v2187 = vpop.f32.mrb[0].mxu0
    %v2188 = vadd.f32 0.0, %v2187
    %v2189 = vpop.f32.mrb[0].mxu0
    %v2190 = vadd.f32 0.0, %v2189
    %2191 = vdwg.mxu0
    %v2192 = vmul.f32 %v2188, %v1774
    %v2193 = vmul.f32 %v2190, %v1778
    %v2194 = vadd.f32 %v2192, %v1787
    %v2195 = vadd.f32 %v2193, %v1791
    %v2196 = vmax.f32 %v2194, 0.0
    %v2197 = vmax.f32 %v2195, 0.0
    %v2199 = vsel %vm1695, %v1622, 0
    %2201 = vmatprep.subr.mxu0 %v1624
    %2202 = vmatpush1.msra.mxu0 %v1623
    %2203 = vmatprep.subr.mxu0 %v1626
    %2204 = vmatpush1.msra.mxu0 %v1625
    %2205 = vmatprep.subr.mxu0 %v1628
    %2206 = vmatpush1.msra.mxu0 %v1627
    %2207 = vmatprep.subr.mxu0 %v1630
    %2208 = vmatpush1.msra.mxu0 %v1629
    %2209 = vmatprep.subr.mxu0 %v1632
    %2210 = vmatpush1.msra.mxu0 %v1631
    %2211 = vmatprep.subr.mxu0 %v1634
    %2212 = vmatpush1.msra.mxu0 %v1633
    %2213 = vmatprep.subr.mxu0 %v1636
    %2214 = vmatpush1.msra.mxu0 %v1635
    %2215 = vmatprep.subr.mxu0 0.0
    %2216 = vmatpush1.msra.mxu0 0.0
    %2217 = vmatprep.subr.mxu0 0.0
    %2218 = vmatpush1.msra.mxu0 0.0
    %2219 = vmatprep.subr.mxu0 0.0
    %2220 = vmatpush1.msra.mxu0 0.0
    %2221 = vmatprep.subr.mxu0 0.0
    %2222 = vmatpush1.msra.mxu0 0.0
    %2223 = vmatprep.subr.mxu0 0.0
    %2224 = vmatpush1.msra.mxu0 0.0
    %2225 = vmatprep.subr.mxu0 0.0
    %2226 = vmatpush1.msra.mxu0 0.0
    %2227 = vmatprep.subr.mxu0 0.0
    %2228 = vmatpush1.msra.mxu0 0.0
    %2229 = vmatprep.subr.mxu0 0.0
    %2230 = vmatpush1.msra.mxu0 0.0
    %2231 = vmatprep.subr.mxu0 0.0
    %2232 = vmatpush1.msra.mxu0 0.0
    %2233 = vmatprep.subr.mxu0 0.0
    %2234 = vmatpush1.msra.mxu0 0.0
    %2235 = vmatprep.subr.mxu0 0.0
    %2236 = vmatpush1.msra.mxu0 0.0
    %2237 = vmatprep.subr.mxu0 0.0
    %2238 = vmatpush1.msra.mxu0 0.0
    %2239 = vmatprep.subr.mxu0 0.0
    %2240 = vmatpush1.msra.mxu0 0.0
    %2241 = vmatprep.subr.mxu0 0.0
    %2242 = vmatpush1.msra.mxu0 0.0
    %2243 = vmatprep.subr.mxu0 0.0
    %2244 = vmatpush1.msra.mxu0 0.0
    %2245 = vmatprep.subr.mxu0 0.0
    %2246 = vmatpush1.msra.mxu0 0.0
    %2247 = vmatprep.subr.mxu0 0.0
    %2248 = vmatpush1.msra.mxu0 0.0
    %2249 = vmatprep.subr.mxu0 0.0
    %2250 = vmatpush1.msra.mxu0 0.0
    %2251 = vmatprep.subr.mxu0 0.0
    %2252 = vmatpush1.msra.mxu0 0.0
    %2253 = vmatprep.subr.mxu0 0.0
    %2254 = vmatpush1.msra.mxu0 0.0
    %2255 = vmatprep.subr.mxu0 0.0
    %2256 = vmatpush1.msra.mxu0 0.0
    %2257 = vmatprep.subr.mxu0 0.0
    %2258 = vmatpush1.msra.mxu0 0.0
    %2259 = vmatprep.subr.mxu0 0.0
    %2260 = vmatpush1.msra.mxu0 0.0
    %2261 = vmatprep.subr.mxu0 0.0
    %2262 = vmatpush1.msra.mxu0 0.0
    %2263 = vmatprep.subr.mxu0 0.0
    %2264 = vmatpush1.msra.mxu0 0.0
    %2265 = vmatprep.mubr.f32.mxu0 0.0
    %2266 = vmatmul.mubr.f32.gmra.mrb[0].mxu0 %v2199
    %v2267 = vpop.f32.mrb[0].mxu0
    %v2268 = vadd.f32 0.0, %v2267
    %v2269 = vpop.f32.mrb[0].mxu0
    %v2270 = vadd.f32 0.0, %v2269
    %2271 = vdwg.mxu0
    %v2272 = vmul.f32 %v2268, %v1774
    %v2273 = vmul.f32 %v2270, %v1778
    %v2274 = vadd.f32 %v2272, %v1787
    %v2275 = vadd.f32 %v2273, %v1791
    %v2276 = vmax.f32 %v2274, 0.0
    %v2277 = vmax.f32 %v2275, 0.0
    %s2278 = sld [smem:[#allocation2]]
    %v2279 = vstv %s2278
    %v2280 = vmul.f32 %v2279, %v1796
    %v2281 = vmul.f32 %v2279, %v1797
    %s2282 = sld [smem:[#allocation2 + $0x1]]
    %v2283 = vstv %s2282
    %v2284 = vmul.f32 %v2283, %v1876
    %v2285 = vmul.f32 %v2283, %v1877
    %v2286 = vadd.f32 %v2280, %v2284
    %v2287 = vadd.f32 %v2281, %v2285
    %s2288 = sld [smem:[#allocation2 + $0x2]]
    %v2289 = vstv %s2288
    %v2290 = vmul.f32 %v2289, %v1956
    %v2291 = vmul.f32 %v2289, %v1957
    %v2292 = vadd.f32 %v2286, %v2290
    %v2293 = vadd.f32 %v2287, %v2291
    %s2294 = sld [smem:[#allocation2 + $0x3]]
    %v2295 = vstv %s2294
    %v2296 = vmul.f32 %v2295, %v2036
    %v2297 = vmul.f32 %v2295, %v2037
    %v2298 = vadd.f32 %v2292, %v2296
    %v2299 = vadd.f32 %v2293, %v2297
    %s2300 = sld [smem:[#allocation2 + $0x4]]
    %v2301 = vstv %s2300
    %v2302 = vmul.f32 %v2301, %v2116
    %v2303 = vmul.f32 %v2301, %v2117
    %v2304 = vadd.f32 %v2298, %v2302
    %v2305 = vadd.f32 %v2299, %v2303
    %s2306 = sld [smem:[#allocation2 + $0x5]]
    %v2307 = vstv %s2306
    %v2308 = vmul.f32 %v2307, %v2196
    %v2309 = vmul.f32 %v2307, %v2197
    %v2310 = vadd.f32 %v2304, %v2308
    %v2311 = vadd.f32 %v2305, %v2309
    %s2312 = sld [smem:[#allocation2 + $0x6]]
    %v2313 = vstv %s2312
    %v2314 = vmul.f32 %v2313, %v2276
    %v2315 = vmul.f32 %v2313, %v2277
    %v2316 = vadd.f32 %v2310, %v2314
    %v2317 = vadd.f32 %v2311, %v2315
    %v2319 = vlaneseq
    %v2320 = vshrl.u32 %v2319, 7
    %v2321 = vsub.s32 0, %v2320
    %v2322 = vrot.slane %v1639, %v2321
    %v2323 = vlaneseq
    %v2324 = vshrl.u32 %v2323, 7
    %v2325 = vsub.s32 1, %v2324
    %v2326 = vrot.slane %v1639, %v2325
    %v2329 = vmul.f32 %v2316, %v2322
    %v2330 = vmul.f32 %v2317, %v2326
    %v2332 = vlaneseq
    %v2333 = vshrl.u32 %v2332, 7
    %v2334 = vsub.s32 0, %v2333
    %v2335 = vrot.slane %v1640, %v2334
    %v2336 = vlaneseq
    %v2337 = vshrl.u32 %v2336, 7
    %v2338 = vsub.s32 1, %v2337
    %v2339 = vrot.slane %v1640, %v2338
    %v2342 = vadd.f32 %v2329, %v2335
    %v2343 = vadd.f32 %v2330, %v2339
    %v2344 = vmax.f32 %v2342, 0.0
    %v2345 = vmax.f32 %v2343, 0.0
    %s2346 = sld [smem:[#allocation2 + $0x7]]
    %v2347 = vstv %s2346
    %v2348 = vmul.f32 %v2347, %v1796
    %v2349 = vmul.f32 %v2347, %v1797
    %s2350 = sld [smem:[#allocation2 + $0x8]]
    %v2351 = vstv %s2350
    %v2352 = vmul.f32 %v2351, %v1876
    %v2353 = vmul.f32 %v2351, %v1877
    %v2354 = vadd.f32 %v2348, %v2352
    %v2355 = vadd.f32 %v2349, %v2353
    %s2356 = sld [smem:[#allocation2 + $0x9]]
    %v2357 = vstv %s2356
    %v2358 = vmul.f32 %v2357, %v1956
    %v2359 = vmul.f32 %v2357, %v1957
    %v2360 = vadd.f32 %v2354, %v2358
    %v2361 = vadd.f32 %v2355, %v2359
    %s2362 = sld [smem:[#allocation2 + $0xa]]
    %v2363 = vstv %s2362
    %v2364 = vmul.f32 %v2363, %v2036
    %v2365 = vmul.f32 %v2363, %v2037
    %v2366 = vadd.f32 %v2360, %v2364
    %v2367 = vadd.f32 %v2361, %v2365
    %s2368 = sld [smem:[#allocation2 + $0xb]]
    %v2369 = vstv %s2368
    %v2370 = vmul.f32 %v2369, %v2116
    %v2371 = vmul.f32 %v2369, %v2117
    %v2372 = vadd.f32 %v2366, %v2370
    %v2373 = vadd.f32 %v2367, %v2371
    %s2374 = sld [smem:[#allocation2 + $0xc]]
    %v2375 = vstv %s2374
    %v2376 = vmul.f32 %v2375, %v2196
    %v2377 = vmul.f32 %v2375, %v2197
    %v2378 = vadd.f32 %v2372, %v2376
    %v2379 = vadd.f32 %v2373, %v2377
    %s2380 = sld [smem:[#allocation2 + $0xd]]
    %v2381 = vstv %s2380
    %v2382 = vmul.f32 %v2381, %v2276
    %v2383 = vmul.f32 %v2381, %v2277
    %v2384 = vadd.f32 %v2378, %v2382
    %v2385 = vadd.f32 %v2379, %v2383
    %v2386 = vmul.f32 %v2384, %v2322
    %v2387 = vmul.f32 %v2385, %v2326
    %v2388 = vadd.f32 %v2386, %v2335
    %v2389 = vadd.f32 %v2387, %v2339
    %v2390 = vmax.f32 %v2388, 0.0
    %v2391 = vmax.f32 %v2389, 0.0
    %s2392 = sld [smem:[#allocation2 + $0xe]]
    %v2393 = vstv %s2392
    %v2394 = vmul.f32 %v2393, %v1796
    %v2395 = vmul.f32 %v2393, %v1797
    %s2396 = sld [smem:[#allocation2 + $0xf]]
    %v2397 = vstv %s2396
    %v2398 = vmul.f32 %v2397, %v1876
    %v2399 = vmul.f32 %v2397, %v1877
    %v2400 = vadd.f32 %v2394, %v2398
    %v2401 = vadd.f32 %v2395, %v2399
    %s2402 = sld [smem:[#allocation2 + $0x10]]
    %v2403 = vstv %s2402
    %v2404 = vmul.f32 %v2403, %v1956
    %v2405 = vmul.f32 %v2403, %v1957
    %v2406 = vadd.f32 %v2400, %v2404
    %v2407 = vadd.f32 %v2401, %v2405
    %s2408 = sld [smem:[#allocation2 + $0x11]]
    %v2409 = vstv %s2408
    %v2410 = vmul.f32 %v2409, %v2036
    %v2411 = vmul.f32 %v2409, %v2037
    %v2412 = vadd.f32 %v2406, %v2410
    %v2413 = vadd.f32 %v2407, %v2411
    %s2414 = sld [smem:[#allocation2 + $0x12]]
    %v2415 = vstv %s2414
    %v2416 = vmul.f32 %v2415, %v2116
    %v2417 = vmul.f32 %v2415, %v2117
    %v2418 = vadd.f32 %v2412, %v2416
    %v2419 = vadd.f32 %v2413, %v2417
    %s2420 = sld [smem:[#allocation2 + $0x13]]
    %v2421 = vstv %s2420
    %v2422 = vmul.f32 %v2421, %v2196
    %v2423 = vmul.f32 %v2421, %v2197
    %v2424 = vadd.f32 %v2418, %v2422
    %v2425 = vadd.f32 %v2419, %v2423
    %s2426 = sld [smem:[#allocation2 + $0x14]]
    %v2427 = vstv %s2426
    %v2428 = vmul.f32 %v2427, %v2276
    %v2429 = vmul.f32 %v2427, %v2277
    %v2430 = vadd.f32 %v2424, %v2428
    %v2431 = vadd.f32 %v2425, %v2429
    %v2432 = vmul.f32 %v2430, %v2322
    %v2433 = vmul.f32 %v2431, %v2326
    %v2434 = vadd.f32 %v2432, %v2335
    %v2435 = vadd.f32 %v2433, %v2339
    %v2436 = vmax.f32 %v2434, 0.0
    %v2437 = vmax.f32 %v2435, 0.0
    %s2438 = sld [smem:[#allocation2 + $0x15]]
    %v2439 = vstv %s2438
    %v2440 = vmul.f32 %v2439, %v1796
    %v2441 = vmul.f32 %v2439, %v1797
    %s2442 = sld [smem:[#allocation2 + $0x16]]
    %v2443 = vstv %s2442
    %v2444 = vmul.f32 %v2443, %v1876
    %v2445 = vmul.f32 %v2443, %v1877
    %v2446 = vadd.f32 %v2440, %v2444
    %v2447 = vadd.f32 %v2441, %v2445
    %s2448 = sld [smem:[#allocation2 + $0x17]]
    %v2449 = vstv %s2448
    %v2450 = vmul.f32 %v2449, %v1956
    %v2451 = vmul.f32 %v2449, %v1957
    %v2452 = vadd.f32 %v2446, %v2450
    %v2453 = vadd.f32 %v2447, %v2451
    %s2454 = sld [smem:[#allocation2 + $0x18]]
    %v2455 = vstv %s2454
    %v2456 = vmul.f32 %v2455, %v2036
    %v2457 = vmul.f32 %v2455, %v2037
    %v2458 = vadd.f32 %v2452, %v2456
    %v2459 = vadd.f32 %v2453, %v2457
    %s2460 = sld [smem:[#allocation2 + $0x19]]
    %v2461 = vstv %s2460
    %v2462 = vmul.f32 %v2461, %v2116
    %v2463 = vmul.f32 %v2461, %v2117
    %v2464 = vadd.f32 %v2458, %v2462
    %v2465 = vadd.f32 %v2459, %v2463
    %s2466 = sld [smem:[#allocation2 + $0x1a]]
    %v2467 = vstv %s2466
    %v2468 = vmul.f32 %v2467, %v2196
    %v2469 = vmul.f32 %v2467, %v2197
    %v2470 = vadd.f32 %v2464, %v2468
    %v2471 = vadd.f32 %v2465, %v2469
    %s2472 = sld [smem:[#allocation2 + $0x1b]]
    %v2473 = vstv %s2472
    %v2474 = vmul.f32 %v2473, %v2276
    %v2475 = vmul.f32 %v2473, %v2277
    %v2476 = vadd.f32 %v2470, %v2474
    %v2477 = vadd.f32 %v2471, %v2475
    %v2478 = vmul.f32 %v2476, %v2322
    %v2479 = vmul.f32 %v2477, %v2326
    %v2480 = vadd.f32 %v2478, %v2335
    %v2481 = vadd.f32 %v2479, %v2339
    %v2482 = vmax.f32 %v2480, 0.0
    %v2483 = vmax.f32 %v2481, 0.0
    %s2484 = sld [smem:[#allocation2 + $0x1c]]
    %v2485 = vstv %s2484
    %v2486 = vmul.f32 %v2485, %v1796
    %v2487 = vmul.f32 %v2485, %v1797
    %s2488 = sld [smem:[#allocation2 + $0x1d]]
    %v2489 = vstv %s2488
    %v2490 = vmul.f32 %v2489, %v1876
    %v2491 = vmul.f32 %v2489, %v1877
    %v2492 = vadd.f32 %v2486, %v2490
    %v2493 = vadd.f32 %v2487, %v2491
    %s2494 = sld [smem:[#allocation2 + $0x1e]]
    %v2495 = vstv %s2494
    %v2496 = vmul.f32 %v2495, %v1956
    %v2497 = vmul.f32 %v2495, %v1957
    %v2498 = vadd.f32 %v2492, %v2496
    %v2499 = vadd.f32 %v2493, %v2497
    %s2500 = sld [smem:[#allocation2 + $0x1f]]
    %v2501 = vstv %s2500
    %v2502 = vmul.f32 %v2501, %v2036
    %v2503 = vmul.f32 %v2501, %v2037
    %v2504 = vadd.f32 %v2498, %v2502
    %v2505 = vadd.f32 %v2499, %v2503
    %s2506 = sld [smem:[#allocation2 + $0x20]]
    %v2507 = vstv %s2506
    %v2508 = vmul.f32 %v2507, %v2116
    %v2509 = vmul.f32 %v2507, %v2117
    %v2510 = vadd.f32 %v2504, %v2508
    %v2511 = vadd.f32 %v2505, %v2509
    %s2512 = sld [smem:[#allocation2 + $0x21]]
    %v2513 = vstv %s2512
    %v2514 = vmul.f32 %v2513, %v2196
    %v2515 = vmul.f32 %v2513, %v2197
    %v2516 = vadd.f32 %v2510, %v2514
    %v2517 = vadd.f32 %v2511, %v2515
    %s2518 = sld [smem:[#allocation2 + $0x22]]
    %v2519 = vstv %s2518
    %v2520 = vmul.f32 %v2519, %v2276
    %v2521 = vmul.f32 %v2519, %v2277
    %v2522 = vadd.f32 %v2516, %v2520
    %v2523 = vadd.f32 %v2517, %v2521
    %v2524 = vmul.f32 %v2522, %v2322
    %v2525 = vmul.f32 %v2523, %v2326
    %v2526 = vadd.f32 %v2524, %v2335
    %v2527 = vadd.f32 %v2525, %v2339
    %v2528 = vmax.f32 %v2526, 0.0
    %v2529 = vmax.f32 %v2527, 0.0
    %s2530 = sld [smem:[#allocation2 + $0x23]]
    %v2531 = vstv %s2530
    %v2532 = vmul.f32 %v2531, %v1796
    %v2533 = vmul.f32 %v2531, %v1797
    %s2534 = sld [smem:[#allocation2 + $0x24]]
    %v2535 = vstv %s2534
    %v2536 = vmul.f32 %v2535, %v1876
    %v2537 = vmul.f32 %v2535, %v1877
    %v2538 = vadd.f32 %v2532, %v2536
    %v2539 = vadd.f32 %v2533, %v2537
    %s2540 = sld [smem:[#allocation2 + $0x25]]
    %v2541 = vstv %s2540
    %v2542 = vmul.f32 %v2541, %v1956
    %v2543 = vmul.f32 %v2541, %v1957
    %v2544 = vadd.f32 %v2538, %v2542
    %v2545 = vadd.f32 %v2539, %v2543
    %s2546 = sld [smem:[#allocation2 + $0x26]]
    %v2547 = vstv %s2546
    %v2548 = vmul.f32 %v2547, %v2036
    %v2549 = vmul.f32 %v2547, %v2037
    %v2550 = vadd.f32 %v2544, %v2548
    %v2551 = vadd.f32 %v2545, %v2549
    %s2552 = sld [smem:[#allocation2 + $0x27]]
    %v2553 = vstv %s2552
    %v2554 = vmul.f32 %v2553, %v2116
    %v2555 = vmul.f32 %v2553, %v2117
    %v2556 = vadd.f32 %v2550, %v2554
    %v2557 = vadd.f32 %v2551, %v2555
    %s2558 = sld [smem:[#allocation2 + $0x28]]
    %v2559 = vstv %s2558
    %v2560 = vmul.f32 %v2559, %v2196
    %v2561 = vmul.f32 %v2559, %v2197
    %v2562 = vadd.f32 %v2556, %v2560
    %v2563 = vadd.f32 %v2557, %v2561
    %s2564 = sld [smem:[#allocation2 + $0x29]]
    %v2565 = vstv %s2564
    %v2566 = vmul.f32 %v2565, %v2276
    %v2567 = vmul.f32 %v2565, %v2277
    %v2568 = vadd.f32 %v2562, %v2566
    %v2569 = vadd.f32 %v2563, %v2567
    %v2570 = vmul.f32 %v2568, %v2322
    %v2571 = vmul.f32 %v2569, %v2326
    %v2572 = vadd.f32 %v2570, %v2335
    %v2573 = vadd.f32 %v2571, %v2339
    %v2574 = vmax.f32 %v2572, 0.0
    %v2575 = vmax.f32 %v2573, 0.0
    %s2576 = sld [smem:[#allocation2 + $0x2a]]
    %v2577 = vstv %s2576
    %v2578 = vmul.f32 %v2577, %v1796
    %v2579 = vmul.f32 %v2577, %v1797
    %s2580 = sld [smem:[#allocation2 + $0x2b]]
    %v2581 = vstv %s2580
    %v2582 = vmul.f32 %v2581, %v1876
    %v2583 = vmul.f32 %v2581, %v1877
    %v2584 = vadd.f32 %v2578, %v2582
    %v2585 = vadd.f32 %v2579, %v2583
    %s2586 = sld [smem:[#allocation2 + $0x2c]]
    %v2587 = vstv %s2586
    %v2588 = vmul.f32 %v2587, %v1956
    %v2589 = vmul.f32 %v2587, %v1957
    %v2590 = vadd.f32 %v2584, %v2588
    %v2591 = vadd.f32 %v2585, %v2589
    %s2592 = sld [smem:[#allocation2 + $0x2d]]
    %v2593 = vstv %s2592
    %v2594 = vmul.f32 %v2593, %v2036
    %v2595 = vmul.f32 %v2593, %v2037
    %v2596 = vadd.f32 %v2590, %v2594
    %v2597 = vadd.f32 %v2591, %v2595
    %s2598 = sld [smem:[#allocation2 + $0x2e]]
    %v2599 = vstv %s2598
    %v2600 = vmul.f32 %v2599, %v2116
    %v2601 = vmul.f32 %v2599, %v2117
    %v2602 = vadd.f32 %v2596, %v2600
    %v2603 = vadd.f32 %v2597, %v2601
    %s2604 = sld [smem:[#allocation2 + $0x2f]]
    %v2605 = vstv %s2604
    %v2606 = vmul.f32 %v2605, %v2196
    %v2607 = vmul.f32 %v2605, %v2197
    %v2608 = vadd.f32 %v2602, %v2606
    %v2609 = vadd.f32 %v2603, %v2607
    %s2610 = sld [smem:[#allocation2 + $0x30]]
    %v2611 = vstv %s2610
    %v2612 = vmul.f32 %v2611, %v2276
    %v2613 = vmul.f32 %v2611, %v2277
    %v2614 = vadd.f32 %v2608, %v2612
    %v2615 = vadd.f32 %v2609, %v2613
    %v2616 = vmul.f32 %v2614, %v2322
    %v2617 = vmul.f32 %v2615, %v2326
    %v2618 = vadd.f32 %v2616, %v2335
    %v2619 = vadd.f32 %v2617, %v2339
    %v2620 = vmax.f32 %v2618, 0.0
    %v2621 = vmax.f32 %v2619, 0.0
    %v2622 = vadd.f32 %v2344, %v2390
    %v2623 = vadd.f32 %v2345, %v2391
    %v2624 = vadd.f32 %v2622, %v2436
    %v2625 = vadd.f32 %v2623, %v2437
    %v2626 = vadd.f32 %v2624, %v2482
    %v2627 = vadd.f32 %v2625, %v2483
    %v2628 = vadd.f32 %v2626, %v2528
    %v2629 = vadd.f32 %v2627, %v2529
    %v2630 = vadd.f32 %v2628, %v2574
    %v2631 = vadd.f32 %v2629, %v2575
    %v2632 = vadd.f32 %v2630, %v2620
    %v2633 = vadd.f32 %v2631, %v2621
    %v2634 = vmul.f32 %v2632, 0.14285715
    %v2635 = vmul.f32 %v2633, 0.14285715
    %v2637 = vlaneseq
    %v2638 = vshrl.u32 %v2637, 7
    %v2639 = vsub.s32 0, %v2638
    %v2640 = vrot.slane %v1661, %v2639
    %vm2642 = vcmask 252928
    %v2644 = vsel %vm2642, %v2635, 0
    %vm2646 = vcmask 1046528
    %v2648 = vsel %vm2646, %v1660, 0
    %2650 = vmatprep.subr.mxu0 0.0
    %2651 = vmatpush1.msra.mxu0 %v1641
    %2652 = vmatprep.subr.mxu0 0.0
    %2653 = vmatpush1.msra.mxu0 %v1642
    %2654 = vmatprep.subr.mxu0 0.0
    %2655 = vmatpush1.msra.mxu0 %v1643
    %2656 = vmatprep.subr.mxu0 0.0
    %2657 = vmatpush1.msra.mxu0 %v1644
    %2658 = vmatprep.subr.mxu0 0.0
    %2659 = vmatpush1.msra.mxu0 %v1645
    %2660 = vmatprep.subr.mxu0 0.0
    %2661 = vmatpush1.msra.mxu0 %v1646
    %2662 = vmatprep.subr.mxu0 0.0
    %2663 = vmatpush1.msra.mxu0 %v1647
    %2664 = vmatprep.subr.mxu0 0.0
    %2665 = vmatpush1.msra.mxu0 %v1648
    %2666 = vmatprep.subr.mxu0 0.0
    %2667 = vmatpush1.msra.mxu0 %v1649
    %2668 = vmatprep.subr.mxu0 0.0
    %2669 = vmatpush1.msra.mxu0 %v1650
    %2670 = vmatprep.subr.mxu0 0.0
    %2671 = vmatpush1.msra.mxu0 %v1651
    %2672 = vmatprep.subr.mxu0 0.0
    %2673 = vmatpush1.msra.mxu0 %v1652
    %2674 = vmatprep.subr.mxu0 0.0
    %2675 = vmatpush1.msra.mxu0 %v1653
    %2676 = vmatprep.subr.mxu0 0.0
    %2677 = vmatpush1.msra.mxu0 %v1654
    %2678 = vmatprep.subr.mxu0 0.0
    %2679 = vmatpush1.msra.mxu0 %v1655
    %2680 = vmatprep.subr.mxu0 0.0
    %2681 = vmatpush1.msra.mxu0 %v1656
    %2682 = vmatprep.subr.mxu0 0.0
    %2683 = vmatpush1.msra.mxu0 %v1657
    %2684 = vmatprep.subr.mxu0 0.0
    %2685 = vmatpush1.msra.mxu0 %v1658
    %2686 = vmatprep.subr.mxu0 0.0
    %2687 = vmatpush1.msra.mxu0 %v1659
    %2688 = vmatprep.subr.mxu0 0.0
    %2689 = vmatpush1.msra.mxu0 %v2648
    %2690 = vmatprep.subr.mxu0 0.0
    %2691 = vmatpush1.msra.mxu0 0.0
    %2692 = vmatprep.subr.mxu0 0.0
    %2693 = vmatpush1.msra.mxu0 0.0
    %2694 = vmatprep.subr.mxu0 0.0
    %2695 = vmatpush1.msra.mxu0 0.0
    %2696 = vmatprep.subr.mxu0 0.0
    %2697 = vmatpush1.msra.mxu0 0.0
    %2698 = vmatprep.subr.mxu0 0.0
    %2699 = vmatpush1.msra.mxu0 0.0
    %2700 = vmatprep.subr.mxu0 0.0
    %2701 = vmatpush1.msra.mxu0 0.0
    %2702 = vmatprep.subr.mxu0 0.0
    %2703 = vmatpush1.msra.mxu0 0.0
    %2704 = vmatprep.subr.mxu0 0.0
    %2705 = vmatpush1.msra.mxu0 0.0
    %2706 = vmatprep.subr.mxu0 0.0
    %2707 = vmatpush1.msra.mxu0 0.0
    %2708 = vmatprep.subr.mxu0 0.0
    %2709 = vmatpush1.msra.mxu0 0.0
    %2710 = vmatprep.subr.mxu0 0.0
    %2711 = vmatpush1.msra.mxu0 0.0
    %2712 = vmatprep.subr.mxu0 0.0
    %2713 = vmatpush1.msra.mxu0 0.0
    %2714 = vmatprep.mubr.f32.mxu0 %v2644
    %2715 = vmatmul.mubr.f32.gmra.mrb[0].mxu0 %v2634
    %v2716 = vpop.f32.mrb[0].mxu0
    %v2717 = vadd.f32 %v2640, %v2716
    %v2718 = vpop.f32.mrb[0].mxu0
    %2719 = vdwg.mxu0
    %v2720 = vmax.f32 %v2717, 0.0
    %v2722 = vlaneseq
    %v2723 = vshrl.u32 %v2722, 7
    %v2724 = vsub.s32 0, %v2723
    %v2725 = vrot.slane %v1672, %v2724
    %v2726 = vlaneseq
    %v2727 = vshrl.u32 %v2726, 7
    %v2728 = vsub.s32 1, %v2727
    %v2729 = vrot.slane %v1672, %v2728
    %vm2732 = vcmask 326656
    %v2734 = vsel %vm2732, %v2720, 0
    %2736 = vmatprep.subr.mxu0 %v1663
    %2737 = vmatpush1.msra.mxu0 %v1662
    %2738 = vmatprep.subr.mxu0 %v1665
    %2739 = vmatpush1.msra.mxu0 %v1664
    %2740 = vmatprep.subr.mxu0 %v1667
    %2741 = vmatpush1.msra.mxu0 %v1666
    %2742 = vmatprep.subr.mxu0 %v1669
    %2743 = vmatpush1.msra.mxu0 %v1668
    %2744 = vmatprep.subr.mxu0 %v1671
    %2745 = vmatpush1.msra.mxu0 %v1670
    %2746 = vmatprep.subr.mxu0 0.0
    %2747 = vmatpush1.msra.mxu0 0.0
    %2748 = vmatprep.subr.mxu0 0.0
    %2749 = vmatpush1.msra.mxu0 0.0
    %2750 = vmatprep.subr.mxu0 0.0
    %2751 = vmatpush1.msra.mxu0 0.0
    %2752 = vmatprep.subr.mxu0 0.0
    %2753 = vmatpush1.msra.mxu0 0.0
    %2754 = vmatprep.subr.mxu0 0.0
    %2755 = vmatpush1.msra.mxu0 0.0
    %2756 = vmatprep.subr.mxu0 0.0
    %2757 = vmatpush1.msra.mxu0 0.0
    %2758 = vmatprep.subr.mxu0 0.0
    %2759 = vmatpush1.msra.mxu0 0.0
    %2760 = vmatprep.subr.mxu0 0.0
    %2761 = vmatpush1.msra.mxu0 0.0
    %2762 = vmatprep.subr.mxu0 0.0
    %2763 = vmatpush1.msra.mxu0 0.0
    %2764 = vmatprep.subr.mxu0 0.0
    %2765 = vmatpush1.msra.mxu0 0.0
    %2766 = vmatprep.subr.mxu0 0.0
    %2767 = vmatpush1.msra.mxu0 0.0
    %2768 = vmatprep.subr.mxu0 0.0
    %2769 = vmatpush1.msra.mxu0 0.0
    %2770 = vmatprep.subr.mxu0 0.0
    %2771 = vmatpush1.msra.mxu0 0.0
    %2772 = vmatprep.subr.mxu0 0.0
    %2773 = vmatpush1.msra.mxu0 0.0
    %2774 = vmatprep.subr.mxu0 0.0
    %2775 = vmatpush1.msra.mxu0 0.0
    %2776 = vmatprep.subr.mxu0 0.0
    %2777 = vmatpush1.msra.mxu0 0.0
    %2778 = vmatprep.subr.mxu0 0.0
    %2779 = vmatpush1.msra.mxu0 0.0
    %2780 = vmatprep.subr.mxu0 0.0
    %2781 = vmatpush1.msra.mxu0 0.0
    %2782 = vmatprep.subr.mxu0 0.0
    %2783 = vmatpush1.msra.mxu0 0.0
    %2784 = vmatprep.subr.mxu0 0.0
    %2785 = vmatpush1.msra.mxu0 0.0
    %2786 = vmatprep.subr.mxu0 0.0
    %2787 = vmatpush1.msra.mxu0 0.0
    %2788 = vmatprep.subr.mxu0 0.0
    %2789 = vmatpush1.msra.mxu0 0.0
    %2790 = vmatprep.subr.mxu0 0.0
    %2791 = vmatpush1.msra.mxu0 0.0
    %2792 = vmatprep.subr.mxu0 0.0
    %2793 = vmatpush1.msra.mxu0 0.0
    %2794 = vmatprep.subr.mxu0 0.0
    %2795 = vmatpush1.msra.mxu0 0.0
    %2796 = vmatprep.subr.mxu0 0.0
    %2797 = vmatpush1.msra.mxu0 0.0
    %2798 = vmatprep.subr.mxu0 0.0
    %2799 = vmatpush1.msra.mxu0 0.0
    %2800 = vmatprep.mubr.f32.mxu0 0.0
    %2801 = vmatmul.mubr.f32.gmra.mrb[0].mxu0 %v2734
    %v2802 = vpop.f32.mrb[0].mxu0
    %v2803 = vadd.f32 %v2725, %v2802
    %v2804 = vpop.f32.mrb[0].mxu0
    %v2805 = vadd.f32 %v2729, %v2804
    %2806 = vdwg.mxu0
    %v2807 = vadd.f32 %v2803, 3.0
    %v2808 = vadd.f32 %v2805, 3.0
    %v2809 = vmax.f32 %v2807, 0.0
    %v2810 = vmax.f32 %v2808, 0.0
    %v2811 = vmin.f32 %v2809, 6.0
    %v2812 = vmin.f32 %v2810, 6.0
    %v2813 = vmul.f32 %v2811, 0.16666667
    %v2814 = vmul.f32 %v2812, 0.16666667
    %v2815 = vmul.f32 %v2344, %v2813
    %v2816 = vmul.f32 %v2345, %v2814
    %v2818 = vsel %vm2642, %v2816, 0
    %v2821 = vsel %vm2646, %v1692, 0
    %2823 = vmatprep.subr.mxu0 0.0
    %2824 = vmatpush1.msra.mxu0 %v1673
    %2825 = vmatprep.subr.mxu0 0.0
    %2826 = vmatpush1.msra.mxu0 %v1674
    %2827 = vmatprep.subr.mxu0 0.0
    %2828 = vmatpush1.msra.mxu0 %v1675
    %2829 = vmatprep.subr.mxu0 0.0
    %2830 = vmatpush1.msra.mxu0 %v1676
    %2831 = vmatprep.subr.mxu0 0.0
    %2832 = vmatpush1.msra.mxu0 %v1677
    %2833 = vmatprep.subr.mxu0 0.0
    %2834 = vmatpush1.msra.mxu0 %v1678
    %2835 = vmatprep.subr.mxu0 0.0
    %2836 = vmatpush1.msra.mxu0 %v1679
    %2837 = vmatprep.subr.mxu0 0.0
    %2838 = vmatpush1.msra.mxu0 %v1680
    %2839 = vmatprep.subr.mxu0 0.0
    %2840 = vmatpush1.msra.mxu0 %v1681
    %2841 = vmatprep.subr.mxu0 0.0
    %2842 = vmatpush1.msra.mxu0 %v1682
    %2843 = vmatprep.subr.mxu0 0.0
    %2844 = vmatpush1.msra.mxu0 %v1683
    %2845 = vmatprep.subr.mxu0 0.0
    %2846 = vmatpush1.msra.mxu0 %v1684
    %2847 = vmatprep.subr.mxu0 0.0
    %2848 = vmatpush1.msra.mxu0 %v1685
    %2849 = vmatprep.subr.mxu0 0.0
    %2850 = vmatpush1.msra.mxu0 %v1686
    %2851 = vmatprep.subr.mxu0 0.0
    %2852 = vmatpush1.msra.mxu0 %v1687
    %2853 = vmatprep.subr.mxu0 0.0
    %2854 = vmatpush1.msra.mxu0 %v1688
    %2855 = vmatprep.subr.mxu0 0.0
    %2856 = vmatpush1.msra.mxu0 %v1689
    %2857 = vmatprep.subr.mxu0 0.0
    %2858 = vmatpush1.msra.mxu0 %v1690
    %2859 = vmatprep.subr.mxu0 0.0
    %2860 = vmatpush1.msra.mxu0 %v1691
    %2861 = vmatprep.subr.mxu0 0.0
    %2862 = vmatpush1.msra.mxu0 %v2821
    %2863 = vmatprep.subr.mxu0 0.0
    %2864 = vmatpush1.msra.mxu0 0.0
    %2865 = vmatprep.subr.mxu0 0.0
    %2866 = vmatpush1.msra.mxu0 0.0
    %2867 = vmatprep.subr.mxu0 0.0
    %2868 = vmatpush1.msra.mxu0 0.0
    %2869 = vmatprep.subr.mxu0 0.0
    %2870 = vmatpush1.msra.mxu0 0.0
    %2871 = vmatprep.subr.mxu0 0.0
    %2872 = vmatpush1.msra.mxu0 0.0
    %2873 = vmatprep.subr.mxu0 0.0
    %2874 = vmatpush1.msra.mxu0 0.0
    %2875 = vmatprep.subr.mxu0 0.0
    %2876 = vmatpush1.msra.mxu0 0.0
    %2877 = vmatprep.subr.mxu0 0.0
    %2878 = vmatpush1.msra.mxu0 0.0
    %2879 = vmatprep.subr.mxu0 0.0
    %2880 = vmatpush1.msra.mxu0 0.0
    %2881 = vmatprep.subr.mxu0 0.0
    %2882 = vmatpush1.msra.mxu0 0.0
    %2883 = vmatprep.subr.mxu0 0.0
    %2884 = vmatpush1.msra.mxu0 0.0
    %2885 = vmatprep.subr.mxu0 0.0
    %2886 = vmatpush1.msra.mxu0 0.0
    %2887 = vmatprep.mubr.f32.mxu0 %v2818
    %2888 = vmatmul.mubr.f32.gmra.mrb[0].mxu0 %v2815
    %v2889 = vpop.f32.mrb[0].mxu0
    %v2890 = vadd.f32 0.0, %v2889
    %v2891 = vpop.f32.mrb[0].mxu0
    %2892 = vdwg.mxu0
    %v2894 = vlaneseq
    %v2895 = vshrl.u32 %v2894, 7
    %v2896 = vsub.s32 0, %v2895
    %v2897 = vrot.slane %v1693, %v2896
    %v2899 = vmul.f32 %v2890, %v2897
    %v2901 = vlaneseq
    %v2902 = vshrl.u32 %v2901, 7
    %v2903 = vsub.s32 0, %v2902
    %v2904 = vrot.slane %v1694, %v2903
    %v2906 = vadd.f32 %v2899, %v2904
    %v2907 = vadd.f32 %v2906, %v470
    %v2908 = vmul.f32 %v2390, %v2813
    %v2909 = vmul.f32 %v2391, %v2814
    %v2911 = vsel %vm2642, %v2909, 0
    %2913 = vmatprep.subr.mxu0 0.0
    %2914 = vmatpush1.msra.mxu0 %v1673
    %2915 = vmatprep.subr.mxu0 0.0
    %2916 = vmatpush1.msra.mxu0 %v1674
    %2917 = vmatprep.subr.mxu0 0.0
    %2918 = vmatpush1.msra.mxu0 %v1675
    %2919 = vmatprep.subr.mxu0 0.0
    %2920 = vmatpush1.msra.mxu0 %v1676
    %2921 = vmatprep.subr.mxu0 0.0
    %2922 = vmatpush1.msra.mxu0 %v1677
    %2923 = vmatprep.subr.mxu0 0.0
    %2924 = vmatpush1.msra.mxu0 %v1678
    %2925 = vmatprep.subr.mxu0 0.0
    %2926 = vmatpush1.msra.mxu0 %v1679
    %2927 = vmatprep.subr.mxu0 0.0
    %2928 = vmatpush1.msra.mxu0 %v1680
    %2929 = vmatprep.subr.mxu0 0.0
    %2930 = vmatpush1.msra.mxu0 %v1681
    %2931 = vmatprep.subr.mxu0 0.0
    %2932 = vmatpush1.msra.mxu0 %v1682
    %2933 = vmatprep.subr.mxu0 0.0
    %2934 = vmatpush1.msra.mxu0 %v1683
    %2935 = vmatprep.subr.mxu0 0.0
    %2936 = vmatpush1.msra.mxu0 %v1684
    %2937 = vmatprep.subr.mxu0 0.0
    %2938 = vmatpush1.msra.mxu0 %v1685
    %2939 = vmatprep.subr.mxu0 0.0
    %2940 = vmatpush1.msra.mxu0 %v1686
    %2941 = vmatprep.subr.mxu0 0.0
    %2942 = vmatpush1.msra.mxu0 %v1687
    %2943 = vmatprep.subr.mxu0 0.0
    %2944 = vmatpush1.msra.mxu0 %v1688
    %2945 = vmatprep.subr.mxu0 0.0
    %2946 = vmatpush1.msra.mxu0 %v1689
    %2947 = vmatprep.subr.mxu0 0.0
    %2948 = vmatpush1.msra.mxu0 %v1690
    %2949 = vmatprep.subr.mxu0 0.0
    %2950 = vmatpush1.msra.mxu0 %v1691
    %2951 = vmatprep.subr.mxu0 0.0
    %2952 = vmatpush1.msra.mxu0 %v2821
    %2953 = vmatprep.subr.mxu0 0.0
    %2954 = vmatpush1.msra.mxu0 0.0
    %2955 = vmatprep.subr.mxu0 0.0
    %2956 = vmatpush1.msra.mxu0 0.0
    %2957 = vmatprep.subr.mxu0 0.0
    %2958 = vmatpush1.msra.mxu0 0.0
    %2959 = vmatprep.subr.mxu0 0.0
    %2960 = vmatpush1.msra.mxu0 0.0
    %2961 = vmatprep.subr.mxu0 0.0
    %2962 = vmatpush1.msra.mxu0 0.0
    %2963 = vmatprep.subr.mxu0 0.0
    %2964 = vmatpush1.msra.mxu0 0.0
    %2965 = vmatprep.subr.mxu0 0.0
    %2966 = vmatpush1.msra.mxu0 0.0
    %2967 = vmatprep.subr.mxu0 0.0
    %2968 = vmatpush1.msra.mxu0 0.0
    %2969 = vmatprep.subr.mxu0 0.0
    %2970 = vmatpush1.msra.mxu0 0.0
    %2971 = vmatprep.subr.mxu0 0.0
    %2972 = vmatpush1.msra.mxu0 0.0
    %2973 = vmatprep.subr.mxu0 0.0
    %2974 = vmatpush1.msra.mxu0 0.0
    %2975 = vmatprep.subr.mxu0 0.0
    %2976 = vmatpush1.msra.mxu0 0.0
    %2977 = vmatprep.mubr.f32.mxu0 %v2911
    %2978 = vmatmul.mubr.f32.gmra.mrb[0].mxu0 %v2908
    %v2979 = vpop.f32.mrb[0].mxu0
    %v2980 = vadd.f32 0.0, %v2979
    %v2981 = vpop.f32.mrb[0].mxu0
    %2982 = vdwg.mxu0
    %v2983 = vmul.f32 %v2980, %v2897
    %v2984 = vadd.f32 %v2983, %v2904
    %v2985 = vadd.f32 %v2984, %v662
    %v2986 = vmul.f32 %v2436, %v2813
    %v2987 = vmul.f32 %v2437, %v2814
    %v2989 = vsel %vm2642, %v2987, 0
    %2991 = vmatprep.subr.mxu0 0.0
    %2992 = vmatpush1.msra.mxu0 %v1673
    %2993 = vmatprep.subr.mxu0 0.0
    %2994 = vmatpush1.msra.mxu0 %v1674
    %2995 = vmatprep.subr.mxu0 0.0
    %2996 = vmatpush1.msra.mxu0 %v1675
    %2997 = vmatprep.subr.mxu0 0.0
    %2998 = vmatpush1.msra.mxu0 %v1676
    %2999 = vmatprep.subr.mxu0 0.0
    %3000 = vmatpush1.msra.mxu0 %v1677
    %3001 = vmatprep.subr.mxu0 0.0
    %3002 = vmatpush1.msra.mxu0 %v1678
    %3003 = vmatprep.subr.mxu0 0.0
    %3004 = vmatpush1.msra.mxu0 %v1679
    %3005 = vmatprep.subr.mxu0 0.0
    %3006 = vmatpush1.msra.mxu0 %v1680
    %3007 = vmatprep.subr.mxu0 0.0
    %3008 = vmatpush1.msra.mxu0 %v1681
    %3009 = vmatprep.subr.mxu0 0.0
    %3010 = vmatpush1.msra.mxu0 %v1682
    %3011 = vmatprep.subr.mxu0 0.0
    %3012 = vmatpush1.msra.mxu0 %v1683
    %3013 = vmatprep.subr.mxu0 0.0
    %3014 = vmatpush1.msra.mxu0 %v1684
    %3015 = vmatprep.subr.mxu0 0.0
    %3016 = vmatpush1.msra.mxu0 %v1685
    %3017 = vmatprep.subr.mxu0 0.0
    %3018 = vmatpush1.msra.mxu0 %v1686
    %3019 = vmatprep.subr.mxu0 0.0
    %3020 = vmatpush1.msra.mxu0 %v1687
    %3021 = vmatprep.subr.mxu0 0.0
    %3022 = vmatpush1.msra.mxu0 %v1688
    %3023 = vmatprep.subr.mxu0 0.0
    %3024 = vmatpush1.msra.mxu0 %v1689
    %3025 = vmatprep.subr.mxu0 0.0
    %3026 = vmatpush1.msra.mxu0 %v1690
    %3027 = vmatprep.subr.mxu0 0.0
    %3028 = vmatpush1.msra.mxu0 %v1691
    %3029 = vmatprep.subr.mxu0 0.0
    %3030 = vmatpush1.msra.mxu0 %v2821
    %3031 = vmatprep.subr.mxu0 0.0
    %3032 = vmatpush1.msra.mxu0 0.0
    %3033 = vmatprep.subr.mxu0 0.0
    %3034 = vmatpush1.msra.mxu0 0.0
    %3035 = vmatprep.subr.mxu0 0.0
    %3036 = vmatpush1.msra.mxu0 0.0
    %3037 = vmatprep.subr.mxu0 0.0
    %3038 = vmatpush1.msra.mxu0 0.0
    %3039 = vmatprep.subr.mxu0 0.0
    %3040 = vmatpush1.msra.mxu0 0.0
    %3041 = vmatprep.subr.mxu0 0.0
    %3042 = vmatpush1.msra.mxu0 0.0
    %3043 = vmatprep.subr.mxu0 0.0
    %3044 = vmatpush1.msra.mxu0 0.0
    %3045 = vmatprep.subr.mxu0 0.0
    %3046 = vmatpush1.msra.mxu0 0.0
    %3047 = vmatprep.subr.mxu0 0.0
    %3048 = vmatpush1.msra.mxu0 0.0
    %3049 = vmatprep.subr.mxu0 0.0
    %3050 = vmatpush1.msra.mxu0 0.0
    %3051 = vmatprep.subr.mxu0 0.0
    %3052 = vmatpush1.msra.mxu0 0.0
    %3053 = vmatprep.subr.mxu0 0.0
    %3054 = vmatpush1.msra.mxu0 0.0
    %3055 = vmatprep.mubr.f32.mxu0 %v2989
    %3056 = vmatmul.mubr.f32.gmra.mrb[0].mxu0 %v2986
    %v3057 = vpop.f32.mrb[0].mxu0
    %v3058 = vadd.f32 0.0, %v3057
    %v3059 = vpop.f32.mrb[0].mxu0
    %3060 = vdwg.mxu0
    %v3061 = vmul.f32 %v3058, %v2897
    %v3062 = vadd.f32 %v3061, %v2904
    %v3063 = vadd.f32 %v3062, %v854
    %v3064 = vmul.f32 %v2482, %v2813
    %v3065 = vmul.f32 %v2483, %v2814
    %v3067 = vsel %vm2642, %v3065, 0
    %3069 = vmatprep.subr.mxu0 0.0
    %3070 = vmatpush1.msra.mxu0 %v1673
    %3071 = vmatprep.subr.mxu0 0.0
    %3072 = vmatpush1.msra.mxu0 %v1674
    %3073 = vmatprep.subr.mxu0 0.0
    %3074 = vmatpush1.msra.mxu0 %v1675
    %3075 = vmatprep.subr.mxu0 0.0
    %3076 = vmatpush1.msra.mxu0 %v1676
    %3077 = vmatprep.subr.mxu0 0.0
    %3078 = vmatpush1.msra.mxu0 %v1677
    %3079 = vmatprep.subr.mxu0 0.0
    %3080 = vmatpush1.msra.mxu0 %v1678
    %3081 = vmatprep.subr.mxu0 0.0
    %3082 = vmatpush1.msra.mxu0 %v1679
    %3083 = vmatprep.subr.mxu0 0.0
    %3084 = vmatpush1.msra.mxu0 %v1680
    %3085 = vmatprep.subr.mxu0 0.0
    %3086 = vmatpush1.msra.mxu0 %v1681
    %3087 = vmatprep.subr.mxu0 0.0
    %3088 = vmatpush1.msra.mxu0 %v1682
    %3089 = vmatprep.subr.mxu0 0.0
    %3090 = vmatpush1.msra.mxu0 %v1683
    %3091 = vmatprep.subr.mxu0 0.0
    %3092 = vmatpush1.msra.mxu0 %v1684
    %3093 = vmatprep.subr.mxu0 0.0
    %3094 = vmatpush1.msra.mxu0 %v1685
    %3095 = vmatprep.subr.mxu0 0.0
    %3096 = vmatpush1.msra.mxu0 %v1686
    %3097 = vmatprep.subr.mxu0 0.0
    %3098 = vmatpush1.msra.mxu0 %v1687
    %3099 = vmatprep.subr.mxu0 0.0
    %3100 = vmatpush1.msra.mxu0 %v1688
    %3101 = vmatprep.subr.mxu0 0.0
    %3102 = vmatpush1.msra.mxu0 %v1689
    %3103 = vmatprep.subr.mxu0 0.0
    %3104 = vmatpush1.msra.mxu0 %v1690
    %3105 = vmatprep.subr.mxu0 0.0
    %3106 = vmatpush1.msra.mxu0 %v1691
    %3107 = vmatprep.subr.mxu0 0.0
    %3108 = vmatpush1.msra.mxu0 %v2821
    %3109 = vmatprep.subr.mxu0 0.0
    %3110 = vmatpush1.msra.mxu0 0.0
    %3111 = vmatprep.subr.mxu0 0.0
    %3112 = vmatpush1.msra.mxu0 0.0
    %3113 = vmatprep.subr.mxu0 0.0
    %3114 = vmatpush1.msra.mxu0 0.0
    %3115 = vmatprep.subr.mxu0 0.0
    %3116 = vmatpush1.msra.mxu0 0.0
    %3117 = vmatprep.subr.mxu0 0.0
    %3118 = vmatpush1.msra.mxu0 0.0
    %3119 = vmatprep.subr.mxu0 0.0
    %3120 = vmatpush1.msra.mxu0 0.0
    %3121 = vmatprep.subr.mxu0 0.0
    %3122 = vmatpush1.msra.mxu0 0.0
    %3123 = vmatprep.subr.mxu0 0.0
    %3124 = vmatpush1.msra.mxu0 0.0
    %3125 = vmatprep.subr.mxu0 0.0
    %3126 = vmatpush1.msra.mxu0 0.0
    %3127 = vmatprep.subr.mxu0 0.0
    %3128 = vmatpush1.msra.mxu0 0.0
    %3129 = vmatprep.subr.mxu0 0.0
    %3130 = vmatpush1.msra.mxu0 0.0
    %3131 = vmatprep.subr.mxu0 0.0
    %3132 = vmatpush1.msra.mxu0 0.0
    %3133 = vmatprep.mubr.f32.mxu0 %v3067
    %3134 = vmatmul.mubr.f32.gmra.mrb[0].mxu0 %v3064
    %v3135 = vpop.f32.mrb[0].mxu0
    %v3136 = vadd.f32 0.0, %v3135
    %v3137 = vpop.f32.mrb[0].mxu0
    %3138 = vdwg.mxu0
    %v3139 = vmul.f32 %v3136, %v2897
    %v3140 = vadd.f32 %v3139, %v2904
    %v3141 = vadd.f32 %v3140, %v1046
    %v3142 = vmul.f32 %v2528, %v2813
    %v3143 = vmul.f32 %v2529, %v2814
    %v3145 = vsel %vm2642, %v3143, 0
    %3147 = vmatprep.subr.mxu0 0.0
    %3148 = vmatpush1.msra.mxu0 %v1673
    %3149 = vmatprep.subr.mxu0 0.0
    %3150 = vmatpush1.msra.mxu0 %v1674
    %3151 = vmatprep.subr.mxu0 0.0
    %3152 = vmatpush1.msra.mxu0 %v1675
    %3153 = vmatprep.subr.mxu0 0.0
    %3154 = vmatpush1.msra.mxu0 %v1676
    %3155 = vmatprep.subr.mxu0 0.0
    %3156 = vmatpush1.msra.mxu0 %v1677
    %3157 = vmatprep.subr.mxu0 0.0
    %3158 = vmatpush1.msra.mxu0 %v1678
    %3159 = vmatprep.subr.mxu0 0.0
    %3160 = vmatpush1.msra.mxu0 %v1679
    %3161 = vmatprep.subr.mxu0 0.0
    %3162 = vmatpush1.msra.mxu0 %v1680
    %3163 = vmatprep.subr.mxu0 0.0
    %3164 = vmatpush1.msra.mxu0 %v1681
    %3165 = vmatprep.subr.mxu0 0.0
    %3166 = vmatpush1.msra.mxu0 %v1682
    %3167 = vmatprep.subr.mxu0 0.0
    %3168 = vmatpush1.msra.mxu0 %v1683
    %3169 = vmatprep.subr.mxu0 0.0
    %3170 = vmatpush1.msra.mxu0 %v1684
    %3171 = vmatprep.subr.mxu0 0.0
    %3172 = vmatpush1.msra.mxu0 %v1685
    %3173 = vmatprep.subr.mxu0 0.0
    %3174 = vmatpush1.msra.mxu0 %v1686
    %3175 = vmatprep.subr.mxu0 0.0
    %3176 = vmatpush1.msra.mxu0 %v1687
    %3177 = vmatprep.subr.mxu0 0.0
    %3178 = vmatpush1.msra.mxu0 %v1688
    %3179 = vmatprep.subr.mxu0 0.0
    %3180 = vmatpush1.msra.mxu0 %v1689
    %3181 = vmatprep.subr.mxu0 0.0
    %3182 = vmatpush1.msra.mxu0 %v1690
    %3183 = vmatprep.subr.mxu0 0.0
    %3184 = vmatpush1.msra.mxu0 %v1691
    %3185 = vmatprep.subr.mxu0 0.0
    %3186 = vmatpush1.msra.mxu0 %v2821
    %3187 = vmatprep.subr.mxu0 0.0
    %3188 = vmatpush1.msra.mxu0 0.0
    %3189 = vmatprep.subr.mxu0 0.0
    %3190 = vmatpush1.msra.mxu0 0.0
    %3191 = vmatprep.subr.mxu0 0.0
    %3192 = vmatpush1.msra.mxu0 0.0
    %3193 = vmatprep.subr.mxu0 0.0
    %3194 = vmatpush1.msra.mxu0 0.0
    %3195 = vmatprep.subr.mxu0 0.0
    %3196 = vmatpush1.msra.mxu0 0.0
    %3197 = vmatprep.subr.mxu0 0.0
    %3198 = vmatpush1.msra.mxu0 0.0
    %3199 = vmatprep.subr.mxu0 0.0
    %3200 = vmatpush1.msra.mxu0 0.0
    %3201 = vmatprep.subr.mxu0 0.0
    %3202 = vmatpush1.msra.mxu0 0.0
    %3203 = vmatprep.subr.mxu0 0.0
    %3204 = vmatpush1.msra.mxu0 0.0
    %3205 = vmatprep.subr.mxu0 0.0
    %3206 = vmatpush1.msra.mxu0 0.0
    %3207 = vmatprep.subr.mxu0 0.0
    %3208 = vmatpush1.msra.mxu0 0.0
    %3209 = vmatprep.subr.mxu0 0.0
    %3210 = vmatpush1.msra.mxu0 0.0
    %3211 = vmatprep.mubr.f32.mxu0 %v3145
    %3212 = vmatmul.mubr.f32.gmra.mrb[0].mxu0 %v3142
    %v3213 = vpop.f32.mrb[0].mxu0
    %v3214 = vadd.f32 0.0, %v3213
    %v3215 = vpop.f32.mrb[0].mxu0
    %3216 = vdwg.mxu0
    %v3217 = vmul.f32 %v3214, %v2897
    %v3218 = vadd.f32 %v3217, %v2904
    %v3219 = vadd.f32 %v3218, %v1238
    %v3220 = vmul.f32 %v2574, %v2813
    %v3221 = vmul.f32 %v2575, %v2814
    %v3223 = vsel %vm2642, %v3221, 0
    %3225 = vmatprep.subr.mxu0 0.0
    %3226 = vmatpush1.msra.mxu0 %v1673
    %3227 = vmatprep.subr.mxu0 0.0
    %3228 = vmatpush1.msra.mxu0 %v1674
    %3229 = vmatprep.subr.mxu0 0.0
    %3230 = vmatpush1.msra.mxu0 %v1675
    %3231 = vmatprep.subr.mxu0 0.0
    %3232 = vmatpush1.msra.mxu0 %v1676
    %3233 = vmatprep.subr.mxu0 0.0
    %3234 = vmatpush1.msra.mxu0 %v1677
    %3235 = vmatprep.subr.mxu0 0.0
    %3236 = vmatpush1.msra.mxu0 %v1678
    %3237 = vmatprep.subr.mxu0 0.0
    %3238 = vmatpush1.msra.mxu0 %v1679
    %3239 = vmatprep.subr.mxu0 0.0
    %3240 = vmatpush1.msra.mxu0 %v1680
    %3241 = vmatprep.subr.mxu0 0.0
    %3242 = vmatpush1.msra.mxu0 %v1681
    %3243 = vmatprep.subr.mxu0 0.0
    %3244 = vmatpush1.msra.mxu0 %v1682
    %3245 = vmatprep.subr.mxu0 0.0
    %3246 = vmatpush1.msra.mxu0 %v1683
    %3247 = vmatprep.subr.mxu0 0.0
    %3248 = vmatpush1.msra.mxu0 %v1684
    %3249 = vmatprep.subr.mxu0 0.0
    %3250 = vmatpush1.msra.mxu0 %v1685
    %3251 = vmatprep.subr.mxu0 0.0
    %3252 = vmatpush1.msra.mxu0 %v1686
    %3253 = vmatprep.subr.mxu0 0.0
    %3254 = vmatpush1.msra.mxu0 %v1687
    %3255 = vmatprep.subr.mxu0 0.0
    %3256 = vmatpush1.msra.mxu0 %v1688
    %3257 = vmatprep.subr.mxu0 0.0
    %3258 = vmatpush1.msra.mxu0 %v1689
    %3259 = vmatprep.subr.mxu0 0.0
    %3260 = vmatpush1.msra.mxu0 %v1690
    %3261 = vmatprep.subr.mxu0 0.0
    %3262 = vmatpush1.msra.mxu0 %v1691
    %3263 = vmatprep.subr.mxu0 0.0
    %3264 = vmatpush1.msra.mxu0 %v2821
    %3265 = vmatprep.subr.mxu0 0.0
    %3266 = vmatpush1.msra.mxu0 0.0
    %3267 = vmatprep.subr.mxu0 0.0
    %3268 = vmatpush1.msra.mxu0 0.0
    %3269 = vmatprep.subr.mxu0 0.0
    %3270 = vmatpush1.msra.mxu0 0.0
    %3271 = vmatprep.subr.mxu0 0.0
    %3272 = vmatpush1.msra.mxu0 0.0
    %3273 = vmatprep.subr.mxu0 0.0
    %3274 = vmatpush1.msra.mxu0 0.0
    %3275 = vmatprep.subr.mxu0 0.0
    %3276 = vmatpush1.msra.mxu0 0.0
    %3277 = vmatprep.subr.mxu0 0.0
    %3278 = vmatpush1.msra.mxu0 0.0
    %3279 = vmatprep.subr.mxu0 0.0
    %3280 = vmatpush1.msra.mxu0 0.0
    %3281 = vmatprep.subr.mxu0 0.0
    %3282 = vmatpush1.msra.mxu0 0.0
    %3283 = vmatprep.subr.mxu0 0.0
    %3284 = vmatpush1.msra.mxu0 0.0
    %3285 = vmatprep.subr.mxu0 0.0
    %3286 = vmatpush1.msra.mxu0 0.0
    %3287 = vmatprep.subr.mxu0 0.0
    %3288 = vmatpush1.msra.mxu0 0.0
    %3289 = vmatprep.mubr.f32.mxu0 %v3223
    %3290 = vmatmul.mubr.f32.gmra.mrb[0].mxu0 %v3220
    %v3291 = vpop.f32.mrb[0].mxu0
    %v3292 = vadd.f32 0.0, %v3291
    %v3293 = vpop.f32.mrb[0].mxu0
    %3294 = vdwg.mxu0
    %v3295 = vmul.f32 %v3292, %v2897
    %v3296 = vadd.f32 %v3295, %v2904
    %v3297 = vadd.f32 %v3296, %v1430
    %v3298 = vmul.f32 %v2620, %v2813
    %v3299 = vmul.f32 %v2621, %v2814
    %v3301 = vsel %vm2642, %v3299, 0
    %3303 = vmatprep.subr.mxu0 0.0
    %3304 = vmatpush1.msra.mxu0 %v1673
    %3305 = vmatprep.subr.mxu0 0.0
    %3306 = vmatpush1.msra.mxu0 %v1674
    %3307 = vmatprep.subr.mxu0 0.0
    %3308 = vmatpush1.msra.mxu0 %v1675
    %3309 = vmatprep.subr.mxu0 0.0
    %3310 = vmatpush1.msra.mxu0 %v1676
    %3311 = vmatprep.subr.mxu0 0.0
    %3312 = vmatpush1.msra.mxu0 %v1677
    %3313 = vmatprep.subr.mxu0 0.0
    %3314 = vmatpush1.msra.mxu0 %v1678
    %3315 = vmatprep.subr.mxu0 0.0
    %3316 = vmatpush1.msra.mxu0 %v1679
    %3317 = vmatprep.subr.mxu0 0.0
    %3318 = vmatpush1.msra.mxu0 %v1680
    %3319 = vmatprep.subr.mxu0 0.0
    %3320 = vmatpush1.msra.mxu0 %v1681
    %3321 = vmatprep.subr.mxu0 0.0
    %3322 = vmatpush1.msra.mxu0 %v1682
    %3323 = vmatprep.subr.mxu0 0.0
    %3324 = vmatpush1.msra.mxu0 %v1683
    %3325 = vmatprep.subr.mxu0 0.0
    %3326 = vmatpush1.msra.mxu0 %v1684
    %3327 = vmatprep.subr.mxu0 0.0
    %3328 = vmatpush1.msra.mxu0 %v1685
    %3329 = vmatprep.subr.mxu0 0.0
    %3330 = vmatpush1.msra.mxu0 %v1686
    %3331 = vmatprep.subr.mxu0 0.0
    %3332 = vmatpush1.msra.mxu0 %v1687
    %3333 = vmatprep.subr.mxu0 0.0
    %3334 = vmatpush1.msra.mxu0 %v1688
    %3335 = vmatprep.subr.mxu0 0.0
    %3336 = vmatpush1.msra.mxu0 %v1689
    %3337 = vmatprep.subr.mxu0 0.0
    %3338 = vmatpush1.msra.mxu0 %v1690
    %3339 = vmatprep.subr.mxu0 0.0
    %3340 = vmatpush1.msra.mxu0 %v1691
    %3341 = vmatprep.subr.mxu0 0.0
    %3342 = vmatpush1.msra.mxu0 %v2821
    %3343 = vmatprep.subr.mxu0 0.0
    %3344 = vmatpush1.msra.mxu0 0.0
    %3345 = vmatprep.subr.mxu0 0.0
    %3346 = vmatpush1.msra.mxu0 0.0
    %3347 = vmatprep.subr.mxu0 0.0
    %3348 = vmatpush1.msra.mxu0 0.0
    %3349 = vmatprep.subr.mxu0 0.0
    %3350 = vmatpush1.msra.mxu0 0.0
    %3351 = vmatprep.subr.mxu0 0.0
    %3352 = vmatpush1.msra.mxu0 0.0
    %3353 = vmatprep.subr.mxu0 0.0
    %3354 = vmatpush1.msra.mxu0 0.0
    %3355 = vmatprep.subr.mxu0 0.0
    %3356 = vmatpush1.msra.mxu0 0.0
    %3357 = vmatprep.subr.mxu0 0.0
    %3358 = vmatpush1.msra.mxu0 0.0
    %3359 = vmatprep.subr.mxu0 0.0
    %3360 = vmatpush1.msra.mxu0 0.0
    %3361 = vmatprep.subr.mxu0 0.0
    %3362 = vmatpush1.msra.mxu0 0.0
    %3363 = vmatprep.subr.mxu0 0.0
    %3364 = vmatpush1.msra.mxu0 0.0
    %3365 = vmatprep.subr.mxu0 0.0
    %3366 = vmatpush1.msra.mxu0 0.0
    %3367 = vmatprep.mubr.f32.mxu0 %v3301
    %3368 = vmatmul.mubr.f32.gmra.mrb[0].mxu0 %v3298
    %v3369 = vpop.f32.mrb[0].mxu0
    %v3370 = vadd.f32 0.0, %v3369
    %v3371 = vpop.f32.mrb[0].mxu0
    %3372 = vdwg.mxu0
    %v3373 = vmul.f32 %v3370, %v2897
    %v3374 = vadd.f32 %v3373, %v2904
    %v3375 = vadd.f32 %v3374, %v1622
    %v3376 = vld [vmem:[%s37] sm:$0xff]
    %v3377 = vld [vmem:[%s37 + $0x8] sm:$0xff]
    %v3378 = vld [vmem:[%s37 + $0x10] sm:$0xff]
    %v3379 = vld [vmem:[%s37 + $0x18] sm:$0xff]
    %v3380 = vld [vmem:[%s37 + $0x20] sm:$0xff]
    %v3381 = vld [vmem:[%s37 + $0x28] sm:$0xff]
    %v3382 = vld [vmem:[%s37 + $0x30] sm:$0xff]
    %v3383 = vld [vmem:[%s37 + $0x38] sm:$0xff]
    %v3384 = vld [vmem:[%s37 + $0x40] sm:$0xff]
    %v3385 = vld [vmem:[%s37 + $0x48] sm:$0xff]
    %v3386 = vld [vmem:[%s37 + $0x50] sm:$0xff]
    %v3387 = vld [vmem:[%s37 + $0x58] sm:$0xff]
    %v3388 = vld [vmem:[%s37 + $0x60] sm:$0xff]
    %v3389 = vld [vmem:[%s37 + $0x68] sm:$0xff]
    %v3390 = vld [vmem:[%s27] sm:$0x3]
    %v3391 = vld [vmem:[%s25] sm:$0x3]
    %v3392 = vld [vmem:[%s23] sm:$0x3]
    %v3393 = vld [vmem:[%s21] sm:$0x3]
    %v3394 = vld [vmem:[%s33] sm:$0xff]
    %v3395 = vld [vmem:[%s33 + $0x8] sm:$0xff]
    %v3396 = vld [vmem:[%s33 + $0x10] sm:$0xff]
    %v3397 = vld [vmem:[%s33 + $0x18] sm:$0xff]
    %v3398 = vld [vmem:[%s33 + $0x20] sm:$0xff]
    %v3399 = vld [vmem:[%s33 + $0x28] sm:$0xff]
    %v3400 = vld [vmem:[%s33 + $0x30] sm:$0xff]
    %v3401 = vld [vmem:[%s33 + $0x38] sm:$0xff]
    %v3402 = vld [vmem:[%s33 + $0x40] sm:$0xff]
    %v3403 = vld [vmem:[%s33 + $0x48] sm:$0xff]
    %v3404 = vld [vmem:[%s33 + $0x50] sm:$0xff]
    %v3405 = vld [vmem:[%s33 + $0x58] sm:$0xff]
    %v3406 = vld [vmem:[%s33 + $0x60] sm:$0xff]
    %v3407 = vld [vmem:[%s33 + $0x68] sm:$0xff]
    %v3408 = vld [vmem:[%s33 + $0x70] sm:$0xff]
    %v3409 = vld [vmem:[%s33 + $0x78] sm:$0xff]
    %v3410 = vld [vmem:[%s33 + $0x80] sm:$0xff]
    %v3411 = vld [vmem:[%s33 + $0x88] sm:$0xff]
    %v3412 = vld [vmem:[%s33 + $0x90] sm:$0xff]
    %v3413 = vld [vmem:[%s33 + $0x98] sm:$0x7f]
    %v3414 = vld [vmem:[%s17] sm:$0x1]
    %v3415 = vld [vmem:[%s35] sm:$0xff]
    %v3416 = vld [vmem:[%s35 + $0x8] sm:$0xff]
    %v3417 = vld [vmem:[%s35 + $0x10] sm:$0xff]
    %v3418 = vld [vmem:[%s35 + $0x18] sm:$0xff]
    %v3419 = vld [vmem:[%s35 + $0x20] sm:$0xff]
    %v3420 = vld [vmem:[%s35 + $0x28] sm:$0xff]
    %v3421 = vld [vmem:[%s35 + $0x30] sm:$0xff]
    %v3422 = vld [vmem:[%s35 + $0x38] sm:$0xff]
    %v3423 = vld [vmem:[%s35 + $0x40] sm:$0xff]
    %v3424 = vld [vmem:[%s35 + $0x48] sm:$0xff]
    %v3425 = vld [vmem:[%s19] sm:$0x3]
    %v3426 = vld [vmem:[%s39] sm:$0xff]
    %v3427 = vld [vmem:[%s39 + $0x8] sm:$0xff]
    %v3428 = vld [vmem:[%s39 + $0x10] sm:$0xff]
    %v3429 = vld [vmem:[%s39 + $0x18] sm:$0xff]
    %v3430 = vld [vmem:[%s39 + $0x20] sm:$0xff]
    %v3431 = vld [vmem:[%s39 + $0x28] sm:$0xff]
    %v3432 = vld [vmem:[%s39 + $0x30] sm:$0xff]
    %v3433 = vld [vmem:[%s39 + $0x38] sm:$0xff]
    %v3434 = vld [vmem:[%s39 + $0x40] sm:$0xff]
    %v3435 = vld [vmem:[%s39 + $0x48] sm:$0xff]
    %v3436 = vld [vmem:[%s39 + $0x50] sm:$0xff]
    %v3437 = vld [vmem:[%s39 + $0x58] sm:$0xff]
    %v3438 = vld [vmem:[%s39 + $0x60] sm:$0xff]
    %v3439 = vld [vmem:[%s39 + $0x68] sm:$0xff]
    %v3440 = vld [vmem:[%s39 + $0x70] sm:$0xff]
    %v3441 = vld [vmem:[%s39 + $0x78] sm:$0xff]
    %v3442 = vld [vmem:[%s39 + $0x80] sm:$0xff]
    %v3443 = vld [vmem:[%s39 + $0x88] sm:$0xff]
    %v3444 = vld [vmem:[%s39 + $0x90] sm:$0xff]
    %v3445 = vld [vmem:[%s39 + $0x98] sm:$0x7f]
    %v3446 = vld [vmem:[%s31] sm:$0x1]
    %v3447 = vld [vmem:[%s29] sm:$0x1]
    %v3449 = vsel %vm1695, %v2907, 0
    %3451 = vmatprep.subr.mxu0 %v3377
    %3452 = vmatpush1.msra.mxu0 %v3376
    %3453 = vmatprep.subr.mxu0 %v3379
    %3454 = vmatpush1.msra.mxu0 %v3378
    %3455 = vmatprep.subr.mxu0 %v3381
    %3456 = vmatpush1.msra.mxu0 %v3380
    %3457 = vmatprep.subr.mxu0 %v3383
    %3458 = vmatpush1.msra.mxu0 %v3382
    %3459 = vmatprep.subr.mxu0 %v3385
    %3460 = vmatpush1.msra.mxu0 %v3384
    %3461 = vmatprep.subr.mxu0 %v3387
    %3462 = vmatpush1.msra.mxu0 %v3386
    %3463 = vmatprep.subr.mxu0 %v3389
    %3464 = vmatpush1.msra.mxu0 %v3388
    %3465 = vmatprep.subr.mxu0 0.0
    %3466 = vmatpush1.msra.mxu0 0.0
    %3467 = vmatprep.subr.mxu0 0.0
    %3468 = vmatpush1.msra.mxu0 0.0
    %3469 = vmatprep.subr.mxu0 0.0
    %3470 = vmatpush1.msra.mxu0 0.0
    %3471 = vmatprep.subr.mxu0 0.0
    %3472 = vmatpush1.msra.mxu0 0.0
    %3473 = vmatprep.subr.mxu0 0.0
    %3474 = vmatpush1.msra.mxu0 0.0
    %3475 = vmatprep.subr.mxu0 0.0
    %3476 = vmatpush1.msra.mxu0 0.0
    %3477 = vmatprep.subr.mxu0 0.0
    %3478 = vmatpush1.msra.mxu0 0.0
    %3479 = vmatprep.subr.mxu0 0.0
    %3480 = vmatpush1.msra.mxu0 0.0
    %3481 = vmatprep.subr.mxu0 0.0
    %3482 = vmatpush1.msra.mxu0 0.0
    %3483 = vmatprep.subr.mxu0 0.0
    %3484 = vmatpush1.msra.mxu0 0.0
    %3485 = vmatprep.subr.mxu0 0.0
    %3486 = vmatpush1.msra.mxu0 0.0
    %3487 = vmatprep.subr.mxu0 0.0
    %3488 = vmatpush1.msra.mxu0 0.0
    %3489 = vmatprep.subr.mxu0 0.0
    %3490 = vmatpush1.msra.mxu0 0.0
    %3491 = vmatprep.subr.mxu0 0.0
    %3492 = vmatpush1.msra.mxu0 0.0
    %3493 = vmatprep.subr.mxu0 0.0
    %3494 = vmatpush1.msra.mxu0 0.0
    %3495 = vmatprep.subr.mxu0 0.0
    %3496 = vmatpush1.msra.mxu0 0.0
    %3497 = vmatprep.subr.mxu0 0.0
    %3498 = vmatpush1.msra.mxu0 0.0
    %3499 = vmatprep.subr.mxu0 0.0
    %3500 = vmatpush1.msra.mxu0 0.0
    %3501 = vmatprep.subr.mxu0 0.0
    %3502 = vmatpush1.msra.mxu0 0.0
    %3503 = vmatprep.subr.mxu0 0.0
    %3504 = vmatpush1.msra.mxu0 0.0
    %3505 = vmatprep.subr.mxu0 0.0
    %3506 = vmatpush1.msra.mxu0 0.0
    %3507 = vmatprep.subr.mxu0 0.0
    %3508 = vmatpush1.msra.mxu0 0.0
    %3509 = vmatprep.subr.mxu0 0.0
    %3510 = vmatpush1.msra.mxu0 0.0
    %3511 = vmatprep.subr.mxu0 0.0
    %3512 = vmatpush1.msra.mxu0 0.0
    %3513 = vmatprep.subr.mxu0 0.0
    %3514 = vmatpush1.msra.mxu0 0.0
    %3515 = vmatprep.mubr.f32.mxu0 0.0
    %3516 = vmatmul.mubr.f32.gmra.mrb[0].mxu0 %v3449
    %v3517 = vpop.f32.mrb[0].mxu0
    %v3518 = vadd.f32 0.0, %v3517
    %v3519 = vpop.f32.mrb[0].mxu0
    %v3520 = vadd.f32 0.0, %v3519
    %3521 = vdwg.mxu0
    %v3523 = vlaneseq
    %v3524 = vshrl.u32 %v3523, 7
    %v3525 = vsub.s32 0, %v3524
    %v3526 = vrot.slane %v3390, %v3525
    %v3527 = vlaneseq
    %v3528 = vshrl.u32 %v3527, 7
    %v3529 = vsub.s32 1, %v3528
    %v3530 = vrot.slane %v3390, %v3529
    %v3533 = vmul.f32 %v3518, %v3526
    %v3534 = vmul.f32 %v3520, %v3530
    %v3536 = vlaneseq
    %v3537 = vshrl.u32 %v3536, 7
    %v3538 = vsub.s32 0, %v3537
    %v3539 = vrot.slane %v3391, %v3538
    %v3540 = vlaneseq
    %v3541 = vshrl.u32 %v3540, 7
    %v3542 = vsub.s32 1, %v3541
    %v3543 = vrot.slane %v3391, %v3542
    %v3546 = vadd.f32 %v3533, %v3539
    %v3547 = vadd.f32 %v3534, %v3543
    %v3548 = vadd.f32 %v3546, 3.0
    %v3549 = vadd.f32 %v3547, 3.0
    %v3550 = vmax.f32 %v3548, 0.0
    %v3551 = vmax.f32 %v3549, 0.0
    %v3552 = vmin.f32 %v3550, 6.0
    %v3553 = vmin.f32 %v3551, 6.0
    %v3554 = vmul.f32 %v3546, %v3552
    %v3555 = vmul.f32 %v3547, %v3553
    %v3556 = vmul.f32 %v3554, 0.16666667
    %v3557 = vmul.f32 %v3555, 0.16666667
    %v3559 = vsel %vm1695, %v2985, 0
    %3561 = vmatprep.subr.mxu0 %v3377
    %3562 = vmatpush1.msra.mxu0 %v3376
    %3563 = vmatprep.subr.mxu0 %v3379
    %3564 = vmatpush1.msra.mxu0 %v3378
    %3565 = vmatprep.subr.mxu0 %v3381
    %3566 = vmatpush1.msra.mxu0 %v3380
    %3567 = vmatprep.subr.mxu0 %v3383
    %3568 = vmatpush1.msra.mxu0 %v3382
    %3569 = vmatprep.subr.mxu0 %v3385
    %3570 = vmatpush1.msra.mxu0 %v3384
    %3571 = vmatprep.subr.mxu0 %v3387
    %3572 = vmatpush1.msra.mxu0 %v3386
    %3573 = vmatprep.subr.mxu0 %v3389
    %3574 = vmatpush1.msra.mxu0 %v3388
    %3575 = vmatprep.subr.mxu0 0.0
    %3576 = vmatpush1.msra.mxu0 0.0
    %3577 = vmatprep.subr.mxu0 0.0
    %3578 = vmatpush1.msra.mxu0 0.0
    %3579 = vmatprep.subr.mxu0 0.0
    %3580 = vmatpush1.msra.mxu0 0.0
    %3581 = vmatprep.subr.mxu0 0.0
    %3582 = vmatpush1.msra.mxu0 0.0
    %3583 = vmatprep.subr.mxu0 0.0
    %3584 = vmatpush1.msra.mxu0 0.0
    %3585 = vmatprep.subr.mxu0 0.0
    %3586 = vmatpush1.msra.mxu0 0.0
    %3587 = vmatprep.subr.mxu0 0.0
    %3588 = vmatpush1.msra.mxu0 0.0
    %3589 = vmatprep.subr.mxu0 0.0
    %3590 = vmatpush1.msra.mxu0 0.0
    %3591 = vmatprep.subr.mxu0 0.0
    %3592 = vmatpush1.msra.mxu0 0.0
    %3593 = vmatprep.subr.mxu0 0.0
    %3594 = vmatpush1.msra.mxu0 0.0
    %3595 = vmatprep.subr.mxu0 0.0
    %3596 = vmatpush1.msra.mxu0 0.0
    %3597 = vmatprep.subr.mxu0 0.0
    %3598 = vmatpush1.msra.mxu0 0.0
    %3599 = vmatprep.subr.mxu0 0.0
    %3600 = vmatpush1.msra.mxu0 0.0
    %3601 = vmatprep.subr.mxu0 0.0
    %3602 = vmatpush1.msra.mxu0 0.0
    %3603 = vmatprep.subr.mxu0 0.0
    %3604 = vmatpush1.msra.mxu0 0.0
    %3605 = vmatprep.subr.mxu0 0.0
    %3606 = vmatpush1.msra.mxu0 0.0
    %3607 = vmatprep.subr.mxu0 0.0
    %3608 = vmatpush1.msra.mxu0 0.0
    %3609 = vmatprep.subr.mxu0 0.0
    %3610 = vmatpush1.msra.mxu0 0.0
    %3611 = vmatprep.subr.mxu0 0.0
    %3612 = vmatpush1.msra.mxu0 0.0
    %3613 = vmatprep.subr.mxu0 0.0
    %3614 = vmatpush1.msra.mxu0 0.0
    %3615 = vmatprep.subr.mxu0 0.0
    %3616 = vmatpush1.msra.mxu0 0.0
    %3617 = vmatprep.subr.mxu0 0.0
    %3618 = vmatpush1.msra.mxu0 0.0
    %3619 = vmatprep.subr.mxu0 0.0
    %3620 = vmatpush1.msra.mxu0 0.0
    %3621 = vmatprep.subr.mxu0 0.0
    %3622 = vmatpush1.msra.mxu0 0.0
    %3623 = vmatprep.subr.mxu0 0.0
    %3624 = vmatpush1.msra.mxu0 0.0
    %3625 = vmatprep.mubr.f32.mxu0 0.0
    %3626 = vmatmul.mubr.f32.gmra.mrb[0].mxu0 %v3559
    %v3627 = vpop.f32.mrb[0].mxu0
    %v3628 = vadd.f32 0.0, %v3627
    %v3629 = vpop.f32.mrb[0].mxu0
    %v3630 = vadd.f32 0.0, %v3629
    %3631 = vdwg.mxu0
    %v3632 = vmul.f32 %v3628, %v3526
    %v3633 = vmul.f32 %v3630, %v3530
    %v3634 = vadd.f32 %v3632, %v3539
    %v3635 = vadd.f32 %v3633, %v3543
    %v3636 = vadd.f32 %v3634, 3.0
    %v3637 = vadd.f32 %v3635, 3.0
    %v3638 = vmax.f32 %v3636, 0.0
    %v3639 = vmax.f32 %v3637, 0.0
    %v3640 = vmin.f32 %v3638, 6.0
    %v3641 = vmin.f32 %v3639, 6.0
    %v3642 = vmul.f32 %v3634, %v3640
    %v3643 = vmul.f32 %v3635, %v3641
    %v3644 = vmul.f32 %v3642, 0.16666667
    %v3645 = vmul.f32 %v3643, 0.16666667
    %v3647 = vsel %vm1695, %v3063, 0
    %3649 = vmatprep.subr.mxu0 %v3377
    %3650 = vmatpush1.msra.mxu0 %v3376
    %3651 = vmatprep.subr.mxu0 %v3379
    %3652 = vmatpush1.msra.mxu0 %v3378
    %3653 = vmatprep.subr.mxu0 %v3381
    %3654 = vmatpush1.msra.mxu0 %v3380
    %3655 = vmatprep.subr.mxu0 %v3383
    %3656 = vmatpush1.msra.mxu0 %v3382
    %3657 = vmatprep.subr.mxu0 %v3385
    %3658 = vmatpush1.msra.mxu0 %v3384
    %3659 = vmatprep.subr.mxu0 %v3387
    %3660 = vmatpush1.msra.mxu0 %v3386
    %3661 = vmatprep.subr.mxu0 %v3389
    %3662 = vmatpush1.msra.mxu0 %v3388
    %3663 = vmatprep.subr.mxu0 0.0
    %3664 = vmatpush1.msra.mxu0 0.0
    %3665 = vmatprep.subr.mxu0 0.0
    %3666 = vmatpush1.msra.mxu0 0.0
    %3667 = vmatprep.subr.mxu0 0.0
    %3668 = vmatpush1.msra.mxu0 0.0
    %3669 = vmatprep.subr.mxu0 0.0
    %3670 = vmatpush1.msra.mxu0 0.0
    %3671 = vmatprep.subr.mxu0 0.0
    %3672 = vmatpush1.msra.mxu0 0.0
    %3673 = vmatprep.subr.mxu0 0.0
    %3674 = vmatpush1.msra.mxu0 0.0
    %3675 = vmatprep.subr.mxu0 0.0
    %3676 = vmatpush1.msra.mxu0 0.0
    %3677 = vmatprep.subr.mxu0 0.0
    %3678 = vmatpush1.msra.mxu0 0.0
    %3679 = vmatprep.subr.mxu0 0.0
    %3680 = vmatpush1.msra.mxu0 0.0
    %3681 = vmatprep.subr.mxu0 0.0
    %3682 = vmatpush1.msra.mxu0 0.0
    %3683 = vmatprep.subr.mxu0 0.0
    %3684 = vmatpush1.msra.mxu0 0.0
    %3685 = vmatprep.subr.mxu0 0.0
    %3686 = vmatpush1.msra.mxu0 0.0
    %3687 = vmatprep.subr.mxu0 0.0
    %3688 = vmatpush1.msra.mxu0 0.0
    %3689 = vmatprep.subr.mxu0 0.0
    %3690 = vmatpush1.msra.mxu0 0.0
    %3691 = vmatprep.subr.mxu0 0.0
    %3692 = vmatpush1.msra.mxu0 0.0
    %3693 = vmatprep.subr.mxu0 0.0
    %3694 = vmatpush1.msra.mxu0 0.0
    %3695 = vmatprep.subr.mxu0 0.0
    %3696 = vmatpush1.msra.mxu0 0.0
    %3697 = vmatprep.subr.mxu0 0.0
    %3698 = vmatpush1.msra.mxu0 0.0
    %3699 = vmatprep.subr.mxu0 0.0
    %3700 = vmatpush1.msra.mxu0 0.0
    %3701 = vmatprep.subr.mxu0 0.0
    %3702 = vmatpush1.msra.mxu0 0.0
    %3703 = vmatprep.subr.mxu0 0.0
    %3704 = vmatpush1.msra.mxu0 0.0
    %3705 = vmatprep.subr.mxu0 0.0
    %3706 = vmatpush1.msra.mxu0 0.0
    %3707 = vmatprep.subr.mxu0 0.0
    %3708 = vmatpush1.msra.mxu0 0.0
    %3709 = vmatprep.subr.mxu0 0.0
    %3710 = vmatpush1.msra.mxu0 0.0
    %3711 = vmatprep.subr.mxu0 0.0
    %3712 = vmatpush1.msra.mxu0 0.0
    %3713 = vmatprep.mubr.f32.mxu0 0.0
    %3714 = vmatmul.mubr.f32.gmra.mrb[0].mxu0 %v3647
    %v3715 = vpop.f32.mrb[0].mxu0
    %v3716 = vadd.f32 0.0, %v3715
    %v3717 = vpop.f32.mrb[0].mxu0
    %v3718 = vadd.f32 0.0, %v3717
    %3719 = vdwg.mxu0
    %v3720 = vmul.f32 %v3716, %v3526
    %v3721 = vmul.f32 %v3718, %v3530
    %v3722 = vadd.f32 %v3720, %v3539
    %v3723 = vadd.f32 %v3721, %v3543
    %v3724 = vadd.f32 %v3722, 3.0
    %v3725 = vadd.f32 %v3723, 3.0
    %v3726 = vmax.f32 %v3724, 0.0
    %v3727 = vmax.f32 %v3725, 0.0
    %v3728 = vmin.f32 %v3726, 6.0
    %v3729 = vmin.f32 %v3727, 6.0
    %v3730 = vmul.f32 %v3722, %v3728
    %v3731 = vmul.f32 %v3723, %v3729
    %v3732 = vmul.f32 %v3730, 0.16666667
    %v3733 = vmul.f32 %v3731, 0.16666667
    %v3735 = vsel %vm1695, %v3141, 0
    %3737 = vmatprep.subr.mxu0 %v3377
    %3738 = vmatpush1.msra.mxu0 %v3376
    %3739 = vmatprep.subr.mxu0 %v3379
    %3740 = vmatpush1.msra.mxu0 %v3378
    %3741 = vmatprep.subr.mxu0 %v3381
    %3742 = vmatpush1.msra.mxu0 %v3380
    %3743 = vmatprep.subr.mxu0 %v3383
    %3744 = vmatpush1.msra.mxu0 %v3382
    %3745 = vmatprep.subr.mxu0 %v3385
    %3746 = vmatpush1.msra.mxu0 %v3384
    %3747 = vmatprep.subr.mxu0 %v3387
    %3748 = vmatpush1.msra.mxu0 %v3386
    %3749 = vmatprep.subr.mxu0 %v3389
    %3750 = vmatpush1.msra.mxu0 %v3388
    %3751 = vmatprep.subr.mxu0 0.0
    %3752 = vmatpush1.msra.mxu0 0.0
    %3753 = vmatprep.subr.mxu0 0.0
    %3754 = vmatpush1.msra.mxu0 0.0
    %3755 = vmatprep.subr.mxu0 0.0
    %3756 = vmatpush1.msra.mxu0 0.0
    %3757 = vmatprep.subr.mxu0 0.0
    %3758 = vmatpush1.msra.mxu0 0.0
    %3759 = vmatprep.subr.mxu0 0.0
    %3760 = vmatpush1.msra.mxu0 0.0
    %3761 = vmatprep.subr.mxu0 0.0
    %3762 = vmatpush1.msra.mxu0 0.0
    %3763 = vmatprep.subr.mxu0 0.0
    %3764 = vmatpush1.msra.mxu0 0.0
    %3765 = vmatprep.subr.mxu0 0.0
    %3766 = vmatpush1.msra.mxu0 0.0
    %3767 = vmatprep.subr.mxu0 0.0
    %3768 = vmatpush1.msra.mxu0 0.0
    %3769 = vmatprep.subr.mxu0 0.0
    %3770 = vmatpush1.msra.mxu0 0.0
    %3771 = vmatprep.subr.mxu0 0.0
    %3772 = vmatpush1.msra.mxu0 0.0
    %3773 = vmatprep.subr.mxu0 0.0
    %3774 = vmatpush1.msra.mxu0 0.0
    %3775 = vmatprep.subr.mxu0 0.0
    %3776 = vmatpush1.msra.mxu0 0.0
    %3777 = vmatprep.subr.mxu0 0.0
    %3778 = vmatpush1.msra.mxu0 0.0
    %3779 = vmatprep.subr.mxu0 0.0
    %3780 = vmatpush1.msra.mxu0 0.0
    %3781 = vmatprep.subr.mxu0 0.0
    %3782 = vmatpush1.msra.mxu0 0.0
    %3783 = vmatprep.subr.mxu0 0.0
    %3784 = vmatpush1.msra.mxu0 0.0
    %3785 = vmatprep.subr.mxu0 0.0
    %3786 = vmatpush1.msra.mxu0 0.0
    %3787 = vmatprep.subr.mxu0 0.0
    %3788 = vmatpush1.msra.mxu0 0.0
    %3789 = vmatprep.subr.mxu0 0.0
    %3790 = vmatpush1.msra.mxu0 0.0
    %3791 = vmatprep.subr.mxu0 0.0
    %3792 = vmatpush1.msra.mxu0 0.0
    %3793 = vmatprep.subr.mxu0 0.0
    %3794 = vmatpush1.msra.mxu0 0.0
    %3795 = vmatprep.subr.mxu0 0.0
    %3796 = vmatpush1.msra.mxu0 0.0
    %3797 = vmatprep.subr.mxu0 0.0
    %3798 = vmatpush1.msra.mxu0 0.0
    %3799 = vmatprep.subr.mxu0 0.0
    %3800 = vmatpush1.msra.mxu0 0.0
    %3801 = vmatprep.mubr.f32.mxu0 0.0
    %3802 = vmatmul.mubr.f32.gmra.mrb[0].mxu0 %v3735
    %v3803 = vpop.f32.mrb[0].mxu0
    %v3804 = vadd.f32 0.0, %v3803
    %v3805 = vpop.f32.mrb[0].mxu0
    %v3806 = vadd.f32 0.0, %v3805
    %3807 = vdwg.mxu0
    %v3808 = vmul.f32 %v3804, %v3526
    %v3809 = vmul.f32 %v3806, %v3530
    %v3810 = vadd.f32 %v3808, %v3539
    %v3811 = vadd.f32 %v3809, %v3543
    %v3812 = vadd.f32 %v3810, 3.0
    %v3813 = vadd.f32 %v3811, 3.0
    %v3814 = vmax.f32 %v3812, 0.0
    %v3815 = vmax.f32 %v3813, 0.0
    %v3816 = vmin.f32 %v3814, 6.0
    %v3817 = vmin.f32 %v3815, 6.0
    %v3818 = vmul.f32 %v3810, %v3816
    %v3819 = vmul.f32 %v3811, %v3817
    %v3820 = vmul.f32 %v3818, 0.16666667
    %v3821 = vmul.f32 %v3819, 0.16666667
    %v3823 = vsel %vm1695, %v3219, 0
    %3825 = vmatprep.subr.mxu0 %v3377
    %3826 = vmatpush1.msra.mxu0 %v3376
    %3827 = vmatprep.subr.mxu0 %v3379
    %3828 = vmatpush1.msra.mxu0 %v3378
    %3829 = vmatprep.subr.mxu0 %v3381
    %3830 = vmatpush1.msra.mxu0 %v3380
    %3831 = vmatprep.subr.mxu0 %v3383
    %3832 = vmatpush1.msra.mxu0 %v3382
    %3833 = vmatprep.subr.mxu0 %v3385
    %3834 = vmatpush1.msra.mxu0 %v3384
    %3835 = vmatprep.subr.mxu0 %v3387
    %3836 = vmatpush1.msra.mxu0 %v3386
    %3837 = vmatprep.subr.mxu0 %v3389
    %3838 = vmatpush1.msra.mxu0 %v3388
    %3839 = vmatprep.subr.mxu0 0.0
    %3840 = vmatpush1.msra.mxu0 0.0
    %3841 = vmatprep.subr.mxu0 0.0
    %3842 = vmatpush1.msra.mxu0 0.0
    %3843 = vmatprep.subr.mxu0 0.0
    %3844 = vmatpush1.msra.mxu0 0.0
    %3845 = vmatprep.subr.mxu0 0.0
    %3846 = vmatpush1.msra.mxu0 0.0
    %3847 = vmatprep.subr.mxu0 0.0
    %3848 = vmatpush1.msra.mxu0 0.0
    %3849 = vmatprep.subr.mxu0 0.0
    %3850 = vmatpush1.msra.mxu0 0.0
    %3851 = vmatprep.subr.mxu0 0.0
    %3852 = vmatpush1.msra.mxu0 0.0
    %3853 = vmatprep.subr.mxu0 0.0
    %3854 = vmatpush1.msra.mxu0 0.0
    %3855 = vmatprep.subr.mxu0 0.0
    %3856 = vmatpush1.msra.mxu0 0.0
    %3857 = vmatprep.subr.mxu0 0.0
    %3858 = vmatpush1.msra.mxu0 0.0
    %3859 = vmatprep.subr.mxu0 0.0
    %3860 = vmatpush1.msra.mxu0 0.0
    %3861 = vmatprep.subr.mxu0 0.0
    %3862 = vmatpush1.msra.mxu0 0.0
    %3863 = vmatprep.subr.mxu0 0.0
    %3864 = vmatpush1.msra.mxu0 0.0
    %3865 = vmatprep.subr.mxu0 0.0
    %3866 = vmatpush1.msra.mxu0 0.0
    %3867 = vmatprep.subr.mxu0 0.0
    %3868 = vmatpush1.msra.mxu0 0.0
    %3869 = vmatprep.subr.mxu0 0.0
    %3870 = vmatpush1.msra.mxu0 0.0
    %3871 = vmatprep.subr.mxu0 0.0
    %3872 = vmatpush1.msra.mxu0 0.0
    %3873 = vmatprep.subr.mxu0 0.0
    %3874 = vmatpush1.msra.mxu0 0.0
    %3875 = vmatprep.subr.mxu0 0.0
    %3876 = vmatpush1.msra.mxu0 0.0
    %3877 = vmatprep.subr.mxu0 0.0
    %3878 = vmatpush1.msra.mxu0 0.0
    %3879 = vmatprep.subr.mxu0 0.0
    %3880 = vmatpush1.msra.mxu0 0.0
    %3881 = vmatprep.subr.mxu0 0.0
    %3882 = vmatpush1.msra.mxu0 0.0
    %3883 = vmatprep.subr.mxu0 0.0
    %3884 = vmatpush1.msra.mxu0 0.0
    %3885 = vmatprep.subr.mxu0 0.0
    %3886 = vmatpush1.msra.mxu0 0.0
    %3887 = vmatprep.subr.mxu0 0.0
    %3888 = vmatpush1.msra.mxu0 0.0
    %3889 = vmatprep.mubr.f32.mxu0 0.0
    %3890 = vmatmul.mubr.f32.gmra.mrb[0].mxu0 %v3823
    %v3891 = vpop.f32.mrb[0].mxu0
    %v3892 = vadd.f32 0.0, %v3891
    %v3893 = vpop.f32.mrb[0].mxu0
    %v3894 = vadd.f32 0.0, %v3893
    %3895 = vdwg.mxu0
    %v3896 = vmul.f32 %v3892, %v3526
    %v3897 = vmul.f32 %v3894, %v3530
    %v3898 = vadd.f32 %v3896, %v3539
    %v3899 = vadd.f32 %v3897, %v3543
    %v3900 = vadd.f32 %v3898, 3.0
    %v3901 = vadd.f32 %v3899, 3.0
    %v3902 = vmax.f32 %v3900, 0.0
    %v3903 = vmax.f32 %v3901, 0.0
    %v3904 = vmin.f32 %v3902, 6.0
    %v3905 = vmin.f32 %v3903, 6.0
    %v3906 = vmul.f32 %v3898, %v3904
    %v3907 = vmul.f32 %v3899, %v3905
    %v3908 = vmul.f32 %v3906, 0.16666667
    %v3909 = vmul.f32 %v3907, 0.16666667
    %v3911 = vsel %vm1695, %v3297, 0
    %3913 = vmatprep.subr.mxu0 %v3377
    %3914 = vmatpush1.msra.mxu0 %v3376
    %3915 = vmatprep.subr.mxu0 %v3379
    %3916 = vmatpush1.msra.mxu0 %v3378
    %3917 = vmatprep.subr.mxu0 %v3381
    %3918 = vmatpush1.msra.mxu0 %v3380
    %3919 = vmatprep.subr.mxu0 %v3383
    %3920 = vmatpush1.msra.mxu0 %v3382
    %3921 = vmatprep.subr.mxu0 %v3385
    %3922 = vmatpush1.msra.mxu0 %v3384
    %3923 = vmatprep.subr.mxu0 %v3387
    %3924 = vmatpush1.msra.mxu0 %v3386
    %3925 = vmatprep.subr.mxu0 %v3389
    %3926 = vmatpush1.msra.mxu0 %v3388
    %3927 = vmatprep.subr.mxu0 0.0
    %3928 = vmatpush1.msra.mxu0 0.0
    %3929 = vmatprep.subr.mxu0 0.0
    %3930 = vmatpush1.msra.mxu0 0.0
    %3931 = vmatprep.subr.mxu0 0.0
    %3932 = vmatpush1.msra.mxu0 0.0
    %3933 = vmatprep.subr.mxu0 0.0
    %3934 = vmatpush1.msra.mxu0 0.0
    %3935 = vmatprep.subr.mxu0 0.0
    %3936 = vmatpush1.msra.mxu0 0.0
    %3937 = vmatprep.subr.mxu0 0.0
    %3938 = vmatpush1.msra.mxu0 0.0
    %3939 = vmatprep.subr.mxu0 0.0
    %3940 = vmatpush1.msra.mxu0 0.0
    %3941 = vmatprep.subr.mxu0 0.0
    %3942 = vmatpush1.msra.mxu0 0.0
    %3943 = vmatprep.subr.mxu0 0.0
    %3944 = vmatpush1.msra.mxu0 0.0
    %3945 = vmatprep.subr.mxu0 0.0
    %3946 = vmatpush1.msra.mxu0 0.0
    %3947 = vmatprep.subr.mxu0 0.0
    %3948 = vmatpush1.msra.mxu0 0.0
    %3949 = vmatprep.subr.mxu0 0.0
    %3950 = vmatpush1.msra.mxu0 0.0
    %3951 = vmatprep.subr.mxu0 0.0
    %3952 = vmatpush1.msra.mxu0 0.0
    %3953 = vmatprep.subr.mxu0 0.0
    %3954 = vmatpush1.msra.mxu0 0.0
    %3955 = vmatprep.subr.mxu0 0.0
    %3956 = vmatpush1.msra.mxu0 0.0
    %3957 = vmatprep.subr.mxu0 0.0
    %3958 = vmatpush1.msra.mxu0 0.0
    %3959 = vmatprep.subr.mxu0 0.0
    %3960 = vmatpush1.msra.mxu0 0.0
    %3961 = vmatprep.subr.mxu0 0.0
    %3962 = vmatpush1.msra.mxu0 0.0
    %3963 = vmatprep.subr.mxu0 0.0
    %3964 = vmatpush1.msra.mxu0 0.0
    %3965 = vmatprep.subr.mxu0 0.0
    %3966 = vmatpush1.msra.mxu0 0.0
    %3967 = vmatprep.subr.mxu0 0.0
    %3968 = vmatpush1.msra.mxu0 0.0
    %3969 = vmatprep.subr.mxu0 0.0
    %3970 = vmatpush1.msra.mxu0 0.0
    %3971 = vmatprep.subr.mxu0 0.0
    %3972 = vmatpush1.msra.mxu0 0.0
    %3973 = vmatprep.subr.mxu0 0.0
    %3974 = vmatpush1.msra.mxu0 0.0
    %3975 = vmatprep.subr.mxu0 0.0
    %3976 = vmatpush1.msra.mxu0 0.0
    %3977 = vmatprep.mubr.f32.mxu0 0.0
    %3978 = vmatmul.mubr.f32.gmra.mrb[0].mxu0 %v3911
    %v3979 = vpop.f32.mrb[0].mxu0
    %v3980 = vadd.f32 0.0, %v3979
    %v3981 = vpop.f32.mrb[0].mxu0
    %v3982 = vadd.f32 0.0, %v3981
    %3983 = vdwg.mxu0
    %v3984 = vmul.f32 %v3980, %v3526
    %v3985 = vmul.f32 %v3982, %v3530
    %v3986 = vadd.f32 %v3984, %v3539
    %v3987 = vadd.f32 %v3985, %v3543
    %v3988 = vadd.f32 %v3986, 3.0
    %v3989 = vadd.f32 %v3987, 3.0
    %v3990 = vmax.f32 %v3988, 0.0
    %v3991 = vmax.f32 %v3989, 0.0
    %v3992 = vmin.f32 %v3990, 6.0
    %v3993 = vmin.f32 %v3991, 6.0
    %v3994 = vmul.f32 %v3986, %v3992
    %v3995 = vmul.f32 %v3987, %v3993
    %v3996 = vmul.f32 %v3994, 0.16666667
    %v3997 = vmul.f32 %v3995, 0.16666667
    %v3999 = vsel %vm1695, %v3375, 0
    %4001 = vmatprep.subr.mxu0 %v3377
    %4002 = vmatpush1.msra.mxu0 %v3376
    %4003 = vmatprep.subr.mxu0 %v3379
    %4004 = vmatpush1.msra.mxu0 %v3378
    %4005 = vmatprep.subr.mxu0 %v3381
    %4006 = vmatpush1.msra.mxu0 %v3380
    %4007 = vmatprep.subr.mxu0 %v3383
    %4008 = vmatpush1.msra.mxu0 %v3382
    %4009 = vmatprep.subr.mxu0 %v3385
    %4010 = vmatpush1.msra.mxu0 %v3384
    %4011 = vmatprep.subr.mxu0 %v3387
    %4012 = vmatpush1.msra.mxu0 %v3386
    %4013 = vmatprep.subr.mxu0 %v3389
    %4014 = vmatpush1.msra.mxu0 %v3388
    %4015 = vmatprep.subr.mxu0 0.0
    %4016 = vmatpush1.msra.mxu0 0.0
    %4017 = vmatprep.subr.mxu0 0.0
    %4018 = vmatpush1.msra.mxu0 0.0
    %4019 = vmatprep.subr.mxu0 0.0
    %4020 = vmatpush1.msra.mxu0 0.0
    %4021 = vmatprep.subr.mxu0 0.0
    %4022 = vmatpush1.msra.mxu0 0.0
    %4023 = vmatprep.subr.mxu0 0.0
    %4024 = vmatpush1.msra.mxu0 0.0
    %4025 = vmatprep.subr.mxu0 0.0
    %4026 = vmatpush1.msra.mxu0 0.0
    %4027 = vmatprep.subr.mxu0 0.0
    %4028 = vmatpush1.msra.mxu0 0.0
    %4029 = vmatprep.subr.mxu0 0.0
    %4030 = vmatpush1.msra.mxu0 0.0
    %4031 = vmatprep.subr.mxu0 0.0
    %4032 = vmatpush1.msra.mxu0 0.0
    %4033 = vmatprep.subr.mxu0 0.0
    %4034 = vmatpush1.msra.mxu0 0.0
    %4035 = vmatprep.subr.mxu0 0.0
    %4036 = vmatpush1.msra.mxu0 0.0
    %4037 = vmatprep.subr.mxu0 0.0
    %4038 = vmatpush1.msra.mxu0 0.0
    %4039 = vmatprep.subr.mxu0 0.0
    %4040 = vmatpush1.msra.mxu0 0.0
    %4041 = vmatprep.subr.mxu0 0.0
    %4042 = vmatpush1.msra.mxu0 0.0
    %4043 = vmatprep.subr.mxu0 0.0
    %4044 = vmatpush1.msra.mxu0 0.0
    %4045 = vmatprep.subr.mxu0 0.0
    %4046 = vmatpush1.msra.mxu0 0.0
    %4047 = vmatprep.subr.mxu0 0.0
    %4048 = vmatpush1.msra.mxu0 0.0
    %4049 = vmatprep.subr.mxu0 0.0
    %4050 = vmatpush1.msra.mxu0 0.0
    %4051 = vmatprep.subr.mxu0 0.0
    %4052 = vmatpush1.msra.mxu0 0.0
    %4053 = vmatprep.subr.mxu0 0.0
    %4054 = vmatpush1.msra.mxu0 0.0
    %4055 = vmatprep.subr.mxu0 0.0
    %4056 = vmatpush1.msra.mxu0 0.0
    %4057 = vmatprep.subr.mxu0 0.0
    %4058 = vmatpush1.msra.mxu0 0.0
    %4059 = vmatprep.subr.mxu0 0.0
    %4060 = vmatpush1.msra.mxu0 0.0
    %4061 = vmatprep.subr.mxu0 0.0
    %4062 = vmatpush1.msra.mxu0 0.0
    %4063 = vmatprep.subr.mxu0 0.0
    %4064 = vmatpush1.msra.mxu0 0.0
    %4065 = vmatprep.mubr.f32.mxu0 0.0
    %4066 = vmatmul.mubr.f32.gmra.mrb[0].mxu0 %v3999
    %v4067 = vpop.f32.mrb[0].mxu0
    %v4068 = vadd.f32 0.0, %v4067
    %v4069 = vpop.f32.mrb[0].mxu0
    %v4070 = vadd.f32 0.0, %v4069
    %4071 = vdwg.mxu0
    %v4072 = vmul.f32 %v4068, %v3526
    %v4073 = vmul.f32 %v4070, %v3530
    %v4074 = vadd.f32 %v4072, %v3539
    %v4075 = vadd.f32 %v4073, %v3543
    %v4076 = vadd.f32 %v4074, 3.0
    %v4077 = vadd.f32 %v4075, 3.0
    %v4078 = vmax.f32 %v4076, 0.0
    %v4079 = vmax.f32 %v4077, 0.0
    %v4080 = vmin.f32 %v4078, 6.0
    %v4081 = vmin.f32 %v4079, 6.0
    %v4082 = vmul.f32 %v4074, %v4080
    %v4083 = vmul.f32 %v4075, %v4081
    %v4084 = vmul.f32 %v4082, 0.16666667
    %v4085 = vmul.f32 %v4083, 0.16666667
    %s4086 = sld [smem:[#allocation2 + $0x31]]
    %v4087 = vstv %s4086
    %v4088 = vmul.f32 %v4087, %v3556
    %v4089 = vmul.f32 %v4087, %v3557
    %s4090 = sld [smem:[#allocation2 + $0x32]]
    %v4091 = vstv %s4090
    %v4092 = vmul.f32 %v4091, %v3644
    %v4093 = vmul.f32 %v4091, %v3645
    %v4094 = vadd.f32 %v4088, %v4092
    %v4095 = vadd.f32 %v4089, %v4093
    %s4096 = sld [smem:[#allocation2 + $0x33]]
    %v4097 = vstv %s4096
    %v4098 = vmul.f32 %v4097, %v3732
    %v4099 = vmul.f32 %v4097, %v3733
    %v4100 = vadd.f32 %v4094, %v4098
    %v4101 = vadd.f32 %v4095, %v4099
    %s4102 = sld [smem:[#allocation2 + $0x34]]
    %v4103 = vstv %s4102
    %v4104 = vmul.f32 %v4103, %v3820
    %v4105 = vmul.f32 %v4103, %v3821
    %v4106 = vadd.f32 %v4100, %v4104
    %v4107 = vadd.f32 %v4101, %v4105
    %s4108 = sld [smem:[#allocation2 + $0x35]]
    %v4109 = vstv %s4108
    %v4110 = vmul.f32 %v4109, %v3908
    %v4111 = vmul.f32 %v4109, %v3909
    %v4112 = vadd.f32 %v4106, %v4110
    %v4113 = vadd.f32 %v4107, %v4111
    %s4114 = sld [smem:[#allocation2 + $0x36]]
    %v4115 = vstv %s4114
    %v4116 = vmul.f32 %v4115, %v3996
    %v4117 = vmul.f32 %v4115, %v3997
    %v4118 = vadd.f32 %v4112, %v4116
    %v4119 = vadd.f32 %v4113, %v4117
    %s4120 = sld [smem:[#allocation2 + $0x37]]
    %v4121 = vstv %s4120
    %v4122 = vmul.f32 %v4121, %v4084
    %v4123 = vmul.f32 %v4121, %v4085
    %v4124 = vadd.f32 %v4118, %v4122
    %v4125 = vadd.f32 %v4119, %v4123
    %v4127 = vlaneseq
    %v4128 = vshrl.u32 %v4127, 7
    %v4129 = vsub.s32 0, %v4128
    %v4130 = vrot.slane %v3392, %v4129
    %v4131 = vlaneseq
    %v4132 = vshrl.u32 %v4131, 7
    %v4133 = vsub.s32 1, %v4132
    %v4134 = vrot.slane %v3392, %v4133
    %v4137 = vmul.f32 %v4124, %v4130
    %v4138 = vmul.f32 %v4125, %v4134
    %v4140 = vlaneseq
    %v4141 = vshrl.u32 %v4140, 7
    %v4142 = vsub.s32 0, %v4141
    %v4143 = vrot.slane %v3393, %v4142
    %v4144 = vlaneseq
    %v4145 = vshrl.u32 %v4144, 7
    %v4146 = vsub.s32 1, %v4145
    %v4147 = vrot.slane %v3393, %v4146
    %v4150 = vadd.f32 %v4137, %v4143
    %v4151 = vadd.f32 %v4138, %v4147
    %v4152 = vadd.f32 %v4150, 3.0
    %v4153 = vadd.f32 %v4151, 3.0
    %v4154 = vmax.f32 %v4152, 0.0
    %v4155 = vmax.f32 %v4153, 0.0
    %v4156 = vmin.f32 %v4154, 6.0
    %v4157 = vmin.f32 %v4155, 6.0
    %v4158 = vmul.f32 %v4150, %v4156
    %v4159 = vmul.f32 %v4151, %v4157
    %v4160 = vmul.f32 %v4158, 0.16666667
    %v4161 = vmul.f32 %v4159, 0.16666667
    %s4162 = sld [smem:[#allocation2 + $0x38]]
    %v4163 = vstv %s4162
    %v4164 = vmul.f32 %v4163, %v3556
    %v4165 = vmul.f32 %v4163, %v3557
    %s4166 = sld [smem:[#allocation2 + $0x39]]
    %v4167 = vstv %s4166
    %v4168 = vmul.f32 %v4167, %v3644
    %v4169 = vmul.f32 %v4167, %v3645
    %v4170 = vadd.f32 %v4164, %v4168
    %v4171 = vadd.f32 %v4165, %v4169
    %s4172 = sld [smem:[#allocation2 + $0x3a]]
    %v4173 = vstv %s4172
    %v4174 = vmul.f32 %v4173, %v3732
    %v4175 = vmul.f32 %v4173, %v3733
    %v4176 = vadd.f32 %v4170, %v4174
    %v4177 = vadd.f32 %v4171, %v4175
    %s4178 = sld [smem:[#allocation2 + $0x3b]]
    %v4179 = vstv %s4178
    %v4180 = vmul.f32 %v4179, %v3820
    %v4181 = vmul.f32 %v4179, %v3821
    %v4182 = vadd.f32 %v4176, %v4180
    %v4183 = vadd.f32 %v4177, %v4181
    %s4184 = sld [smem:[#allocation2 + $0x3c]]
    %v4185 = vstv %s4184
    %v4186 = vmul.f32 %v4185, %v3908
    %v4187 = vmul.f32 %v4185, %v3909
    %v4188 = vadd.f32 %v4182, %v4186
    %v4189 = vadd.f32 %v4183, %v4187
    %s4190 = sld [smem:[#allocation2 + $0x3d]]
    %v4191 = vstv %s4190
    %v4192 = vmul.f32 %v4191, %v3996
    %v4193 = vmul.f32 %v4191, %v3997
    %v4194 = vadd.f32 %v4188, %v4192
    %v4195 = vadd.f32 %v4189, %v4193
    %s4196 = sld [smem:[#allocation2 + $0x3e]]
    %v4197 = vstv %s4196
    %v4198 = vmul.f32 %v4197, %v4084
    %v4199 = vmul.f32 %v4197, %v4085
    %v4200 = vadd.f32 %v4194, %v4198
    %v4201 = vadd.f32 %v4195, %v4199
    %v4202 = vmul.f32 %v4200, %v4130
    %v4203 = vmul.f32 %v4201, %v4134
    %v4204 = vadd.f32 %v4202, %v4143
    %v4205 = vadd.f32 %v4203, %v4147
    %v4206 = vadd.f32 %v4204, 3.0
    %v4207 = vadd.f32 %v4205, 3.0
    %v4208 = vmax.f32 %v4206, 0.0
    %v4209 = vmax.f32 %v4207, 0.0
    %v4210 = vmin.f32 %v4208, 6.0
    %v4211 = vmin.f32 %v4209, 6.0
    %v4212 = vmul.f32 %v4204, %v4210
    %v4213 = vmul.f32 %v4205, %v4211
    %v4214 = vmul.f32 %v4212, 0.16666667
    %v4215 = vmul.f32 %v4213, 0.16666667
    %s4216 = sld [smem:[#allocation2 + $0x3f]]
    %v4217 = vstv %s4216
    %v4218 = vmul.f32 %v4217, %v3556
    %v4219 = vmul.f32 %v4217, %v3557
    %s4220 = sld [smem:[#allocation2 + $0x40]]
    %v4221 = vstv %s4220
    %v4222 = vmul.f32 %v4221, %v3644
    %v4223 = vmul.f32 %v4221, %v3645
    %v4224 = vadd.f32 %v4218, %v4222
    %v4225 = vadd.f32 %v4219, %v4223
    %s4226 = sld [smem:[#allocation2 + $0x41]]
    %v4227 = vstv %s4226
    %v4228 = vmul.f32 %v4227, %v3732
    %v4229 = vmul.f32 %v4227, %v3733
    %v4230 = vadd.f32 %v4224, %v4228
    %v4231 = vadd.f32 %v4225, %v4229
    %s4232 = sld [smem:[#allocation2 + $0x42]]
    %v4233 = vstv %s4232
    %v4234 = vmul.f32 %v4233, %v3820
    %v4235 = vmul.f32 %v4233, %v3821
    %v4236 = vadd.f32 %v4230, %v4234
    %v4237 = vadd.f32 %v4231, %v4235
    %s4238 = sld [smem:[#allocation2 + $0x43]]
    %v4239 = vstv %s4238
    %v4240 = vmul.f32 %v4239, %v3908
    %v4241 = vmul.f32 %v4239, %v3909
    %v4242 = vadd.f32 %v4236, %v4240
    %v4243 = vadd.f32 %v4237, %v4241
    %s4244 = sld [smem:[#allocation2 + $0x44]]
    %v4245 = vstv %s4244
    %v4246 = vmul.f32 %v4245, %v3996
    %v4247 = vmul.f32 %v4245, %v3997
    %v4248 = vadd.f32 %v4242, %v4246
    %v4249 = vadd.f32 %v4243, %v4247
    %s4250 = sld [smem:[#allocation2 + $0x45]]
    %v4251 = vstv %s4250
    %v4252 = vmul.f32 %v4251, %v4084
    %v4253 = vmul.f32 %v4251, %v4085
    %v4254 = vadd.f32 %v4248, %v4252
    %v4255 = vadd.f32 %v4249, %v4253
    %v4256 = vmul.f32 %v4254, %v4130
    %v4257 = vmul.f32 %v4255, %v4134
    %v4258 = vadd.f32 %v4256, %v4143
    %v4259 = vadd.f32 %v4257, %v4147
    %v4260 = vadd.f32 %v4258, 3.0
    %v4261 = vadd.f32 %v4259, 3.0
    %v4262 = vmax.f32 %v4260, 0.0
    %v4263 = vmax.f32 %v4261, 0.0
    %v4264 = vmin.f32 %v4262, 6.0
    %v4265 = vmin.f32 %v4263, 6.0
    %v4266 = vmul.f32 %v4258, %v4264
    %v4267 = vmul.f32 %v4259, %v4265
    %v4268 = vmul.f32 %v4266, 0.16666667
    %v4269 = vmul.f32 %v4267, 0.16666667
    %s4270 = sld [smem:[#allocation2 + $0x46]]
    %v4271 = vstv %s4270
    %v4272 = vmul.f32 %v4271, %v3556
    %v4273 = vmul.f32 %v4271, %v3557
    %s4274 = sld [smem:[#allocation2 + $0x47]]
    %v4275 = vstv %s4274
    %v4276 = vmul.f32 %v4275, %v3644
    %v4277 = vmul.f32 %v4275, %v3645
    %v4278 = vadd.f32 %v4272, %v4276
    %v4279 = vadd.f32 %v4273, %v4277
    %s4280 = sld [smem:[#allocation2 + $0x48]]
    %v4281 = vstv %s4280
    %v4282 = vmul.f32 %v4281, %v3732
    %v4283 = vmul.f32 %v4281, %v3733
    %v4284 = vadd.f32 %v4278, %v4282
    %v4285 = vadd.f32 %v4279, %v4283
    %s4286 = sld [smem:[#allocation2 + $0x49]]
    %v4287 = vstv %s4286
    %v4288 = vmul.f32 %v4287, %v3820
    %v4289 = vmul.f32 %v4287, %v3821
    %v4290 = vadd.f32 %v4284, %v4288
    %v4291 = vadd.f32 %v4285, %v4289
    %s4292 = sld [smem:[#allocation2 + $0x4a]]
    %v4293 = vstv %s4292
    %v4294 = vmul.f32 %v4293, %v3908
    %v4295 = vmul.f32 %v4293, %v3909
    %v4296 = vadd.f32 %v4290, %v4294
    %v4297 = vadd.f32 %v4291, %v4295
    %s4298 = sld [smem:[#allocation2 + $0x4b]]
    %v4299 = vstv %s4298
    %v4300 = vmul.f32 %v4299, %v3996
    %v4301 = vmul.f32 %v4299, %v3997
    %v4302 = vadd.f32 %v4296, %v4300
    %v4303 = vadd.f32 %v4297, %v4301
    %s4304 = sld [smem:[#allocation2 + $0x4c]]
    %v4305 = vstv %s4304
    %v4306 = vmul.f32 %v4305, %v4084
    %v4307 = vmul.f32 %v4305, %v4085
    %v4308 = vadd.f32 %v4302, %v4306
    %v4309 = vadd.f32 %v4303, %v4307
    %v4310 = vmul.f32 %v4308, %v4130
    %v4311 = vmul.f32 %v4309, %v4134
    %v4312 = vadd.f32 %v4310, %v4143
    %v4313 = vadd.f32 %v4311, %v4147
    %v4314 = vadd.f32 %v4312, 3.0
    %v4315 = vadd.f32 %v4313, 3.0
    %v4316 = vmax.f32 %v4314, 0.0
    %v4317 = vmax.f32 %v4315, 0.0
    %v4318 = vmin.f32 %v4316, 6.0
    %v4319 = vmin.f32 %v4317, 6.0
    %v4320 = vmul.f32 %v4312, %v4318
    %v4321 = vmul.f32 %v4313, %v4319
    %v4322 = vmul.f32 %v4320, 0.16666667
    %v4323 = vmul.f32 %v4321, 0.16666667
    %s4324 = sld [smem:[#allocation2 + $0x4d]]
    %v4325 = vstv %s4324
    %v4326 = vmul.f32 %v4325, %v3556
    %v4327 = vmul.f32 %v4325, %v3557
    %s4328 = sld [smem:[#allocation2 + $0x4e]]
    %v4329 = vstv %s4328
    %v4330 = vmul.f32 %v4329, %v3644
    %v4331 = vmul.f32 %v4329, %v3645
    %v4332 = vadd.f32 %v4326, %v4330
    %v4333 = vadd.f32 %v4327, %v4331
    %s4334 = sld [smem:[#allocation2 + $0x4f]]
    %v4335 = vstv %s4334
    %v4336 = vmul.f32 %v4335, %v3732
    %v4337 = vmul.f32 %v4335, %v3733
    %v4338 = vadd.f32 %v4332, %v4336
    %v4339 = vadd.f32 %v4333, %v4337
    %s4340 = sld [smem:[#allocation2 + $0x50]]
    %v4341 = vstv %s4340
    %v4342 = vmul.f32 %v4341, %v3820
    %v4343 = vmul.f32 %v4341, %v3821
    %v4344 = vadd.f32 %v4338, %v4342
    %v4345 = vadd.f32 %v4339, %v4343
    %s4346 = sld [smem:[#allocation2 + $0x51]]
    %v4347 = vstv %s4346
    %v4348 = vmul.f32 %v4347, %v3908
    %v4349 = vmul.f32 %v4347, %v3909
    %v4350 = vadd.f32 %v4344, %v4348
    %v4351 = vadd.f32 %v4345, %v4349
    %s4352 = sld [smem:[#allocation2 + $0x52]]
    %v4353 = vstv %s4352
    %v4354 = vmul.f32 %v4353, %v3996
    %v4355 = vmul.f32 %v4353, %v3997
    %v4356 = vadd.f32 %v4350, %v4354
    %v4357 = vadd.f32 %v4351, %v4355
    %s4358 = sld [smem:[#allocation2 + $0x53]]
    %v4359 = vstv %s4358
    %v4360 = vmul.f32 %v4359, %v4084
    %v4361 = vmul.f32 %v4359, %v4085
    %v4362 = vadd.f32 %v4356, %v4360
    %v4363 = vadd.f32 %v4357, %v4361
    %v4364 = vmul.f32 %v4362, %v4130
    %v4365 = vmul.f32 %v4363, %v4134
    %v4366 = vadd.f32 %v4364, %v4143
    %v4367 = vadd.f32 %v4365, %v4147
    %v4368 = vadd.f32 %v4366, 3.0
    %v4369 = vadd.f32 %v4367, 3.0
    %v4370 = vmax.f32 %v4368, 0.0
    %v4371 = vmax.f32 %v4369, 0.0
    %v4372 = vmin.f32 %v4370, 6.0
    %v4373 = vmin.f32 %v4371, 6.0
    %v4374 = vmul.f32 %v4366, %v4372
    %v4375 = vmul.f32 %v4367, %v4373
    %v4376 = vmul.f32 %v4374, 0.16666667
    %v4377 = vmul.f32 %v4375, 0.16666667
    %s4378 = sld [smem:[#allocation2 + $0x54]]
    %v4379 = vstv %s4378
    %v4380 = vmul.f32 %v4379, %v3556
    %v4381 = vmul.f32 %v4379, %v3557
    %s4382 = sld [smem:[#allocation2 + $0x55]]
    %v4383 = vstv %s4382
    %v4384 = vmul.f32 %v4383, %v3644
    %v4385 = vmul.f32 %v4383, %v3645
    %v4386 = vadd.f32 %v4380, %v4384
    %v4387 = vadd.f32 %v4381, %v4385
    %s4388 = sld [smem:[#allocation2 + $0x56]]
    %v4389 = vstv %s4388
    %v4390 = vmul.f32 %v4389, %v3732
    %v4391 = vmul.f32 %v4389, %v3733
    %v4392 = vadd.f32 %v4386, %v4390
    %v4393 = vadd.f32 %v4387, %v4391
    %s4394 = sld [smem:[#allocation2 + $0x57]]
    %v4395 = vstv %s4394
    %v4396 = vmul.f32 %v4395, %v3820
    %v4397 = vmul.f32 %v4395, %v3821
    %v4398 = vadd.f32 %v4392, %v4396
    %v4399 = vadd.f32 %v4393, %v4397
    %s4400 = sld [smem:[#allocation2 + $0x58]]
    %v4401 = vstv %s4400
    %v4402 = vmul.f32 %v4401, %v3908
    %v4403 = vmul.f32 %v4401, %v3909
    %v4404 = vadd.f32 %v4398, %v4402
    %v4405 = vadd.f32 %v4399, %v4403
    %s4406 = sld [smem:[#allocation2 + $0x59]]
    %v4407 = vstv %s4406
    %v4408 = vmul.f32 %v4407, %v3996
    %v4409 = vmul.f32 %v4407, %v3997
    %v4410 = vadd.f32 %v4404, %v4408
    %v4411 = vadd.f32 %v4405, %v4409
    %s4412 = sld [smem:[#allocation2 + $0x5a]]
    %v4413 = vstv %s4412
    %v4414 = vmul.f32 %v4413, %v4084
    %v4415 = vmul.f32 %v4413, %v4085
    %v4416 = vadd.f32 %v4410, %v4414
    %v4417 = vadd.f32 %v4411, %v4415
    %v4418 = vmul.f32 %v4416, %v4130
    %v4419 = vmul.f32 %v4417, %v4134
    %v4420 = vadd.f32 %v4418, %v4143
    %v4421 = vadd.f32 %v4419, %v4147
    %v4422 = vadd.f32 %v4420, 3.0
    %v4423 = vadd.f32 %v4421, 3.0
    %v4424 = vmax.f32 %v4422, 0.0
    %v4425 = vmax.f32 %v4423, 0.0
    %v4426 = vmin.f32 %v4424, 6.0
    %v4427 = vmin.f32 %v4425, 6.0
    %v4428 = vmul.f32 %v4420, %v4426
    %v4429 = vmul.f32 %v4421, %v4427
    %v4430 = vmul.f32 %v4428, 0.16666667
    %v4431 = vmul.f32 %v4429, 0.16666667
    %s4432 = sld [smem:[#allocation2 + $0x5b]]
    %v4433 = vstv %s4432
    %v4434 = vmul.f32 %v4433, %v3556
    %v4435 = vmul.f32 %v4433, %v3557
    %s4436 = sld [smem:[#allocation2 + $0x5c]]
    %v4437 = vstv %s4436
    %v4438 = vmul.f32 %v4437, %v3644
    %v4439 = vmul.f32 %v4437, %v3645
    %v4440 = vadd.f32 %v4434, %v4438
    %v4441 = vadd.f32 %v4435, %v4439
    %s4442 = sld [smem:[#allocation2 + $0x5d]]
    %v4443 = vstv %s4442
    %v4444 = vmul.f32 %v4443, %v3732
    %v4445 = vmul.f32 %v4443, %v3733
    %v4446 = vadd.f32 %v4440, %v4444
    %v4447 = vadd.f32 %v4441, %v4445
    %s4448 = sld [smem:[#allocation2 + $0x5e]]
    %v4449 = vstv %s4448
    %v4450 = vmul.f32 %v4449, %v3820
    %v4451 = vmul.f32 %v4449, %v3821
    %v4452 = vadd.f32 %v4446, %v4450
    %v4453 = vadd.f32 %v4447, %v4451
    %s4454 = sld [smem:[#allocation2 + $0x5f]]
    %v4455 = vstv %s4454
    %v4456 = vmul.f32 %v4455, %v3908
    %v4457 = vmul.f32 %v4455, %v3909
    %v4458 = vadd.f32 %v4452, %v4456
    %v4459 = vadd.f32 %v4453, %v4457
    %s4460 = sld [smem:[#allocation2 + $0x60]]
    %v4461 = vstv %s4460
    %v4462 = vmul.f32 %v4461, %v3996
    %v4463 = vmul.f32 %v4461, %v3997
    %v4464 = vadd.f32 %v4458, %v4462
    %v4465 = vadd.f32 %v4459, %v4463
    %s4466 = sld [smem:[#allocation2 + $0x61]]
    %v4467 = vstv %s4466
    %v4468 = vmul.f32 %v4467, %v4084
    %v4469 = vmul.f32 %v4467, %v4085
    %v4470 = vadd.f32 %v4464, %v4468
    %v4471 = vadd.f32 %v4465, %v4469
    %v4472 = vmul.f32 %v4470, %v4130
    %v4473 = vmul.f32 %v4471, %v4134
    %v4474 = vadd.f32 %v4472, %v4143
    %v4475 = vadd.f32 %v4473, %v4147
    %v4476 = vadd.f32 %v4474, 3.0
    %v4477 = vadd.f32 %v4475, 3.0
    %v4478 = vmax.f32 %v4476, 0.0
    %v4479 = vmax.f32 %v4477, 0.0
    %v4480 = vmin.f32 %v4478, 6.0
    %v4481 = vmin.f32 %v4479, 6.0
    %v4482 = vmul.f32 %v4474, %v4480
    %v4483 = vmul.f32 %v4475, %v4481
    %v4484 = vmul.f32 %v4482, 0.16666667
    %v4485 = vmul.f32 %v4483, 0.16666667
    %v4486 = vmax.f32 %v4160, %v4214
    %v4487 = vmax.f32 %v4161, %v4215
    %v4488 = vmax.f32 %v4486, %v4268
    %v4489 = vmax.f32 %v4487, %v4269
    %v4490 = vmax.f32 %v4488, %v4322
    %v4491 = vmax.f32 %v4489, %v4323
    %v4492 = vmax.f32 %v4490, %v4376
    %v4493 = vmax.f32 %v4491, %v4377
    %v4494 = vmax.f32 %v4492, %v4430
    %v4495 = vmax.f32 %v4493, %v4431
    %v4496 = vmax.f32 %v4494, %v4484
    %v4497 = vmax.f32 %v4495, %v4485
    %v4499 = vlaneseq
    %v4500 = vshrl.u32 %v4499, 7
    %v4501 = vsub.s32 0, %v4500
    %v4502 = vrot.slane %v3414, %v4501
    %v4505 = vsel %vm2642, %v4497, 0
    %v4508 = vsel %vm2646, %v3413, 0
    %4510 = vmatprep.subr.mxu0 0.0
    %4511 = vmatpush1.msra.mxu0 %v3394
    %4512 = vmatprep.subr.mxu0 0.0
    %4513 = vmatpush1.msra.mxu0 %v3395
    %4514 = vmatprep.subr.mxu0 0.0
    %4515 = vmatpush1.msra.mxu0 %v3396
    %4516 = vmatprep.subr.mxu0 0.0
    %4517 = vmatpush1.msra.mxu0 %v3397
    %4518 = vmatprep.subr.mxu0 0.0
    %4519 = vmatpush1.msra.mxu0 %v3398
    %4520 = vmatprep.subr.mxu0 0.0
    %4521 = vmatpush1.msra.mxu0 %v3399
    %4522 = vmatprep.subr.mxu0 0.0
    %4523 = vmatpush1.msra.mxu0 %v3400
    %4524 = vmatprep.subr.mxu0 0.0
    %4525 = vmatpush1.msra.mxu0 %v3401
    %4526 = vmatprep.subr.mxu0 0.0
    %4527 = vmatpush1.msra.mxu0 %v3402
    %4528 = vmatprep.subr.mxu0 0.0
    %4529 = vmatpush1.msra.mxu0 %v3403
    %4530 = vmatprep.subr.mxu0 0.0
    %4531 = vmatpush1.msra.mxu0 %v3404
    %4532 = vmatprep.subr.mxu0 0.0
    %4533 = vmatpush1.msra.mxu0 %v3405
    %4534 = vmatprep.subr.mxu0 0.0
    %4535 = vmatpush1.msra.mxu0 %v3406
    %4536 = vmatprep.subr.mxu0 0.0
    %4537 = vmatpush1.msra.mxu0 %v3407
    %4538 = vmatprep.subr.mxu0 0.0
    %4539 = vmatpush1.msra.mxu0 %v3408
    %4540 = vmatprep.subr.mxu0 0.0
    %4541 = vmatpush1.msra.mxu0 %v3409
    %4542 = vmatprep.subr.mxu0 0.0
    %4543 = vmatpush1.msra.mxu0 %v3410
    %4544 = vmatprep.subr.mxu0 0.0
    %4545 = vmatpush1.msra.mxu0 %v3411
    %4546 = vmatprep.subr.mxu0 0.0
    %4547 = vmatpush1.msra.mxu0 %v3412
    %4548 = vmatprep.subr.mxu0 0.0
    %4549 = vmatpush1.msra.mxu0 %v4508
    %4550 = vmatprep.subr.mxu0 0.0
    %4551 = vmatpush1.msra.mxu0 0.0
    %4552 = vmatprep.subr.mxu0 0.0
    %4553 = vmatpush1.msra.mxu0 0.0
    %4554 = vmatprep.subr.mxu0 0.0
    %4555 = vmatpush1.msra.mxu0 0.0
    %4556 = vmatprep.subr.mxu0 0.0
    %4557 = vmatpush1.msra.mxu0 0.0
    %4558 = vmatprep.subr.mxu0 0.0
    %4559 = vmatpush1.msra.mxu0 0.0
    %4560 = vmatprep.subr.mxu0 0.0
    %4561 = vmatpush1.msra.mxu0 0.0
    %4562 = vmatprep.subr.mxu0 0.0
    %4563 = vmatpush1.msra.mxu0 0.0
    %4564 = vmatprep.subr.mxu0 0.0
    %4565 = vmatpush1.msra.mxu0 0.0
    %4566 = vmatprep.subr.mxu0 0.0
    %4567 = vmatpush1.msra.mxu0 0.0
    %4568 = vmatprep.subr.mxu0 0.0
    %4569 = vmatpush1.msra.mxu0 0.0
    %4570 = vmatprep.subr.mxu0 0.0
    %4571 = vmatpush1.msra.mxu0 0.0
    %4572 = vmatprep.subr.mxu0 0.0
    %4573 = vmatpush1.msra.mxu0 0.0
    %4574 = vmatprep.mubr.f32.mxu0 %v4505
    %4575 = vmatmul.mubr.f32.gmra.mrb[0].mxu0 %v4496
    %v4576 = vpop.f32.mrb[0].mxu0
    %v4577 = vadd.f32 %v4502, %v4576
    %v4578 = vpop.f32.mrb[0].mxu0
    %4579 = vdwg.mxu0
    %v4580 = vmax.f32 %v4577, 0.0
    %v4582 = vlaneseq
    %v4583 = vshrl.u32 %v4582, 7
    %v4584 = vsub.s32 0, %v4583
    %v4585 = vrot.slane %v3425, %v4584
    %v4586 = vlaneseq
    %v4587 = vshrl.u32 %v4586, 7
    %v4588 = vsub.s32 1, %v4587
    %v4589 = vrot.slane %v3425, %v4588
    %v4593 = vsel %vm2732, %v4580, 0
    %4595 = vmatprep.subr.mxu0 %v3416
    %4596 = vmatpush1.msra.mxu0 %v3415
    %4597 = vmatprep.subr.mxu0 %v3418
    %4598 = vmatpush1.msra.mxu0 %v3417
    %4599 = vmatprep.subr.mxu0 %v3420
    %4600 = vmatpush1.msra.mxu0 %v3419
    %4601 = vmatprep.subr.mxu0 %v3422
    %4602 = vmatpush1.msra.mxu0 %v3421
    %4603 = vmatprep.subr.mxu0 %v3424
    %4604 = vmatpush1.msra.mxu0 %v3423
    %4605 = vmatprep.subr.mxu0 0.0
    %4606 = vmatpush1.msra.mxu0 0.0
    %4607 = vmatprep.subr.mxu0 0.0
    %4608 = vmatpush1.msra.mxu0 0.0
    %4609 = vmatprep.subr.mxu0 0.0
    %4610 = vmatpush1.msra.mxu0 0.0
    %4611 = vmatprep.subr.mxu0 0.0
    %4612 = vmatpush1.msra.mxu0 0.0
    %4613 = vmatprep.subr.mxu0 0.0
    %4614 = vmatpush1.msra.mxu0 0.0
    %4615 = vmatprep.subr.mxu0 0.0
    %4616 = vmatpush1.msra.mxu0 0.0
    %4617 = vmatprep.subr.mxu0 0.0
    %4618 = vmatpush1.msra.mxu0 0.0
    %4619 = vmatprep.subr.mxu0 0.0
    %4620 = vmatpush1.msra.mxu0 0.0
    %4621 = vmatprep.subr.mxu0 0.0
    %4622 = vmatpush1.msra.mxu0 0.0
    %4623 = vmatprep.subr.mxu0 0.0
    %4624 = vmatpush1.msra.mxu0 0.0
    %4625 = vmatprep.subr.mxu0 0.0
    %4626 = vmatpush1.msra.mxu0 0.0
    %4627 = vmatprep.subr.mxu0 0.0
    %4628 = vmatpush1.msra.mxu0 0.0
    %4629 = vmatprep.subr.mxu0 0.0
    %4630 = vmatpush1.msra.mxu0 0.0
    %4631 = vmatprep.subr.mxu0 0.0
    %4632 = vmatpush1.msra.mxu0 0.0
    %4633 = vmatprep.subr.mxu0 0.0
    %4634 = vmatpush1.msra.mxu0 0.0
    %4635 = vmatprep.subr.mxu0 0.0
    %4636 = vmatpush1.msra.mxu0 0.0
    %4637 = vmatprep.subr.mxu0 0.0
    %4638 = vmatpush1.msra.mxu0 0.0
    %4639 = vmatprep.subr.mxu0 0.0
    %4640 = vmatpush1.msra.mxu0 0.0
    %4641 = vmatprep.subr.mxu0 0.0
    %4642 = vmatpush1.msra.mxu0 0.0
    %4643 = vmatprep.subr.mxu0 0.0
    %4644 = vmatpush1.msra.mxu0 0.0
    %4645 = vmatprep.subr.mxu0 0.0
    %4646 = vmatpush1.msra.mxu0 0.0
    %4647 = vmatprep.subr.mxu0 0.0
    %4648 = vmatpush1.msra.mxu0 0.0
    %4649 = vmatprep.subr.mxu0 0.0
    %4650 = vmatpush1.msra.mxu0 0.0
    %4651 = vmatprep.subr.mxu0 0.0
    %4652 = vmatpush1.msra.mxu0 0.0
    %4653 = vmatprep.subr.mxu0 0.0
    %4654 = vmatpush1.msra.mxu0 0.0
    %4655 = vmatprep.subr.mxu0 0.0
    %4656 = vmatpush1.msra.mxu0 0.0
    %4657 = vmatprep.subr.mxu0 0.0
    %4658 = vmatpush1.msra.mxu0 0.0
    %4659 = vmatprep.mubr.f32.mxu0 0.0
    %4660 = vmatmul.mubr.f32.gmra.mrb[0].mxu0 %v4593
    %v4661 = vpop.f32.mrb[0].mxu0
    %v4662 = vadd.f32 %v4585, %v4661
    %v4663 = vpop.f32.mrb[0].mxu0
    %v4664 = vadd.f32 %v4589, %v4663
    %4665 = vdwg.mxu0
    %v4666 = vadd.f32 %v4662, 3.0
    %v4667 = vadd.f32 %v4664, 3.0
    %v4668 = vmax.f32 %v4666, 0.0
    %v4669 = vmax.f32 %v4667, 0.0
    %v4670 = vmin.f32 %v4668, 6.0
    %v4671 = vmin.f32 %v4669, 6.0
    %v4672 = vmul.f32 %v4670, 0.16666667
    %v4673 = vmul.f32 %v4671, 0.16666667
    %v4674 = vmul.f32 %v4160, %v4672
    %v4675 = vmul.f32 %v4161, %v4673
    %v4677 = vsel %vm2642, %v4675, 0
    %v4680 = vsel %vm2646, %v3445, 0
    %4682 = vmatprep.subr.mxu0 0.0
    %4683 = vmatpush1.msra.mxu0 %v3426
    %4684 = vmatprep.subr.mxu0 0.0
    %4685 = vmatpush1.msra.mxu0 %v3427
    %4686 = vmatprep.subr.mxu0 0.0
    %4687 = vmatpush1.msra.mxu0 %v3428
    %4688 = vmatprep.subr.mxu0 0.0
    %4689 = vmatpush1.msra.mxu0 %v3429
    %4690 = vmatprep.subr.mxu0 0.0
    %4691 = vmatpush1.msra.mxu0 %v3430
    %4692 = vmatprep.subr.mxu0 0.0
    %4693 = vmatpush1.msra.mxu0 %v3431
    %4694 = vmatprep.subr.mxu0 0.0
    %4695 = vmatpush1.msra.mxu0 %v3432
    %4696 = vmatprep.subr.mxu0 0.0
    %4697 = vmatpush1.msra.mxu0 %v3433
    %4698 = vmatprep.subr.mxu0 0.0
    %4699 = vmatpush1.msra.mxu0 %v3434
    %4700 = vmatprep.subr.mxu0 0.0
    %4701 = vmatpush1.msra.mxu0 %v3435
    %4702 = vmatprep.subr.mxu0 0.0
    %4703 = vmatpush1.msra.mxu0 %v3436
    %4704 = vmatprep.subr.mxu0 0.0
    %4705 = vmatpush1.msra.mxu0 %v3437
    %4706 = vmatprep.subr.mxu0 0.0
    %4707 = vmatpush1.msra.mxu0 %v3438
    %4708 = vmatprep.subr.mxu0 0.0
    %4709 = vmatpush1.msra.mxu0 %v3439
    %4710 = vmatprep.subr.mxu0 0.0
    %4711 = vmatpush1.msra.mxu0 %v3440
    %4712 = vmatprep.subr.mxu0 0.0
    %4713 = vmatpush1.msra.mxu0 %v3441
    %4714 = vmatprep.subr.mxu0 0.0
    %4715 = vmatpush1.msra.mxu0 %v3442
    %4716 = vmatprep.subr.mxu0 0.0
    %4717 = vmatpush1.msra.mxu0 %v3443
    %4718 = vmatprep.subr.mxu0 0.0
    %4719 = vmatpush1.msra.mxu0 %v3444
    %4720 = vmatprep.subr.mxu0 0.0
    %4721 = vmatpush1.msra.mxu0 %v4680
    %4722 = vmatprep.subr.mxu0 0.0
    %4723 = vmatpush1.msra.mxu0 0.0
    %4724 = vmatprep.subr.mxu0 0.0
    %4725 = vmatpush1.msra.mxu0 0.0
    %4726 = vmatprep.subr.mxu0 0.0
    %4727 = vmatpush1.msra.mxu0 0.0
    %4728 = vmatprep.subr.mxu0 0.0
    %4729 = vmatpush1.msra.mxu0 0.0
    %4730 = vmatprep.subr.mxu0 0.0
    %4731 = vmatpush1.msra.mxu0 0.0
    %4732 = vmatprep.subr.mxu0 0.0
    %4733 = vmatpush1.msra.mxu0 0.0
    %4734 = vmatprep.subr.mxu0 0.0
    %4735 = vmatpush1.msra.mxu0 0.0
    %4736 = vmatprep.subr.mxu0 0.0
    %4737 = vmatpush1.msra.mxu0 0.0
    %4738 = vmatprep.subr.mxu0 0.0
    %4739 = vmatpush1.msra.mxu0 0.0
    %4740 = vmatprep.subr.mxu0 0.0
    %4741 = vmatpush1.msra.mxu0 0.0
    %4742 = vmatprep.subr.mxu0 0.0
    %4743 = vmatpush1.msra.mxu0 0.0
    %4744 = vmatprep.subr.mxu0 0.0
    %4745 = vmatpush1.msra.mxu0 0.0
    %4746 = vmatprep.mubr.f32.mxu0 %v4677
    %4747 = vmatmul.mubr.f32.gmra.mrb[0].mxu0 %v4674
    %v4748 = vpop.f32.mrb[0].mxu0
    %v4749 = vadd.f32 0.0, %v4748
    %v4750 = vpop.f32.mrb[0].mxu0
    %4751 = vdwg.mxu0
    %v4753 = vlaneseq
    %v4754 = vshrl.u32 %v4753, 7
    %v4755 = vsub.s32 0, %v4754
    %v4756 = vrot.slane %v3446, %v4755
    %v4758 = vmul.f32 %v4749, %v4756
    %v4760 = vlaneseq
    %v4761 = vshrl.u32 %v4760, 7
    %v4762 = vsub.s32 0, %v4761
    %v4763 = vrot.slane %v3447, %v4762
    %v4765 = vadd.f32 %v4758, %v4763
    %v4766 = vadd.f32 %v4765, %v2907
    %v4767 = vmul.f32 %v4214, %v4672
    %v4768 = vmul.f32 %v4215, %v4673
    %v4770 = vsel %vm2642, %v4768, 0
    %4772 = vmatprep.subr.mxu0 0.0
    %4773 = vmatpush1.msra.mxu0 %v3426
    %4774 = vmatprep.subr.mxu0 0.0
    %4775 = vmatpush1.msra.mxu0 %v3427
    %4776 = vmatprep.subr.mxu0 0.0
    %4777 = vmatpush1.msra.mxu0 %v3428
    %4778 = vmatprep.subr.mxu0 0.0
    %4779 = vmatpush1.msra.mxu0 %v3429
    %4780 = vmatprep.subr.mxu0 0.0
    %4781 = vmatpush1.msra.mxu0 %v3430
    %4782 = vmatprep.subr.mxu0 0.0
    %4783 = vmatpush1.msra.mxu0 %v3431
    %4784 = vmatprep.subr.mxu0 0.0
    %4785 = vmatpush1.msra.mxu0 %v3432
    %4786 = vmatprep.subr.mxu0 0.0
    %4787 = vmatpush1.msra.mxu0 %v3433
    %4788 = vmatprep.subr.mxu0 0.0
    %4789 = vmatpush1.msra.mxu0 %v3434
    %4790 = vmatprep.subr.mxu0 0.0
    %4791 = vmatpush1.msra.mxu0 %v3435
    %4792 = vmatprep.subr.mxu0 0.0
    %4793 = vmatpush1.msra.mxu0 %v3436
    %4794 = vmatprep.subr.mxu0 0.0
    %4795 = vmatpush1.msra.mxu0 %v3437
    %4796 = vmatprep.subr.mxu0 0.0
    %4797 = vmatpush1.msra.mxu0 %v3438
    %4798 = vmatprep.subr.mxu0 0.0
    %4799 = vmatpush1.msra.mxu0 %v3439
    %4800 = vmatprep.subr.mxu0 0.0
    %4801 = vmatpush1.msra.mxu0 %v3440
    %4802 = vmatprep.subr.mxu0 0.0
    %4803 = vmatpush1.msra.mxu0 %v3441
    %4804 = vmatprep.subr.mxu0 0.0
    %4805 = vmatpush1.msra.mxu0 %v3442
    %4806 = vmatprep.subr.mxu0 0.0
    %4807 = vmatpush1.msra.mxu0 %v3443
    %4808 = vmatprep.subr.mxu0 0.0
    %4809 = vmatpush1.msra.mxu0 %v3444
    %4810 = vmatprep.subr.mxu0 0.0
    %4811 = vmatpush1.msra.mxu0 %v4680
    %4812 = vmatprep.subr.mxu0 0.0
    %4813 = vmatpush1.msra.mxu0 0.0
    %4814 = vmatprep.subr.mxu0 0.0
    %4815 = vmatpush1.msra.mxu0 0.0
    %4816 = vmatprep.subr.mxu0 0.0
    %4817 = vmatpush1.msra.mxu0 0.0
    %4818 = vmatprep.subr.mxu0 0.0
    %4819 = vmatpush1.msra.mxu0 0.0
    %4820 = vmatprep.subr.mxu0 0.0
    %4821 = vmatpush1.msra.mxu0 0.0
    %4822 = vmatprep.subr.mxu0 0.0
    %4823 = vmatpush1.msra.mxu0 0.0
    %4824 = vmatprep.subr.mxu0 0.0
    %4825 = vmatpush1.msra.mxu0 0.0
    %4826 = vmatprep.subr.mxu0 0.0
    %4827 = vmatpush1.msra.mxu0 0.0
    %4828 = vmatprep.subr.mxu0 0.0
    %4829 = vmatpush1.msra.mxu0 0.0
    %4830 = vmatprep.subr.mxu0 0.0
    %4831 = vmatpush1.msra.mxu0 0.0
    %4832 = vmatprep.subr.mxu0 0.0
    %4833 = vmatpush1.msra.mxu0 0.0
    %4834 = vmatprep.subr.mxu0 0.0
    %4835 = vmatpush1.msra.mxu0 0.0
    %4836 = vmatprep.mubr.f32.mxu0 %v4770
    %4837 = vmatmul.mubr.f32.gmra.mrb[0].mxu0 %v4767
    %v4838 = vpop.f32.mrb[0].mxu0
    %v4839 = vadd.f32 0.0, %v4838
    %v4840 = vpop.f32.mrb[0].mxu0
    %4841 = vdwg.mxu0
    %v4842 = vmul.f32 %v4839, %v4756
    %v4843 = vadd.f32 %v4842, %v4763
    %v4844 = vadd.f32 %v4843, %v2985
    %v4845 = vmul.f32 %v4268, %v4672
    %v4846 = vmul.f32 %v4269, %v4673
    %v4848 = vsel %vm2642, %v4846, 0
    %4850 = vmatprep.subr.mxu0 0.0
    %4851 = vmatpush1.msra.mxu0 %v3426
    %4852 = vmatprep.subr.mxu0 0.0
    %4853 = vmatpush1.msra.mxu0 %v3427
    %4854 = vmatprep.subr.mxu0 0.0
    %4855 = vmatpush1.msra.mxu0 %v3428
    %4856 = vmatprep.subr.mxu0 0.0
    %4857 = vmatpush1.msra.mxu0 %v3429
    %4858 = vmatprep.subr.mxu0 0.0
    %4859 = vmatpush1.msra.mxu0 %v3430
    %4860 = vmatprep.subr.mxu0 0.0
    %4861 = vmatpush1.msra.mxu0 %v3431
    %4862 = vmatprep.subr.mxu0 0.0
    %4863 = vmatpush1.msra.mxu0 %v3432
    %4864 = vmatprep.subr.mxu0 0.0
    %4865 = vmatpush1.msra.mxu0 %v3433
    %4866 = vmatprep.subr.mxu0 0.0
    %4867 = vmatpush1.msra.mxu0 %v3434
    %4868 = vmatprep.subr.mxu0 0.0
    %4869 = vmatpush1.msra.mxu0 %v3435
    %4870 = vmatprep.subr.mxu0 0.0
    %4871 = vmatpush1.msra.mxu0 %v3436
    %4872 = vmatprep.subr.mxu0 0.0
    %4873 = vmatpush1.msra.mxu0 %v3437
    %4874 = vmatprep.subr.mxu0 0.0
    %4875 = vmatpush1.msra.mxu0 %v3438
    %4876 = vmatprep.subr.mxu0 0.0
    %4877 = vmatpush1.msra.mxu0 %v3439
    %4878 = vmatprep.subr.mxu0 0.0
    %4879 = vmatpush1.msra.mxu0 %v3440
    %4880 = vmatprep.subr.mxu0 0.0
    %4881 = vmatpush1.msra.mxu0 %v3441
    %4882 = vmatprep.subr.mxu0 0.0
    %4883 = vmatpush1.msra.mxu0 %v3442
    %4884 = vmatprep.subr.mxu0 0.0
    %4885 = vmatpush1.msra.mxu0 %v3443
    %4886 = vmatprep.subr.mxu0 0.0
    %4887 = vmatpush1.msra.mxu0 %v3444
    %4888 = vmatprep.subr.mxu0 0.0
    %4889 = vmatpush1.msra.mxu0 %v4680
    %4890 = vmatprep.subr.mxu0 0.0
    %4891 = vmatpush1.msra.mxu0 0.0
    %4892 = vmatprep.subr.mxu0 0.0
    %4893 = vmatpush1.msra.mxu0 0.0
    %4894 = vmatprep.subr.mxu0 0.0
    %4895 = vmatpush1.msra.mxu0 0.0
    %4896 = vmatprep.subr.mxu0 0.0
    %4897 = vmatpush1.msra.mxu0 0.0
    %4898 = vmatprep.subr.mxu0 0.0
    %4899 = vmatpush1.msra.mxu0 0.0
    %4900 = vmatprep.subr.mxu0 0.0
    %4901 = vmatpush1.msra.mxu0 0.0
    %4902 = vmatprep.subr.mxu0 0.0
    %4903 = vmatpush1.msra.mxu0 0.0
    %4904 = vmatprep.subr.mxu0 0.0
    %4905 = vmatpush1.msra.mxu0 0.0
    %4906 = vmatprep.subr.mxu0 0.0
    %4907 = vmatpush1.msra.mxu0 0.0
    %4908 = vmatprep.subr.mxu0 0.0
    %4909 = vmatpush1.msra.mxu0 0.0
    %4910 = vmatprep.subr.mxu0 0.0
    %4911 = vmatpush1.msra.mxu0 0.0
    %4912 = vmatprep.subr.mxu0 0.0
    %4913 = vmatpush1.msra.mxu0 0.0
    %4914 = vmatprep.mubr.f32.mxu0 %v4848
    %4915 = vmatmul.mubr.f32.gmra.mrb[0].mxu0 %v4845
    %v4916 = vpop.f32.mrb[0].mxu0
    %v4917 = vadd.f32 0.0, %v4916
    %v4918 = vpop.f32.mrb[0].mxu0
    %4919 = vdwg.mxu0
    %v4920 = vmul.f32 %v4917, %v4756
    %v4921 = vadd.f32 %v4920, %v4763
    %v4922 = vadd.f32 %v4921, %v3063
    %v4923 = vmul.f32 %v4322, %v4672
    %v4924 = vmul.f32 %v4323, %v4673
    %v4926 = vsel %vm2642, %v4924, 0
    %4928 = vmatprep.subr.mxu0 0.0
    %4929 = vmatpush1.msra.mxu0 %v3426
    %4930 = vmatprep.subr.mxu0 0.0
    %4931 = vmatpush1.msra.mxu0 %v3427
    %4932 = vmatprep.subr.mxu0 0.0
    %4933 = vmatpush1.msra.mxu0 %v3428
    %4934 = vmatprep.subr.mxu0 0.0
    %4935 = vmatpush1.msra.mxu0 %v3429
    %4936 = vmatprep.subr.mxu0 0.0
    %4937 = vmatpush1.msra.mxu0 %v3430
    %4938 = vmatprep.subr.mxu0 0.0
    %4939 = vmatpush1.msra.mxu0 %v3431
    %4940 = vmatprep.subr.mxu0 0.0
    %4941 = vmatpush1.msra.mxu0 %v3432
    %4942 = vmatprep.subr.mxu0 0.0
    %4943 = vmatpush1.msra.mxu0 %v3433
    %4944 = vmatprep.subr.mxu0 0.0
    %4945 = vmatpush1.msra.mxu0 %v3434
    %4946 = vmatprep.subr.mxu0 0.0
    %4947 = vmatpush1.msra.mxu0 %v3435
    %4948 = vmatprep.subr.mxu0 0.0
    %4949 = vmatpush1.msra.mxu0 %v3436
    %4950 = vmatprep.subr.mxu0 0.0
    %4951 = vmatpush1.msra.mxu0 %v3437
    %4952 = vmatprep.subr.mxu0 0.0
    %4953 = vmatpush1.msra.mxu0 %v3438
    %4954 = vmatprep.subr.mxu0 0.0
    %4955 = vmatpush1.msra.mxu0 %v3439
    %4956 = vmatprep.subr.mxu0 0.0
    %4957 = vmatpush1.msra.mxu0 %v3440
    %4958 = vmatprep.subr.mxu0 0.0
    %4959 = vmatpush1.msra.mxu0 %v3441
    %4960 = vmatprep.subr.mxu0 0.0
    %4961 = vmatpush1.msra.mxu0 %v3442
    %4962 = vmatprep.subr.mxu0 0.0
    %4963 = vmatpush1.msra.mxu0 %v3443
    %4964 = vmatprep.subr.mxu0 0.0
    %4965 = vmatpush1.msra.mxu0 %v3444
    %4966 = vmatprep.subr.mxu0 0.0
    %4967 = vmatpush1.msra.mxu0 %v4680
    %4968 = vmatprep.subr.mxu0 0.0
    %4969 = vmatpush1.msra.mxu0 0.0
    %4970 = vmatprep.subr.mxu0 0.0
    %4971 = vmatpush1.msra.mxu0 0.0
    %4972 = vmatprep.subr.mxu0 0.0
    %4973 = vmatpush1.msra.mxu0 0.0
    %4974 = vmatprep.subr.mxu0 0.0
    %4975 = vmatpush1.msra.mxu0 0.0
    %4976 = vmatprep.subr.mxu0 0.0
    %4977 = vmatpush1.msra.mxu0 0.0
    %4978 = vmatprep.subr.mxu0 0.0
    %4979 = vmatpush1.msra.mxu0 0.0
    %4980 = vmatprep.subr.mxu0 0.0
    %4981 = vmatpush1.msra.mxu0 0.0
    %4982 = vmatprep.subr.mxu0 0.0
    %4983 = vmatpush1.msra.mxu0 0.0
    %4984 = vmatprep.subr.mxu0 0.0
    %4985 = vmatpush1.msra.mxu0 0.0
    %4986 = vmatprep.subr.mxu0 0.0
    %4987 = vmatpush1.msra.mxu0 0.0
    %4988 = vmatprep.subr.mxu0 0.0
    %4989 = vmatpush1.msra.mxu0 0.0
    %4990 = vmatprep.subr.mxu0 0.0
    %4991 = vmatpush1.msra.mxu0 0.0
    %4992 = vmatprep.mubr.f32.mxu0 %v4926
    %4993 = vmatmul.mubr.f32.gmra.mrb[0].mxu0 %v4923
    %v4994 = vpop.f32.mrb[0].mxu0
    %v4995 = vadd.f32 0.0, %v4994
    %v4996 = vpop.f32.mrb[0].mxu0
    %4997 = vdwg.mxu0
    %v4998 = vmul.f32 %v4995, %v4756
    %v4999 = vadd.f32 %v4998, %v4763
    %v5000 = vadd.f32 %v4999, %v3141
    %v5001 = vmul.f32 %v4376, %v4672
    %v5002 = vmul.f32 %v4377, %v4673
    %v5004 = vsel %vm2642, %v5002, 0
    %5006 = vmatprep.subr.mxu0 0.0
    %5007 = vmatpush1.msra.mxu0 %v3426
    %5008 = vmatprep.subr.mxu0 0.0
    %5009 = vmatpush1.msra.mxu0 %v3427
    %5010 = vmatprep.subr.mxu0 0.0
    %5011 = vmatpush1.msra.mxu0 %v3428
    %5012 = vmatprep.subr.mxu0 0.0
    %5013 = vmatpush1.msra.mxu0 %v3429
    %5014 = vmatprep.subr.mxu0 0.0
    %5015 = vmatpush1.msra.mxu0 %v3430
    %5016 = vmatprep.subr.mxu0 0.0
    %5017 = vmatpush1.msra.mxu0 %v3431
    %5018 = vmatprep.subr.mxu0 0.0
    %5019 = vmatpush1.msra.mxu0 %v3432
    %5020 = vmatprep.subr.mxu0 0.0
    %5021 = vmatpush1.msra.mxu0 %v3433
    %5022 = vmatprep.subr.mxu0 0.0
    %5023 = vmatpush1.msra.mxu0 %v3434
    %5024 = vmatprep.subr.mxu0 0.0
    %5025 = vmatpush1.msra.mxu0 %v3435
    %5026 = vmatprep.subr.mxu0 0.0
    %5027 = vmatpush1.msra.mxu0 %v3436
    %5028 = vmatprep.subr.mxu0 0.0
    %5029 = vmatpush1.msra.mxu0 %v3437
    %5030 = vmatprep.subr.mxu0 0.0
    %5031 = vmatpush1.msra.mxu0 %v3438
    %5032 = vmatprep.subr.mxu0 0.0
    %5033 = vmatpush1.msra.mxu0 %v3439
    %5034 = vmatprep.subr.mxu0 0.0
    %5035 = vmatpush1.msra.mxu0 %v3440
    %5036 = vmatprep.subr.mxu0 0.0
    %5037 = vmatpush1.msra.mxu0 %v3441
    %5038 = vmatprep.subr.mxu0 0.0
    %5039 = vmatpush1.msra.mxu0 %v3442
    %5040 = vmatprep.subr.mxu0 0.0
    %5041 = vmatpush1.msra.mxu0 %v3443
    %5042 = vmatprep.subr.mxu0 0.0
    %5043 = vmatpush1.msra.mxu0 %v3444
    %5044 = vmatprep.subr.mxu0 0.0
    %5045 = vmatpush1.msra.mxu0 %v4680
    %5046 = vmatprep.subr.mxu0 0.0
    %5047 = vmatpush1.msra.mxu0 0.0
    %5048 = vmatprep.subr.mxu0 0.0
    %5049 = vmatpush1.msra.mxu0 0.0
    %5050 = vmatprep.subr.mxu0 0.0
    %5051 = vmatpush1.msra.mxu0 0.0
    %5052 = vmatprep.subr.mxu0 0.0
    %5053 = vmatpush1.msra.mxu0 0.0
    %5054 = vmatprep.subr.mxu0 0.0
    %5055 = vmatpush1.msra.mxu0 0.0
    %5056 = vmatprep.subr.mxu0 0.0
    %5057 = vmatpush1.msra.mxu0 0.0
    %5058 = vmatprep.subr.mxu0 0.0
    %5059 = vmatpush1.msra.mxu0 0.0
    %5060 = vmatprep.subr.mxu0 0.0
    %5061 = vmatpush1.msra.mxu0 0.0
    %5062 = vmatprep.subr.mxu0 0.0
    %5063 = vmatpush1.msra.mxu0 0.0
    %5064 = vmatprep.subr.mxu0 0.0
    %5065 = vmatpush1.msra.mxu0 0.0
    %5066 = vmatprep.subr.mxu0 0.0
    %5067 = vmatpush1.msra.mxu0 0.0
    %5068 = vmatprep.subr.mxu0 0.0
    %5069 = vmatpush1.msra.mxu0 0.0
    %5070 = vmatprep.mubr.f32.mxu0 %v5004
    %5071 = vmatmul.mubr.f32.gmra.mrb[0].mxu0 %v5001
    %v5072 = vpop.f32.mrb[0].mxu0
    %v5073 = vadd.f32 0.0, %v5072
    %v5074 = vpop.f32.mrb[0].mxu0
    %5075 = vdwg.mxu0
    %v5076 = vmul.f32 %v5073, %v4756
    %v5077 = vadd.f32 %v5076, %v4763
    %v5078 = vadd.f32 %v5077, %v3219
    %v5079 = vmul.f32 %v4430, %v4672
    %v5080 = vmul.f32 %v4431, %v4673
    %v5082 = vsel %vm2642, %v5080, 0
    %5084 = vmatprep.subr.mxu0 0.0
    %5085 = vmatpush1.msra.mxu0 %v3426
    %5086 = vmatprep.subr.mxu0 0.0
    %5087 = vmatpush1.msra.mxu0 %v3427
    %5088 = vmatprep.subr.mxu0 0.0
    %5089 = vmatpush1.msra.mxu0 %v3428
    %5090 = vmatprep.subr.mxu0 0.0
    %5091 = vmatpush1.msra.mxu0 %v3429
    %5092 = vmatprep.subr.mxu0 0.0
    %5093 = vmatpush1.msra.mxu0 %v3430
    %5094 = vmatprep.subr.mxu0 0.0
    %5095 = vmatpush1.msra.mxu0 %v3431
    %5096 = vmatprep.subr.mxu0 0.0
    %5097 = vmatpush1.msra.mxu0 %v3432
    %5098 = vmatprep.subr.mxu0 0.0
    %5099 = vmatpush1.msra.mxu0 %v3433
    %5100 = vmatprep.subr.mxu0 0.0
    %5101 = vmatpush1.msra.mxu0 %v3434
    %5102 = vmatprep.subr.mxu0 0.0
    %5103 = vmatpush1.msra.mxu0 %v3435
    %5104 = vmatprep.subr.mxu0 0.0
    %5105 = vmatpush1.msra.mxu0 %v3436
    %5106 = vmatprep.subr.mxu0 0.0
    %5107 = vmatpush1.msra.mxu0 %v3437
    %5108 = vmatprep.subr.mxu0 0.0
    %5109 = vmatpush1.msra.mxu0 %v3438
    %5110 = vmatprep.subr.mxu0 0.0
    %5111 = vmatpush1.msra.mxu0 %v3439
    %5112 = vmatprep.subr.mxu0 0.0
    %5113 = vmatpush1.msra.mxu0 %v3440
    %5114 = vmatprep.subr.mxu0 0.0
    %5115 = vmatpush1.msra.mxu0 %v3441
    %5116 = vmatprep.subr.mxu0 0.0
    %5117 = vmatpush1.msra.mxu0 %v3442
    %5118 = vmatprep.subr.mxu0 0.0
    %5119 = vmatpush1.msra.mxu0 %v3443
    %5120 = vmatprep.subr.mxu0 0.0
    %5121 = vmatpush1.msra.mxu0 %v3444
    %5122 = vmatprep.subr.mxu0 0.0
    %5123 = vmatpush1.msra.mxu0 %v4680
    %5124 = vmatprep.subr.mxu0 0.0
    %5125 = vmatpush1.msra.mxu0 0.0
    %5126 = vmatprep.subr.mxu0 0.0
    %5127 = vmatpush1.msra.mxu0 0.0
    %5128 = vmatprep.subr.mxu0 0.0
    %5129 = vmatpush1.msra.mxu0 0.0
    %5130 = vmatprep.subr.mxu0 0.0
    %5131 = vmatpush1.msra.mxu0 0.0
    %5132 = vmatprep.subr.mxu0 0.0
    %5133 = vmatpush1.msra.mxu0 0.0
    %5134 = vmatprep.subr.mxu0 0.0
    %5135 = vmatpush1.msra.mxu0 0.0
    %5136 = vmatprep.subr.mxu0 0.0
    %5137 = vmatpush1.msra.mxu0 0.0
    %5138 = vmatprep.subr.mxu0 0.0
    %5139 = vmatpush1.msra.mxu0 0.0
    %5140 = vmatprep.subr.mxu0 0.0
    %5141 = vmatpush1.msra.mxu0 0.0
    %5142 = vmatprep.subr.mxu0 0.0
    %5143 = vmatpush1.msra.mxu0 0.0
    %5144 = vmatprep.subr.mxu0 0.0
    %5145 = vmatpush1.msra.mxu0 0.0
    %5146 = vmatprep.subr.mxu0 0.0
    %5147 = vmatpush1.msra.mxu0 0.0
    %5148 = vmatprep.mubr.f32.mxu0 %v5082
    %5149 = vmatmul.mubr.f32.gmra.mrb[0].mxu0 %v5079
    %v5150 = vpop.f32.mrb[0].mxu0
    %v5151 = vadd.f32 0.0, %v5150
    %v5152 = vpop.f32.mrb[0].mxu0
    %5153 = vdwg.mxu0
    %v5154 = vmul.f32 %v5151, %v4756
    %v5155 = vadd.f32 %v5154, %v4763
    %v5156 = vadd.f32 %v5155, %v3297
    %v5157 = vmul.f32 %v4484, %v4672
    %v5158 = vmul.f32 %v4485, %v4673
    %v5160 = vsel %vm2642, %v5158, 0
    %5162 = vmatprep.subr.mxu0 0.0
    %5163 = vmatpush1.msra.mxu0 %v3426
    %5164 = vmatprep.subr.mxu0 0.0
    %5165 = vmatpush1.msra.mxu0 %v3427
    %5166 = vmatprep.subr.mxu0 0.0
    %5167 = vmatpush1.msra.mxu0 %v3428
    %5168 = vmatprep.subr.mxu0 0.0
    %5169 = vmatpush1.msra.mxu0 %v3429
    %5170 = vmatprep.subr.mxu0 0.0
    %5171 = vmatpush1.msra.mxu0 %v3430
    %5172 = vmatprep.subr.mxu0 0.0
    %5173 = vmatpush1.msra.mxu0 %v3431
    %5174 = vmatprep.subr.mxu0 0.0
    %5175 = vmatpush1.msra.mxu0 %v3432
    %5176 = vmatprep.subr.mxu0 0.0
    %5177 = vmatpush1.msra.mxu0 %v3433
    %5178 = vmatprep.subr.mxu0 0.0
    %5179 = vmatpush1.msra.mxu0 %v3434
    %5180 = vmatprep.subr.mxu0 0.0
    %5181 = vmatpush1.msra.mxu0 %v3435
    %5182 = vmatprep.subr.mxu0 0.0
    %5183 = vmatpush1.msra.mxu0 %v3436
    %5184 = vmatprep.subr.mxu0 0.0
    %5185 = vmatpush1.msra.mxu0 %v3437
    %5186 = vmatprep.subr.mxu0 0.0
    %5187 = vmatpush1.msra.mxu0 %v3438
    %5188 = vmatprep.subr.mxu0 0.0
    %5189 = vmatpush1.msra.mxu0 %v3439
    %5190 = vmatprep.subr.mxu0 0.0
    %5191 = vmatpush1.msra.mxu0 %v3440
    %5192 = vmatprep.subr.mxu0 0.0
    %5193 = vmatpush1.msra.mxu0 %v3441
    %5194 = vmatprep.subr.mxu0 0.0
    %5195 = vmatpush1.msra.mxu0 %v3442
    %5196 = vmatprep.subr.mxu0 0.0
    %5197 = vmatpush1.msra.mxu0 %v3443
    %5198 = vmatprep.subr.mxu0 0.0
    %5199 = vmatpush1.msra.mxu0 %v3444
    %5200 = vmatprep.subr.mxu0 0.0
    %5201 = vmatpush1.msra.mxu0 %v4680
    %5202 = vmatprep.subr.mxu0 0.0
    %5203 = vmatpush1.msra.mxu0 0.0
    %5204 = vmatprep.subr.mxu0 0.0
    %5205 = vmatpush1.msra.mxu0 0.0
    %5206 = vmatprep.subr.mxu0 0.0
    %5207 = vmatpush1.msra.mxu0 0.0
    %5208 = vmatprep.subr.mxu0 0.0
    %5209 = vmatpush1.msra.mxu0 0.0
    %5210 = vmatprep.subr.mxu0 0.0
    %5211 = vmatpush1.msra.mxu0 0.0
    %5212 = vmatprep.subr.mxu0 0.0
    %5213 = vmatpush1.msra.mxu0 0.0
    %5214 = vmatprep.subr.mxu0 0.0
    %5215 = vmatpush1.msra.mxu0 0.0
    %5216 = vmatprep.subr.mxu0 0.0
    %5217 = vmatpush1.msra.mxu0 0.0
    %5218 = vmatprep.subr.mxu0 0.0
    %5219 = vmatpush1.msra.mxu0 0.0
    %5220 = vmatprep.subr.mxu0 0.0
    %5221 = vmatpush1.msra.mxu0 0.0
    %5222 = vmatprep.subr.mxu0 0.0
    %5223 = vmatpush1.msra.mxu0 0.0
    %5224 = vmatprep.subr.mxu0 0.0
    %5225 = vmatpush1.msra.mxu0 0.0
    %5226 = vmatprep.mubr.f32.mxu0 %v5160
    %5227 = vmatmul.mubr.f32.gmra.mrb[0].mxu0 %v5157
    %v5228 = vpop.f32.mrb[0].mxu0
    %v5229 = vadd.f32 0.0, %v5228
    %v5230 = vpop.f32.mrb[0].mxu0
    %5231 = vdwg.mxu0
    %v5232 = vmul.f32 %v5229, %v4756
    %v5233 = vadd.f32 %v5232, %v4763
    %v5234 = vadd.f32 %v5233, %v3375
    %v5235 = vld [vmem:[%s93] sm:$0xff]
    %v5236 = vld [vmem:[%s93 + $0x8] sm:$0xff]
    %v5237 = vld [vmem:[%s93 + $0x10] sm:$0xff]
    %v5238 = vld [vmem:[%s93 + $0x18] sm:$0xff]
    %v5239 = vld [vmem:[%s93 + $0x20] sm:$0xff]
    %v5240 = vld [vmem:[%s93 + $0x28] sm:$0xff]
    %v5241 = vld [vmem:[%s93 + $0x30] sm:$0xff]
    %v5242 = vld [vmem:[%s93 + $0x38] sm:$0xff]
    %v5243 = vld [vmem:[%s93 + $0x40] sm:$0xff]
    %v5244 = vld [vmem:[%s93 + $0x48] sm:$0xff]
    %v5245 = vld [vmem:[%s93 + $0x50] sm:$0xff]
    %v5246 = vld [vmem:[%s93 + $0x58] sm:$0xff]
    %v5247 = vld [vmem:[%s93 + $0x60] sm:$0xff]
    %v5248 = vld [vmem:[%s93 + $0x68] sm:$0xff]
    %v5249 = vld [vmem:[%s83] sm:$0x3]
    %v5250 = vld [vmem:[%s81] sm:$0x3]
    %v5251 = vld [vmem:[%s79] sm:$0x3]
    %v5252 = vld [vmem:[%s77] sm:$0x3]
    %v5253 = vld [vmem:[%s89] sm:$0xff]
    %v5254 = vld [vmem:[%s89 + $0x8] sm:$0xff]
    %v5255 = vld [vmem:[%s89 + $0x10] sm:$0xff]
    %v5256 = vld [vmem:[%s89 + $0x18] sm:$0xff]
    %v5257 = vld [vmem:[%s89 + $0x20] sm:$0xff]
    %v5258 = vld [vmem:[%s89 + $0x28] sm:$0xff]
    %v5259 = vld [vmem:[%s89 + $0x30] sm:$0xff]
    %v5260 = vld [vmem:[%s89 + $0x38] sm:$0xff]
    %v5261 = vld [vmem:[%s89 + $0x40] sm:$0xff]
    %v5262 = vld [vmem:[%s89 + $0x48] sm:$0xff]
    %v5263 = vld [vmem:[%s89 + $0x50] sm:$0xff]
    %v5264 = vld [vmem:[%s89 + $0x58] sm:$0xff]
    %v5265 = vld [vmem:[%s89 + $0x60] sm:$0xff]
    %v5266 = vld [vmem:[%s89 + $0x68] sm:$0xff]
    %v5267 = vld [vmem:[%s89 + $0x70] sm:$0xff]
    %v5268 = vld [vmem:[%s89 + $0x78] sm:$0xff]
    %v5269 = vld [vmem:[%s89 + $0x80] sm:$0xff]
    %v5270 = vld [vmem:[%s89 + $0x88] sm:$0xff]
    %v5271 = vld [vmem:[%s89 + $0x90] sm:$0xff]
    %v5272 = vld [vmem:[%s89 + $0x98] sm:$0x7f]
    %v5273 = vld [vmem:[#allocation6] sm:$0x1]
    %v5274 = vld [vmem:[%s91] sm:$0xff]
    %v5275 = vld [vmem:[%s91 + $0x8] sm:$0xff]
    %v5276 = vld [vmem:[%s91 + $0x10] sm:$0xff]
    %v5277 = vld [vmem:[%s91 + $0x18] sm:$0xff]
    %v5278 = vld [vmem:[%s91 + $0x20] sm:$0xff]
    %v5279 = vld [vmem:[%s91 + $0x28] sm:$0xff]
    %v5280 = vld [vmem:[%s91 + $0x30] sm:$0xff]
    %v5281 = vld [vmem:[%s91 + $0x38] sm:$0xff]
    %v5282 = vld [vmem:[%s91 + $0x40] sm:$0xff]
    %v5283 = vld [vmem:[%s91 + $0x48] sm:$0xff]
    %v5284 = vld [vmem:[%s75] sm:$0x3]
    %v5285 = vld [vmem:[%s95] sm:$0xff]
    %v5286 = vld [vmem:[%s95 + $0x8] sm:$0xff]
    %v5287 = vld [vmem:[%s95 + $0x10] sm:$0xff]
    %v5288 = vld [vmem:[%s95 + $0x18] sm:$0xff]
    %v5289 = vld [vmem:[%s95 + $0x20] sm:$0xff]
    %v5290 = vld [vmem:[%s95 + $0x28] sm:$0xff]
    %v5291 = vld [vmem:[%s95 + $0x30] sm:$0xff]
    %v5292 = vld [vmem:[%s95 + $0x38] sm:$0xff]
    %v5293 = vld [vmem:[%s95 + $0x40] sm:$0xff]
    %v5294 = vld [vmem:[%s95 + $0x48] sm:$0xff]
    %v5295 = vld [vmem:[%s95 + $0x50] sm:$0xff]
    %v5296 = vld [vmem:[%s95 + $0x58] sm:$0xff]
    %v5297 = vld [vmem:[%s95 + $0x60] sm:$0xff]
    %v5298 = vld [vmem:[%s95 + $0x68] sm:$0xff]
    %v5299 = vld [vmem:[%s95 + $0x70] sm:$0xff]
    %v5300 = vld [vmem:[%s95 + $0x78] sm:$0xff]
    %v5301 = vld [vmem:[%s95 + $0x80] sm:$0xff]
    %v5302 = vld [vmem:[%s95 + $0x88] sm:$0xff]
    %v5303 = vld [vmem:[%s95 + $0x90] sm:$0xff]
    %v5304 = vld [vmem:[%s95 + $0x98] sm:$0x7f]
    %v5305 = vld [vmem:[#allocation9] sm:$0x1]
    %v5306 = vld [vmem:[#allocation7] sm:$0x1]
    %5307 = vmatprep.subr.mxu0 %v5236
    %5308 = vmatpush1.msra.mxu0 %v5235
    %5309 = vmatprep.subr.mxu0 %v5238
    %5310 = vmatpush1.msra.mxu0 %v5237
    %5311 = vmatprep.subr.mxu0 %v5240
    %5312 = vmatpush1.msra.mxu0 %v5239
    %5313 = vmatprep.subr.mxu0 %v5242
    %5314 = vmatpush1.msra.mxu0 %v5241
    %5315 = vmatprep.subr.mxu0 %v5244
    %5316 = vmatpush1.msra.mxu0 %v5243
    %5317 = vmatprep.subr.mxu0 %v5246
    %5318 = vmatpush1.msra.mxu0 %v5245
    %5319 = vmatprep.subr.mxu0 %v5248
    %5320 = vmatpush1.msra.mxu0 %v5247
    %5321 = vmatprep.subr.mxu0 0.0
    %5322 = vmatpush1.msra.mxu0 0.0
    %5323 = vmatprep.subr.mxu0 0.0
    %5324 = vmatpush1.msra.mxu0 0.0
    %5325 = vmatprep.subr.mxu0 0.0
    %5326 = vmatpush1.msra.mxu0 0.0
    %5327 = vmatprep.subr.mxu0 0.0
    %5328 = vmatpush1.msra.mxu0 0.0
    %5329 = vmatprep.subr.mxu0 0.0
    %5330 = vmatpush1.msra.mxu0 0.0
    %5331 = vmatprep.subr.mxu0 0.0
    %5332 = vmatpush1.msra.mxu0 0.0
    %5333 = vmatprep.subr.mxu0 0.0
    %5334 = vmatpush1.msra.mxu0 0.0
    %5335 = vmatprep.subr.mxu0 0.0
    %5336 = vmatpush1.msra.mxu0 0.0
    %5337 = vmatprep.subr.mxu0 0.0
    %5338 = vmatpush1.msra.mxu0 0.0
    %5339 = vmatprep.subr.mxu0 0.0
    %5340 = vmatpush1.msra.mxu0 0.0
    %5341 = vmatprep.subr.mxu0 0.0
    %5342 = vmatpush1.msra.mxu0 0.0
    %5343 = vmatprep.subr.mxu0 0.0
    %5344 = vmatpush1.msra.mxu0 0.0
    %5345 = vmatprep.subr.mxu0 0.0
    %5346 = vmatpush1.msra.mxu0 0.0
    %5347 = vmatprep.subr.mxu0 0.0
    %5348 = vmatpush1.msra.mxu0 0.0
    %5349 = vmatprep.subr.mxu0 0.0
    %5350 = vmatpush1.msra.mxu0 0.0
    %5351 = vmatprep.subr.mxu0 0.0
    %5352 = vmatpush1.msra.mxu0 0.0
    %5353 = vmatprep.subr.mxu0 0.0
    %5354 = vmatpush1.msra.mxu0 0.0
    %5355 = vmatprep.subr.mxu0 0.0
    %5356 = vmatpush1.msra.mxu0 0.0
    %5357 = vmatprep.subr.mxu0 0.0
    %5358 = vmatpush1.msra.mxu0 0.0
    %5359 = vmatprep.subr.mxu0 0.0
    %5360 = vmatpush1.msra.mxu0 0.0
    %5361 = vmatprep.subr.mxu0 0.0
    %5362 = vmatpush1.msra.mxu0 0.0
    %5363 = vmatprep.subr.mxu0 0.0
    %5364 = vmatpush1.msra.mxu0 0.0
    %5365 = vmatprep.subr.mxu0 0.0
    %5366 = vmatpush1.msra.mxu0 0.0
    %5367 = vmatprep.subr.mxu0 0.0
    %5368 = vmatpush1.msra.mxu0 0.0
    %5369 = vmatprep.subr.mxu0 0.0
    %5370 = vmatpush1.msra.mxu0 0.0
    %5371 = vmatprep.mubr.f32.mxu0 0.0
    %5372 = vmatmul.mubr.f32.gmra.mrb[0].mxu0 %v3449
    %v5373 = vpop.f32.mrb[0].mxu0
    %v5374 = vadd.f32 0.0, %v5373
    %v5375 = vpop.f32.mrb[0].mxu0
    %v5376 = vadd.f32 0.0, %v5375
    %5377 = vdwg.mxu0
    %v5379 = vlaneseq
    %v5380 = vshrl.u32 %v5379, 7
    %v5381 = vsub.s32 0, %v5380
    %v5382 = vrot.slane %v5249, %v5381
    %v5383 = vlaneseq
    %v5384 = vshrl.u32 %v5383, 7
    %v5385 = vsub.s32 1, %v5384
    %v5386 = vrot.slane %v5249, %v5385
    %v5389 = vmul.f32 %v5374, %v5382
    %v5390 = vmul.f32 %v5376, %v5386
    %v5392 = vlaneseq
    %v5393 = vshrl.u32 %v5392, 7
    %v5394 = vsub.s32 0, %v5393
    %v5395 = vrot.slane %v5250, %v5394
    %v5396 = vlaneseq
    %v5397 = vshrl.u32 %v5396, 7
    %v5398 = vsub.s32 1, %v5397
    %v5399 = vrot.slane %v5250, %v5398
    %v5402 = vadd.f32 %v5389, %v5395
    %v5403 = vadd.f32 %v5390, %v5399
    %v5404 = vadd.f32 %v5402, 3.0
    %v5405 = vadd.f32 %v5403, 3.0
    %v5406 = vmax.f32 %v5404, 0.0
    %v5407 = vmax.f32 %v5405, 0.0
    %v5408 = vmin.f32 %v5406, 6.0
    %v5409 = vmin.f32 %v5407, 6.0
    %v5410 = vmul.f32 %v5402, %v5408
    %v5411 = vmul.f32 %v5403, %v5409
    %v5412 = vmul.f32 %v5410, 0.16666667
    %v5413 = vmul.f32 %v5411, 0.16666667
    %5414 = vmatprep.subr.mxu0 %v5236
    %5415 = vmatpush1.msra.mxu0 %v5235
    %5416 = vmatprep.subr.mxu0 %v5238
    %5417 = vmatpush1.msra.mxu0 %v5237
    %5418 = vmatprep.subr.mxu0 %v5240
    %5419 = vmatpush1.msra.mxu0 %v5239
    %5420 = vmatprep.subr.mxu0 %v5242
    %5421 = vmatpush1.msra.mxu0 %v5241
    %5422 = vmatprep.subr.mxu0 %v5244
    %5423 = vmatpush1.msra.mxu0 %v5243
    %5424 = vmatprep.subr.mxu0 %v5246
    %5425 = vmatpush1.msra.mxu0 %v5245
    %5426 = vmatprep.subr.mxu0 %v5248
    %5427 = vmatpush1.msra.mxu0 %v5247
    %5428 = vmatprep.subr.mxu0 0.0
    %5429 = vmatpush1.msra.mxu0 0.0
    %5430 = vmatprep.subr.mxu0 0.0
    %5431 = vmatpush1.msra.mxu0 0.0
    %5432 = vmatprep.subr.mxu0 0.0
    %5433 = vmatpush1.msra.mxu0 0.0
    %5434 = vmatprep.subr.mxu0 0.0
    %5435 = vmatpush1.msra.mxu0 0.0
    %5436 = vmatprep.subr.mxu0 0.0
    %5437 = vmatpush1.msra.mxu0 0.0
    %5438 = vmatprep.subr.mxu0 0.0
    %5439 = vmatpush1.msra.mxu0 0.0
    %5440 = vmatprep.subr.mxu0 0.0
    %5441 = vmatpush1.msra.mxu0 0.0
    %5442 = vmatprep.subr.mxu0 0.0
    %5443 = vmatpush1.msra.mxu0 0.0
    %5444 = vmatprep.subr.mxu0 0.0
    %5445 = vmatpush1.msra.mxu0 0.0
    %5446 = vmatprep.subr.mxu0 0.0
    %5447 = vmatpush1.msra.mxu0 0.0
    %5448 = vmatprep.subr.mxu0 0.0
    %5449 = vmatpush1.msra.mxu0 0.0
    %5450 = vmatprep.subr.mxu0 0.0
    %5451 = vmatpush1.msra.mxu0 0.0
    %5452 = vmatprep.subr.mxu0 0.0
    %5453 = vmatpush1.msra.mxu0 0.0
    %5454 = vmatprep.subr.mxu0 0.0
    %5455 = vmatpush1.msra.mxu0 0.0
    %5456 = vmatprep.subr.mxu0 0.0
    %5457 = vmatpush1.msra.mxu0 0.0
    %5458 = vmatprep.subr.mxu0 0.0
    %5459 = vmatpush1.msra.mxu0 0.0
    %5460 = vmatprep.subr.mxu0 0.0
    %5461 = vmatpush1.msra.mxu0 0.0
    %5462 = vmatprep.subr.mxu0 0.0
    %5463 = vmatpush1.msra.mxu0 0.0
    %5464 = vmatprep.subr.mxu0 0.0
    %5465 = vmatpush1.msra.mxu0 0.0
    %5466 = vmatprep.subr.mxu0 0.0
    %5467 = vmatpush1.msra.mxu0 0.0
    %5468 = vmatprep.subr.mxu0 0.0
    %5469 = vmatpush1.msra.mxu0 0.0
    %5470 = vmatprep.subr.mxu0 0.0
    %5471 = vmatpush1.msra.mxu0 0.0
    %5472 = vmatprep.subr.mxu0 0.0
    %5473 = vmatpush1.msra.mxu0 0.0
    %5474 = vmatprep.subr.mxu0 0.0
    %5475 = vmatpush1.msra.mxu0 0.0
    %5476 = vmatprep.subr.mxu0 0.0
    %5477 = vmatpush1.msra.mxu0 0.0
    %5478 = vmatprep.mubr.f32.mxu0 0.0
    %5479 = vmatmul.mubr.f32.gmra.mrb[0].mxu0 %v3559
    %v5480 = vpop.f32.mrb[0].mxu0
    %v5481 = vadd.f32 0.0, %v5480
    %v5482 = vpop.f32.mrb[0].mxu0
    %v5483 = vadd.f32 0.0, %v5482
    %5484 = vdwg.mxu0
    %v5485 = vmul.f32 %v5481, %v5382
    %v5486 = vmul.f32 %v5483, %v5386
    %v5487 = vadd.f32 %v5485, %v5395
    %v5488 = vadd.f32 %v5486, %v5399
    %v5489 = vadd.f32 %v5487, 3.0
    %v5490 = vadd.f32 %v5488, 3.0
    %v5491 = vmax.f32 %v5489, 0.0
    %v5492 = vmax.f32 %v5490, 0.0
    %v5493 = vmin.f32 %v5491, 6.0
    %v5494 = vmin.f32 %v5492, 6.0
    %v5495 = vmul.f32 %v5487, %v5493
    %v5496 = vmul.f32 %v5488, %v5494
    %v5497 = vmul.f32 %v5495, 0.16666667
    %v5498 = vmul.f32 %v5496, 0.16666667
    %5499 = vmatprep.subr.mxu0 %v5236
    %5500 = vmatpush1.msra.mxu0 %v5235
    %5501 = vmatprep.subr.mxu0 %v5238
    %5502 = vmatpush1.msra.mxu0 %v5237
    %5503 = vmatprep.subr.mxu0 %v5240
    %5504 = vmatpush1.msra.mxu0 %v5239
    %5505 = vmatprep.subr.mxu0 %v5242
    %5506 = vmatpush1.msra.mxu0 %v5241
    %5507 = vmatprep.subr.mxu0 %v5244
    %5508 = vmatpush1.msra.mxu0 %v5243
    %5509 = vmatprep.subr.mxu0 %v5246
    %5510 = vmatpush1.msra.mxu0 %v5245
    %5511 = vmatprep.subr.mxu0 %v5248
    %5512 = vmatpush1.msra.mxu0 %v5247
    %5513 = vmatprep.subr.mxu0 0.0
    %5514 = vmatpush1.msra.mxu0 0.0
    %5515 = vmatprep.subr.mxu0 0.0
    %5516 = vmatpush1.msra.mxu0 0.0
    %5517 = vmatprep.subr.mxu0 0.0
    %5518 = vmatpush1.msra.mxu0 0.0
    %5519 = vmatprep.subr.mxu0 0.0
    %5520 = vmatpush1.msra.mxu0 0.0
    %5521 = vmatprep.subr.mxu0 0.0
    %5522 = vmatpush1.msra.mxu0 0.0
    %5523 = vmatprep.subr.mxu0 0.0
    %5524 = vmatpush1.msra.mxu0 0.0
    %5525 = vmatprep.subr.mxu0 0.0
    %5526 = vmatpush1.msra.mxu0 0.0
    %5527 = vmatprep.subr.mxu0 0.0
    %5528 = vmatpush1.msra.mxu0 0.0
    %5529 = vmatprep.subr.mxu0 0.0
    %5530 = vmatpush1.msra.mxu0 0.0
    %5531 = vmatprep.subr.mxu0 0.0
    %5532 = vmatpush1.msra.mxu0 0.0
    %5533 = vmatprep.subr.mxu0 0.0
    %5534 = vmatpush1.msra.mxu0 0.0
    %5535 = vmatprep.subr.mxu0 0.0
    %5536 = vmatpush1.msra.mxu0 0.0
    %5537 = vmatprep.subr.mxu0 0.0
    %5538 = vmatpush1.msra.mxu0 0.0
    %5539 = vmatprep.subr.mxu0 0.0
    %5540 = vmatpush1.msra.mxu0 0.0
    %5541 = vmatprep.subr.mxu0 0.0
    %5542 = vmatpush1.msra.mxu0 0.0
    %5543 = vmatprep.subr.mxu0 0.0
    %5544 = vmatpush1.msra.mxu0 0.0
    %5545 = vmatprep.subr.mxu0 0.0
    %5546 = vmatpush1.msra.mxu0 0.0
    %5547 = vmatprep.subr.mxu0 0.0
    %5548 = vmatpush1.msra.mxu0 0.0
    %5549 = vmatprep.subr.mxu0 0.0
    %5550 = vmatpush1.msra.mxu0 0.0
    %5551 = vmatprep.subr.mxu0 0.0
    %5552 = vmatpush1.msra.mxu0 0.0
    %5553 = vmatprep.subr.mxu0 0.0
    %5554 = vmatpush1.msra.mxu0 0.0
    %5555 = vmatprep.subr.mxu0 0.0
    %5556 = vmatpush1.msra.mxu0 0.0
    %5557 = vmatprep.subr.mxu0 0.0
    %5558 = vmatpush1.msra.mxu0 0.0
    %5559 = vmatprep.subr.mxu0 0.0
    %5560 = vmatpush1.msra.mxu0 0.0
    %5561 = vmatprep.subr.mxu0 0.0
    %5562 = vmatpush1.msra.mxu0 0.0
    %5563 = vmatprep.mubr.f32.mxu0 0.0
    %5564 = vmatmul.mubr.f32.gmra.mrb[0].mxu0 %v3647
    %v5565 = vpop.f32.mrb[0].mxu0
    %v5566 = vadd.f32 0.0, %v5565
    %v5567 = vpop.f32.mrb[0].mxu0
    %v5568 = vadd.f32 0.0, %v5567
    %5569 = vdwg.mxu0
    %v5570 = vmul.f32 %v5566, %v5382
    %v5571 = vmul.f32 %v5568, %v5386
    %v5572 = vadd.f32 %v5570, %v5395
    %v5573 = vadd.f32 %v5571, %v5399
    %v5574 = vadd.f32 %v5572, 3.0
    %v5575 = vadd.f32 %v5573, 3.0
    %v5576 = vmax.f32 %v5574, 0.0
    %v5577 = vmax.f32 %v5575, 0.0
    %v5578 = vmin.f32 %v5576, 6.0
    %v5579 = vmin.f32 %v5577, 6.0
    %v5580 = vmul.f32 %v5572, %v5578
    %v5581 = vmul.f32 %v5573, %v5579
    %v5582 = vmul.f32 %v5580, 0.16666667
    %v5583 = vmul.f32 %v5581, 0.16666667
    %5584 = vmatprep.subr.mxu0 %v5236
    %5585 = vmatpush1.msra.mxu0 %v5235
    %5586 = vmatprep.subr.mxu0 %v5238
    %5587 = vmatpush1.msra.mxu0 %v5237
    %5588 = vmatprep.subr.mxu0 %v5240
    %5589 = vmatpush1.msra.mxu0 %v5239
    %5590 = vmatprep.subr.mxu0 %v5242
    %5591 = vmatpush1.msra.mxu0 %v5241
    %5592 = vmatprep.subr.mxu0 %v5244
    %5593 = vmatpush1.msra.mxu0 %v5243
    %5594 = vmatprep.subr.mxu0 %v5246
    %5595 = vmatpush1.msra.mxu0 %v5245
    %5596 = vmatprep.subr.mxu0 %v5248
    %5597 = vmatpush1.msra.mxu0 %v5247
    %5598 = vmatprep.subr.mxu0 0.0
    %5599 = vmatpush1.msra.mxu0 0.0
    %5600 = vmatprep.subr.mxu0 0.0
    %5601 = vmatpush1.msra.mxu0 0.0
    %5602 = vmatprep.subr.mxu0 0.0
    %5603 = vmatpush1.msra.mxu0 0.0
    %5604 = vmatprep.subr.mxu0 0.0
    %5605 = vmatpush1.msra.mxu0 0.0
    %5606 = vmatprep.subr.mxu0 0.0
    %5607 = vmatpush1.msra.mxu0 0.0
    %5608 = vmatprep.subr.mxu0 0.0
    %5609 = vmatpush1.msra.mxu0 0.0
    %5610 = vmatprep.subr.mxu0 0.0
    %5611 = vmatpush1.msra.mxu0 0.0
    %5612 = vmatprep.subr.mxu0 0.0
    %5613 = vmatpush1.msra.mxu0 0.0
    %5614 = vmatprep.subr.mxu0 0.0
    %5615 = vmatpush1.msra.mxu0 0.0
    %5616 = vmatprep.subr.mxu0 0.0
    %5617 = vmatpush1.msra.mxu0 0.0
    %5618 = vmatprep.subr.mxu0 0.0
    %5619 = vmatpush1.msra.mxu0 0.0
    %5620 = vmatprep.subr.mxu0 0.0
    %5621 = vmatpush1.msra.mxu0 0.0
    %5622 = vmatprep.subr.mxu0 0.0
    %5623 = vmatpush1.msra.mxu0 0.0
    %5624 = vmatprep.subr.mxu0 0.0
    %5625 = vmatpush1.msra.mxu0 0.0
    %5626 = vmatprep.subr.mxu0 0.0
    %5627 = vmatpush1.msra.mxu0 0.0
    %5628 = vmatprep.subr.mxu0 0.0
    %5629 = vmatpush1.msra.mxu0 0.0
    %5630 = vmatprep.subr.mxu0 0.0
    %5631 = vmatpush1.msra.mxu0 0.0
    %5632 = vmatprep.subr.mxu0 0.0
    %5633 = vmatpush1.msra.mxu0 0.0
    %5634 = vmatprep.subr.mxu0 0.0
    %5635 = vmatpush1.msra.mxu0 0.0
    %5636 = vmatprep.subr.mxu0 0.0
    %5637 = vmatpush1.msra.mxu0 0.0
    %5638 = vmatprep.subr.mxu0 0.0
    %5639 = vmatpush1.msra.mxu0 0.0
    %5640 = vmatprep.subr.mxu0 0.0
    %5641 = vmatpush1.msra.mxu0 0.0
    %5642 = vmatprep.subr.mxu0 0.0
    %5643 = vmatpush1.msra.mxu0 0.0
    %5644 = vmatprep.subr.mxu0 0.0
    %5645 = vmatpush1.msra.mxu0 0.0
    %5646 = vmatprep.subr.mxu0 0.0
    %5647 = vmatpush1.msra.mxu0 0.0
    %5648 = vmatprep.mubr.f32.mxu0 0.0
    %5649 = vmatmul.mubr.f32.gmra.mrb[0].mxu0 %v3735
    %v5650 = vpop.f32.mrb[0].mxu0
    %v5651 = vadd.f32 0.0, %v5650
    %v5652 = vpop.f32.mrb[0].mxu0
    %v5653 = vadd.f32 0.0, %v5652
    %5654 = vdwg.mxu0
    %v5655 = vmul.f32 %v5651, %v5382
    %v5656 = vmul.f32 %v5653, %v5386
    %v5657 = vadd.f32 %v5655, %v5395
    %v5658 = vadd.f32 %v5656, %v5399
    %v5659 = vadd.f32 %v5657, 3.0
    %v5660 = vadd.f32 %v5658, 3.0
    %v5661 = vmax.f32 %v5659, 0.0
    %v5662 = vmax.f32 %v5660, 0.0
    %v5663 = vmin.f32 %v5661, 6.0
    %v5664 = vmin.f32 %v5662, 6.0
    %v5665 = vmul.f32 %v5657, %v5663
    %v5666 = vmul.f32 %v5658, %v5664
    %v5667 = vmul.f32 %v5665, 0.16666667
    %v5668 = vmul.f32 %v5666, 0.16666667
    %5669 = vmatprep.subr.mxu0 %v5236
    %5670 = vmatpush1.msra.mxu0 %v5235
    %5671 = vmatprep.subr.mxu0 %v5238
    %5672 = vmatpush1.msra.mxu0 %v5237
    %5673 = vmatprep.subr.mxu0 %v5240
    %5674 = vmatpush1.msra.mxu0 %v5239
    %5675 = vmatprep.subr.mxu0 %v5242
    %5676 = vmatpush1.msra.mxu0 %v5241
    %5677 = vmatprep.subr.mxu0 %v5244
    %5678 = vmatpush1.msra.mxu0 %v5243
    %5679 = vmatprep.subr.mxu0 %v5246
    %5680 = vmatpush1.msra.mxu0 %v5245
    %5681 = vmatprep.subr.mxu0 %v5248
    %5682 = vmatpush1.msra.mxu0 %v5247
    %5683 = vmatprep.subr.mxu0 0.0
    %5684 = vmatpush1.msra.mxu0 0.0
    %5685 = vmatprep.subr.mxu0 0.0
    %5686 = vmatpush1.msra.mxu0 0.0
    %5687 = vmatprep.subr.mxu0 0.0
    %5688 = vmatpush1.msra.mxu0 0.0
    %5689 = vmatprep.subr.mxu0 0.0
    %5690 = vmatpush1.msra.mxu0 0.0
    %5691 = vmatprep.subr.mxu0 0.0
    %5692 = vmatpush1.msra.mxu0 0.0
    %5693 = vmatprep.subr.mxu0 0.0
    %5694 = vmatpush1.msra.mxu0 0.0
    %5695 = vmatprep.subr.mxu0 0.0
    %5696 = vmatpush1.msra.mxu0 0.0
    %5697 = vmatprep.subr.mxu0 0.0
    %5698 = vmatpush1.msra.mxu0 0.0
    %5699 = vmatprep.subr.mxu0 0.0
    %5700 = vmatpush1.msra.mxu0 0.0
    %5701 = vmatprep.subr.mxu0 0.0
    %5702 = vmatpush1.msra.mxu0 0.0
    %5703 = vmatprep.subr.mxu0 0.0
    %5704 = vmatpush1.msra.mxu0 0.0
    %5705 = vmatprep.subr.mxu0 0.0
    %5706 = vmatpush1.msra.mxu0 0.0
    %5707 = vmatprep.subr.mxu0 0.0
    %5708 = vmatpush1.msra.mxu0 0.0
    %5709 = vmatprep.subr.mxu0 0.0
    %5710 = vmatpush1.msra.mxu0 0.0
    %5711 = vmatprep.subr.mxu0 0.0
    %5712 = vmatpush1.msra.mxu0 0.0
    %5713 = vmatprep.subr.mxu0 0.0
    %5714 = vmatpush1.msra.mxu0 0.0
    %5715 = vmatprep.subr.mxu0 0.0
    %5716 = vmatpush1.msra.mxu0 0.0
    %5717 = vmatprep.subr.mxu0 0.0
    %5718 = vmatpush1.msra.mxu0 0.0
    %5719 = vmatprep.subr.mxu0 0.0
    %5720 = vmatpush1.msra.mxu0 0.0
    %5721 = vmatprep.subr.mxu0 0.0
    %5722 = vmatpush1.msra.mxu0 0.0
    %5723 = vmatprep.subr.mxu0 0.0
    %5724 = vmatpush1.msra.mxu0 0.0
    %5725 = vmatprep.subr.mxu0 0.0
    %5726 = vmatpush1.msra.mxu0 0.0
    %5727 = vmatprep.subr.mxu0 0.0
    %5728 = vmatpush1.msra.mxu0 0.0
    %5729 = vmatprep.subr.mxu0 0.0
    %5730 = vmatpush1.msra.mxu0 0.0
    %5731 = vmatprep.subr.mxu0 0.0
    %5732 = vmatpush1.msra.mxu0 0.0
    %5733 = vmatprep.mubr.f32.mxu0 0.0
    %5734 = vmatmul.mubr.f32.gmra.mrb[0].mxu0 %v3823
    %v5735 = vpop.f32.mrb[0].mxu0
    %v5736 = vadd.f32 0.0, %v5735
    %v5737 = vpop.f32.mrb[0].mxu0
    %v5738 = vadd.f32 0.0, %v5737
    %5739 = vdwg.mxu0
    %v5740 = vmul.f32 %v5736, %v5382
    %v5741 = vmul.f32 %v5738, %v5386
    %v5742 = vadd.f32 %v5740, %v5395
    %v5743 = vadd.f32 %v5741, %v5399
    %v5744 = vadd.f32 %v5742, 3.0
    %v5745 = vadd.f32 %v5743, 3.0
    %v5746 = vmax.f32 %v5744, 0.0
    %v5747 = vmax.f32 %v5745, 0.0
    %v5748 = vmin.f32 %v5746, 6.0
    %v5749 = vmin.f32 %v5747, 6.0
    %v5750 = vmul.f32 %v5742, %v5748
    %v5751 = vmul.f32 %v5743, %v5749
    %v5752 = vmul.f32 %v5750, 0.16666667
    %v5753 = vmul.f32 %v5751, 0.16666667
    %5754 = vmatprep.subr.mxu0 %v5236
    %5755 = vmatpush1.msra.mxu0 %v5235
    %5756 = vmatprep.subr.mxu0 %v5238
    %5757 = vmatpush1.msra.mxu0 %v5237
    %5758 = vmatprep.subr.mxu0 %v5240
    %5759 = vmatpush1.msra.mxu0 %v5239
    %5760 = vmatprep.subr.mxu0 %v5242
    %5761 = vmatpush1.msra.mxu0 %v5241
    %5762 = vmatprep.subr.mxu0 %v5244
    %5763 = vmatpush1.msra.mxu0 %v5243
    %5764 = vmatprep.subr.mxu0 %v5246
    %5765 = vmatpush1.msra.mxu0 %v5245
    %5766 = vmatprep.subr.mxu0 %v5248
    %5767 = vmatpush1.msra.mxu0 %v5247
    %5768 = vmatprep.subr.mxu0 0.0
    %5769 = vmatpush1.msra.mxu0 0.0
    %5770 = vmatprep.subr.mxu0 0.0
    %5771 = vmatpush1.msra.mxu0 0.0
    %5772 = vmatprep.subr.mxu0 0.0
    %5773 = vmatpush1.msra.mxu0 0.0
    %5774 = vmatprep.subr.mxu0 0.0
    %5775 = vmatpush1.msra.mxu0 0.0
    %5776 = vmatprep.subr.mxu0 0.0
    %5777 = vmatpush1.msra.mxu0 0.0
    %5778 = vmatprep.subr.mxu0 0.0
    %5779 = vmatpush1.msra.mxu0 0.0
    %5780 = vmatprep.subr.mxu0 0.0
    %5781 = vmatpush1.msra.mxu0 0.0
    %5782 = vmatprep.subr.mxu0 0.0
    %5783 = vmatpush1.msra.mxu0 0.0
    %5784 = vmatprep.subr.mxu0 0.0
    %5785 = vmatpush1.msra.mxu0 0.0
    %5786 = vmatprep.subr.mxu0 0.0
    %5787 = vmatpush1.msra.mxu0 0.0
    %5788 = vmatprep.subr.mxu0 0.0
    %5789 = vmatpush1.msra.mxu0 0.0
    %5790 = vmatprep.subr.mxu0 0.0
    %5791 = vmatpush1.msra.mxu0 0.0
    %5792 = vmatprep.subr.mxu0 0.0
    %5793 = vmatpush1.msra.mxu0 0.0
    %5794 = vmatprep.subr.mxu0 0.0
    %5795 = vmatpush1.msra.mxu0 0.0
    %5796 = vmatprep.subr.mxu0 0.0
    %5797 = vmatpush1.msra.mxu0 0.0
    %5798 = vmatprep.subr.mxu0 0.0
    %5799 = vmatpush1.msra.mxu0 0.0
    %5800 = vmatprep.subr.mxu0 0.0
    %5801 = vmatpush1.msra.mxu0 0.0
    %5802 = vmatprep.subr.mxu0 0.0
    %5803 = vmatpush1.msra.mxu0 0.0
    %5804 = vmatprep.subr.mxu0 0.0
    %5805 = vmatpush1.msra.mxu0 0.0
    %5806 = vmatprep.subr.mxu0 0.0
    %5807 = vmatpush1.msra.mxu0 0.0
    %5808 = vmatprep.subr.mxu0 0.0
    %5809 = vmatpush1.msra.mxu0 0.0
    %5810 = vmatprep.subr.mxu0 0.0
    %5811 = vmatpush1.msra.mxu0 0.0
    %5812 = vmatprep.subr.mxu0 0.0
    %5813 = vmatpush1.msra.mxu0 0.0
    %5814 = vmatprep.subr.mxu0 0.0
    %5815 = vmatpush1.msra.mxu0 0.0
    %5816 = vmatprep.subr.mxu0 0.0
    %5817 = vmatpush1.msra.mxu0 0.0
    %5818 = vmatprep.mubr.f32.mxu0 0.0
    %5819 = vmatmul.mubr.f32.gmra.mrb[0].mxu0 %v3911
    %v5820 = vpop.f32.mrb[0].mxu0
    %v5821 = vadd.f32 0.0, %v5820
    %v5822 = vpop.f32.mrb[0].mxu0
    %v5823 = vadd.f32 0.0, %v5822
    %5824 = vdwg.mxu0
    %v5825 = vmul.f32 %v5821, %v5382
    %v5826 = vmul.f32 %v5823, %v5386
    %v5827 = vadd.f32 %v5825, %v5395
    %v5828 = vadd.f32 %v5826, %v5399
    %v5829 = vadd.f32 %v5827, 3.0
    %v5830 = vadd.f32 %v5828, 3.0
    %v5831 = vmax.f32 %v5829, 0.0
    %v5832 = vmax.f32 %v5830, 0.0
    %v5833 = vmin.f32 %v5831, 6.0
    %v5834 = vmin.f32 %v5832, 6.0
    %v5835 = vmul.f32 %v5827, %v5833
    %v5836 = vmul.f32 %v5828, %v5834
    %v5837 = vmul.f32 %v5835, 0.16666667
    %v5838 = vmul.f32 %v5836, 0.16666667
    %5839 = vmatprep.subr.mxu0 %v5236
    %5840 = vmatpush1.msra.mxu0 %v5235
    %5841 = vmatprep.subr.mxu0 %v5238
    %5842 = vmatpush1.msra.mxu0 %v5237
    %5843 = vmatprep.subr.mxu0 %v5240
    %5844 = vmatpush1.msra.mxu0 %v5239
    %5845 = vmatprep.subr.mxu0 %v5242
    %5846 = vmatpush1.msra.mxu0 %v5241
    %5847 = vmatprep.subr.mxu0 %v5244
    %5848 = vmatpush1.msra.mxu0 %v5243
    %5849 = vmatprep.subr.mxu0 %v5246
    %5850 = vmatpush1.msra.mxu0 %v5245
    %5851 = vmatprep.subr.mxu0 %v5248
    %5852 = vmatpush1.msra.mxu0 %v5247
    %5853 = vmatprep.subr.mxu0 0.0
    %5854 = vmatpush1.msra.mxu0 0.0
    %5855 = vmatprep.subr.mxu0 0.0
    %5856 = vmatpush1.msra.mxu0 0.0
    %5857 = vmatprep.subr.mxu0 0.0
    %5858 = vmatpush1.msra.mxu0 0.0
    %5859 = vmatprep.subr.mxu0 0.0
    %5860 = vmatpush1.msra.mxu0 0.0
    %5861 = vmatprep.subr.mxu0 0.0
    %5862 = vmatpush1.msra.mxu0 0.0
    %5863 = vmatprep.subr.mxu0 0.0
    %5864 = vmatpush1.msra.mxu0 0.0
    %5865 = vmatprep.subr.mxu0 0.0
    %5866 = vmatpush1.msra.mxu0 0.0
    %5867 = vmatprep.subr.mxu0 0.0
    %5868 = vmatpush1.msra.mxu0 0.0
    %5869 = vmatprep.subr.mxu0 0.0
    %5870 = vmatpush1.msra.mxu0 0.0
    %5871 = vmatprep.subr.mxu0 0.0
    %5872 = vmatpush1.msra.mxu0 0.0
    %5873 = vmatprep.subr.mxu0 0.0
    %5874 = vmatpush1.msra.mxu0 0.0
    %5875 = vmatprep.subr.mxu0 0.0
    %5876 = vmatpush1.msra.mxu0 0.0
    %5877 = vmatprep.subr.mxu0 0.0
    %5878 = vmatpush1.msra.mxu0 0.0
    %5879 = vmatprep.subr.mxu0 0.0
    %5880 = vmatpush1.msra.mxu0 0.0
    %5881 = vmatprep.subr.mxu0 0.0
    %5882 = vmatpush1.msra.mxu0 0.0
    %5883 = vmatprep.subr.mxu0 0.0
    %5884 = vmatpush1.msra.mxu0 0.0
    %5885 = vmatprep.subr.mxu0 0.0
    %5886 = vmatpush1.msra.mxu0 0.0
    %5887 = vmatprep.subr.mxu0 0.0
    %5888 = vmatpush1.msra.mxu0 0.0
    %5889 = vmatprep.subr.mxu0 0.0
    %5890 = vmatpush1.msra.mxu0 0.0
    %5891 = vmatprep.subr.mxu0 0.0
    %5892 = vmatpush1.msra.mxu0 0.0
    %5893 = vmatprep.subr.mxu0 0.0
    %5894 = vmatpush1.msra.mxu0 0.0
    %5895 = vmatprep.subr.mxu0 0.0
    %5896 = vmatpush1.msra.mxu0 0.0
    %5897 = vmatprep.subr.mxu0 0.0
    %5898 = vmatpush1.msra.mxu0 0.0
    %5899 = vmatprep.subr.mxu0 0.0
    %5900 = vmatpush1.msra.mxu0 0.0
    %5901 = vmatprep.subr.mxu0 0.0
    %5902 = vmatpush1.msra.mxu0 0.0
    %5903 = vmatprep.mubr.f32.mxu0 0.0
    %5904 = vmatmul.mubr.f32.gmra.mrb[0].mxu0 %v3999
    %v5905 = vpop.f32.mrb[0].mxu0
    %v5906 = vadd.f32 0.0, %v5905
    %v5907 = vpop.f32.mrb[0].mxu0
    %v5908 = vadd.f32 0.0, %v5907
    %5909 = vdwg.mxu0
    %v5910 = vmul.f32 %v5906, %v5382
    %v5911 = vmul.f32 %v5908, %v5386
    %v5912 = vadd.f32 %v5910, %v5395
    %v5913 = vadd.f32 %v5911, %v5399
    %v5914 = vadd.f32 %v5912, 3.0
    %v5915 = vadd.f32 %v5913, 3.0
    %v5916 = vmax.f32 %v5914, 0.0
    %v5917 = vmax.f32 %v5915, 0.0
    %v5918 = vmin.f32 %v5916, 6.0
    %v5919 = vmin.f32 %v5917, 6.0
    %v5920 = vmul.f32 %v5912, %v5918
    %v5921 = vmul.f32 %v5913, %v5919
    %v5922 = vmul.f32 %v5920, 0.16666667
    %v5923 = vmul.f32 %v5921, 0.16666667
    %s5924 = sld [smem:[#allocation2 + $0x62]]
    %v5925 = vstv %s5924
    %v5926 = vmul.f32 %v5925, %v5412
    %v5927 = vmul.f32 %v5925, %v5413
    %s5928 = sld [smem:[#allocation2 + $0x63]]
    %v5929 = vstv %s5928
    %v5930 = vmul.f32 %v5929, %v5497
    %v5931 = vmul.f32 %v5929, %v5498
    %v5932 = vadd.f32 %v5926, %v5930
    %v5933 = vadd.f32 %v5927, %v5931
    %s5934 = sld [smem:[#allocation2 + $0x64]]
    %v5935 = vstv %s5934
    %v5936 = vmul.f32 %v5935, %v5582
    %v5937 = vmul.f32 %v5935, %v5583
    %v5938 = vadd.f32 %v5932, %v5936
    %v5939 = vadd.f32 %v5933, %v5937
    %s5940 = sld [smem:[#allocation2 + $0x65]]
    %v5941 = vstv %s5940
    %v5942 = vmul.f32 %v5941, %v5667
    %v5943 = vmul.f32 %v5941, %v5668
    %v5944 = vadd.f32 %v5938, %v5942
    %v5945 = vadd.f32 %v5939, %v5943
    %s5946 = sld [smem:[#allocation2 + $0x66]]
    %v5947 = vstv %s5946
    %v5948 = vmul.f32 %v5947, %v5752
    %v5949 = vmul.f32 %v5947, %v5753
    %v5950 = vadd.f32 %v5944, %v5948
    %v5951 = vadd.f32 %v5945, %v5949
    %s5952 = sld [smem:[#allocation2 + $0x67]]
    %v5953 = vstv %s5952
    %v5954 = vmul.f32 %v5953, %v5837
    %v5955 = vmul.f32 %v5953, %v5838
    %v5956 = vadd.f32 %v5950, %v5954
    %v5957 = vadd.f32 %v5951, %v5955
    %s5958 = sld [smem:[#allocation2 + $0x68]]
    %v5959 = vstv %s5958
    %v5960 = vmul.f32 %v5959, %v5922
    %v5961 = vmul.f32 %v5959, %v5923
    %v5962 = vadd.f32 %v5956, %v5960
    %v5963 = vadd.f32 %v5957, %v5961
    %v5965 = vlaneseq
    %v5966 = vshrl.u32 %v5965, 7
    %v5967 = vsub.s32 0, %v5966
    %v5968 = vrot.slane %v5251, %v5967
    %v5969 = vlaneseq
    %v5970 = vshrl.u32 %v5969, 7
    %v5971 = vsub.s32 1, %v5970
    %v5972 = vrot.slane %v5251, %v5971
    %v5975 = vmul.f32 %v5962, %v5968
    %v5976 = vmul.f32 %v5963, %v5972
    %v5978 = vlaneseq
    %v5979 = vshrl.u32 %v5978, 7
    %v5980 = vsub.s32 0, %v5979
    %v5981 = vrot.slane %v5252, %v5980
    %v5982 = vlaneseq
    %v5983 = vshrl.u32 %v5982, 7
    %v5984 = vsub.s32 1, %v5983
    %v5985 = vrot.slane %v5252, %v5984
    %v5988 = vadd.f32 %v5975, %v5981
    %v5989 = vadd.f32 %v5976, %v5985
    %v5990 = vadd.f32 %v5988, 3.0
    %v5991 = vadd.f32 %v5989, 3.0
    %v5992 = vmax.f32 %v5990, 0.0
    %v5993 = vmax.f32 %v5991, 0.0
    %v5994 = vmin.f32 %v5992, 6.0
    %v5995 = vmin.f32 %v5993, 6.0
    %v5996 = vmul.f32 %v5988, %v5994
    %v5997 = vmul.f32 %v5989, %v5995
    %v5998 = vmul.f32 %v5996, 0.16666667
    %v5999 = vmul.f32 %v5997, 0.16666667
    %s6000 = sld [smem:[#allocation2 + $0x69]]
    %v6001 = vstv %s6000
    %v6002 = vmul.f32 %v6001, %v5412
    %v6003 = vmul.f32 %v6001, %v5413
    %s6004 = sld [smem:[#allocation2 + $0x6a]]
    %v6005 = vstv %s6004
    %v6006 = vmul.f32 %v6005, %v5497
    %v6007 = vmul.f32 %v6005, %v5498
    %v6008 = vadd.f32 %v6002, %v6006
    %v6009 = vadd.f32 %v6003, %v6007
    %s6010 = sld [smem:[#allocation2 + $0x6b]]
    %v6011 = vstv %s6010
    %v6012 = vmul.f32 %v6011, %v5582
    %v6013 = vmul.f32 %v6011, %v5583
    %v6014 = vadd.f32 %v6008, %v6012
    %v6015 = vadd.f32 %v6009, %v6013
    %s6016 = sld [smem:[#allocation2 + $0x6c]]
    %v6017 = vstv %s6016
    %v6018 = vmul.f32 %v6017, %v5667
    %v6019 = vmul.f32 %v6017, %v5668
    %v6020 = vadd.f32 %v6014, %v6018
    %v6021 = vadd.f32 %v6015, %v6019
    %s6022 = sld [smem:[#allocation2 + $0x6d]]
    %v6023 = vstv %s6022
    %v6024 = vmul.f32 %v6023, %v5752
    %v6025 = vmul.f32 %v6023, %v5753
    %v6026 = vadd.f32 %v6020, %v6024
    %v6027 = vadd.f32 %v6021, %v6025
    %s6028 = sld [smem:[#allocation2 + $0x6e]]
    %v6029 = vstv %s6028
    %v6030 = vmul.f32 %v6029, %v5837
    %v6031 = vmul.f32 %v6029, %v5838
    %v6032 = vadd.f32 %v6026, %v6030
    %v6033 = vadd.f32 %v6027, %v6031
    %s6034 = sld [smem:[#allocation2 + $0x6f]]
    %v6035 = vstv %s6034
    %v6036 = vmul.f32 %v6035, %v5922
    %v6037 = vmul.f32 %v6035, %v5923
    %v6038 = vadd.f32 %v6032, %v6036
    %v6039 = vadd.f32 %v6033, %v6037
    %v6040 = vmul.f32 %v6038, %v5968
    %v6041 = vmul.f32 %v6039, %v5972
    %v6042 = vadd.f32 %v6040, %v5981
    %v6043 = vadd.f32 %v6041, %v5985
    %v6044 = vadd.f32 %v6042, 3.0
    %v6045 = vadd.f32 %v6043, 3.0
    %v6046 = vmax.f32 %v6044, 0.0
    %v6047 = vmax.f32 %v6045, 0.0
    %v6048 = vmin.f32 %v6046, 6.0
    %v6049 = vmin.f32 %v6047, 6.0
    %v6050 = vmul.f32 %v6042, %v6048
    %v6051 = vmul.f32 %v6043, %v6049
    %v6052 = vmul.f32 %v6050, 0.16666667
    %v6053 = vmul.f32 %v6051, 0.16666667
    %s6054 = sld [smem:[#allocation2 + $0x70]]
    %v6055 = vstv %s6054
    %v6056 = vmul.f32 %v6055, %v5412
    %v6057 = vmul.f32 %v6055, %v5413
    %s6058 = sld [smem:[#allocation2 + $0x71]]
    %v6059 = vstv %s6058
    %v6060 = vmul.f32 %v6059, %v5497
    %v6061 = vmul.f32 %v6059, %v5498
    %v6062 = vadd.f32 %v6056, %v6060
    %v6063 = vadd.f32 %v6057, %v6061
    %s6064 = sld [smem:[#allocation2 + $0x72]]
    %v6065 = vstv %s6064
    %v6066 = vmul.f32 %v6065, %v5582
    %v6067 = vmul.f32 %v6065, %v5583
    %v6068 = vadd.f32 %v6062, %v6066
    %v6069 = vadd.f32 %v6063, %v6067
    %s6070 = sld [smem:[#allocation2 + $0x73]]
    %v6071 = vstv %s6070
    %v6072 = vmul.f32 %v6071, %v5667
    %v6073 = vmul.f32 %v6071, %v5668
    %v6074 = vadd.f32 %v6068, %v6072
    %v6075 = vadd.f32 %v6069, %v6073
    %s6076 = sld [smem:[#allocation2 + $0x74]]
    %v6077 = vstv %s6076
    %v6078 = vmul.f32 %v6077, %v5752
    %v6079 = vmul.f32 %v6077, %v5753
    %v6080 = vadd.f32 %v6074, %v6078
    %v6081 = vadd.f32 %v6075, %v6079
    %s6082 = sld [smem:[#allocation2 + $0x75]]
    %v6083 = vstv %s6082
    %v6084 = vmul.f32 %v6083, %v5837
    %v6085 = vmul.f32 %v6083, %v5838
    %v6086 = vadd.f32 %v6080, %v6084
    %v6087 = vadd.f32 %v6081, %v6085
    %s6088 = sld [smem:[#allocation2 + $0x76]]
    %v6089 = vstv %s6088
    %v6090 = vmul.f32 %v6089, %v5922
    %v6091 = vmul.f32 %v6089, %v5923
    %v6092 = vadd.f32 %v6086, %v6090
    %v6093 = vadd.f32 %v6087, %v6091
    %v6094 = vmul.f32 %v6092, %v5968
    %v6095 = vmul.f32 %v6093, %v5972
    %v6096 = vadd.f32 %v6094, %v5981
    %v6097 = vadd.f32 %v6095, %v5985
    %v6098 = vadd.f32 %v6096, 3.0
    %v6099 = vadd.f32 %v6097, 3.0
    %v6100 = vmax.f32 %v6098, 0.0
    %v6101 = vmax.f32 %v6099, 0.0
    %v6102 = vmin.f32 %v6100, 6.0
    %v6103 = vmin.f32 %v6101, 6.0
    %v6104 = vmul.f32 %v6096, %v6102
    %v6105 = vmul.f32 %v6097, %v6103
    %v6106 = vmul.f32 %v6104, 0.16666667
    %v6107 = vmul.f32 %v6105, 0.16666667
    %s6108 = sld [smem:[#allocation2 + $0x77]]
    %v6109 = vstv %s6108
    %v6110 = vmul.f32 %v6109, %v5412
    %v6111 = vmul.f32 %v6109, %v5413
    %s6112 = sld [smem:[#allocation2 + $0x78]]
    %v6113 = vstv %s6112
    %v6114 = vmul.f32 %v6113, %v5497
    %v6115 = vmul.f32 %v6113, %v5498
    %v6116 = vadd.f32 %v6110, %v6114
    %v6117 = vadd.f32 %v6111, %v6115
    %s6118 = sld [smem:[#allocation2 + $0x79]]
    %v6119 = vstv %s6118
    %v6120 = vmul.f32 %v6119, %v5582
    %v6121 = vmul.f32 %v6119, %v5583
    %v6122 = vadd.f32 %v6116, %v6120
    %v6123 = vadd.f32 %v6117, %v6121
    %s6124 = sld [smem:[#allocation2 + $0x7a]]
    %v6125 = vstv %s6124
    %v6126 = vmul.f32 %v6125, %v5667
    %v6127 = vmul.f32 %v6125, %v5668
    %v6128 = vadd.f32 %v6122, %v6126
    %v6129 = vadd.f32 %v6123, %v6127
    %s6130 = sld [smem:[#allocation2 + $0x7b]]
    %v6131 = vstv %s6130
    %v6132 = vmul.f32 %v6131, %v5752
    %v6133 = vmul.f32 %v6131, %v5753
    %v6134 = vadd.f32 %v6128, %v6132
    %v6135 = vadd.f32 %v6129, %v6133
    %s6136 = sld [smem:[#allocation2 + $0x7c]]
    %v6137 = vstv %s6136
    %v6138 = vmul.f32 %v6137, %v5837
    %v6139 = vmul.f32 %v6137, %v5838
    %v6140 = vadd.f32 %v6134, %v6138
    %v6141 = vadd.f32 %v6135, %v6139
    %s6142 = sld [smem:[#allocation2 + $0x7d]]
    %v6143 = vstv %s6142
    %v6144 = vmul.f32 %v6143, %v5922
    %v6145 = vmul.f32 %v6143, %v5923
    %v6146 = vadd.f32 %v6140, %v6144
    %v6147 = vadd.f32 %v6141, %v6145
    %v6148 = vmul.f32 %v6146, %v5968
    %v6149 = vmul.f32 %v6147, %v5972
    %v6150 = vadd.f32 %v6148, %v5981
    %v6151 = vadd.f32 %v6149, %v5985
    %v6152 = vadd.f32 %v6150, 3.0
    %v6153 = vadd.f32 %v6151, 3.0
    %v6154 = vmax.f32 %v6152, 0.0
    %v6155 = vmax.f32 %v6153, 0.0
    %v6156 = vmin.f32 %v6154, 6.0
    %v6157 = vmin.f32 %v6155, 6.0
    %v6158 = vmul.f32 %v6150, %v6156
    %v6159 = vmul.f32 %v6151, %v6157
    %v6160 = vmul.f32 %v6158, 0.16666667
    %v6161 = vmul.f32 %v6159, 0.16666667
    %s6162 = sld [smem:[#allocation2 + $0x7e]]
    %v6163 = vstv %s6162
    %v6164 = vmul.f32 %v6163, %v5412
    %v6165 = vmul.f32 %v6163, %v5413
    %s6166 = sld [smem:[#allocation2 + $0x7f]]
    %v6167 = vstv %s6166
    %v6168 = vmul.f32 %v6167, %v5497
    %v6169 = vmul.f32 %v6167, %v5498
    %v6170 = vadd.f32 %v6164, %v6168
    %v6171 = vadd.f32 %v6165, %v6169
    %s6172 = sld [smem:[#allocation2 + $0x80]]
    %v6173 = vstv %s6172
    %v6174 = vmul.f32 %v6173, %v5582
    %v6175 = vmul.f32 %v6173, %v5583
    %v6176 = vadd.f32 %v6170, %v6174
    %v6177 = vadd.f32 %v6171, %v6175
    %s6178 = sld [smem:[#allocation2 + $0x81]]
    %v6179 = vstv %s6178
    %v6180 = vmul.f32 %v6179, %v5667
    %v6181 = vmul.f32 %v6179, %v5668
    %v6182 = vadd.f32 %v6176, %v6180
    %v6183 = vadd.f32 %v6177, %v6181
    %s6184 = sld [smem:[#allocation2 + $0x82]]
    %v6185 = vstv %s6184
    %v6186 = vmul.f32 %v6185, %v5752
    %v6187 = vmul.f32 %v6185, %v5753
    %v6188 = vadd.f32 %v6182, %v6186
    %v6189 = vadd.f32 %v6183, %v6187
    %s6190 = sld [smem:[#allocation2 + $0x83]]
    %v6191 = vstv %s6190
    %v6192 = vmul.f32 %v6191, %v5837
    %v6193 = vmul.f32 %v6191, %v5838
    %v6194 = vadd.f32 %v6188, %v6192
    %v6195 = vadd.f32 %v6189, %v6193
    %s6196 = sld [smem:[#allocation2 + $0x84]]
    %v6197 = vstv %s6196
    %v6198 = vmul.f32 %v6197, %v5922
    %v6199 = vmul.f32 %v6197, %v5923
    %v6200 = vadd.f32 %v6194, %v6198
    %v6201 = vadd.f32 %v6195, %v6199
    %v6202 = vmul.f32 %v6200, %v5968
    %v6203 = vmul.f32 %v6201, %v5972
    %v6204 = vadd.f32 %v6202, %v5981
    %v6205 = vadd.f32 %v6203, %v5985
    %v6206 = vadd.f32 %v6204, 3.0
    %v6207 = vadd.f32 %v6205, 3.0
    %v6208 = vmax.f32 %v6206, 0.0
    %v6209 = vmax.f32 %v6207, 0.0
    %v6210 = vmin.f32 %v6208, 6.0
    %v6211 = vmin.f32 %v6209, 6.0
    %v6212 = vmul.f32 %v6204, %v6210
    %v6213 = vmul.f32 %v6205, %v6211
    %v6214 = vmul.f32 %v6212, 0.16666667
    %v6215 = vmul.f32 %v6213, 0.16666667
    %s6216 = sld [smem:[#allocation2 + $0x85]]
    %v6217 = vstv %s6216
    %v6218 = vmul.f32 %v6217, %v5412
    %v6219 = vmul.f32 %v6217, %v5413
    %s6220 = sld [smem:[#allocation2 + $0x86]]
    %v6221 = vstv %s6220
    %v6222 = vmul.f32 %v6221, %v5497
    %v6223 = vmul.f32 %v6221, %v5498
    %v6224 = vadd.f32 %v6218, %v6222
    %v6225 = vadd.f32 %v6219, %v6223
    %s6226 = sld [smem:[#allocation2 + $0x87]]
    %v6227 = vstv %s6226
    %v6228 = vmul.f32 %v6227, %v5582
    %v6229 = vmul.f32 %v6227, %v5583
    %v6230 = vadd.f32 %v6224, %v6228
    %v6231 = vadd.f32 %v6225, %v6229
    %s6232 = sld [smem:[#allocation2 + $0x88]]
    %v6233 = vstv %s6232
    %v6234 = vmul.f32 %v6233, %v5667
    %v6235 = vmul.f32 %v6233, %v5668
    %v6236 = vadd.f32 %v6230, %v6234
    %v6237 = vadd.f32 %v6231, %v6235
    %s6238 = sld [smem:[#allocation2 + $0x89]]
    %v6239 = vstv %s6238
    %v6240 = vmul.f32 %v6239, %v5752
    %v6241 = vmul.f32 %v6239, %v5753
    %v6242 = vadd.f32 %v6236, %v6240
    %v6243 = vadd.f32 %v6237, %v6241
    %s6244 = sld [smem:[#allocation2 + $0x8a]]
    %v6245 = vstv %s6244
    %v6246 = vmul.f32 %v6245, %v5837
    %v6247 = vmul.f32 %v6245, %v5838
    %v6248 = vadd.f32 %v6242, %v6246
    %v6249 = vadd.f32 %v6243, %v6247
    %s6250 = sld [smem:[#allocation2 + $0x8b]]
    %v6251 = vstv %s6250
    %v6252 = vmul.f32 %v6251, %v5922
    %v6253 = vmul.f32 %v6251, %v5923
    %v6254 = vadd.f32 %v6248, %v6252
    %v6255 = vadd.f32 %v6249, %v6253
    %v6256 = vmul.f32 %v6254, %v5968
    %v6257 = vmul.f32 %v6255, %v5972
    %v6258 = vadd.f32 %v6256, %v5981
    %v6259 = vadd.f32 %v6257, %v5985
    %v6260 = vadd.f32 %v6258, 3.0
    %v6261 = vadd.f32 %v6259, 3.0
    %v6262 = vmax.f32 %v6260, 0.0
    %v6263 = vmax.f32 %v6261, 0.0
    %v6264 = vmin.f32 %v6262, 6.0
    %v6265 = vmin.f32 %v6263, 6.0
    %v6266 = vmul.f32 %v6258, %v6264
    %v6267 = vmul.f32 %v6259, %v6265
    %v6268 = vmul.f32 %v6266, 0.16666667
    %v6269 = vmul.f32 %v6267, 0.16666667
    %s6270 = sld [smem:[#allocation2 + $0x8c]]
    %v6271 = vstv %s6270
    %v6272 = vmul.f32 %v6271, %v5412
    %v6273 = vmul.f32 %v6271, %v5413
    %s6274 = sld [smem:[#allocation2 + $0x8d]]
    %v6275 = vstv %s6274
    %v6276 = vmul.f32 %v6275, %v5497
    %v6277 = vmul.f32 %v6275, %v5498
    %v6278 = vadd.f32 %v6272, %v6276
    %v6279 = vadd.f32 %v6273, %v6277
    %s6280 = sld [smem:[#allocation2 + $0x8e]]
    %v6281 = vstv %s6280
    %v6282 = vmul.f32 %v6281, %v5582
    %v6283 = vmul.f32 %v6281, %v5583
    %v6284 = vadd.f32 %v6278, %v6282
    %v6285 = vadd.f32 %v6279, %v6283
    %s6286 = sld [smem:[#allocation2 + $0x8f]]
    %v6287 = vstv %s6286
    %v6288 = vmul.f32 %v6287, %v5667
    %v6289 = vmul.f32 %v6287, %v5668
    %v6290 = vadd.f32 %v6284, %v6288
    %v6291 = vadd.f32 %v6285, %v6289
    %s6292 = sld [smem:[#allocation2 + $0x90]]
    %v6293 = vstv %s6292
    %v6294 = vmul.f32 %v6293, %v5752
    %v6295 = vmul.f32 %v6293, %v5753
    %v6296 = vadd.f32 %v6290, %v6294
    %v6297 = vadd.f32 %v6291, %v6295
    %s6298 = sld [smem:[#allocation2 + $0x91]]
    %v6299 = vstv %s6298
    %v6300 = vmul.f32 %v6299, %v5837
    %v6301 = vmul.f32 %v6299, %v5838
    %v6302 = vadd.f32 %v6296, %v6300
    %v6303 = vadd.f32 %v6297, %v6301
    %s6304 = sld [smem:[#allocation2 + $0x92]]
    %v6305 = vstv %s6304
    %v6306 = vmul.f32 %v6305, %v5922
    %v6307 = vmul.f32 %v6305, %v5923
    %v6308 = vadd.f32 %v6302, %v6306
    %v6309 = vadd.f32 %v6303, %v6307
    %v6310 = vmul.f32 %v6308, %v5968
    %v6311 = vmul.f32 %v6309, %v5972
    %v6312 = vadd.f32 %v6310, %v5981
    %v6313 = vadd.f32 %v6311, %v5985
    %v6314 = vadd.f32 %v6312, 3.0
    %v6315 = vadd.f32 %v6313, 3.0
    %v6316 = vmax.f32 %v6314, 0.0
    %v6317 = vmax.f32 %v6315, 0.0
    %v6318 = vmin.f32 %v6316, 6.0
    %v6319 = vmin.f32 %v6317, 6.0
    %v6320 = vmul.f32 %v6312, %v6318
    %v6321 = vmul.f32 %v6313, %v6319
    %v6322 = vmul.f32 %v6320, 0.16666667
    %v6323 = vmul.f32 %v6321, 0.16666667
    %v6324 = vmax.f32 %v5998, %v6052
    %v6325 = vmax.f32 %v5999, %v6053
    %v6326 = vmax.f32 %v6324, %v6106
    %v6327 = vmax.f32 %v6325, %v6107
    %v6328 = vmax.f32 %v6326, %v6160
    %v6329 = vmax.f32 %v6327, %v6161
    %v6330 = vmax.f32 %v6328, %v6214
    %v6331 = vmax.f32 %v6329, %v6215
    %v6332 = vmax.f32 %v6330, %v6268
    %v6333 = vmax.f32 %v6331, %v6269
    %v6334 = vmax.f32 %v6332, %v6322
    %v6335 = vmax.f32 %v6333, %v6323
    %v6337 = vlaneseq
    %v6338 = vshrl.u32 %v6337, 7
    %v6339 = vsub.s32 0, %v6338
    %v6340 = vrot.slane %v5273, %v6339
    %v6343 = vsel %vm2642, %v6335, 0
    %v6346 = vsel %vm2646, %v5272, 0
    %6348 = vmatprep.subr.mxu0 0.0
    %6349 = vmatpush1.msra.mxu0 %v5253
    %6350 = vmatprep.subr.mxu0 0.0
    %6351 = vmatpush1.msra.mxu0 %v5254
    %6352 = vmatprep.subr.mxu0 0.0
    %6353 = vmatpush1.msra.mxu0 %v5255
    %6354 = vmatprep.subr.mxu0 0.0
    %6355 = vmatpush1.msra.mxu0 %v5256
    %6356 = vmatprep.subr.mxu0 0.0
    %6357 = vmatpush1.msra.mxu0 %v5257
    %6358 = vmatprep.subr.mxu0 0.0
    %6359 = vmatpush1.msra.mxu0 %v5258
    %6360 = vmatprep.subr.mxu0 0.0
    %6361 = vmatpush1.msra.mxu0 %v5259
    %6362 = vmatprep.subr.mxu0 0.0
    %6363 = vmatpush1.msra.mxu0 %v5260
    %6364 = vmatprep.subr.mxu0 0.0
    %6365 = vmatpush1.msra.mxu0 %v5261
    %6366 = vmatprep.subr.mxu0 0.0
    %6367 = vmatpush1.msra.mxu0 %v5262
    %6368 = vmatprep.subr.mxu0 0.0
    %6369 = vmatpush1.msra.mxu0 %v5263
    %6370 = vmatprep.subr.mxu0 0.0
    %6371 = vmatpush1.msra.mxu0 %v5264
    %6372 = vmatprep.subr.mxu0 0.0
    %6373 = vmatpush1.msra.mxu0 %v5265
    %6374 = vmatprep.subr.mxu0 0.0
    %6375 = vmatpush1.msra.mxu0 %v5266
    %6376 = vmatprep.subr.mxu0 0.0
    %6377 = vmatpush1.msra.mxu0 %v5267
    %6378 = vmatprep.subr.mxu0 0.0
    %6379 = vmatpush1.msra.mxu0 %v5268
    %6380 = vmatprep.subr.mxu0 0.0
    %6381 = vmatpush1.msra.mxu0 %v5269
    %6382 = vmatprep.subr.mxu0 0.0
    %6383 = vmatpush1.msra.mxu0 %v5270
    %6384 = vmatprep.subr.mxu0 0.0
    %6385 = vmatpush1.msra.mxu0 %v5271
    %6386 = vmatprep.subr.mxu0 0.0
    %6387 = vmatpush1.msra.mxu0 %v6346
    %6388 = vmatprep.subr.mxu0 0.0
    %6389 = vmatpush1.msra.mxu0 0.0
    %6390 = vmatprep.subr.mxu0 0.0
    %6391 = vmatpush1.msra.mxu0 0.0
    %6392 = vmatprep.subr.mxu0 0.0
    %6393 = vmatpush1.msra.mxu0 0.0
    %6394 = vmatprep.subr.mxu0 0.0
    %6395 = vmatpush1.msra.mxu0 0.0
    %6396 = vmatprep.subr.mxu0 0.0
    %6397 = vmatpush1.msra.mxu0 0.0
    %6398 = vmatprep.subr.mxu0 0.0
    %6399 = vmatpush1.msra.mxu0 0.0
    %6400 = vmatprep.subr.mxu0 0.0
    %6401 = vmatpush1.msra.mxu0 0.0
    %6402 = vmatprep.subr.mxu0 0.0
    %6403 = vmatpush1.msra.mxu0 0.0
    %6404 = vmatprep.subr.mxu0 0.0
    %6405 = vmatpush1.msra.mxu0 0.0
    %6406 = vmatprep.subr.mxu0 0.0
    %6407 = vmatpush1.msra.mxu0 0.0
    %6408 = vmatprep.subr.mxu0 0.0
    %6409 = vmatpush1.msra.mxu0 0.0
    %6410 = vmatprep.subr.mxu0 0.0
    %6411 = vmatpush1.msra.mxu0 0.0
    %6412 = vmatprep.mubr.f32.mxu0 %v6343
    %6413 = vmatmul.mubr.f32.gmra.mrb[0].mxu0 %v6334
    %v6414 = vpop.f32.mrb[0].mxu0
    %v6415 = vadd.f32 %v6340, %v6414
    %v6416 = vpop.f32.mrb[0].mxu0
    %6417 = vdwg.mxu0
    %v6418 = vmax.f32 %v6415, 0.0
    %v6420 = vlaneseq
    %v6421 = vshrl.u32 %v6420, 7
    %v6422 = vsub.s32 0, %v6421
    %v6423 = vrot.slane %v5284, %v6422
    %v6424 = vlaneseq
    %v6425 = vshrl.u32 %v6424, 7
    %v6426 = vsub.s32 1, %v6425
    %v6427 = vrot.slane %v5284, %v6426
    %v6431 = vsel %vm2732, %v6418, 0
    %6433 = vmatprep.subr.mxu0 %v5275
    %6434 = vmatpush1.msra.mxu0 %v5274
    %6435 = vmatprep.subr.mxu0 %v5277
    %6436 = vmatpush1.msra.mxu0 %v5276
    %6437 = vmatprep.subr.mxu0 %v5279
    %6438 = vmatpush1.msra.mxu0 %v5278
    %6439 = vmatprep.subr.mxu0 %v5281
    %6440 = vmatpush1.msra.mxu0 %v5280
    %6441 = vmatprep.subr.mxu0 %v5283
    %6442 = vmatpush1.msra.mxu0 %v5282
    %6443 = vmatprep.subr.mxu0 0.0
    %6444 = vmatpush1.msra.mxu0 0.0
    %6445 = vmatprep.subr.mxu0 0.0
    %6446 = vmatpush1.msra.mxu0 0.0
    %6447 = vmatprep.subr.mxu0 0.0
    %6448 = vmatpush1.msra.mxu0 0.0
    %6449 = vmatprep.subr.mxu0 0.0
    %6450 = vmatpush1.msra.mxu0 0.0
    %6451 = vmatprep.subr.mxu0 0.0
    %6452 = vmatpush1.msra.mxu0 0.0
    %6453 = vmatprep.subr.mxu0 0.0
    %6454 = vmatpush1.msra.mxu0 0.0
    %6455 = vmatprep.subr.mxu0 0.0
    %6456 = vmatpush1.msra.mxu0 0.0
    %6457 = vmatprep.subr.mxu0 0.0
    %6458 = vmatpush1.msra.mxu0 0.0
    %6459 = vmatprep.subr.mxu0 0.0
    %6460 = vmatpush1.msra.mxu0 0.0
    %6461 = vmatprep.subr.mxu0 0.0
    %6462 = vmatpush1.msra.mxu0 0.0
    %6463 = vmatprep.subr.mxu0 0.0
    %6464 = vmatpush1.msra.mxu0 0.0
    %6465 = vmatprep.subr.mxu0 0.0
    %6466 = vmatpush1.msra.mxu0 0.0
    %6467 = vmatprep.subr.mxu0 0.0
    %6468 = vmatpush1.msra.mxu0 0.0
    %6469 = vmatprep.subr.mxu0 0.0
    %6470 = vmatpush1.msra.mxu0 0.0
    %6471 = vmatprep.subr.mxu0 0.0
    %6472 = vmatpush1.msra.mxu0 0.0
    %6473 = vmatprep.subr.mxu0 0.0
    %6474 = vmatpush1.msra.mxu0 0.0
    %6475 = vmatprep.subr.mxu0 0.0
    %6476 = vmatpush1.msra.mxu0 0.0
    %6477 = vmatprep.subr.mxu0 0.0
    %6478 = vmatpush1.msra.mxu0 0.0
    %6479 = vmatprep.subr.mxu0 0.0
    %6480 = vmatpush1.msra.mxu0 0.0
    %6481 = vmatprep.subr.mxu0 0.0
    %6482 = vmatpush1.msra.mxu0 0.0
    %6483 = vmatprep.subr.mxu0 0.0
    %6484 = vmatpush1.msra.mxu0 0.0
    %6485 = vmatprep.subr.mxu0 0.0
    %6486 = vmatpush1.msra.mxu0 0.0
    %6487 = vmatprep.subr.mxu0 0.0
    %6488 = vmatpush1.msra.mxu0 0.0
    %6489 = vmatprep.subr.mxu0 0.0
    %6490 = vmatpush1.msra.mxu0 0.0
    %6491 = vmatprep.subr.mxu0 0.0
    %6492 = vmatpush1.msra.mxu0 0.0
    %6493 = vmatprep.subr.mxu0 0.0
    %6494 = vmatpush1.msra.mxu0 0.0
    %6495 = vmatprep.subr.mxu0 0.0
    %6496 = vmatpush1.msra.mxu0 0.0
    %6497 = vmatprep.mubr.f32.mxu0 0.0
    %6498 = vmatmul.mubr.f32.gmra.mrb[0].mxu0 %v6431
    %v6499 = vpop.f32.mrb[0].mxu0
    %v6500 = vadd.f32 %v6423, %v6499
    %v6501 = vpop.f32.mrb[0].mxu0
    %v6502 = vadd.f32 %v6427, %v6501
    %6503 = vdwg.mxu0
    %v6504 = vadd.f32 %v6500, 3.0
    %v6505 = vadd.f32 %v6502, 3.0
    %v6506 = vmax.f32 %v6504, 0.0
    %v6507 = vmax.f32 %v6505, 0.0
    %v6508 = vmin.f32 %v6506, 6.0
    %v6509 = vmin.f32 %v6507, 6.0
    %v6510 = vmul.f32 %v6508, 0.16666667
    %v6511 = vmul.f32 %v6509, 0.16666667
    %v6512 = vmul.f32 %v5998, %v6510
    %v6513 = vmul.f32 %v5999, %v6511
    %v6515 = vsel %vm2642, %v6513, 0
    %v6518 = vsel %vm2646, %v5304, 0
    %6520 = vmatprep.subr.mxu0 0.0
    %6521 = vmatpush1.msra.mxu0 %v5285
    %6522 = vmatprep.subr.mxu0 0.0
    %6523 = vmatpush1.msra.mxu0 %v5286
    %6524 = vmatprep.subr.mxu0 0.0
    %6525 = vmatpush1.msra.mxu0 %v5287
    %6526 = vmatprep.subr.mxu0 0.0
    %6527 = vmatpush1.msra.mxu0 %v5288
    %6528 = vmatprep.subr.mxu0 0.0
    %6529 = vmatpush1.msra.mxu0 %v5289
    %6530 = vmatprep.subr.mxu0 0.0
    %6531 = vmatpush1.msra.mxu0 %v5290
    %6532 = vmatprep.subr.mxu0 0.0
    %6533 = vmatpush1.msra.mxu0 %v5291
    %6534 = vmatprep.subr.mxu0 0.0
    %6535 = vmatpush1.msra.mxu0 %v5292
    %6536 = vmatprep.subr.mxu0 0.0
    %6537 = vmatpush1.msra.mxu0 %v5293
    %6538 = vmatprep.subr.mxu0 0.0
    %6539 = vmatpush1.msra.mxu0 %v5294
    %6540 = vmatprep.subr.mxu0 0.0
    %6541 = vmatpush1.msra.mxu0 %v5295
    %6542 = vmatprep.subr.mxu0 0.0
    %6543 = vmatpush1.msra.mxu0 %v5296
    %6544 = vmatprep.subr.mxu0 0.0
    %6545 = vmatpush1.msra.mxu0 %v5297
    %6546 = vmatprep.subr.mxu0 0.0
    %6547 = vmatpush1.msra.mxu0 %v5298
    %6548 = vmatprep.subr.mxu0 0.0
    %6549 = vmatpush1.msra.mxu0 %v5299
    %6550 = vmatprep.subr.mxu0 0.0
    %6551 = vmatpush1.msra.mxu0 %v5300
    %6552 = vmatprep.subr.mxu0 0.0
    %6553 = vmatpush1.msra.mxu0 %v5301
    %6554 = vmatprep.subr.mxu0 0.0
    %6555 = vmatpush1.msra.mxu0 %v5302
    %6556 = vmatprep.subr.mxu0 0.0
    %6557 = vmatpush1.msra.mxu0 %v5303
    %6558 = vmatprep.subr.mxu0 0.0
    %6559 = vmatpush1.msra.mxu0 %v6518
    %6560 = vmatprep.subr.mxu0 0.0
    %6561 = vmatpush1.msra.mxu0 0.0
    %6562 = vmatprep.subr.mxu0 0.0
    %6563 = vmatpush1.msra.mxu0 0.0
    %6564 = vmatprep.subr.mxu0 0.0
    %6565 = vmatpush1.msra.mxu0 0.0
    %6566 = vmatprep.subr.mxu0 0.0
    %6567 = vmatpush1.msra.mxu0 0.0
    %6568 = vmatprep.subr.mxu0 0.0
    %6569 = vmatpush1.msra.mxu0 0.0
    %6570 = vmatprep.subr.mxu0 0.0
    %6571 = vmatpush1.msra.mxu0 0.0
    %6572 = vmatprep.subr.mxu0 0.0
    %6573 = vmatpush1.msra.mxu0 0.0
    %6574 = vmatprep.subr.mxu0 0.0
    %6575 = vmatpush1.msra.mxu0 0.0
    %6576 = vmatprep.subr.mxu0 0.0
    %6577 = vmatpush1.msra.mxu0 0.0
    %6578 = vmatprep.subr.mxu0 0.0
    %6579 = vmatpush1.msra.mxu0 0.0
    %6580 = vmatprep.subr.mxu0 0.0
    %6581 = vmatpush1.msra.mxu0 0.0
    %6582 = vmatprep.subr.mxu0 0.0
    %6583 = vmatpush1.msra.mxu0 0.0
    %6584 = vmatprep.mubr.f32.mxu0 %v6515
    %6585 = vmatmul.mubr.f32.gmra.mrb[0].mxu0 %v6512
    %v6586 = vpop.f32.mrb[0].mxu0
    %v6587 = vadd.f32 0.0, %v6586
    %v6588 = vpop.f32.mrb[0].mxu0
    %6589 = vdwg.mxu0
    %v6591 = vlaneseq
    %v6592 = vshrl.u32 %v6591, 7
    %v6593 = vsub.s32 0, %v6592
    %v6594 = vrot.slane %v5305, %v6593
    %v6596 = vmul.f32 %v6587, %v6594
    %v6598 = vlaneseq
    %v6599 = vshrl.u32 %v6598, 7
    %v6600 = vsub.s32 0, %v6599
    %v6601 = vrot.slane %v5306, %v6600
    %v6603 = vadd.f32 %v6596, %v6601
    %v6604 = vadd.f32 %v6603, %v2907
    %v6605 = vmul.f32 %v6052, %v6510
    %v6606 = vmul.f32 %v6053, %v6511
    %v6608 = vsel %vm2642, %v6606, 0
    %6610 = vmatprep.subr.mxu0 0.0
    %6611 = vmatpush1.msra.mxu0 %v5285
    %6612 = vmatprep.subr.mxu0 0.0
    %6613 = vmatpush1.msra.mxu0 %v5286
    %6614 = vmatprep.subr.mxu0 0.0
    %6615 = vmatpush1.msra.mxu0 %v5287
    %6616 = vmatprep.subr.mxu0 0.0
    %6617 = vmatpush1.msra.mxu0 %v5288
    %6618 = vmatprep.subr.mxu0 0.0
    %6619 = vmatpush1.msra.mxu0 %v5289
    %6620 = vmatprep.subr.mxu0 0.0
    %6621 = vmatpush1.msra.mxu0 %v5290
    %6622 = vmatprep.subr.mxu0 0.0
    %6623 = vmatpush1.msra.mxu0 %v5291
    %6624 = vmatprep.subr.mxu0 0.0
    %6625 = vmatpush1.msra.mxu0 %v5292
    %6626 = vmatprep.subr.mxu0 0.0
    %6627 = vmatpush1.msra.mxu0 %v5293
    %6628 = vmatprep.subr.mxu0 0.0
    %6629 = vmatpush1.msra.mxu0 %v5294
    %6630 = vmatprep.subr.mxu0 0.0
    %6631 = vmatpush1.msra.mxu0 %v5295
    %6632 = vmatprep.subr.mxu0 0.0
    %6633 = vmatpush1.msra.mxu0 %v5296
    %6634 = vmatprep.subr.mxu0 0.0
    %6635 = vmatpush1.msra.mxu0 %v5297
    %6636 = vmatprep.subr.mxu0 0.0
    %6637 = vmatpush1.msra.mxu0 %v5298
    %6638 = vmatprep.subr.mxu0 0.0
    %6639 = vmatpush1.msra.mxu0 %v5299
    %6640 = vmatprep.subr.mxu0 0.0
    %6641 = vmatpush1.msra.mxu0 %v5300
    %6642 = vmatprep.subr.mxu0 0.0
    %6643 = vmatpush1.msra.mxu0 %v5301
    %6644 = vmatprep.subr.mxu0 0.0
    %6645 = vmatpush1.msra.mxu0 %v5302
    %6646 = vmatprep.subr.mxu0 0.0
    %6647 = vmatpush1.msra.mxu0 %v5303
    %6648 = vmatprep.subr.mxu0 0.0
    %6649 = vmatpush1.msra.mxu0 %v6518
    %6650 = vmatprep.subr.mxu0 0.0
    %6651 = vmatpush1.msra.mxu0 0.0
    %6652 = vmatprep.subr.mxu0 0.0
    %6653 = vmatpush1.msra.mxu0 0.0
    %6654 = vmatprep.subr.mxu0 0.0
    %6655 = vmatpush1.msra.mxu0 0.0
    %6656 = vmatprep.subr.mxu0 0.0
    %6657 = vmatpush1.msra.mxu0 0.0
    %6658 = vmatprep.subr.mxu0 0.0
    %6659 = vmatpush1.msra.mxu0 0.0
    %6660 = vmatprep.subr.mxu0 0.0
    %6661 = vmatpush1.msra.mxu0 0.0
    %6662 = vmatprep.subr.mxu0 0.0
    %6663 = vmatpush1.msra.mxu0 0.0
    %6664 = vmatprep.subr.mxu0 0.0
    %6665 = vmatpush1.msra.mxu0 0.0
    %6666 = vmatprep.subr.mxu0 0.0
    %6667 = vmatpush1.msra.mxu0 0.0
    %6668 = vmatprep.subr.mxu0 0.0
    %6669 = vmatpush1.msra.mxu0 0.0
    %6670 = vmatprep.subr.mxu0 0.0
    %6671 = vmatpush1.msra.mxu0 0.0
    %6672 = vmatprep.subr.mxu0 0.0
    %6673 = vmatpush1.msra.mxu0 0.0
    %6674 = vmatprep.mubr.f32.mxu0 %v6608
    %6675 = vmatmul.mubr.f32.gmra.mrb[0].mxu0 %v6605
    %v6676 = vpop.f32.mrb[0].mxu0
    %v6677 = vadd.f32 0.0, %v6676
    %v6678 = vpop.f32.mrb[0].mxu0
    %6679 = vdwg.mxu0
    %v6680 = vmul.f32 %v6677, %v6594
    %v6681 = vadd.f32 %v6680, %v6601
    %v6682 = vadd.f32 %v6681, %v2985
    %v6683 = vmul.f32 %v6106, %v6510
    %v6684 = vmul.f32 %v6107, %v6511
    %v6686 = vsel %vm2642, %v6684, 0
    %6688 = vmatprep.subr.mxu0 0.0
    %6689 = vmatpush1.msra.mxu0 %v5285
    %6690 = vmatprep.subr.mxu0 0.0
    %6691 = vmatpush1.msra.mxu0 %v5286
    %6692 = vmatprep.subr.mxu0 0.0
    %6693 = vmatpush1.msra.mxu0 %v5287
    %6694 = vmatprep.subr.mxu0 0.0
    %6695 = vmatpush1.msra.mxu0 %v5288
    %6696 = vmatprep.subr.mxu0 0.0
    %6697 = vmatpush1.msra.mxu0 %v5289
    %6698 = vmatprep.subr.mxu0 0.0
    %6699 = vmatpush1.msra.mxu0 %v5290
    %6700 = vmatprep.subr.mxu0 0.0
    %6701 = vmatpush1.msra.mxu0 %v5291
    %6702 = vmatprep.subr.mxu0 0.0
    %6703 = vmatpush1.msra.mxu0 %v5292
    %6704 = vmatprep.subr.mxu0 0.0
    %6705 = vmatpush1.msra.mxu0 %v5293
    %6706 = vmatprep.subr.mxu0 0.0
    %6707 = vmatpush1.msra.mxu0 %v5294
    %6708 = vmatprep.subr.mxu0 0.0
    %6709 = vmatpush1.msra.mxu0 %v5295
    %6710 = vmatprep.subr.mxu0 0.0
    %6711 = vmatpush1.msra.mxu0 %v5296
    %6712 = vmatprep.subr.mxu0 0.0
    %6713 = vmatpush1.msra.mxu0 %v5297
    %6714 = vmatprep.subr.mxu0 0.0
    %6715 = vmatpush1.msra.mxu0 %v5298
    %6716 = vmatprep.subr.mxu0 0.0
    %6717 = vmatpush1.msra.mxu0 %v5299
    %6718 = vmatprep.subr.mxu0 0.0
    %6719 = vmatpush1.msra.mxu0 %v5300
    %6720 = vmatprep.subr.mxu0 0.0
    %6721 = vmatpush1.msra.mxu0 %v5301
    %6722 = vmatprep.subr.mxu0 0.0
    %6723 = vmatpush1.msra.mxu0 %v5302
    %6724 = vmatprep.subr.mxu0 0.0
    %6725 = vmatpush1.msra.mxu0 %v5303
    %6726 = vmatprep.subr.mxu0 0.0
    %6727 = vmatpush1.msra.mxu0 %v6518
    %6728 = vmatprep.subr.mxu0 0.0
    %6729 = vmatpush1.msra.mxu0 0.0
    %6730 = vmatprep.subr.mxu0 0.0
    %6731 = vmatpush1.msra.mxu0 0.0
    %6732 = vmatprep.subr.mxu0 0.0
    %6733 = vmatpush1.msra.mxu0 0.0
    %6734 = vmatprep.subr.mxu0 0.0
    %6735 = vmatpush1.msra.mxu0 0.0
    %6736 = vmatprep.subr.mxu0 0.0
    %6737 = vmatpush1.msra.mxu0 0.0
    %6738 = vmatprep.subr.mxu0 0.0
    %6739 = vmatpush1.msra.mxu0 0.0
    %6740 = vmatprep.subr.mxu0 0.0
    %6741 = vmatpush1.msra.mxu0 0.0
    %6742 = vmatprep.subr.mxu0 0.0
    %6743 = vmatpush1.msra.mxu0 0.0
    %6744 = vmatprep.subr.mxu0 0.0
    %6745 = vmatpush1.msra.mxu0 0.0
    %6746 = vmatprep.subr.mxu0 0.0
    %6747 = vmatpush1.msra.mxu0 0.0
    %6748 = vmatprep.subr.mxu0 0.0
    %6749 = vmatpush1.msra.mxu0 0.0
    %6750 = vmatprep.subr.mxu0 0.0
    %6751 = vmatpush1.msra.mxu0 0.0
    %6752 = vmatprep.mubr.f32.mxu0 %v6686
    %6753 = vmatmul.mubr.f32.gmra.mrb[0].mxu0 %v6683
    %v6754 = vpop.f32.mrb[0].mxu0
    %v6755 = vadd.f32 0.0, %v6754
    %v6756 = vpop.f32.mrb[0].mxu0
    %6757 = vdwg.mxu0
    %v6758 = vmul.f32 %v6755, %v6594
    %v6759 = vadd.f32 %v6758, %v6601
    %v6760 = vadd.f32 %v6759, %v3063
    %v6761 = vmul.f32 %v6160, %v6510
    %v6762 = vmul.f32 %v6161, %v6511
    %v6764 = vsel %vm2642, %v6762, 0
    %6766 = vmatprep.subr.mxu0 0.0
    %6767 = vmatpush1.msra.mxu0 %v5285
    %6768 = vmatprep.subr.mxu0 0.0
    %6769 = vmatpush1.msra.mxu0 %v5286
    %6770 = vmatprep.subr.mxu0 0.0
    %6771 = vmatpush1.msra.mxu0 %v5287
    %6772 = vmatprep.subr.mxu0 0.0
    %6773 = vmatpush1.msra.mxu0 %v5288
    %6774 = vmatprep.subr.mxu0 0.0
    %6775 = vmatpush1.msra.mxu0 %v5289
    %6776 = vmatprep.subr.mxu0 0.0
    %6777 = vmatpush1.msra.mxu0 %v5290
    %6778 = vmatprep.subr.mxu0 0.0
    %6779 = vmatpush1.msra.mxu0 %v5291
    %6780 = vmatprep.subr.mxu0 0.0
    %6781 = vmatpush1.msra.mxu0 %v5292
    %6782 = vmatprep.subr.mxu0 0.0
    %6783 = vmatpush1.msra.mxu0 %v5293
    %6784 = vmatprep.subr.mxu0 0.0
    %6785 = vmatpush1.msra.mxu0 %v5294
    %6786 = vmatprep.subr.mxu0 0.0
    %6787 = vmatpush1.msra.mxu0 %v5295
    %6788 = vmatprep.subr.mxu0 0.0
    %6789 = vmatpush1.msra.mxu0 %v5296
    %6790 = vmatprep.subr.mxu0 0.0
    %6791 = vmatpush1.msra.mxu0 %v5297
    %6792 = vmatprep.subr.mxu0 0.0
    %6793 = vmatpush1.msra.mxu0 %v5298
    %6794 = vmatprep.subr.mxu0 0.0
    %6795 = vmatpush1.msra.mxu0 %v5299
    %6796 = vmatprep.subr.mxu0 0.0
    %6797 = vmatpush1.msra.mxu0 %v5300
    %6798 = vmatprep.subr.mxu0 0.0
    %6799 = vmatpush1.msra.mxu0 %v5301
    %6800 = vmatprep.subr.mxu0 0.0
    %6801 = vmatpush1.msra.mxu0 %v5302
    %6802 = vmatprep.subr.mxu0 0.0
    %6803 = vmatpush1.msra.mxu0 %v5303
    %6804 = vmatprep.subr.mxu0 0.0
    %6805 = vmatpush1.msra.mxu0 %v6518
    %6806 = vmatprep.subr.mxu0 0.0
    %6807 = vmatpush1.msra.mxu0 0.0
    %6808 = vmatprep.subr.mxu0 0.0
    %6809 = vmatpush1.msra.mxu0 0.0
    %6810 = vmatprep.subr.mxu0 0.0
    %6811 = vmatpush1.msra.mxu0 0.0
    %6812 = vmatprep.subr.mxu0 0.0
    %6813 = vmatpush1.msra.mxu0 0.0
    %6814 = vmatprep.subr.mxu0 0.0
    %6815 = vmatpush1.msra.mxu0 0.0
    %6816 = vmatprep.subr.mxu0 0.0
    %6817 = vmatpush1.msra.mxu0 0.0
    %6818 = vmatprep.subr.mxu0 0.0
    %6819 = vmatpush1.msra.mxu0 0.0
    %6820 = vmatprep.subr.mxu0 0.0
    %6821 = vmatpush1.msra.mxu0 0.0
    %6822 = vmatprep.subr.mxu0 0.0
    %6823 = vmatpush1.msra.mxu0 0.0
    %6824 = vmatprep.subr.mxu0 0.0
    %6825 = vmatpush1.msra.mxu0 0.0
    %6826 = vmatprep.subr.mxu0 0.0
    %6827 = vmatpush1.msra.mxu0 0.0
    %6828 = vmatprep.subr.mxu0 0.0
    %6829 = vmatpush1.msra.mxu0 0.0
    %6830 = vmatprep.mubr.f32.mxu0 %v6764
    %6831 = vmatmul.mubr.f32.gmra.mrb[0].mxu0 %v6761
    %v6832 = vpop.f32.mrb[0].mxu0
    %v6833 = vadd.f32 0.0, %v6832
    %v6834 = vpop.f32.mrb[0].mxu0
    %6835 = vdwg.mxu0
    %v6836 = vmul.f32 %v6833, %v6594
    %v6837 = vadd.f32 %v6836, %v6601
    %v6838 = vadd.f32 %v6837, %v3141
    %v6839 = vmul.f32 %v6214, %v6510
    %v6840 = vmul.f32 %v6215, %v6511
    %v6842 = vsel %vm2642, %v6840, 0
    %6844 = vmatprep.subr.mxu0 0.0
    %6845 = vmatpush1.msra.mxu0 %v5285
    %6846 = vmatprep.subr.mxu0 0.0
    %6847 = vmatpush1.msra.mxu0 %v5286
    %6848 = vmatprep.subr.mxu0 0.0
    %6849 = vmatpush1.msra.mxu0 %v5287
    %6850 = vmatprep.subr.mxu0 0.0
    %6851 = vmatpush1.msra.mxu0 %v5288
    %6852 = vmatprep.subr.mxu0 0.0
    %6853 = vmatpush1.msra.mxu0 %v5289
    %6854 = vmatprep.subr.mxu0 0.0
    %6855 = vmatpush1.msra.mxu0 %v5290
    %6856 = vmatprep.subr.mxu0 0.0
    %6857 = vmatpush1.msra.mxu0 %v5291
    %6858 = vmatprep.subr.mxu0 0.0
    %6859 = vmatpush1.msra.mxu0 %v5292
    %6860 = vmatprep.subr.mxu0 0.0
    %6861 = vmatpush1.msra.mxu0 %v5293
    %6862 = vmatprep.subr.mxu0 0.0
    %6863 = vmatpush1.msra.mxu0 %v5294
    %6864 = vmatprep.subr.mxu0 0.0
    %6865 = vmatpush1.msra.mxu0 %v5295
    %6866 = vmatprep.subr.mxu0 0.0
    %6867 = vmatpush1.msra.mxu0 %v5296
    %6868 = vmatprep.subr.mxu0 0.0
    %6869 = vmatpush1.msra.mxu0 %v5297
    %6870 = vmatprep.subr.mxu0 0.0
    %6871 = vmatpush1.msra.mxu0 %v5298
    %6872 = vmatprep.subr.mxu0 0.0
    %6873 = vmatpush1.msra.mxu0 %v5299
    %6874 = vmatprep.subr.mxu0 0.0
    %6875 = vmatpush1.msra.mxu0 %v5300
    %6876 = vmatprep.subr.mxu0 0.0
    %6877 = vmatpush1.msra.mxu0 %v5301
    %6878 = vmatprep.subr.mxu0 0.0
    %6879 = vmatpush1.msra.mxu0 %v5302
    %6880 = vmatprep.subr.mxu0 0.0
    %6881 = vmatpush1.msra.mxu0 %v5303
    %6882 = vmatprep.subr.mxu0 0.0
    %6883 = vmatpush1.msra.mxu0 %v6518
    %6884 = vmatprep.subr.mxu0 0.0
    %6885 = vmatpush1.msra.mxu0 0.0
    %6886 = vmatprep.subr.mxu0 0.0
    %6887 = vmatpush1.msra.mxu0 0.0
    %6888 = vmatprep.subr.mxu0 0.0
    %6889 = vmatpush1.msra.mxu0 0.0
    %6890 = vmatprep.subr.mxu0 0.0
    %6891 = vmatpush1.msra.mxu0 0.0
    %6892 = vmatprep.subr.mxu0 0.0
    %6893 = vmatpush1.msra.mxu0 0.0
    %6894 = vmatprep.subr.mxu0 0.0
    %6895 = vmatpush1.msra.mxu0 0.0
    %6896 = vmatprep.subr.mxu0 0.0
    %6897 = vmatpush1.msra.mxu0 0.0
    %6898 = vmatprep.subr.mxu0 0.0
    %6899 = vmatpush1.msra.mxu0 0.0
    %6900 = vmatprep.subr.mxu0 0.0
    %6901 = vmatpush1.msra.mxu0 0.0
    %6902 = vmatprep.subr.mxu0 0.0
    %6903 = vmatpush1.msra.mxu0 0.0
    %6904 = vmatprep.subr.mxu0 0.0
    %6905 = vmatpush1.msra.mxu0 0.0
    %6906 = vmatprep.subr.mxu0 0.0
    %6907 = vmatpush1.msra.mxu0 0.0
    %6908 = vmatprep.mubr.f32.mxu0 %v6842
    %6909 = vmatmul.mubr.f32.gmra.mrb[0].mxu0 %v6839
    %v6910 = vpop.f32.mrb[0].mxu0
    %v6911 = vadd.f32 0.0, %v6910
    %v6912 = vpop.f32.mrb[0].mxu0
    %6913 = vdwg.mxu0
    %v6914 = vmul.f32 %v6911, %v6594
    %v6915 = vadd.f32 %v6914, %v6601
    %v6916 = vadd.f32 %v6915, %v3219
    %v6917 = vmul.f32 %v6268, %v6510
    %v6918 = vmul.f32 %v6269, %v6511
    %v6920 = vsel %vm2642, %v6918, 0
    %6922 = vmatprep.subr.mxu0 0.0
    %6923 = vmatpush1.msra.mxu0 %v5285
    %6924 = vmatprep.subr.mxu0 0.0
    %6925 = vmatpush1.msra.mxu0 %v5286
    %6926 = vmatprep.subr.mxu0 0.0
    %6927 = vmatpush1.msra.mxu0 %v5287
    %6928 = vmatprep.subr.mxu0 0.0
    %6929 = vmatpush1.msra.mxu0 %v5288
    %6930 = vmatprep.subr.mxu0 0.0
    %6931 = vmatpush1.msra.mxu0 %v5289
    %6932 = vmatprep.subr.mxu0 0.0
    %6933 = vmatpush1.msra.mxu0 %v5290
    %6934 = vmatprep.subr.mxu0 0.0
    %6935 = vmatpush1.msra.mxu0 %v5291
    %6936 = vmatprep.subr.mxu0 0.0
    %6937 = vmatpush1.msra.mxu0 %v5292
    %6938 = vmatprep.subr.mxu0 0.0
    %6939 = vmatpush1.msra.mxu0 %v5293
    %6940 = vmatprep.subr.mxu0 0.0
    %6941 = vmatpush1.msra.mxu0 %v5294
    %6942 = vmatprep.subr.mxu0 0.0
    %6943 = vmatpush1.msra.mxu0 %v5295
    %6944 = vmatprep.subr.mxu0 0.0
    %6945 = vmatpush1.msra.mxu0 %v5296
    %6946 = vmatprep.subr.mxu0 0.0
    %6947 = vmatpush1.msra.mxu0 %v5297
    %6948 = vmatprep.subr.mxu0 0.0
    %6949 = vmatpush1.msra.mxu0 %v5298
    %6950 = vmatprep.subr.mxu0 0.0
    %6951 = vmatpush1.msra.mxu0 %v5299
    %6952 = vmatprep.subr.mxu0 0.0
    %6953 = vmatpush1.msra.mxu0 %v5300
    %6954 = vmatprep.subr.mxu0 0.0
    %6955 = vmatpush1.msra.mxu0 %v5301
    %6956 = vmatprep.subr.mxu0 0.0
    %6957 = vmatpush1.msra.mxu0 %v5302
    %6958 = vmatprep.subr.mxu0 0.0
    %6959 = vmatpush1.msra.mxu0 %v5303
    %6960 = vmatprep.subr.mxu0 0.0
    %6961 = vmatpush1.msra.mxu0 %v6518
    %6962 = vmatprep.subr.mxu0 0.0
    %6963 = vmatpush1.msra.mxu0 0.0
    %6964 = vmatprep.subr.mxu0 0.0
    %6965 = vmatpush1.msra.mxu0 0.0
    %6966 = vmatprep.subr.mxu0 0.0
    %6967 = vmatpush1.msra.mxu0 0.0
    %6968 = vmatprep.subr.mxu0 0.0
    %6969 = vmatpush1.msra.mxu0 0.0
    %6970 = vmatprep.subr.mxu0 0.0
    %6971 = vmatpush1.msra.mxu0 0.0
    %6972 = vmatprep.subr.mxu0 0.0
    %6973 = vmatpush1.msra.mxu0 0.0
    %6974 = vmatprep.subr.mxu0 0.0
    %6975 = vmatpush1.msra.mxu0 0.0
    %6976 = vmatprep.subr.mxu0 0.0
    %6977 = vmatpush1.msra.mxu0 0.0
    %6978 = vmatprep.subr.mxu0 0.0
    %6979 = vmatpush1.msra.mxu0 0.0
    %6980 = vmatprep.subr.mxu0 0.0
    %6981 = vmatpush1.msra.mxu0 0.0
    %6982 = vmatprep.subr.mxu0 0.0
    %6983 = vmatpush1.msra.mxu0 0.0
    %6984 = vmatprep.subr.mxu0 0.0
    %6985 = vmatpush1.msra.mxu0 0.0
    %6986 = vmatprep.mubr.f32.mxu0 %v6920
    %6987 = vmatmul.mubr.f32.gmra.mrb[0].mxu0 %v6917
    %v6988 = vpop.f32.mrb[0].mxu0
    %v6989 = vadd.f32 0.0, %v6988
    %v6990 = vpop.f32.mrb[0].mxu0
    %6991 = vdwg.mxu0
    %v6992 = vmul.f32 %v6989, %v6594
    %v6993 = vadd.f32 %v6992, %v6601
    %v6994 = vadd.f32 %v6993, %v3297
    %v6995 = vmul.f32 %v6322, %v6510
    %v6996 = vmul.f32 %v6323, %v6511
    %v6998 = vsel %vm2642, %v6996, 0
    %7000 = vmatprep.subr.mxu0 0.0
    %7001 = vmatpush1.msra.mxu0 %v5285
    %7002 = vmatprep.subr.mxu0 0.0
    %7003 = vmatpush1.msra.mxu0 %v5286
    %7004 = vmatprep.subr.mxu0 0.0
    %7005 = vmatpush1.msra.mxu0 %v5287
    %7006 = vmatprep.subr.mxu0 0.0
    %7007 = vmatpush1.msra.mxu0 %v5288
    %7008 = vmatprep.subr.mxu0 0.0
    %7009 = vmatpush1.msra.mxu0 %v5289
    %7010 = vmatprep.subr.mxu0 0.0
    %7011 = vmatpush1.msra.mxu0 %v5290
    %7012 = vmatprep.subr.mxu0 0.0
    %7013 = vmatpush1.msra.mxu0 %v5291
    %7014 = vmatprep.subr.mxu0 0.0
    %7015 = vmatpush1.msra.mxu0 %v5292
    %7016 = vmatprep.subr.mxu0 0.0
    %7017 = vmatpush1.msra.mxu0 %v5293
    %7018 = vmatprep.subr.mxu0 0.0
    %7019 = vmatpush1.msra.mxu0 %v5294
    %7020 = vmatprep.subr.mxu0 0.0
    %7021 = vmatpush1.msra.mxu0 %v5295
    %7022 = vmatprep.subr.mxu0 0.0
    %7023 = vmatpush1.msra.mxu0 %v5296
    %7024 = vmatprep.subr.mxu0 0.0
    %7025 = vmatpush1.msra.mxu0 %v5297
    %7026 = vmatprep.subr.mxu0 0.0
    %7027 = vmatpush1.msra.mxu0 %v5298
    %7028 = vmatprep.subr.mxu0 0.0
    %7029 = vmatpush1.msra.mxu0 %v5299
    %7030 = vmatprep.subr.mxu0 0.0
    %7031 = vmatpush1.msra.mxu0 %v5300
    %7032 = vmatprep.subr.mxu0 0.0
    %7033 = vmatpush1.msra.mxu0 %v5301
    %7034 = vmatprep.subr.mxu0 0.0
    %7035 = vmatpush1.msra.mxu0 %v5302
    %7036 = vmatprep.subr.mxu0 0.0
    %7037 = vmatpush1.msra.mxu0 %v5303
    %7038 = vmatprep.subr.mxu0 0.0
    %7039 = vmatpush1.msra.mxu0 %v6518
    %7040 = vmatprep.subr.mxu0 0.0
    %7041 = vmatpush1.msra.mxu0 0.0
    %7042 = vmatprep.subr.mxu0 0.0
    %7043 = vmatpush1.msra.mxu0 0.0
    %7044 = vmatprep.subr.mxu0 0.0
    %7045 = vmatpush1.msra.mxu0 0.0
    %7046 = vmatprep.subr.mxu0 0.0
    %7047 = vmatpush1.msra.mxu0 0.0
    %7048 = vmatprep.subr.mxu0 0.0
    %7049 = vmatpush1.msra.mxu0 0.0
    %7050 = vmatprep.subr.mxu0 0.0
    %7051 = vmatpush1.msra.mxu0 0.0
    %7052 = vmatprep.subr.mxu0 0.0
    %7053 = vmatpush1.msra.mxu0 0.0
    %7054 = vmatprep.subr.mxu0 0.0
    %7055 = vmatpush1.msra.mxu0 0.0
    %7056 = vmatprep.subr.mxu0 0.0
    %7057 = vmatpush1.msra.mxu0 0.0
    %7058 = vmatprep.subr.mxu0 0.0
    %7059 = vmatpush1.msra.mxu0 0.0
    %7060 = vmatprep.subr.mxu0 0.0
    %7061 = vmatpush1.msra.mxu0 0.0
    %7062 = vmatprep.subr.mxu0 0.0
    %7063 = vmatpush1.msra.mxu0 0.0
    %7064 = vmatprep.mubr.f32.mxu0 %v6998
    %7065 = vmatmul.mubr.f32.gmra.mrb[0].mxu0 %v6995
    %v7066 = vpop.f32.mrb[0].mxu0
    %v7067 = vadd.f32 0.0, %v7066
    %v7068 = vpop.f32.mrb[0].mxu0
    %7069 = vdwg.mxu0
    %v7070 = vmul.f32 %v7067, %v6594
    %v7071 = vadd.f32 %v7070, %v6601
    %v7072 = vadd.f32 %v7071, %v3375
    %v7073 = vld [vmem:[%s41] sm:$0xff]
    %v7074 = vld [vmem:[%s41 + $0x8] sm:$0xff]
    %v7075 = vld [vmem:[%s41 + $0x10] sm:$0xff]
    %v7076 = vld [vmem:[%s41 + $0x18] sm:$0xff]
    %v7077 = vld [vmem:[%s41 + $0x20] sm:$0xff]
    %v7078 = vld [vmem:[%s41 + $0x28] sm:$0xff]
    %v7079 = vld [vmem:[%s41 + $0x30] sm:$0xff]
    %s7080 = scalar_lea.vmem %s41, 56
    %v7081 = vld [vmem:[%s7080] sm:$0xff]
    %v7082 = vld [vmem:[%s7080 + $0x8] sm:$0xff]
    %v7083 = vld [vmem:[%s7080 + $0x10] sm:$0xff]
    %v7084 = vld [vmem:[%s7080 + $0x18] sm:$0xff]
    %v7085 = vld [vmem:[%s7080 + $0x20] sm:$0xff]
    %v7086 = vld [vmem:[%s7080 + $0x28] sm:$0xff]
    %v7087 = vld [vmem:[%s7080 + $0x30] sm:$0xff]
    %v7089 = vsel %vm1695, %v4844, 0
    %7091 = vmatprep.subr.mxu0 0.0
    %7092 = vmatpush1.msra.mxu0 %v7081
    %7093 = vmatprep.subr.mxu0 0.0
    %7094 = vmatpush1.msra.mxu0 %v7082
    %7095 = vmatprep.subr.mxu0 0.0
    %7096 = vmatpush1.msra.mxu0 %v7083
    %7097 = vmatprep.subr.mxu0 0.0
    %7098 = vmatpush1.msra.mxu0 %v7084
    %7099 = vmatprep.subr.mxu0 0.0
    %7100 = vmatpush1.msra.mxu0 %v7085
    %7101 = vmatprep.subr.mxu0 0.0
    %7102 = vmatpush1.msra.mxu0 %v7086
    %7103 = vmatprep.subr.mxu0 0.0
    %7104 = vmatpush1.msra.mxu0 %v7087
    %7105 = vmatprep.subr.mxu0 0.0
    %7106 = vmatpush1.msra.mxu0 0.0
    %7107 = vmatprep.subr.mxu0 0.0
    %7108 = vmatpush1.msra.mxu0 0.0
    %7109 = vmatprep.subr.mxu0 0.0
    %7110 = vmatpush1.msra.mxu0 0.0
    %7111 = vmatprep.subr.mxu0 0.0
    %7112 = vmatpush1.msra.mxu0 0.0
    %7113 = vmatprep.subr.mxu0 0.0
    %7114 = vmatpush1.msra.mxu0 0.0
    %7115 = vmatprep.subr.mxu0 0.0
    %7116 = vmatpush1.msra.mxu0 0.0
    %7117 = vmatprep.subr.mxu0 0.0
    %7118 = vmatpush1.msra.mxu0 0.0
    %7119 = vmatprep.subr.mxu0 0.0
    %7120 = vmatpush1.msra.mxu0 0.0
    %7121 = vmatprep.subr.mxu0 0.0
    %7122 = vmatpush1.msra.mxu0 0.0
    %7123 = vmatprep.subr.mxu0 0.0
    %7124 = vmatpush1.msra.mxu0 0.0
    %7125 = vmatprep.subr.mxu0 0.0
    %7126 = vmatpush1.msra.mxu0 0.0
    %7127 = vmatprep.subr.mxu0 0.0
    %7128 = vmatpush1.msra.mxu0 0.0
    %7129 = vmatprep.subr.mxu0 0.0
    %7130 = vmatpush1.msra.mxu0 0.0
    %7131 = vmatprep.subr.mxu0 0.0
    %7132 = vmatpush1.msra.mxu0 0.0
    %7133 = vmatprep.subr.mxu0 0.0
    %7134 = vmatpush1.msra.mxu0 0.0
    %7135 = vmatprep.subr.mxu0 0.0
    %7136 = vmatpush1.msra.mxu0 0.0
    %7137 = vmatprep.subr.mxu0 0.0
    %7138 = vmatpush1.msra.mxu0 0.0
    %7139 = vmatprep.subr.mxu0 0.0
    %7140 = vmatpush1.msra.mxu0 0.0
    %7141 = vmatprep.subr.mxu0 0.0
    %7142 = vmatpush1.msra.mxu0 0.0
    %7143 = vmatprep.subr.mxu0 0.0
    %7144 = vmatpush1.msra.mxu0 0.0
    %7145 = vmatprep.subr.mxu0 0.0
    %7146 = vmatpush1.msra.mxu0 0.0
    %7147 = vmatprep.subr.mxu0 0.0
    %7148 = vmatpush1.msra.mxu0 0.0
    %7149 = vmatprep.subr.mxu0 0.0
    %7150 = vmatpush1.msra.mxu0 0.0
    %7151 = vmatprep.subr.mxu0 0.0
    %7152 = vmatpush1.msra.mxu0 0.0
    %7153 = vmatprep.subr.mxu0 0.0
    %7154 = vmatpush1.msra.mxu0 0.0
    %7155 = vmatprep.mubr.f32.mxu0 0.0
    %7156 = vmatmul.mubr.f32.gmra.mrb[0].mxu0 %v7089
    %v7157 = vpop.f32.mrb[0].mxu0
    %v7158 = vadd.f32 0.0, %v7157
    %v7159 = vpop.f32.mrb[0].mxu0
    %7160 = vdwg.mxu0
    %v7162 = vsel %vm1695, %v4766, 0
    %7164 = vmatprep.subr.mxu0 0.0
    %7165 = vmatpush1.msra.mxu0 %v7073
    %7166 = vmatprep.subr.mxu0 0.0
    %7167 = vmatpush1.msra.mxu0 %v7074
    %7168 = vmatprep.subr.mxu0 0.0
    %7169 = vmatpush1.msra.mxu0 %v7075
    %7170 = vmatprep.subr.mxu0 0.0
    %7171 = vmatpush1.msra.mxu0 %v7076
    %7172 = vmatprep.subr.mxu0 0.0
    %7173 = vmatpush1.msra.mxu0 %v7077
    %7174 = vmatprep.subr.mxu0 0.0
    %7175 = vmatpush1.msra.mxu0 %v7078
    %7176 = vmatprep.subr.mxu0 0.0
    %7177 = vmatpush1.msra.mxu0 %v7079
    %7178 = vmatprep.subr.mxu0 0.0
    %7179 = vmatpush1.msra.mxu0 0.0
    %7180 = vmatprep.subr.mxu0 0.0
    %7181 = vmatpush1.msra.mxu0 0.0
    %7182 = vmatprep.subr.mxu0 0.0
    %7183 = vmatpush1.msra.mxu0 0.0
    %7184 = vmatprep.subr.mxu0 0.0
    %7185 = vmatpush1.msra.mxu0 0.0
    %7186 = vmatprep.subr.mxu0 0.0
    %7187 = vmatpush1.msra.mxu0 0.0
    %7188 = vmatprep.subr.mxu0 0.0
    %7189 = vmatpush1.msra.mxu0 0.0
    %7190 = vmatprep.subr.mxu0 0.0
    %7191 = vmatpush1.msra.mxu0 0.0
    %7192 = vmatprep.subr.mxu0 0.0
    %7193 = vmatpush1.msra.mxu0 0.0
    %7194 = vmatprep.subr.mxu0 0.0
    %7195 = vmatpush1.msra.mxu0 0.0
    %7196 = vmatprep.subr.mxu0 0.0
    %7197 = vmatpush1.msra.mxu0 0.0
    %7198 = vmatprep.subr.mxu0 0.0
    %7199 = vmatpush1.msra.mxu0 0.0
    %7200 = vmatprep.subr.mxu0 0.0
    %7201 = vmatpush1.msra.mxu0 0.0
    %7202 = vmatprep.subr.mxu0 0.0
    %7203 = vmatpush1.msra.mxu0 0.0
    %7204 = vmatprep.subr.mxu0 0.0
    %7205 = vmatpush1.msra.mxu0 0.0
    %7206 = vmatprep.subr.mxu0 0.0
    %7207 = vmatpush1.msra.mxu0 0.0
    %7208 = vmatprep.subr.mxu0 0.0
    %7209 = vmatpush1.msra.mxu0 0.0
    %7210 = vmatprep.subr.mxu0 0.0
    %7211 = vmatpush1.msra.mxu0 0.0
    %7212 = vmatprep.subr.mxu0 0.0
    %7213 = vmatpush1.msra.mxu0 0.0
    %7214 = vmatprep.subr.mxu0 0.0
    %7215 = vmatpush1.msra.mxu0 0.0
    %7216 = vmatprep.subr.mxu0 0.0
    %7217 = vmatpush1.msra.mxu0 0.0
    %7218 = vmatprep.subr.mxu0 0.0
    %7219 = vmatpush1.msra.mxu0 0.0
    %7220 = vmatprep.subr.mxu0 0.0
    %7221 = vmatpush1.msra.mxu0 0.0
    %7222 = vmatprep.subr.mxu0 0.0
    %7223 = vmatpush1.msra.mxu0 0.0
    %7224 = vmatprep.subr.mxu0 0.0
    %7225 = vmatpush1.msra.mxu0 0.0
    %7226 = vmatprep.subr.mxu0 0.0
    %7227 = vmatpush1.msra.mxu0 0.0
    %7228 = vmatprep.mubr.f32.mxu0 0.0
    %7229 = vmatmul.mubr.f32.gmra.mrb[0].mxu0 %v7162
    %v7230 = vpop.f32.mrb[0].mxu0
    %v7231 = vadd.f32 %v7158, %v7230
    %v7232 = vpop.f32.mrb[0].mxu0
    %7233 = vdwg.mxu0
    %s7234 = scalar_lea.vmem %s41, 112
    %v7235 = vld [vmem:[%s7234] sm:$0xff]
    %v7236 = vld [vmem:[%s7234 + $0x8] sm:$0xff]
    %v7237 = vld [vmem:[%s7234 + $0x10] sm:$0xff]
    %v7238 = vld [vmem:[%s7234 + $0x18] sm:$0xff]
    %v7239 = vld [vmem:[%s7234 + $0x20] sm:$0xff]
    %v7240 = vld [vmem:[%s7234 + $0x28] sm:$0xff]
    %v7241 = vld [vmem:[%s7234 + $0x30] sm:$0xff]
    %v7243 = vsel %vm1695, %v4922, 0
    %7245 = vmatprep.subr.mxu0 0.0
    %7246 = vmatpush1.msra.mxu0 %v7235
    %7247 = vmatprep.subr.mxu0 0.0
    %7248 = vmatpush1.msra.mxu0 %v7236
    %7249 = vmatprep.subr.mxu0 0.0
    %7250 = vmatpush1.msra.mxu0 %v7237
    %7251 = vmatprep.subr.mxu0 0.0
    %7252 = vmatpush1.msra.mxu0 %v7238
    %7253 = vmatprep.subr.mxu0 0.0
    %7254 = vmatpush1.msra.mxu0 %v7239
    %7255 = vmatprep.subr.mxu0 0.0
    %7256 = vmatpush1.msra.mxu0 %v7240
    %7257 = vmatprep.subr.mxu0 0.0
    %7258 = vmatpush1.msra.mxu0 %v7241
    %7259 = vmatprep.subr.mxu0 0.0
    %7260 = vmatpush1.msra.mxu0 0.0
    %7261 = vmatprep.subr.mxu0 0.0
    %7262 = vmatpush1.msra.mxu0 0.0
    %7263 = vmatprep.subr.mxu0 0.0
    %7264 = vmatpush1.msra.mxu0 0.0
    %7265 = vmatprep.subr.mxu0 0.0
    %7266 = vmatpush1.msra.mxu0 0.0
    %7267 = vmatprep.subr.mxu0 0.0
    %7268 = vmatpush1.msra.mxu0 0.0
    %7269 = vmatprep.subr.mxu0 0.0
    %7270 = vmatpush1.msra.mxu0 0.0
    %7271 = vmatprep.subr.mxu0 0.0
    %7272 = vmatpush1.msra.mxu0 0.0
    %7273 = vmatprep.subr.mxu0 0.0
    %7274 = vmatpush1.msra.mxu0 0.0
    %7275 = vmatprep.subr.mxu0 0.0
    %7276 = vmatpush1.msra.mxu0 0.0
    %7277 = vmatprep.subr.mxu0 0.0
    %7278 = vmatpush1.msra.mxu0 0.0
    %7279 = vmatprep.subr.mxu0 0.0
    %7280 = vmatpush1.msra.mxu0 0.0
    %7281 = vmatprep.subr.mxu0 0.0
    %7282 = vmatpush1.msra.mxu0 0.0
    %7283 = vmatprep.subr.mxu0 0.0
    %7284 = vmatpush1.msra.mxu0 0.0
    %7285 = vmatprep.subr.mxu0 0.0
    %7286 = vmatpush1.msra.mxu0 0.0
    %7287 = vmatprep.subr.mxu0 0.0
    %7288 = vmatpush1.msra.mxu0 0.0
    %7289 = vmatprep.subr.mxu0 0.0
    %7290 = vmatpush1.msra.mxu0 0.0
    %7291 = vmatprep.subr.mxu0 0.0
    %7292 = vmatpush1.msra.mxu0 0.0
    %7293 = vmatprep.subr.mxu0 0.0
    %7294 = vmatpush1.msra.mxu0 0.0
    %7295 = vmatprep.subr.mxu0 0.0
    %7296 = vmatpush1.msra.mxu0 0.0
    %7297 = vmatprep.subr.mxu0 0.0
    %7298 = vmatpush1.msra.mxu0 0.0
    %7299 = vmatprep.subr.mxu0 0.0
    %7300 = vmatpush1.msra.mxu0 0.0
    %7301 = vmatprep.subr.mxu0 0.0
    %7302 = vmatpush1.msra.mxu0 0.0
    %7303 = vmatprep.subr.mxu0 0.0
    %7304 = vmatpush1.msra.mxu0 0.0
    %7305 = vmatprep.subr.mxu0 0.0
    %7306 = vmatpush1.msra.mxu0 0.0
    %7307 = vmatprep.subr.mxu0 0.0
    %7308 = vmatpush1.msra.mxu0 0.0
    %7309 = vmatprep.mubr.f32.mxu0 0.0
    %7310 = vmatmul.mubr.f32.gmra.mrb[0].mxu0 %v7243
    %v7311 = vpop.f32.mrb[0].mxu0
    %v7312 = vadd.f32 0.0, %v7311
    %v7313 = vpop.f32.mrb[0].mxu0
    %7314 = vdwg.mxu0
    %v7315 = vadd.f32 %v7231, %v7312
    %s7316 = scalar_lea.vmem %s41, 168
    %v7317 = vld [vmem:[%s7316] sm:$0xff]
    %v7318 = vld [vmem:[%s7316 + $0x8] sm:$0xff]
    %v7319 = vld [vmem:[%s7316 + $0x10] sm:$0xff]
    %v7320 = vld [vmem:[%s7316 + $0x18] sm:$0xff]
    %v7321 = vld [vmem:[%s7316 + $0x20] sm:$0xff]
    %v7322 = vld [vmem:[%s7316 + $0x28] sm:$0xff]
    %v7323 = vld [vmem:[%s7316 + $0x30] sm:$0xff]
    %v7325 = vsel %vm1695, %v5000, 0
    %7327 = vmatprep.subr.mxu0 0.0
    %7328 = vmatpush1.msra.mxu0 %v7317
    %7329 = vmatprep.subr.mxu0 0.0
    %7330 = vmatpush1.msra.mxu0 %v7318
    %7331 = vmatprep.subr.mxu0 0.0
    %7332 = vmatpush1.msra.mxu0 %v7319
    %7333 = vmatprep.subr.mxu0 0.0
    %7334 = vmatpush1.msra.mxu0 %v7320
    %7335 = vmatprep.subr.mxu0 0.0
    %7336 = vmatpush1.msra.mxu0 %v7321
    %7337 = vmatprep.subr.mxu0 0.0
    %7338 = vmatpush1.msra.mxu0 %v7322
    %7339 = vmatprep.subr.mxu0 0.0
    %7340 = vmatpush1.msra.mxu0 %v7323
    %7341 = vmatprep.subr.mxu0 0.0
    %7342 = vmatpush1.msra.mxu0 0.0
    %7343 = vmatprep.subr.mxu0 0.0
    %7344 = vmatpush1.msra.mxu0 0.0
    %7345 = vmatprep.subr.mxu0 0.0
    %7346 = vmatpush1.msra.mxu0 0.0
    %7347 = vmatprep.subr.mxu0 0.0
    %7348 = vmatpush1.msra.mxu0 0.0
    %7349 = vmatprep.subr.mxu0 0.0
    %7350 = vmatpush1.msra.mxu0 0.0
    %7351 = vmatprep.subr.mxu0 0.0
    %7352 = vmatpush1.msra.mxu0 0.0
    %7353 = vmatprep.subr.mxu0 0.0
    %7354 = vmatpush1.msra.mxu0 0.0
    %7355 = vmatprep.subr.mxu0 0.0
    %7356 = vmatpush1.msra.mxu0 0.0
    %7357 = vmatprep.subr.mxu0 0.0
    %7358 = vmatpush1.msra.mxu0 0.0
    %7359 = vmatprep.subr.mxu0 0.0
    %7360 = vmatpush1.msra.mxu0 0.0
    %7361 = vmatprep.subr.mxu0 0.0
    %7362 = vmatpush1.msra.mxu0 0.0
    %7363 = vmatprep.subr.mxu0 0.0
    %7364 = vmatpush1.msra.mxu0 0.0
    %7365 = vmatprep.subr.mxu0 0.0
    %7366 = vmatpush1.msra.mxu0 0.0
    %7367 = vmatprep.subr.mxu0 0.0
    %7368 = vmatpush1.msra.mxu0 0.0
    %7369 = vmatprep.subr.mxu0 0.0
    %7370 = vmatpush1.msra.mxu0 0.0
    %7371 = vmatprep.subr.mxu0 0.0
    %7372 = vmatpush1.msra.mxu0 0.0
    %7373 = vmatprep.subr.mxu0 0.0
    %7374 = vmatpush1.msra.mxu0 0.0
    %7375 = vmatprep.subr.mxu0 0.0
    %7376 = vmatpush1.msra.mxu0 0.0
    %7377 = vmatprep.subr.mxu0 0.0
    %7378 = vmatpush1.msra.mxu0 0.0
    %7379 = vmatprep.subr.mxu0 0.0
    %7380 = vmatpush1.msra.mxu0 0.0
    %7381 = vmatprep.subr.mxu0 0.0
    %7382 = vmatpush1.msra.mxu0 0.0
    %7383 = vmatprep.subr.mxu0 0.0
    %7384 = vmatpush1.msra.mxu0 0.0
    %7385 = vmatprep.subr.mxu0 0.0
    %7386 = vmatpush1.msra.mxu0 0.0
    %7387 = vmatprep.subr.mxu0 0.0
    %7388 = vmatpush1.msra.mxu0 0.0
    %7389 = vmatprep.subr.mxu0 0.0
    %7390 = vmatpush1.msra.mxu0 0.0
    %7391 = vmatprep.mubr.f32.mxu0 0.0
    %7392 = vmatmul.mubr.f32.gmra.mrb[0].mxu0 %v7325
    %v7393 = vpop.f32.mrb[0].mxu0
    %v7394 = vadd.f32 0.0, %v7393
    %v7395 = vpop.f32.mrb[0].mxu0
    %7396 = vdwg.mxu0
    %v7397 = vadd.f32 %v7315, %v7394
    %s7398 = scalar_lea.vmem %s41, 224
    %v7399 = vld [vmem:[%s7398] sm:$0xff]
    %v7400 = vld [vmem:[%s7398 + $0x8] sm:$0xff]
    %v7401 = vld [vmem:[%s7398 + $0x10] sm:$0xff]
    %v7402 = vld [vmem:[%s7398 + $0x18] sm:$0xff]
    %v7403 = vld [vmem:[%s7398 + $0x20] sm:$0xff]
    %v7404 = vld [vmem:[%s7398 + $0x28] sm:$0xff]
    %v7405 = vld [vmem:[%s7398 + $0x30] sm:$0xff]
    %v7407 = vsel %vm1695, %v5078, 0
    %7409 = vmatprep.subr.mxu0 0.0
    %7410 = vmatpush1.msra.mxu0 %v7399
    %7411 = vmatprep.subr.mxu0 0.0
    %7412 = vmatpush1.msra.mxu0 %v7400
    %7413 = vmatprep.subr.mxu0 0.0
    %7414 = vmatpush1.msra.mxu0 %v7401
    %7415 = vmatprep.subr.mxu0 0.0
    %7416 = vmatpush1.msra.mxu0 %v7402
    %7417 = vmatprep.subr.mxu0 0.0
    %7418 = vmatpush1.msra.mxu0 %v7403
    %7419 = vmatprep.subr.mxu0 0.0
    %7420 = vmatpush1.msra.mxu0 %v7404
    %7421 = vmatprep.subr.mxu0 0.0
    %7422 = vmatpush1.msra.mxu0 %v7405
    %7423 = vmatprep.subr.mxu0 0.0
    %7424 = vmatpush1.msra.mxu0 0.0
    %7425 = vmatprep.subr.mxu0 0.0
    %7426 = vmatpush1.msra.mxu0 0.0
    %7427 = vmatprep.subr.mxu0 0.0
    %7428 = vmatpush1.msra.mxu0 0.0
    %7429 = vmatprep.subr.mxu0 0.0
    %7430 = vmatpush1.msra.mxu0 0.0
    %7431 = vmatprep.subr.mxu0 0.0
    %7432 = vmatpush1.msra.mxu0 0.0
    %7433 = vmatprep.subr.mxu0 0.0
    %7434 = vmatpush1.msra.mxu0 0.0
    %7435 = vmatprep.subr.mxu0 0.0
    %7436 = vmatpush1.msra.mxu0 0.0
    %7437 = vmatprep.subr.mxu0 0.0
    %7438 = vmatpush1.msra.mxu0 0.0
    %7439 = vmatprep.subr.mxu0 0.0
    %7440 = vmatpush1.msra.mxu0 0.0
    %7441 = vmatprep.subr.mxu0 0.0
    %7442 = vmatpush1.msra.mxu0 0.0
    %7443 = vmatprep.subr.mxu0 0.0
    %7444 = vmatpush1.msra.mxu0 0.0
    %7445 = vmatprep.subr.mxu0 0.0
    %7446 = vmatpush1.msra.mxu0 0.0
    %7447 = vmatprep.subr.mxu0 0.0
    %7448 = vmatpush1.msra.mxu0 0.0
    %7449 = vmatprep.subr.mxu0 0.0
    %7450 = vmatpush1.msra.mxu0 0.0
    %7451 = vmatprep.subr.mxu0 0.0
    %7452 = vmatpush1.msra.mxu0 0.0
    %7453 = vmatprep.subr.mxu0 0.0
    %7454 = vmatpush1.msra.mxu0 0.0
    %7455 = vmatprep.subr.mxu0 0.0
    %7456 = vmatpush1.msra.mxu0 0.0
    %7457 = vmatprep.subr.mxu0 0.0
    %7458 = vmatpush1.msra.mxu0 0.0
    %7459 = vmatprep.subr.mxu0 0.0
    %7460 = vmatpush1.msra.mxu0 0.0
    %7461 = vmatprep.subr.mxu0 0.0
    %7462 = vmatpush1.msra.mxu0 0.0
    %7463 = vmatprep.subr.mxu0 0.0
    %7464 = vmatpush1.msra.mxu0 0.0
    %7465 = vmatprep.subr.mxu0 0.0
    %7466 = vmatpush1.msra.mxu0 0.0
    %7467 = vmatprep.subr.mxu0 0.0
    %7468 = vmatpush1.msra.mxu0 0.0
    %7469 = vmatprep.subr.mxu0 0.0
    %7470 = vmatpush1.msra.mxu0 0.0
    %7471 = vmatprep.subr.mxu0 0.0
    %7472 = vmatpush1.msra.mxu0 0.0
    %7473 = vmatprep.mubr.f32.mxu0 0.0
    %7474 = vmatmul.mubr.f32.gmra.mrb[0].mxu0 %v7407
    %v7475 = vpop.f32.mrb[0].mxu0
    %v7476 = vadd.f32 0.0, %v7475
    %v7477 = vpop.f32.mrb[0].mxu0
    %7478 = vdwg.mxu0
    %v7479 = vadd.f32 %v7397, %v7476
    %s7480 = scalar_lea.vmem %s41, 280
    %v7481 = vld [vmem:[%s7480] sm:$0xff]
    %v7482 = vld [vmem:[%s7480 + $0x8] sm:$0xff]
    %v7483 = vld [vmem:[%s7480 + $0x10] sm:$0xff]
    %v7484 = vld [vmem:[%s7480 + $0x18] sm:$0xff]
    %v7485 = vld [vmem:[%s7480 + $0x20] sm:$0xff]
    %v7486 = vld [vmem:[%s7480 + $0x28] sm:$0xff]
    %v7487 = vld [vmem:[%s7480 + $0x30] sm:$0xff]
    %v7489 = vsel %vm1695, %v5156, 0
    %7491 = vmatprep.subr.mxu0 0.0
    %7492 = vmatpush1.msra.mxu0 %v7481
    %7493 = vmatprep.subr.mxu0 0.0
    %7494 = vmatpush1.msra.mxu0 %v7482
    %7495 = vmatprep.subr.mxu0 0.0
    %7496 = vmatpush1.msra.mxu0 %v7483
    %7497 = vmatprep.subr.mxu0 0.0
    %7498 = vmatpush1.msra.mxu0 %v7484
    %7499 = vmatprep.subr.mxu0 0.0
    %7500 = vmatpush1.msra.mxu0 %v7485
    %7501 = vmatprep.subr.mxu0 0.0
    %7502 = vmatpush1.msra.mxu0 %v7486
    %7503 = vmatprep.subr.mxu0 0.0
    %7504 = vmatpush1.msra.mxu0 %v7487
    %7505 = vmatprep.subr.mxu0 0.0
    %7506 = vmatpush1.msra.mxu0 0.0
    %7507 = vmatprep.subr.mxu0 0.0
    %7508 = vmatpush1.msra.mxu0 0.0
    %7509 = vmatprep.subr.mxu0 0.0
    %7510 = vmatpush1.msra.mxu0 0.0
    %7511 = vmatprep.subr.mxu0 0.0
    %7512 = vmatpush1.msra.mxu0 0.0
    %7513 = vmatprep.subr.mxu0 0.0
    %7514 = vmatpush1.msra.mxu0 0.0
    %7515 = vmatprep.subr.mxu0 0.0
    %7516 = vmatpush1.msra.mxu0 0.0
    %7517 = vmatprep.subr.mxu0 0.0
    %7518 = vmatpush1.msra.mxu0 0.0
    %7519 = vmatprep.subr.mxu0 0.0
    %7520 = vmatpush1.msra.mxu0 0.0
    %7521 = vmatprep.subr.mxu0 0.0
    %7522 = vmatpush1.msra.mxu0 0.0
    %7523 = vmatprep.subr.mxu0 0.0
    %7524 = vmatpush1.msra.mxu0 0.0
    %7525 = vmatprep.subr.mxu0 0.0
    %7526 = vmatpush1.msra.mxu0 0.0
    %7527 = vmatprep.subr.mxu0 0.0
    %7528 = vmatpush1.msra.mxu0 0.0
    %7529 = vmatprep.subr.mxu0 0.0
    %7530 = vmatpush1.msra.mxu0 0.0
    %7531 = vmatprep.subr.mxu0 0.0
    %7532 = vmatpush1.msra.mxu0 0.0
    %7533 = vmatprep.subr.mxu0 0.0
    %7534 = vmatpush1.msra.mxu0 0.0
    %7535 = vmatprep.subr.mxu0 0.0
    %7536 = vmatpush1.msra.mxu0 0.0
    %7537 = vmatprep.subr.mxu0 0.0
    %7538 = vmatpush1.msra.mxu0 0.0
    %7539 = vmatprep.subr.mxu0 0.0
    %7540 = vmatpush1.msra.mxu0 0.0
    %7541 = vmatprep.subr.mxu0 0.0
    %7542 = vmatpush1.msra.mxu0 0.0
    %7543 = vmatprep.subr.mxu0 0.0
    %7544 = vmatpush1.msra.mxu0 0.0
    %7545 = vmatprep.subr.mxu0 0.0
    %7546 = vmatpush1.msra.mxu0 0.0
    %7547 = vmatprep.subr.mxu0 0.0
    %7548 = vmatpush1.msra.mxu0 0.0
    %7549 = vmatprep.subr.mxu0 0.0
    %7550 = vmatpush1.msra.mxu0 0.0
    %7551 = vmatprep.subr.mxu0 0.0
    %7552 = vmatpush1.msra.mxu0 0.0
    %7553 = vmatprep.subr.mxu0 0.0
    %7554 = vmatpush1.msra.mxu0 0.0
    %7555 = vmatprep.mubr.f32.mxu0 0.0
    %7556 = vmatmul.mubr.f32.gmra.mrb[0].mxu0 %v7489
    %v7557 = vpop.f32.mrb[0].mxu0
    %v7558 = vadd.f32 0.0, %v7557
    %v7559 = vpop.f32.mrb[0].mxu0
    %7560 = vdwg.mxu0
    %v7561 = vadd.f32 %v7479, %v7558
    %s7562 = scalar_lea.vmem %s41, 336
    %v7563 = vld [vmem:[%s7562] sm:$0xff]
    %v7564 = vld [vmem:[%s7562 + $0x8] sm:$0xff]
    %v7565 = vld [vmem:[%s7562 + $0x10] sm:$0xff]
    %v7566 = vld [vmem:[%s7562 + $0x18] sm:$0xff]
    %v7567 = vld [vmem:[%s7562 + $0x20] sm:$0xff]
    %v7568 = vld [vmem:[%s7562 + $0x28] sm:$0xff]
    %v7569 = vld [vmem:[%s7562 + $0x30] sm:$0xff]
    %v7571 = vsel %vm1695, %v5234, 0
    %7573 = vmatprep.subr.mxu0 0.0
    %7574 = vmatpush1.msra.mxu0 %v7563
    %7575 = vmatprep.subr.mxu0 0.0
    %7576 = vmatpush1.msra.mxu0 %v7564
    %7577 = vmatprep.subr.mxu0 0.0
    %7578 = vmatpush1.msra.mxu0 %v7565
    %7579 = vmatprep.subr.mxu0 0.0
    %7580 = vmatpush1.msra.mxu0 %v7566
    %7581 = vmatprep.subr.mxu0 0.0
    %7582 = vmatpush1.msra.mxu0 %v7567
    %7583 = vmatprep.subr.mxu0 0.0
    %7584 = vmatpush1.msra.mxu0 %v7568
    %7585 = vmatprep.subr.mxu0 0.0
    %7586 = vmatpush1.msra.mxu0 %v7569
    %7587 = vmatprep.subr.mxu0 0.0
    %7588 = vmatpush1.msra.mxu0 0.0
    %7589 = vmatprep.subr.mxu0 0.0
    %7590 = vmatpush1.msra.mxu0 0.0
    %7591 = vmatprep.subr.mxu0 0.0
    %7592 = vmatpush1.msra.mxu0 0.0
    %7593 = vmatprep.subr.mxu0 0.0
    %7594 = vmatpush1.msra.mxu0 0.0
    %7595 = vmatprep.subr.mxu0 0.0
    %7596 = vmatpush1.msra.mxu0 0.0
    %7597 = vmatprep.subr.mxu0 0.0
    %7598 = vmatpush1.msra.mxu0 0.0
    %7599 = vmatprep.subr.mxu0 0.0
    %7600 = vmatpush1.msra.mxu0 0.0
    %7601 = vmatprep.subr.mxu0 0.0
    %7602 = vmatpush1.msra.mxu0 0.0
    %7603 = vmatprep.subr.mxu0 0.0
    %7604 = vmatpush1.msra.mxu0 0.0
    %7605 = vmatprep.subr.mxu0 0.0
    %7606 = vmatpush1.msra.mxu0 0.0
    %7607 = vmatprep.subr.mxu0 0.0
    %7608 = vmatpush1.msra.mxu0 0.0
    %7609 = vmatprep.subr.mxu0 0.0
    %7610 = vmatpush1.msra.mxu0 0.0
    %7611 = vmatprep.subr.mxu0 0.0
    %7612 = vmatpush1.msra.mxu0 0.0
    %7613 = vmatprep.subr.mxu0 0.0
    %7614 = vmatpush1.msra.mxu0 0.0
    %7615 = vmatprep.subr.mxu0 0.0
    %7616 = vmatpush1.msra.mxu0 0.0
    %7617 = vmatprep.subr.mxu0 0.0
    %7618 = vmatpush1.msra.mxu0 0.0
    %7619 = vmatprep.subr.mxu0 0.0
    %7620 = vmatpush1.msra.mxu0 0.0
    %7621 = vmatprep.subr.mxu0 0.0
    %7622 = vmatpush1.msra.mxu0 0.0
    %7623 = vmatprep.subr.mxu0 0.0
    %7624 = vmatpush1.msra.mxu0 0.0
    %7625 = vmatprep.subr.mxu0 0.0
    %7626 = vmatpush1.msra.mxu0 0.0
    %7627 = vmatprep.subr.mxu0 0.0
    %7628 = vmatpush1.msra.mxu0 0.0
    %7629 = vmatprep.subr.mxu0 0.0
    %7630 = vmatpush1.msra.mxu0 0.0
    %7631 = vmatprep.subr.mxu0 0.0
    %7632 = vmatpush1.msra.mxu0 0.0
    %7633 = vmatprep.subr.mxu0 0.0
    %7634 = vmatpush1.msra.mxu0 0.0
    %7635 = vmatprep.subr.mxu0 0.0
    %7636 = vmatpush1.msra.mxu0 0.0
    %7637 = vmatprep.mubr.f32.mxu0 0.0
    %7638 = vmatmul.mubr.f32.gmra.mrb[0].mxu0 %v7571
    %v7639 = vpop.f32.mrb[0].mxu0
    %v7640 = vadd.f32 0.0, %v7639
    %v7641 = vpop.f32.mrb[0].mxu0
    %7642 = vdwg.mxu0
    %v7643 = vadd.f32 %v7561, %v7640
    %v7644 = vld [vmem:[%s13] sm:$0x1]
    %v7646 = vlaneseq
    %v7647 = vshrl.u32 %v7646, 7
    %v7648 = vsub.s32 0, %v7647
    %v7649 = vrot.slane %v7644, %v7648
    %v7651 = vadd.f32 %v7643, %v7649
    %v7652 = vmax.f32 %v7651, 0.0
    %v7653 = vld [vmem:[%s43] sm:$0xff]
    %v7654 = vld [vmem:[%s43 + $0x8] sm:$0xff]
    %v7655 = vld [vmem:[%s43 + $0x10] sm:$0xff]
    %v7656 = vld [vmem:[%s43 + $0x18] sm:$0xff]
    %v7657 = vld [vmem:[%s43 + $0x20] sm:$0xff]
    %v7658 = vld [vmem:[%s43 + $0x28] sm:$0xff]
    %v7659 = vld [vmem:[%s43 + $0x30] sm:$0xff]
    %v7660 = vld [vmem:[%s43 + $0x38] sm:$0xff]
    %v7661 = vld [vmem:[%s43 + $0x40] sm:$0xff]
    %v7662 = vld [vmem:[%s43 + $0x48] sm:$0xff]
    %v7663 = vld [vmem:[%s43 + $0x50] sm:$0x1]
    %v7664 = vld [vmem:[%s15] sm:$0x1]
    %v7666 = vlaneseq
    %v7667 = vshrl.u32 %v7666, 7
    %v7668 = vsub.s32 0, %v7667
    %v7669 = vrot.slane %v7664, %v7668
    %vm7671 = vcmask 662528
    %v7673 = vsel %vm7671, %v7652, 0
    %vm7675 = vcmask 1040384
    %v7677 = vsel %vm7675, %v7663, 0
    %7679 = vmatprep.subr.mxu0 0.0
    %7680 = vmatpush1.msra.mxu0 %v7653
    %7681 = vmatprep.subr.mxu0 0.0
    %7682 = vmatpush1.msra.mxu0 %v7654
    %7683 = vmatprep.subr.mxu0 0.0
    %7684 = vmatpush1.msra.mxu0 %v7655
    %7685 = vmatprep.subr.mxu0 0.0
    %7686 = vmatpush1.msra.mxu0 %v7656
    %7687 = vmatprep.subr.mxu0 0.0
    %7688 = vmatpush1.msra.mxu0 %v7657
    %7689 = vmatprep.subr.mxu0 0.0
    %7690 = vmatpush1.msra.mxu0 %v7658
    %7691 = vmatprep.subr.mxu0 0.0
    %7692 = vmatpush1.msra.mxu0 %v7659
    %7693 = vmatprep.subr.mxu0 0.0
    %7694 = vmatpush1.msra.mxu0 %v7660
    %7695 = vmatprep.subr.mxu0 0.0
    %7696 = vmatpush1.msra.mxu0 %v7661
    %7697 = vmatprep.subr.mxu0 0.0
    %7698 = vmatpush1.msra.mxu0 %v7662
    %7699 = vmatprep.subr.mxu0 0.0
    %7700 = vmatpush1.msra.mxu0 %v7677
    %7701 = vmatprep.subr.mxu0 0.0
    %7702 = vmatpush1.msra.mxu0 0.0
    %7703 = vmatprep.subr.mxu0 0.0
    %7704 = vmatpush1.msra.mxu0 0.0
    %7705 = vmatprep.subr.mxu0 0.0
    %7706 = vmatpush1.msra.mxu0 0.0
    %7707 = vmatprep.subr.mxu0 0.0
    %7708 = vmatpush1.msra.mxu0 0.0
    %7709 = vmatprep.subr.mxu0 0.0
    %7710 = vmatpush1.msra.mxu0 0.0
    %7711 = vmatprep.subr.mxu0 0.0
    %7712 = vmatpush1.msra.mxu0 0.0
    %7713 = vmatprep.subr.mxu0 0.0
    %7714 = vmatpush1.msra.mxu0 0.0
    %7715 = vmatprep.subr.mxu0 0.0
    %7716 = vmatpush1.msra.mxu0 0.0
    %7717 = vmatprep.subr.mxu0 0.0
    %7718 = vmatpush1.msra.mxu0 0.0
    %7719 = vmatprep.subr.mxu0 0.0
    %7720 = vmatpush1.msra.mxu0 0.0
    %7721 = vmatprep.subr.mxu0 0.0
    %7722 = vmatpush1.msra.mxu0 0.0
    %7723 = vmatprep.subr.mxu0 0.0
    %7724 = vmatpush1.msra.mxu0 0.0
    %7725 = vmatprep.subr.mxu0 0.0
    %7726 = vmatpush1.msra.mxu0 0.0
    %7727 = vmatprep.subr.mxu0 0.0
    %7728 = vmatpush1.msra.mxu0 0.0
    %7729 = vmatprep.subr.mxu0 0.0
    %7730 = vmatpush1.msra.mxu0 0.0
    %7731 = vmatprep.subr.mxu0 0.0
    %7732 = vmatpush1.msra.mxu0 0.0
    %7733 = vmatprep.subr.mxu0 0.0
    %7734 = vmatpush1.msra.mxu0 0.0
    %7735 = vmatprep.subr.mxu0 0.0
    %7736 = vmatpush1.msra.mxu0 0.0
    %7737 = vmatprep.subr.mxu0 0.0
    %7738 = vmatpush1.msra.mxu0 0.0
    %7739 = vmatprep.subr.mxu0 0.0
    %7740 = vmatpush1.msra.mxu0 0.0
    %7741 = vmatprep.subr.mxu0 0.0
    %7742 = vmatpush1.msra.mxu0 0.0
    %7743 = vmatprep.mubr.f32.mxu0 0.0
    %7744 = vmatmul.mubr.f32.gmra.mrb[0].mxu0 %v7673
    %v7745 = vpop.f32.mrb[0].mxu0
    %v7746 = vadd.f32 %v7669, %v7745
    %v7747 = vpop.f32.mrb[0].mxu0
    %7748 = vdwg.mxu0
    %v7749 = vld [vmem:[%s3] sm:$0xff]
    %vm7750 = vcmp.ne.s32.totalorder %v7749, 0
    %v7751 = vsel %vm7750, %v7746, -1e+08
    %v7752 = vsel %vm7671, %v7751, -inf
    %7753 = vmax.xlane.f32.xlu0 %v7752
    %v7754 = vpop.xlane.xlu0 %7753
    %v7755 = vsub.f32 %v7751, %v7754
    %v7756 = vmul.f32 %v7755, 1.442695
    %v7757 = vpow.pop %v7756
    %v7758 = vsel %vm7671, %v7757, 0.0
    %7759 = vadd.xlane.f32.xlu0 %v7758
    %v7760 = vpop.xlane.xlu0 %7759
    %v7761 = vlog2.pop %v7760
    %v7762 = vmul.f32 %v7761, 0.6931472
    %v7763 = vsub.f32 %v7755, %v7762
    %7764 = vst.msk [vmem:[#allocation10] sm:$0xff] %vm7671, %v7763
    %v7765 = vld [vmem:[%s97] sm:$0xff]
    %v7766 = vld [vmem:[%s97 + $0x8] sm:$0xff]
    %v7767 = vld [vmem:[%s97 + $0x10] sm:$0xff]
    %v7768 = vld [vmem:[%s97 + $0x18] sm:$0xff]
    %v7769 = vld [vmem:[%s97 + $0x20] sm:$0xff]
    %v7770 = vld [vmem:[%s97 + $0x28] sm:$0xff]
    %v7771 = vld [vmem:[%s97 + $0x30] sm:$0xff]
    %s7772 = scalar_lea.vmem %s97, 56
    %v7773 = vld [vmem:[%s7772] sm:$0xff]
    %v7774 = vld [vmem:[%s7772 + $0x8] sm:$0xff]
    %v7775 = vld [vmem:[%s7772 + $0x10] sm:$0xff]
    %v7776 = vld [vmem:[%s7772 + $0x18] sm:$0xff]
    %v7777 = vld [vmem:[%s7772 + $0x20] sm:$0xff]
    %v7778 = vld [vmem:[%s7772 + $0x28] sm:$0xff]
    %v7779 = vld [vmem:[%s7772 + $0x30] sm:$0xff]
    %v7781 = vsel %vm1695, %v6682, 0
    %7783 = vmatprep.subr.mxu0 0.0
    %7784 = vmatpush1.msra.mxu0 %v7773
    %7785 = vmatprep.subr.mxu0 0.0
    %7786 = vmatpush1.msra.mxu0 %v7774
    %7787 = vmatprep.subr.mxu0 0.0
    %7788 = vmatpush1.msra.mxu0 %v7775
    %7789 = vmatprep.subr.mxu0 0.0
    %7790 = vmatpush1.msra.mxu0 %v7776
    %7791 = vmatprep.subr.mxu0 0.0
    %7792 = vmatpush1.msra.mxu0 %v7777
    %7793 = vmatprep.subr.mxu0 0.0
    %7794 = vmatpush1.msra.mxu0 %v7778
    %7795 = vmatprep.subr.mxu0 0.0
    %7796 = vmatpush1.msra.mxu0 %v7779
    %7797 = vmatprep.subr.mxu0 0.0
    %7798 = vmatpush1.msra.mxu0 0.0
    %7799 = vmatprep.subr.mxu0 0.0
    %7800 = vmatpush1.msra.mxu0 0.0
    %7801 = vmatprep.subr.mxu0 0.0
    %7802 = vmatpush1.msra.mxu0 0.0
    %7803 = vmatprep.subr.mxu0 0.0
    %7804 = vmatpush1.msra.mxu0 0.0
    %7805 = vmatprep.subr.mxu0 0.0
    %7806 = vmatpush1.msra.mxu0 0.0
    %7807 = vmatprep.subr.mxu0 0.0
    %7808 = vmatpush1.msra.mxu0 0.0
    %7809 = vmatprep.subr.mxu0 0.0
    %7810 = vmatpush1.msra.mxu0 0.0
    %7811 = vmatprep.subr.mxu0 0.0
    %7812 = vmatpush1.msra.mxu0 0.0
    %7813 = vmatprep.subr.mxu0 0.0
    %7814 = vmatpush1.msra.mxu0 0.0
    %7815 = vmatprep.subr.mxu0 0.0
    %7816 = vmatpush1.msra.mxu0 0.0
    %7817 = vmatprep.subr.mxu0 0.0
    %7818 = vmatpush1.msra.mxu0 0.0
    %7819 = vmatprep.subr.mxu0 0.0
    %7820 = vmatpush1.msra.mxu0 0.0
    %7821 = vmatprep.subr.mxu0 0.0
    %7822 = vmatpush1.msra.mxu0 0.0
    %7823 = vmatprep.subr.mxu0 0.0
    %7824 = vmatpush1.msra.mxu0 0.0
    %7825 = vmatprep.subr.mxu0 0.0
    %7826 = vmatpush1.msra.mxu0 0.0
    %7827 = vmatprep.subr.mxu0 0.0
    %7828 = vmatpush1.msra.mxu0 0.0
    %7829 = vmatprep.subr.mxu0 0.0
    %7830 = vmatpush1.msra.mxu0 0.0
    %7831 = vmatprep.subr.mxu0 0.0
    %7832 = vmatpush1.msra.mxu0 0.0
    %7833 = vmatprep.subr.mxu0 0.0
    %7834 = vmatpush1.msra.mxu0 0.0
    %7835 = vmatprep.subr.mxu0 0.0
    %7836 = vmatpush1.msra.mxu0 0.0
    %7837 = vmatprep.subr.mxu0 0.0
    %7838 = vmatpush1.msra.mxu0 0.0
    %7839 = vmatprep.subr.mxu0 0.0
    %7840 = vmatpush1.msra.mxu0 0.0
    %7841 = vmatprep.subr.mxu0 0.0
    %7842 = vmatpush1.msra.mxu0 0.0
    %7843 = vmatprep.subr.mxu0 0.0
    %7844 = vmatpush1.msra.mxu0 0.0
    %7845 = vmatprep.subr.mxu0 0.0
    %7846 = vmatpush1.msra.mxu0 0.0
    %7847 = vmatprep.mubr.f32.mxu0 0.0
    %7848 = vmatmul.mubr.f32.gmra.mrb[0].mxu0 %v7781
    %v7849 = vpop.f32.mrb[0].mxu0
    %v7850 = vadd.f32 0.0, %v7849
    %v7851 = vpop.f32.mrb[0].mxu0
    %7852 = vdwg.mxu0
    %v7854 = vsel %vm1695, %v6604, 0
    %7856 = vmatprep.subr.mxu0 0.0
    %7857 = vmatpush1.msra.mxu0 %v7765
    %7858 = vmatprep.subr.mxu0 0.0
    %7859 = vmatpush1.msra.mxu0 %v7766
    %7860 = vmatprep.subr.mxu0 0.0
    %7861 = vmatpush1.msra.mxu0 %v7767
    %7862 = vmatprep.subr.mxu0 0.0
    %7863 = vmatpush1.msra.mxu0 %v7768
    %7864 = vmatprep.subr.mxu0 0.0
    %7865 = vmatpush1.msra.mxu0 %v7769
    %7866 = vmatprep.subr.mxu0 0.0
    %7867 = vmatpush1.msra.mxu0 %v7770
    %7868 = vmatprep.subr.mxu0 0.0
    %7869 = vmatpush1.msra.mxu0 %v7771
    %7870 = vmatprep.subr.mxu0 0.0
    %7871 = vmatpush1.msra.mxu0 0.0
    %7872 = vmatprep.subr.mxu0 0.0
    %7873 = vmatpush1.msra.mxu0 0.0
    %7874 = vmatprep.subr.mxu0 0.0
    %7875 = vmatpush1.msra.mxu0 0.0
    %7876 = vmatprep.subr.mxu0 0.0
    %7877 = vmatpush1.msra.mxu0 0.0
    %7878 = vmatprep.subr.mxu0 0.0
    %7879 = vmatpush1.msra.mxu0 0.0
    %7880 = vmatprep.subr.mxu0 0.0
    %7881 = vmatpush1.msra.mxu0 0.0
    %7882 = vmatprep.subr.mxu0 0.0
    %7883 = vmatpush1.msra.mxu0 0.0
    %7884 = vmatprep.subr.mxu0 0.0
    %7885 = vmatpush1.msra.mxu0 0.0
    %7886 = vmatprep.subr.mxu0 0.0
    %7887 = vmatpush1.msra.mxu0 0.0
    %7888 = vmatprep.subr.mxu0 0.0
    %7889 = vmatpush1.msra.mxu0 0.0
    %7890 = vmatprep.subr.mxu0 0.0
    %7891 = vmatpush1.msra.mxu0 0.0
    %7892 = vmatprep.subr.mxu0 0.0
    %7893 = vmatpush1.msra.mxu0 0.0
    %7894 = vmatprep.subr.mxu0 0.0
    %7895 = vmatpush1.msra.mxu0 0.0
    %7896 = vmatprep.subr.mxu0 0.0
    %7897 = vmatpush1.msra.mxu0 0.0
    %7898 = vmatprep.subr.mxu0 0.0
    %7899 = vmatpush1.msra.mxu0 0.0
    %7900 = vmatprep.subr.mxu0 0.0
    %7901 = vmatpush1.msra.mxu0 0.0
    %7902 = vmatprep.subr.mxu0 0.0
    %7903 = vmatpush1.msra.mxu0 0.0
    %7904 = vmatprep.subr.mxu0 0.0
    %7905 = vmatpush1.msra.mxu0 0.0
    %7906 = vmatprep.subr.mxu0 0.0
    %7907 = vmatpush1.msra.mxu0 0.0
    %7908 = vmatprep.subr.mxu0 0.0
    %7909 = vmatpush1.msra.mxu0 0.0
    %7910 = vmatprep.subr.mxu0 0.0
    %7911 = vmatpush1.msra.mxu0 0.0
    %7912 = vmatprep.subr.mxu0 0.0
    %7913 = vmatpush1.msra.mxu0 0.0
    %7914 = vmatprep.subr.mxu0 0.0
    %7915 = vmatpush1.msra.mxu0 0.0
    %7916 = vmatprep.subr.mxu0 0.0
    %7917 = vmatpush1.msra.mxu0 0.0
    %7918 = vmatprep.subr.mxu0 0.0
    %7919 = vmatpush1.msra.mxu0 0.0
    %7920 = vmatprep.mubr.f32.mxu0 0.0
    %7921 = vmatmul.mubr.f32.gmra.mrb[0].mxu0 %v7854
    %v7922 = vpop.f32.mrb[0].mxu0
    %v7923 = vadd.f32 %v7850, %v7922
    %v7924 = vpop.f32.mrb[0].mxu0
    %7925 = vdwg.mxu0
    %s7926 = scalar_lea.vmem %s97, 112
    %v7927 = vld [vmem:[%s7926] sm:$0xff]
    %v7928 = vld [vmem:[%s7926 + $0x8] sm:$0xff]
    %v7929 = vld [vmem:[%s7926 + $0x10] sm:$0xff]
    %v7930 = vld [vmem:[%s7926 + $0x18] sm:$0xff]
    %v7931 = vld [vmem:[%s7926 + $0x20] sm:$0xff]
    %v7932 = vld [vmem:[%s7926 + $0x28] sm:$0xff]
    %v7933 = vld [vmem:[%s7926 + $0x30] sm:$0xff]
    %v7935 = vsel %vm1695, %v6760, 0
    %7937 = vmatprep.subr.mxu0 0.0
    %7938 = vmatpush1.msra.mxu0 %v7927
    %7939 = vmatprep.subr.mxu0 0.0
    %7940 = vmatpush1.msra.mxu0 %v7928
    %7941 = vmatprep.subr.mxu0 0.0
    %7942 = vmatpush1.msra.mxu0 %v7929
    %7943 = vmatprep.subr.mxu0 0.0
    %7944 = vmatpush1.msra.mxu0 %v7930
    %7945 = vmatprep.subr.mxu0 0.0
    %7946 = vmatpush1.msra.mxu0 %v7931
    %7947 = vmatprep.subr.mxu0 0.0
    %7948 = vmatpush1.msra.mxu0 %v7932
    %7949 = vmatprep.subr.mxu0 0.0
    %7950 = vmatpush1.msra.mxu0 %v7933
    %7951 = vmatprep.subr.mxu0 0.0
    %7952 = vmatpush1.msra.mxu0 0.0
    %7953 = vmatprep.subr.mxu0 0.0
    %7954 = vmatpush1.msra.mxu0 0.0
    %7955 = vmatprep.subr.mxu0 0.0
    %7956 = vmatpush1.msra.mxu0 0.0
    %7957 = vmatprep.subr.mxu0 0.0
    %7958 = vmatpush1.msra.mxu0 0.0
    %7959 = vmatprep.subr.mxu0 0.0
    %7960 = vmatpush1.msra.mxu0 0.0
    %7961 = vmatprep.subr.mxu0 0.0
    %7962 = vmatpush1.msra.mxu0 0.0
    %7963 = vmatprep.subr.mxu0 0.0
    %7964 = vmatpush1.msra.mxu0 0.0
    %7965 = vmatprep.subr.mxu0 0.0
    %7966 = vmatpush1.msra.mxu0 0.0
    %7967 = vmatprep.subr.mxu0 0.0
    %7968 = vmatpush1.msra.mxu0 0.0
    %7969 = vmatprep.subr.mxu0 0.0
    %7970 = vmatpush1.msra.mxu0 0.0
    %7971 = vmatprep.subr.mxu0 0.0
    %7972 = vmatpush1.msra.mxu0 0.0
    %7973 = vmatprep.subr.mxu0 0.0
    %7974 = vmatpush1.msra.mxu0 0.0
    %7975 = vmatprep.subr.mxu0 0.0
    %7976 = vmatpush1.msra.mxu0 0.0
    %7977 = vmatprep.subr.mxu0 0.0
    %7978 = vmatpush1.msra.mxu0 0.0
    %7979 = vmatprep.subr.mxu0 0.0
    %7980 = vmatpush1.msra.mxu0 0.0
    %7981 = vmatprep.subr.mxu0 0.0
    %7982 = vmatpush1.msra.mxu0 0.0
    %7983 = vmatprep.subr.mxu0 0.0
    %7984 = vmatpush1.msra.mxu0 0.0
    %7985 = vmatprep.subr.mxu0 0.0
    %7986 = vmatpush1.msra.mxu0 0.0
    %7987 = vmatprep.subr.mxu0 0.0
    %7988 = vmatpush1.msra.mxu0 0.0
    %7989 = vmatprep.subr.mxu0 0.0
    %7990 = vmatpush1.msra.mxu0 0.0
    %7991 = vmatprep.subr.mxu0 0.0
    %7992 = vmatpush1.msra.mxu0 0.0
    %7993 = vmatprep.subr.mxu0 0.0
    %7994 = vmatpush1.msra.mxu0 0.0
    %7995 = vmatprep.subr.mxu0 0.0
    %7996 = vmatpush1.msra.mxu0 0.0
    %7997 = vmatprep.subr.mxu0 0.0
    %7998 = vmatpush1.msra.mxu0 0.0
    %7999 = vmatprep.subr.mxu0 0.0
    %8000 = vmatpush1.msra.mxu0 0.0
    %8001 = vmatprep.mubr.f32.mxu0 0.0
    %8002 = vmatmul.mubr.f32.gmra.mrb[0].mxu0 %v7935
    %v8003 = vpop.f32.mrb[0].mxu0
    %v8004 = vadd.f32 0.0, %v8003
    %v8005 = vpop.f32.mrb[0].mxu0
    %8006 = vdwg.mxu0
    %v8007 = vadd.f32 %v7923, %v8004
    %s8008 = scalar_lea.vmem %s97, 168
    %v8009 = vld [vmem:[%s8008] sm:$0xff]
    %v8010 = vld [vmem:[%s8008 + $0x8] sm:$0xff]
    %v8011 = vld [vmem:[%s8008 + $0x10] sm:$0xff]
    %v8012 = vld [vmem:[%s8008 + $0x18] sm:$0xff]
    %v8013 = vld [vmem:[%s8008 + $0x20] sm:$0xff]
    %v8014 = vld [vmem:[%s8008 + $0x28] sm:$0xff]
    %v8015 = vld [vmem:[%s8008 + $0x30] sm:$0xff]
    %v8017 = vsel %vm1695, %v6838, 0
    %8019 = vmatprep.subr.mxu0 0.0
    %8020 = vmatpush1.msra.mxu0 %v8009
    %8021 = vmatprep.subr.mxu0 0.0
    %8022 = vmatpush1.msra.mxu0 %v8010
    %8023 = vmatprep.subr.mxu0 0.0
    %8024 = vmatpush1.msra.mxu0 %v8011
    %8025 = vmatprep.subr.mxu0 0.0
    %8026 = vmatpush1.msra.mxu0 %v8012
    %8027 = vmatprep.subr.mxu0 0.0
    %8028 = vmatpush1.msra.mxu0 %v8013
    %8029 = vmatprep.subr.mxu0 0.0
    %8030 = vmatpush1.msra.mxu0 %v8014
    %8031 = vmatprep.subr.mxu0 0.0
    %8032 = vmatpush1.msra.mxu0 %v8015
    %8033 = vmatprep.subr.mxu0 0.0
    %8034 = vmatpush1.msra.mxu0 0.0
    %8035 = vmatprep.subr.mxu0 0.0
    %8036 = vmatpush1.msra.mxu0 0.0
    %8037 = vmatprep.subr.mxu0 0.0
    %8038 = vmatpush1.msra.mxu0 0.0
    %8039 = vmatprep.subr.mxu0 0.0
    %8040 = vmatpush1.msra.mxu0 0.0
    %8041 = vmatprep.subr.mxu0 0.0
    %8042 = vmatpush1.msra.mxu0 0.0
    %8043 = vmatprep.subr.mxu0 0.0
    %8044 = vmatpush1.msra.mxu0 0.0
    %8045 = vmatprep.subr.mxu0 0.0
    %8046 = vmatpush1.msra.mxu0 0.0
    %8047 = vmatprep.subr.mxu0 0.0
    %8048 = vmatpush1.msra.mxu0 0.0
    %8049 = vmatprep.subr.mxu0 0.0
    %8050 = vmatpush1.msra.mxu0 0.0
    %8051 = vmatprep.subr.mxu0 0.0
    %8052 = vmatpush1.msra.mxu0 0.0
    %8053 = vmatprep.subr.mxu0 0.0
    %8054 = vmatpush1.msra.mxu0 0.0
    %8055 = vmatprep.subr.mxu0 0.0
    %8056 = vmatpush1.msra.mxu0 0.0
    %8057 = vmatprep.subr.mxu0 0.0
    %8058 = vmatpush1.msra.mxu0 0.0
    %8059 = vmatprep.subr.mxu0 0.0
    %8060 = vmatpush1.msra.mxu0 0.0
    %8061 = vmatprep.subr.mxu0 0.0
    %8062 = vmatpush1.msra.mxu0 0.0
    %8063 = vmatprep.subr.mxu0 0.0
    %8064 = vmatpush1.msra.mxu0 0.0
    %8065 = vmatprep.subr.mxu0 0.0
    %8066 = vmatpush1.msra.mxu0 0.0
    %8067 = vmatprep.subr.mxu0 0.0
    %8068 = vmatpush1.msra.mxu0 0.0
    %8069 = vmatprep.subr.mxu0 0.0
    %8070 = vmatpush1.msra.mxu0 0.0
    %8071 = vmatprep.subr.mxu0 0.0
    %8072 = vmatpush1.msra.mxu0 0.0
    %8073 = vmatprep.subr.mxu0 0.0
    %8074 = vmatpush1.msra.mxu0 0.0
    %8075 = vmatprep.subr.mxu0 0.0
    %8076 = vmatpush1.msra.mxu0 0.0
    %8077 = vmatprep.subr.mxu0 0.0
    %8078 = vmatpush1.msra.mxu0 0.0
    %8079 = vmatprep.subr.mxu0 0.0
    %8080 = vmatpush1.msra.mxu0 0.0
    %8081 = vmatprep.subr.mxu0 0.0
    %8082 = vmatpush1.msra.mxu0 0.0
    %8083 = vmatprep.mubr.f32.mxu0 0.0
    %8084 = vmatmul.mubr.f32.gmra.mrb[0].mxu0 %v8017
    %v8085 = vpop.f32.mrb[0].mxu0
    %v8086 = vadd.f32 0.0, %v8085
    %v8087 = vpop.f32.mrb[0].mxu0
    %8088 = vdwg.mxu0
    %v8089 = vadd.f32 %v8007, %v8086
    %s8090 = scalar_lea.vmem %s97, 224
    %v8091 = vld [vmem:[%s8090] sm:$0xff]
    %v8092 = vld [vmem:[%s8090 + $0x8] sm:$0xff]
    %v8093 = vld [vmem:[%s8090 + $0x10] sm:$0xff]
    %v8094 = vld [vmem:[%s8090 + $0x18] sm:$0xff]
    %v8095 = vld [vmem:[%s8090 + $0x20] sm:$0xff]
    %v8096 = vld [vmem:[%s8090 + $0x28] sm:$0xff]
    %v8097 = vld [vmem:[%s8090 + $0x30] sm:$0xff]
    %v8099 = vsel %vm1695, %v6916, 0
    %8101 = vmatprep.subr.mxu0 0.0
    %8102 = vmatpush1.msra.mxu0 %v8091
    %8103 = vmatprep.subr.mxu0 0.0
    %8104 = vmatpush1.msra.mxu0 %v8092
    %8105 = vmatprep.subr.mxu0 0.0
    %8106 = vmatpush1.msra.mxu0 %v8093
    %8107 = vmatprep.subr.mxu0 0.0
    %8108 = vmatpush1.msra.mxu0 %v8094
    %8109 = vmatprep.subr.mxu0 0.0
    %8110 = vmatpush1.msra.mxu0 %v8095
    %8111 = vmatprep.subr.mxu0 0.0
    %8112 = vmatpush1.msra.mxu0 %v8096
    %8113 = vmatprep.subr.mxu0 0.0
    %8114 = vmatpush1.msra.mxu0 %v8097
    %8115 = vmatprep.subr.mxu0 0.0
    %8116 = vmatpush1.msra.mxu0 0.0
    %8117 = vmatprep.subr.mxu0 0.0
    %8118 = vmatpush1.msra.mxu0 0.0
    %8119 = vmatprep.subr.mxu0 0.0
    %8120 = vmatpush1.msra.mxu0 0.0
    %8121 = vmatprep.subr.mxu0 0.0
    %8122 = vmatpush1.msra.mxu0 0.0
    %8123 = vmatprep.subr.mxu0 0.0
    %8124 = vmatpush1.msra.mxu0 0.0
    %8125 = vmatprep.subr.mxu0 0.0
    %8126 = vmatpush1.msra.mxu0 0.0
    %8127 = vmatprep.subr.mxu0 0.0
    %8128 = vmatpush1.msra.mxu0 0.0
    %8129 = vmatprep.subr.mxu0 0.0
    %8130 = vmatpush1.msra.mxu0 0.0
    %8131 = vmatprep.subr.mxu0 0.0
    %8132 = vmatpush1.msra.mxu0 0.0
    %8133 = vmatprep.subr.mxu0 0.0
    %8134 = vmatpush1.msra.mxu0 0.0
    %8135 = vmatprep.subr.mxu0 0.0
    %8136 = vmatpush1.msra.mxu0 0.0
    %8137 = vmatprep.subr.mxu0 0.0
    %8138 = vmatpush1.msra.mxu0 0.0
    %8139 = vmatprep.subr.mxu0 0.0
    %8140 = vmatpush1.msra.mxu0 0.0
    %8141 = vmatprep.subr.mxu0 0.0
    %8142 = vmatpush1.msra.mxu0 0.0
    %8143 = vmatprep.subr.mxu0 0.0
    %8144 = vmatpush1.msra.mxu0 0.0
    %8145 = vmatprep.subr.mxu0 0.0
    %8146 = vmatpush1.msra.mxu0 0.0
    %8147 = vmatprep.subr.mxu0 0.0
    %8148 = vmatpush1.msra.mxu0 0.0
    %8149 = vmatprep.subr.mxu0 0.0
    %8150 = vmatpush1.msra.mxu0 0.0
    %8151 = vmatprep.subr.mxu0 0.0
    %8152 = vmatpush1.msra.mxu0 0.0
    %8153 = vmatprep.subr.mxu0 0.0
    %8154 = vmatpush1.msra.mxu0 0.0
    %8155 = vmatprep.subr.mxu0 0.0
    %8156 = vmatpush1.msra.mxu0 0.0
    %8157 = vmatprep.subr.mxu0 0.0
    %8158 = vmatpush1.msra.mxu0 0.0
    %8159 = vmatprep.subr.mxu0 0.0
    %8160 = vmatpush1.msra.mxu0 0.0
    %8161 = vmatprep.subr.mxu0 0.0
    %8162 = vmatpush1.msra.mxu0 0.0
    %8163 = vmatprep.subr.mxu0 0.0
    %8164 = vmatpush1.msra.mxu0 0.0
    %8165 = vmatprep.mubr.f32.mxu0 0.0
    %8166 = vmatmul.mubr.f32.gmra.mrb[0].mxu0 %v8099
    %v8167 = vpop.f32.mrb[0].mxu0
    %v8168 = vadd.f32 0.0, %v8167
    %v8169 = vpop.f32.mrb[0].mxu0
    %8170 = vdwg.mxu0
    %v8171 = vadd.f32 %v8089, %v8168
    %s8172 = scalar_lea.vmem %s97, 280
    %v8173 = vld [vmem:[%s8172] sm:$0xff]
    %v8174 = vld [vmem:[%s8172 + $0x8] sm:$0xff]
    %v8175 = vld [vmem:[%s8172 + $0x10] sm:$0xff]
    %v8176 = vld [vmem:[%s8172 + $0x18] sm:$0xff]
    %v8177 = vld [vmem:[%s8172 + $0x20] sm:$0xff]
    %v8178 = vld [vmem:[%s8172 + $0x28] sm:$0xff]
    %v8179 = vld [vmem:[%s8172 + $0x30] sm:$0xff]
    %v8181 = vsel %vm1695, %v6994, 0
    %8183 = vmatprep.subr.mxu0 0.0
    %8184 = vmatpush1.msra.mxu0 %v8173
    %8185 = vmatprep.subr.mxu0 0.0
    %8186 = vmatpush1.msra.mxu0 %v8174
    %8187 = vmatprep.subr.mxu0 0.0
    %8188 = vmatpush1.msra.mxu0 %v8175
    %8189 = vmatprep.subr.mxu0 0.0
    %8190 = vmatpush1.msra.mxu0 %v8176
    %8191 = vmatprep.subr.mxu0 0.0
    %8192 = vmatpush1.msra.mxu0 %v8177
    %8193 = vmatprep.subr.mxu0 0.0
    %8194 = vmatpush1.msra.mxu0 %v8178
    %8195 = vmatprep.subr.mxu0 0.0
    %8196 = vmatpush1.msra.mxu0 %v8179
    %8197 = vmatprep.subr.mxu0 0.0
    %8198 = vmatpush1.msra.mxu0 0.0
    %8199 = vmatprep.subr.mxu0 0.0
    %8200 = vmatpush1.msra.mxu0 0.0
    %8201 = vmatprep.subr.mxu0 0.0
    %8202 = vmatpush1.msra.mxu0 0.0
    %8203 = vmatprep.subr.mxu0 0.0
    %8204 = vmatpush1.msra.mxu0 0.0
    %8205 = vmatprep.subr.mxu0 0.0
    %8206 = vmatpush1.msra.mxu0 0.0
    %8207 = vmatprep.subr.mxu0 0.0
    %8208 = vmatpush1.msra.mxu0 0.0
    %8209 = vmatprep.subr.mxu0 0.0
    %8210 = vmatpush1.msra.mxu0 0.0
    %8211 = vmatprep.subr.mxu0 0.0
    %8212 = vmatpush1.msra.mxu0 0.0
    %8213 = vmatprep.subr.mxu0 0.0
    %8214 = vmatpush1.msra.mxu0 0.0
    %8215 = vmatprep.subr.mxu0 0.0
    %8216 = vmatpush1.msra.mxu0 0.0
    %8217 = vmatprep.subr.mxu0 0.0
    %8218 = vmatpush1.msra.mxu0 0.0
    %8219 = vmatprep.subr.mxu0 0.0
    %8220 = vmatpush1.msra.mxu0 0.0
    %8221 = vmatprep.subr.mxu0 0.0
    %8222 = vmatpush1.msra.mxu0 0.0
    %8223 = vmatprep.subr.mxu0 0.0
    %8224 = vmatpush1.msra.mxu0 0.0
    %8225 = vmatprep.subr.mxu0 0.0
    %8226 = vmatpush1.msra.mxu0 0.0
    %8227 = vmatprep.subr.mxu0 0.0
    %8228 = vmatpush1.msra.mxu0 0.0
    %8229 = vmatprep.subr.mxu0 0.0
    %8230 = vmatpush1.msra.mxu0 0.0
    %8231 = vmatprep.subr.mxu0 0.0
    %8232 = vmatpush1.msra.mxu0 0.0
    %8233 = vmatprep.subr.mxu0 0.0
    %8234 = vmatpush1.msra.mxu0 0.0
    %8235 = vmatprep.subr.mxu0 0.0
    %8236 = vmatpush1.msra.mxu0 0.0
    %8237 = vmatprep.subr.mxu0 0.0
    %8238 = vmatpush1.msra.mxu0 0.0
    %8239 = vmatprep.subr.mxu0 0.0
    %8240 = vmatpush1.msra.mxu0 0.0
    %8241 = vmatprep.subr.mxu0 0.0
    %8242 = vmatpush1.msra.mxu0 0.0
    %8243 = vmatprep.subr.mxu0 0.0
    %8244 = vmatpush1.msra.mxu0 0.0
    %8245 = vmatprep.subr.mxu0 0.0
    %8246 = vmatpush1.msra.mxu0 0.0
    %8247 = vmatprep.mubr.f32.mxu0 0.0
    %8248 = vmatmul.mubr.f32.gmra.mrb[0].mxu0 %v8181
    %v8249 = vpop.f32.mrb[0].mxu0
    %v8250 = vadd.f32 0.0, %v8249
    %v8251 = vpop.f32.mrb[0].mxu0
    %8252 = vdwg.mxu0
    %v8253 = vadd.f32 %v8171, %v8250
    %s8254 = scalar_lea.vmem %s97, 336
    %v8255 = vld [vmem:[%s8254] sm:$0xff]
    %v8256 = vld [vmem:[%s8254 + $0x8] sm:$0xff]
    %v8257 = vld [vmem:[%s8254 + $0x10] sm:$0xff]
    %v8258 = vld [vmem:[%s8254 + $0x18] sm:$0xff]
    %v8259 = vld [vmem:[%s8254 + $0x20] sm:$0xff]
    %v8260 = vld [vmem:[%s8254 + $0x28] sm:$0xff]
    %v8261 = vld [vmem:[%s8254 + $0x30] sm:$0xff]
    %v8263 = vsel %vm1695, %v7072, 0
    %8265 = vmatprep.subr.mxu0 0.0
    %8266 = vmatpush1.msra.mxu0 %v8255
    %8267 = vmatprep.subr.mxu0 0.0
    %8268 = vmatpush1.msra.mxu0 %v8256
    %8269 = vmatprep.subr.mxu0 0.0
    %8270 = vmatpush1.msra.mxu0 %v8257
    %8271 = vmatprep.subr.mxu0 0.0
    %8272 = vmatpush1.msra.mxu0 %v8258
    %8273 = vmatprep.subr.mxu0 0.0
    %8274 = vmatpush1.msra.mxu0 %v8259
    %8275 = vmatprep.subr.mxu0 0.0
    %8276 = vmatpush1.msra.mxu0 %v8260
    %8277 = vmatprep.subr.mxu0 0.0
    %8278 = vmatpush1.msra.mxu0 %v8261
    %8279 = vmatprep.subr.mxu0 0.0
    %8280 = vmatpush1.msra.mxu0 0.0
    %8281 = vmatprep.subr.mxu0 0.0
    %8282 = vmatpush1.msra.mxu0 0.0
    %8283 = vmatprep.subr.mxu0 0.0
    %8284 = vmatpush1.msra.mxu0 0.0
    %8285 = vmatprep.subr.mxu0 0.0
    %8286 = vmatpush1.msra.mxu0 0.0
    %8287 = vmatprep.subr.mxu0 0.0
    %8288 = vmatpush1.msra.mxu0 0.0
    %8289 = vmatprep.subr.mxu0 0.0
    %8290 = vmatpush1.msra.mxu0 0.0
    %8291 = vmatprep.subr.mxu0 0.0
    %8292 = vmatpush1.msra.mxu0 0.0
    %8293 = vmatprep.subr.mxu0 0.0
    %8294 = vmatpush1.msra.mxu0 0.0
    %8295 = vmatprep.subr.mxu0 0.0
    %8296 = vmatpush1.msra.mxu0 0.0
    %8297 = vmatprep.subr.mxu0 0.0
    %8298 = vmatpush1.msra.mxu0 0.0
    %8299 = vmatprep.subr.mxu0 0.0
    %8300 = vmatpush1.msra.mxu0 0.0
    %8301 = vmatprep.subr.mxu0 0.0
    %8302 = vmatpush1.msra.mxu0 0.0
    %8303 = vmatprep.subr.mxu0 0.0
    %8304 = vmatpush1.msra.mxu0 0.0
    %8305 = vmatprep.subr.mxu0 0.0
    %8306 = vmatpush1.msra.mxu0 0.0
    %8307 = vmatprep.subr.mxu0 0.0
    %8308 = vmatpush1.msra.mxu0 0.0
    %8309 = vmatprep.subr.mxu0 0.0
    %8310 = vmatpush1.msra.mxu0 0.0
    %8311 = vmatprep.subr.mxu0 0.0
    %8312 = vmatpush1.msra.mxu0 0.0
    %8313 = vmatprep.subr.mxu0 0.0
    %8314 = vmatpush1.msra.mxu0 0.0
    %8315 = vmatprep.subr.mxu0 0.0
    %8316 = vmatpush1.msra.mxu0 0.0
    %8317 = vmatprep.subr.mxu0 0.0
    %8318 = vmatpush1.msra.mxu0 0.0
    %8319 = vmatprep.subr.mxu0 0.0
    %8320 = vmatpush1.msra.mxu0 0.0
    %8321 = vmatprep.subr.mxu0 0.0
    %8322 = vmatpush1.msra.mxu0 0.0
    %8323 = vmatprep.subr.mxu0 0.0
    %8324 = vmatpush1.msra.mxu0 0.0
    %8325 = vmatprep.subr.mxu0 0.0
    %8326 = vmatpush1.msra.mxu0 0.0
    %8327 = vmatprep.subr.mxu0 0.0
    %8328 = vmatpush1.msra.mxu0 0.0
    %8329 = vmatprep.mubr.f32.mxu0 0.0
    %8330 = vmatmul.mubr.f32.gmra.mrb[0].mxu0 %v8263
    %v8331 = vpop.f32.mrb[0].mxu0
    %v8332 = vadd.f32 0.0, %v8331
    %v8333 = vpop.f32.mrb[0].mxu0
    %8334 = vdwg.mxu0
    %v8335 = vadd.f32 %v8253, %v8332
    %v8336 = vld [vmem:[%s69] sm:$0x1]
    %v8338 = vlaneseq
    %v8339 = vshrl.u32 %v8338, 7
    %v8340 = vsub.s32 0, %v8339
    %v8341 = vrot.slane %v8336, %v8340
    %v8343 = vadd.f32 %v8335, %v8341
    %v8344 = vmax.f32 %v8343, 0.0
    %v8345 = vld [vmem:[%s99] sm:$0x3]
    %v8346 = vld [vmem:[%s71] sm:$0x1]
    %v8348 = vlaneseq
    %v8349 = vshrl.u32 %v8348, 7
    %v8350 = vsub.s32 0, %v8349
    %v8351 = vrot.slane %v8346, %v8350
    %vm8353 = vcmask 15360
    %v8355 = vsel %vm8353, %v8344, 0
    %vm8357 = vcmask 1041408
    %v8359 = vsel %vm8357, %v8345, 0
    %8361 = vmatprep.subr.mxu0 0.0
    %8362 = vmatpush1.msra.mxu0 %v8359
    %8363 = vmatprep.subr.mxu0 0.0
    %8364 = vmatpush1.msra.mxu0 0.0
    %8365 = vmatprep.subr.mxu0 0.0
    %8366 = vmatpush1.msra.mxu0 0.0
    %8367 = vmatprep.subr.mxu0 0.0
    %8368 = vmatpush1.msra.mxu0 0.0
    %8369 = vmatprep.subr.mxu0 0.0
    %8370 = vmatpush1.msra.mxu0 0.0
    %8371 = vmatprep.subr.mxu0 0.0
    %8372 = vmatpush1.msra.mxu0 0.0
    %8373 = vmatprep.subr.mxu0 0.0
    %8374 = vmatpush1.msra.mxu0 0.0
    %8375 = vmatprep.subr.mxu0 0.0
    %8376 = vmatpush1.msra.mxu0 0.0
    %8377 = vmatprep.subr.mxu0 0.0
    %8378 = vmatpush1.msra.mxu0 0.0
    %8379 = vmatprep.subr.mxu0 0.0
    %8380 = vmatpush1.msra.mxu0 0.0
    %8381 = vmatprep.subr.mxu0 0.0
    %8382 = vmatpush1.msra.mxu0 0.0
    %8383 = vmatprep.subr.mxu0 0.0
    %8384 = vmatpush1.msra.mxu0 0.0
    %8385 = vmatprep.subr.mxu0 0.0
    %8386 = vmatpush1.msra.mxu0 0.0
    %8387 = vmatprep.subr.mxu0 0.0
    %8388 = vmatpush1.msra.mxu0 0.0
    %8389 = vmatprep.subr.mxu0 0.0
    %8390 = vmatpush1.msra.mxu0 0.0
    %8391 = vmatprep.subr.mxu0 0.0
    %8392 = vmatpush1.msra.mxu0 0.0
    %8393 = vmatprep.subr.mxu0 0.0
    %8394 = vmatpush1.msra.mxu0 0.0
    %8395 = vmatprep.subr.mxu0 0.0
    %8396 = vmatpush1.msra.mxu0 0.0
    %8397 = vmatprep.subr.mxu0 0.0
    %8398 = vmatpush1.msra.mxu0 0.0
    %8399 = vmatprep.subr.mxu0 0.0
    %8400 = vmatpush1.msra.mxu0 0.0
    %8401 = vmatprep.subr.mxu0 0.0
    %8402 = vmatpush1.msra.mxu0 0.0
    %8403 = vmatprep.subr.mxu0 0.0
    %8404 = vmatpush1.msra.mxu0 0.0
    %8405 = vmatprep.subr.mxu0 0.0
    %8406 = vmatpush1.msra.mxu0 0.0
    %8407 = vmatprep.subr.mxu0 0.0
    %8408 = vmatpush1.msra.mxu0 0.0
    %8409 = vmatprep.subr.mxu0 0.0
    %8410 = vmatpush1.msra.mxu0 0.0
    %8411 = vmatprep.subr.mxu0 0.0
    %8412 = vmatpush1.msra.mxu0 0.0
    %8413 = vmatprep.subr.mxu0 0.0
    %8414 = vmatpush1.msra.mxu0 0.0
    %8415 = vmatprep.subr.mxu0 0.0
    %8416 = vmatpush1.msra.mxu0 0.0
    %8417 = vmatprep.subr.mxu0 0.0
    %8418 = vmatpush1.msra.mxu0 0.0
    %8419 = vmatprep.subr.mxu0 0.0
    %8420 = vmatpush1.msra.mxu0 0.0
    %8421 = vmatprep.subr.mxu0 0.0
    %8422 = vmatpush1.msra.mxu0 0.0
    %8423 = vmatprep.subr.mxu0 0.0
    %8424 = vmatpush1.msra.mxu0 0.0
    %8425 = vmatprep.mubr.f32.mxu0 0.0
    %8426 = vmatmul.mubr.f32.gmra.mrb[0].mxu0 %v8355
    %v8427 = vpop.f32.mrb[0].mxu0
    %v8428 = vadd.f32 %v8351, %v8427
    %v8429 = vpop.f32.mrb[0].mxu0
    %8430 = vdwg.mxu0
    %v8431 = vtanh.pop %v8428
    %8432 = vst.msk [vmem:[%s103] sm:$0xff] %vm8353, %v8431
    // Predicated region
    $region218: #{tpu_custom_call.1} parent=1 // pred_check
      _
    $region219: #{tpu_custom_call.1} parent=1 // pred_check_branch
      %8434 = sbr.rel (0) target = $region221
    $region220: #{tpu_custom_call.1} parent=1 // pred_region
      %s8436 = ssub.s32 128, 128
      %8437 = vsyncadd [#allocation4], %s8436
      %s8439 = sshll.u32 [#allocation10], 4
      %s8440 = int_to_ptr.vmem [resolvable:$true] %s8439
      %8442 = dma.vmem_to_hbm [thread:$0]  %s8440, 128, %s101, [#allocation4]
    $region221: #{tpu_custom_call.1} parent=1 // pred_fallthru
      _
    // Predicated region
    $region222: #{tpu_custom_call.1} parent=1 // pred_check
      _
    $region223: #{tpu_custom_call.1} parent=1 // pred_check_branch
      %8444 = sbr.rel (0) target = $region225
    $region224: #{tpu_custom_call.1} parent=1 // pred_region
      _
    $region225: #{tpu_custom_call.1} parent=1 // pred_fallthru
      _
    // Predicated region
    $region226: #{tpu_custom_call.1} parent=1 // pred_check
      _
    $region227: #{tpu_custom_call.1} parent=1 // pred_check_branch
      %8446 = sbr.rel (0) target = $region229
    $region228: #{tpu_custom_call.1} parent=1 // pred_region
      %8447 = dma.done [#allocation4], 128
    $region229: #{tpu_custom_call.1} parent=1 // pred_fallthru
      _
    // Predicated region
    $region230: #{tpu_custom_call.1} parent=1 // pred_check
      _
    $region231: #{tpu_custom_call.1} parent=1 // pred_check_branch
      %8449 = sbr.rel (0) target = $region233
    $region232: #{tpu_custom_call.1} parent=1 // pred_region
      _
    $region233: #{tpu_custom_call.1} parent=1 // pred_fallthru
      _
    %8450 = vsyncpa [#allocation3], 1
    %8451 = vsyncpa [#allocation8], 1
    %8452 = vsyncpa [#allocation4], 1
    %8453 = vsyncpa [#allocation5], 1

</llo_original>
